<compile_context>
chip_gen: v6e
topology: v6e:2x2x1
jax: 0.10.0
libtpu: 0.0.40
codegen_flags: <defaults>
</compile_context>

<pallas_src>
import functools

import jax
import jax.numpy as jnp
from jax import lax
from jax.experimental import pallas as pl
from jax.experimental.pallas import tpu as pltpu


def _round_up(v, m):
    return ((v + m - 1) // m) * m


def _manam_chunk_kernel(
    # inputs
    x0_ref, u_ref, w_sg_ref, w_y_ref, b_y_ref,
    # output: one (Tc, bb, n_x_f + n_x_b + n_y) chunk per grid step
    out_ref,
    # scratch: loop-carried state, persists across the sequential time axis
    x_s, y_s, mu_s, sig_s,
    *,
    time_chunk, unroll, n_x_f, n_x_b, n_y,
    gamma_power, adaptive_gamma_eval,
    min_x_b, max_x_b, min_x, max_x, min_y, max_y,
):
    c = pl.program_id(1)

    w_sg = w_sg_ref[...]        # (n_x, n_x)   state -> [dx_f | g_b]
    w_y = w_y_ref[...]          # (n_x, n_y)   state -> y
    b_y = b_y_ref[...]          # (1, n_y)

    # ---- first chunk of each batch block: load the initial condition. ----
    @pl.when(c == 0)
    def _init():
        x0 = x0_ref[...]                                   # [x_f_0 | x_b_0]
        x_s[...] = x0
        mu_s[...] = x0[:, n_x_f:]                          # mu_0 = x_b_0
        sig_s[...] = jnp.ones((x0.shape[0], n_x_b), jnp.float32)
        # pre-loop y_step = h(x_f_0) + h_b(x_f_0, x_b_0), NOT clipped
        y_s[...] = jnp.dot(x0, w_y, preferred_element_type=jnp.float32) + b_y

    t_base = c * time_chunk

    def one_step(t_idx):
        x_all = x_s[...]
        y_cur = y_s[...]
        mu = mu_s[...]
        sig = sig_s[...]

        # ---- emit the pre-update state: x[:, t] = x_step, y[:, t] = y_step.
        out_ref[t_idx] = jnp.concatenate([x_all, y_cur], axis=-1)

        tf = (t_base + t_idx).astype(jnp.float32)
        t1 = tf + 1.0                       # (t + 1)
        t2 = tf + 2.0                       # (t + 2)

        x_f = x_all[:, :n_x_f]
        x_b = x_all[:, n_x_f:]

        # ---- one fused dot: [dx_f_lin | g_b_lin]; u-terms + biases hoisted.
        sg = jnp.dot(x_all, w_sg, preferred_element_type=jnp.float32) + u_ref[t_idx]
        dx_f = sg[:, :n_x_f]
        g_b = sg[:, n_x_f:]

        # ---- MANAM adaptive gamma (vectorized over (bb, n_x_b)). ----
        if gamma_power == 1:                # trace-time special cases: no pow
            gp = sig
        elif gamma_power == 2:
            gp = sig * sig
        else:
            gp = sig ** gamma_power
        inv_gp = 1.0 / gp

        if adaptive_gamma_eval:
            diff = x_b - mu
            one_p = 1.0 + inv_gp
            delta = (g_b * (diff + 0.5 * g_b * one_p)) * (1.0 - inv_gp)
            epsilon = (t2 * (sig * sig - t2 / t1)
                       + diff * (diff + g_b * one_p
                                 + 0.5 * g_b * g_b * (1.0 + inv_gp * inv_gp)))
            d1 = jnp.logical_and(epsilon >= delta, delta >= 0.0)
            d2 = jnp.logical_and(epsilon < delta, delta < 0.0)
            d3 = jnp.logical_and(delta < epsilon, epsilon < 0.0)
            rhs4 = delta * delta - epsilon * epsilon
            d4 = jnp.logical_and((2.0 * t2 * t2 / t1) * epsilon >= rhs4, rhs4 > 0.0)
            inv_gamma = jnp.where(d1 | d2 | d3 | d4, inv_gp, 1.0)
            x_b_new = x_b + g_b * inv_gamma          # divide -> multiply
        else:
            x_b_new = x_b + g_b
        # TODO(synk): display_gamma_condition_stat D_i satisfaction-ratio
        # prints are host-side diagnostics and are not implemented.

        x_f_new = x_f + dx_f

        # y from the *unclipped* new state, then project x_f, y, x_b
        # (same ordering as the PyTorch forward).
        y_new = (jnp.dot(jnp.concatenate([x_f_new, x_b_new], axis=-1), w_y,
                         preferred_element_type=jnp.float32) + b_y)
        x_f_new = jnp.clip(x_f_new, min_x, max_x)
        y_new = jnp.clip(y_new, min_y, max_y)
        x_b_new = jnp.clip(x_b_new, min_x_b, max_x_b)

        # ---- running mean / std of x_b (new x_b, old mu / sigma). ----
        diff2 = x_b_new - mu
        sig_new = jnp.sqrt((t1 / t2) * sig * sig + (t1 / (t2 * t2)) * diff2 * diff2)
        mu_new = (t1 / t2) * mu + (1.0 / t2) * x_b_new

        x_s[...] = jnp.concatenate([x_f_new, x_b_new], axis=-1)
        y_s[...] = y_new
        mu_s[...] = mu_new
        sig_s[...] = sig_new

    def block(blk, carry):
        base = blk * unroll
        for k in range(unroll):             # static unroll window of 8 steps
            one_step(base + k)
        return carry

    lax.fori_loop(0, time_chunk // unroll, block, 0)


def state_space_simulator_augmented_manam(
    x_f_0, x_b_0, u, params, *,
    min_cons_hard_x_b_step, max_cons_hard_x_b_step,
    min_cons_hard_x_step, max_cons_hard_x_step,
    min_cons_hard_y_step, max_cons_hard_y_step,
    gamma_power=1, adaptive_gamma_eval=True,
    batch_block=None, time_chunk=None,
):
    """JAX/Pallas equivalent of StateSpaceSimulatorAugmented_MANAM.forward.

    Returns (x_f, x_b, y) of shapes (B, T, n_x_f), (B, T, n_x_b), (B, T, n_y).
    """
    # TODO(synk): theta_f / theta_h / datascaler are consumed inside the
    # user-supplied f / h sub-modules; with affine surrogates they have no
    # observable effect and are therefore not plumbed through.
    x_f_0 = jnp.asarray(x_f_0, jnp.float32)
    x_b_0 = jnp.asarray(x_b_0, jnp.float32)
    u = jnp.asarray(u, jnp.float32)

    B, n_x_f = x_f_0.shape
    _, n_x_b = x_b_0.shape
    _, T, _ = u.shape
    n_y = params["W_h"].shape[1]
    n_x = n_x_f + n_x_b
    n_out = n_x + n_y

    # Batch blocking: keep bb = B on single-TC chips (v5e/v6e); pass
    # batch_block = B // 2 on v7x so the "parallel" axis shards over 2 TCs.
    bb = B if batch_block is None else batch_block
    assert B % bb == 0 and (bb == B or bb % 8 == 0)
    nb = B // bb

    # Time chunking (amortize per-grid-step overhead, coalesce DMAs).
    tc = min(128, _round_up(T, 8)) if time_chunk is None else time_chunk
    tc = _round_up(tc, 8)
    n_chunks = pl.cdiv(T, tc)
    t_pad = n_chunks * tc
    unroll = 8

    # ---- fuse all state-dependent affine maps (host side, once). ----
    #   [dx_f | g_b] = x_all @ W_sg + (u @ W_sg_u + b_sg)
    #   y            = x_all @ W_y  + b_y
    w_sg = jnp.concatenate([
        jnp.concatenate([params["W_f_x"] + params["W_fb_x"], params["W_gb_x"]], axis=1),
        jnp.concatenate([params["W_fb_b"], params["W_gb_b"]], axis=1),
    ], axis=0)                                                       # (n_x, n_x)
    w_y = jnp.concatenate([params["W_h"] + params["W_hb_x"],
                           params["W_hb_b"]], axis=0)                # (n_x, n_y)
    b_y = params["b_h"] + params["b_hb"]                             # (1, n_y)
    w_sg_u = jnp.concatenate([params["W_f_u"] + params["W_fb_u"],
                              params["W_gb_u"]], axis=1)             # (n_u, n_x)
    b_sg = jnp.concatenate([params["b_f"] + params["b_fb"],
                            params["b_gb"]], axis=1)                 # (1, n_x)

    # u-dependent (state-independent) projections + biases hoisted out of the
    # sequential loop; produced directly in time-major layout for streaming.
    u_sg = jnp.einsum("btu,uo->tbo", u, w_sg_u) + b_sg               # (T, B, n_x)
    if t_pad != T:
        u_sg = jnp.concatenate(
            [u_sg, jnp.zeros((t_pad - T, B, n_x), jnp.float32)], axis=0)

    x0 = jnp.concatenate([x_f_0, x_b_0], axis=1)                     # (B, n_x)

    kernel = functools.partial(
        _manam_chunk_kernel,
        time_chunk=tc, unroll=unroll,
        n_x_f=n_x_f, n_x_b=n_x_b, n_y=n_y,
        gamma_power=gamma_power, adaptive_gamma_eval=adaptive_gamma_eval,
        min_x_b=float(min_cons_hard_x_b_step), max_x_b=float(max_cons_hard_x_b_step),
        min_x=float(min_cons_hard_x_step), max_x=float(max_cons_hard_x_step),
        min_y=float(min_cons_hard_y_step), max_y=float(max_cons_hard_y_step),
    )

    const = lambda b, c: (0, 0)      # weights: DMA once, stay VMEM-resident
    traj = pl.pallas_call(
        kernel,
        grid=(nb, n_chunks),
        in_specs=[
            pl.BlockSpec((bb, n_x), lambda b, c: (b, 0)),            # x0
            pl.BlockSpec((tc, bb, n_x), lambda b, c: (c, b, 0)),     # u proj + bias
            pl.BlockSpec((n_x, n_x), const),                         # W_sg
            pl.BlockSpec((n_x, n_y), const),                         # W_y
            pl.BlockSpec((1, n_y), const),                           # b_y
        ],
        out_specs=pl.BlockSpec((tc, bb, n_out), lambda b, c: (c, b, 0)),
        out_shape=jax.ShapeDtypeStruct((t_pad, B, n_out), jnp.float32),
        scratch_shapes=[
            pltpu.VMEM((bb, n_x), jnp.float32),      # [x_f | x_b]
            pltpu.VMEM((bb, n_y), jnp.float32),      # y_step
            pltpu.VMEM((bb, n_x_b), jnp.float32),    # mu_x_b
            pltpu.VMEM((bb, n_x_b), jnp.float32),    # sigma_x_b
        ],
        compiler_params=pltpu.CompilerParams(
            dimension_semantics=("parallel", "arbitrary"),
            vmem_limit_bytes=32 * 1024 * 1024,
        ),
    )(x0, u_sg, w_sg, w_y, b_y)

    # Split the coalesced trajectory back into (B, T, ·) views (these three
    # slices fuse with the transpose into one XLA copy each, outside the
    # sequential loop).
    traj = jnp.transpose(traj[:T], (1, 0, 2))
    return (traj[..., :n_x_f], traj[..., n_x_f:n_x], traj[..., n_x:])


def _reference_scan(x_f_0, x_b_0, u, params, *, bounds, gamma_power,
                    adaptive_gamma_eval):
    """Pure-JAX (lax.scan) mirror of the PyTorch forward, for validation."""
    (min_xb, max_xb, min_x, max_x, min_y, max_y) = bounds
    hp = jax.lax.Precision.HIGHEST
    W_gb_x, W_gb_b = params["W_gb_x"], params["W_gb_b"]
    W_gb_u, b_gb = params["W_gb_u"], params["b_gb"]
    W_dx_x = params["W_f_x"] + params["W_fb_x"]
    W_dx_b = params["W_fb_b"]
    W_dx_u = params["W_f_u"] + params["W_fb_u"]
    b_dx = params["b_f"] + params["b_fb"]
    W_y_x = params["W_h"] + params["W_hb_x"]
    W_y_b = params["W_hb_b"]
    b_y = params["b_h"] + params["b_hb"]

    def step(carry, ut):
        x_f, x_b, y, mu, sig, t = carry
        emit = (x_f, x_b, y)
        gp = sig ** gamma_power
        g_b = (jnp.dot(x_f, W_gb_x, precision=hp) + jnp.dot(x_b, W_gb_b, precision=hp)
               + jnp.dot(ut, W_gb_u, precision=hp) + b_gb)
        delta = (g_b * (x_b - mu + g_b / 2.0 * (1.0 + 1.0 / gp))) * (1.0 - 1.0 / gp)
        eps = ((t + 2.0) * (sig ** 2 - (t + 2.0) / (t + 1.0))
               + (x_b - mu) * (x_b - mu + g_b * (1.0 + 1.0 / gp)
                               + g_b ** 2 / 2.0 * (1.0 + 1.0 / gp ** 2)))
        if adaptive_gamma_eval:
            d1 = (eps >= delta) & (delta >= 0.0)
            d2 = (eps < delta) & (delta < 0.0)
            d3 = (delta < eps) & (eps < 0.0)
            rhs = delta ** 2 - eps ** 2
            d4 = ((2.0 * (t + 2.0) ** 2 / (t + 1.0)) * eps >= rhs) & (rhs > 0.0)
            gamma = jnp.where(d1 | d2 | d3 | d4, gp, jnp.ones_like(gp))
        else:
            gamma = jnp.ones_like(gp)
        dx_f = (jnp.dot(x_f, W_dx_x, precision=hp) + jnp.dot(x_b, W_dx_b, precision=hp)
                + jnp.dot(ut, W_dx_u, precision=hp) + b_dx)
        x_f_n = x_f + dx_f
        x_b_n = x_b + g_b / gamma
        y_n = jnp.dot(x_f_n, W_y_x, precision=hp) + jnp.dot(x_b_n, W_y_b, precision=hp) + b_y
        x_f_n = jnp.clip(x_f_n, min_x, max_x)
        y_n = jnp.clip(y_n, min_y, max_y)
        x_b_n = jnp.clip(x_b_n, min_xb, max_xb)
        sig_n = jnp.sqrt((t + 1.0) / (t + 2.0) * sig ** 2
                         + (t + 1.0) / (t + 2.0) ** 2 * (x_b_n - mu) ** 2)
        mu_n = (t + 1.0) / (t + 2.0) * mu + 1.0 / (t + 2.0) * x_b_n
        return (x_f_n, x_b_n, y_n, mu_n, sig_n, t + 1.0), emit

    y0 = jnp.dot(x_f_0, W_y_x, precision=hp) + jnp.dot(x_b_0, W_y_b, precision=hp) + b_y
    carry0 = (x_f_0, x_b_0, y0, x_b_0, jnp.ones_like(x_b_0), jnp.float32(0.0))
    _, (xf_seq, xb_seq, y_seq) = lax.scan(step, carry0, jnp.transpose(u, (1, 0, 2)))
    tr = lambda a: jnp.transpose(a, (1, 0, 2))
    return tr(xf_seq), tr(xb_seq), tr(y_seq)


if __name__ == "__main__":
    jax.config.update("jax_default_matmul_precision", "highest")

    key = jax.random.PRNGKey(0)
    keys = jax.random.split(key, 19)

    B, T = 8, 16
    n_x_f, n_x_b, n_u, n_y = 16, 8, 4, 4

    def rnd(k, shape, scale=0.1):
        return scale * jax.random.normal(k, shape, dtype=jnp.float32)

    x_f_0 = rnd(keys[0], (B, n_x_f), 0.5)
    x_b_0 = rnd(keys[1], (B, n_x_b), 0.5)
    u = rnd(keys[2], (B, T, n_u), 1.0)

    params = dict(
        # f(x_f, u)          ~ x_f @ W_f_x + u @ W_f_u + b_f
        W_f_x=rnd(keys[3], (n_x_f, n_x_f)), W_f_u=rnd(keys[4], (n_u, n_x_f)),
        b_f=rnd(keys[5], (1, n_x_f)),
        # f_b(x_f, x_b, u)
        W_fb_x=rnd(keys[6], (n_x_f, n_x_f)), W_fb_b=rnd(keys[7], (n_x_b, n_x_f)),
        W_fb_u=rnd(keys[8], (n_u, n_x_f)), b_fb=rnd(keys[9], (1, n_x_f)),
        # g_b(x_f, x_b, u)
        W_gb_x=rnd(keys[10], (n_x_f, n_x_b)), W_gb_b=rnd(keys[11], (n_x_b, n_x_b)),
        W_gb_u=rnd(keys[12], (n_u, n_x_b)), b_gb=rnd(keys[13], (1, n_x_b)),
        # h(x_f)
        W_h=rnd(keys[14], (n_x_f, n_y)), b_h=rnd(keys[15], (1, n_y)),
        # h_b(x_f, x_b)
        W_hb_x=rnd(keys[16], (n_x_f, n_y)), W_hb_b=rnd(keys[17], (n_x_b, n_y)),
        b_hb=rnd(keys[18], (1, n_y)),
    )

    bounds = dict(
        min_cons_hard_x_b_step=-3.0, max_cons_hard_x_b_step=3.0,
        min_cons_hard_x_step=-5.0, max_cons_hard_x_step=5.0,
        min_cons_hard_y_step=-5.0, max_cons_hard_y_step=5.0,
    )

    x_f, x_b, y = state_space_simulator_augmented_manam(
        x_f_0, x_b_0, u, params,
        gamma_power=1, adaptive_gamma_eval=True, **bounds)
    x_f, x_b, y = jax.block_until_ready((x_f, x_b, y))

    assert x_f.shape == (B, T, n_x_f) and x_b.shape == (B, T, n_x_b) and y.shape == (B, T, n_y)
    assert x_f.dtype == jnp.float32 and x_b.dtype == jnp.float32 and y.dtype == jnp.float32
    assert bool(jnp.isfinite(x_f).all() & jnp.isfinite(x_b).all() & jnp.isfinite(y).all())
    # First emitted sample must be the initial condition.
    assert bool(jnp.allclose(x_f[:, 0, :], x_f_0)) and bool(jnp.allclose(x_b[:, 0, :], x_b_0))
    # First output sample must be h(x_f_0) + h_b(x_f_0, x_b_0).
    y0_expected = (x_f_0 @ (params["W_h"] + params["W_hb_x"])
                   + x_b_0 @ params["W_hb_b"] + params["b_h"] + params["b_hb"])
    assert bool(jnp.allclose(y[:, 0, :], y0_expected, rtol=1e-2, atol=1e-2))

    # Full-trajectory check against the pure-JAX reference of the torch loop.
    xf_r, xb_r, y_r = _reference_scan(
        x_f_0, x_b_0, u, params,
        bounds=(-3.0, 3.0, -5.0, 5.0, -5.0, 5.0),
        gamma_power=1, adaptive_gamma_eval=True)
    assert bool(jnp.allclose(x_f, xf_r, rtol=2e-3, atol=2e-3))
    assert bool(jnp.allclose(x_b, xb_r, rtol=2e-3, atol=2e-3))
    assert bool(jnp.allclose(y, y_r, rtol=2e-3, atol=2e-3))

    print("KERNEL_OK")
</pallas_src>

<mosaic_0001>
module attributes {stable_mosaic.version = 11 : i64} {
  func.func @_manam_chunk_kernel(%arg0: i32, %arg1: i32, %arg2: memref<8x24xf32, #tpu.memory_space<vmem>>, %arg3: memref<16x8x24xf32, #tpu.memory_space<vmem>>, %arg4: memref<24x24xf32, #tpu.memory_space<vmem>>, %arg5: memref<24x4xf32, #tpu.memory_space<vmem>>, %arg6: memref<1x4xf32, #tpu.memory_space<vmem>>, %arg7: memref<16x8x28xf32, #tpu.memory_space<vmem>>, %arg8: memref<8x24xf32, #tpu.memory_space<vmem>>, %arg9: memref<8x4xf32, #tpu.memory_space<vmem>>, %arg10: memref<8x8xf32, #tpu.memory_space<vmem>>, %arg11: memref<8x8xf32, #tpu.memory_space<vmem>>) attributes {dimension_semantics = [#tpu.dimension_semantics<parallel>, #tpu.dimension_semantics<arbitrary>], iteration_bounds = array<i64: 1, 1>, scalar_prefetch = 0 : i64, scratch_operands = 4 : i64, tpu.core_type = #tpu.core_type<tc>, window_params = [{transform_indices = @transform_0, window_bounds = array<i64: 8, 24>}, {transform_indices = @transform_1, window_bounds = array<i64: 16, 8, 24>}, {pipeline_mode = #tpu.pipeline_mode<synchronous>, transform_indices = @transform_2, window_bounds = array<i64: 24, 24>}, {pipeline_mode = #tpu.pipeline_mode<synchronous>, transform_indices = @transform_3, window_bounds = array<i64: 24, 4>}, {pipeline_mode = #tpu.pipeline_mode<synchronous>, transform_indices = @transform_4, window_bounds = array<i64: 1, 4>}, {transform_indices = @transform_5, window_bounds = array<i64: 16, 8, 28>}]} {
    %c0 = arith.constant 0 : index
    %c0_0 = arith.constant 0 : index
    %0 = vector.load %arg4[%c0, %c0_0] : memref<24x24xf32, #tpu.memory_space<vmem>>, vector<24x24xf32>
    %c0_1 = arith.constant 0 : index
    %c0_2 = arith.constant 0 : index
    %1 = vector.load %arg5[%c0_1, %c0_2] : memref<24x4xf32, #tpu.memory_space<vmem>>, vector<24x4xf32>
    %c0_3 = arith.constant 0 : index
    %c0_4 = arith.constant 0 : index
    %2 = vector.load %arg6[%c0_3, %c0_4] : memref<1x4xf32, #tpu.memory_space<vmem>>, vector<1x4xf32>
    %c0_i32 = arith.constant 0 : i32
    %3 = arith.cmpi eq, %arg1, %c0_i32 : i32
    %4 = arith.extui %3 : i1 to i32
    %c0_i32_5 = arith.constant 0 : i32
    %5 = arith.cmpi ne, %4, %c0_i32_5 : i32
    scf.if %5 {
      %c0_8 = arith.constant 0 : index
      %c0_9 = arith.constant 0 : index
      %8 = vector.load %arg2[%c0_8, %c0_9] : memref<8x24xf32, #tpu.memory_space<vmem>>, vector<8x24xf32>
      %c0_10 = arith.constant 0 : index
      %c0_11 = arith.constant 0 : index
      %9 = vector.load %arg8[%c0_10, %c0_11] : memref<8x24xf32, #tpu.memory_space<vmem>>, vector<8x24xf32>
      tpu.vector_store %arg8[%c0_10, %c0_11], %8 {strides = array<i32>} : memref<8x24xf32, #tpu.memory_space<vmem>>, vector<8x24xf32>,
      %10 = vector.extract_strided_slice %8 {offsets = [0, 16], sizes = [8, 8], strides = [1, 1]} : vector<8x24xf32> to vector<8x8xf32>
      %c0_12 = arith.constant 0 : index
      %c0_13 = arith.constant 0 : index
      %11 = vector.load %arg10[%c0_12, %c0_13] : memref<8x8xf32, #tpu.memory_space<vmem>>, vector<8x8xf32>
      tpu.vector_store %arg10[%c0_12, %c0_13], %10 {strides = array<i32>} : memref<8x8xf32, #tpu.memory_space<vmem>>, vector<8x8xf32>,
      %cst = arith.constant 1.000000e+00 : f32
      %12 = vector.broadcast %cst : f32 to vector<8x8xf32>
      %c0_14 = arith.constant 0 : index
      %c0_15 = arith.constant 0 : index
      %13 = vector.load %arg11[%c0_14, %c0_15] : memref<8x8xf32, #tpu.memory_space<vmem>>, vector<8x8xf32>
      tpu.vector_store %arg11[%c0_14, %c0_15], %12 {strides = array<i32>} : memref<8x8xf32, #tpu.memory_space<vmem>>, vector<8x8xf32>,
      %cst_16 = arith.constant dense<0.000000e+00> : vector<8x4xf32>
      %14 = tpu.matmul %8, %1, %cst_16 {dimension_numbers = #tpu.dot_dimension_numbers<[1], [0], [0], [1], [0, 0, 1, 1], [], []>, precision = #tpu.contract_precision<fp32>} : vector<8x24xf32>, vector<24x4xf32>, vector<8x4xf32> -> vector<8x4xf32>
      %15 = vector.broadcast %2 : vector<1x4xf32> to vector<8x4xf32>
      %16 = arith.addf %14, %15 : vector<8x4xf32>
      %c0_17 = arith.constant 0 : index
      %c0_18 = arith.constant 0 : index
      %17 = vector.load %arg9[%c0_17, %c0_18] : memref<8x4xf32, #tpu.memory_space<vmem>>, vector<8x4xf32>
      tpu.vector_store %arg9[%c0_17, %c0_18], %16 {strides = array<i32>} : memref<8x4xf32, #tpu.memory_space<vmem>>, vector<8x4xf32>,
    } else {
    }
    %c16_i32 = arith.constant 16 : i32
    %6 = arith.muli %arg1, %c16_i32 : i32
    %c0_i32_6 = arith.constant 0 : i32
    %c2_i32 = arith.constant 2 : i32
    %7 = arith.addi %c0_i32_6, %c2_i32 : i32
    %c1_i32 = arith.constant 1 : i32
    scf.for %arg12 = %c0_i32_6 to %7 step %c1_i32  : i32 {
      %c8_i32 = arith.constant 8 : i32
      %8 = arith.muli %arg12, %c8_i32 : i32
      %c0_i32_8 = arith.constant 0 : i32
      %9 = arith.addi %8, %c0_i32_8 : i32
      %c0_9 = arith.constant 0 : index
      %c0_10 = arith.constant 0 : index
      %10 = vector.load %arg8[%c0_9, %c0_10] : memref<8x24xf32, #tpu.memory_space<vmem>>, vector<8x24xf32>
      %c0_11 = arith.constant 0 : index
      %c0_12 = arith.constant 0 : index
      %11 = vector.load %arg9[%c0_11, %c0_12] : memref<8x4xf32, #tpu.memory_space<vmem>>, vector<8x4xf32>
      %c0_13 = arith.constant 0 : index
      %c0_14 = arith.constant 0 : index
      %12 = vector.load %arg10[%c0_13, %c0_14] : memref<8x8xf32, #tpu.memory_space<vmem>>, vector<8x8xf32>
      %c0_15 = arith.constant 0 : index
      %c0_16 = arith.constant 0 : index
      %13 = vector.load %arg11[%c0_15, %c0_16] : memref<8x8xf32, #tpu.memory_space<vmem>>, vector<8x8xf32>
      %14 = tpu.concatenate %10, %11 in 1 : vector<8x24xf32>, vector<8x4xf32> -> vector<8x28xf32>
      %15 = arith.index_cast %9 : i32 to index
      %c0_17 = arith.constant 0 : index
      %c0_18 = arith.constant 0 : index
      %16 = vector.load %arg7[%15, %c0_17, %c0_18] : memref<16x8x28xf32, #tpu.memory_space<vmem>>, vector<1x8x28xf32>
      %17 = vector.shape_cast %16 : vector<1x8x28xf32> to vector<8x28xf32>
      %18 = vector.shape_cast %14 : vector<8x28xf32> to vector<1x8x28xf32>
      tpu.vector_store %arg7[%15, %c0_17, %c0_18], %18 {strides = array<i32>} : memref<16x8x28xf32, #tpu.memory_space<vmem>>, vector<1x8x28xf32>,
      %19 = arith.addi %6, %9 : i32
      %20 = arith.sitofp %19 : i32 to f32
      %cst = arith.constant 1.000000e+00 : f32
      %21 = arith.addf %20, %cst : f32
      %cst_19 = arith.constant 2.000000e+00 : f32
      %22 = arith.addf %20, %cst_19 : f32
      %23 = vector.extract_strided_slice %10 {offsets = [0, 0], sizes = [8, 16], strides = [1, 1]} : vector<8x24xf32> to vector<8x16xf32>
      %24 = vector.extract_strided_slice %10 {offsets = [0, 16], sizes = [8, 8], strides = [1, 1]} : vector<8x24xf32> to vector<8x8xf32>
      %cst_20 = arith.constant dense<0.000000e+00> : vector<8x24xf32>
      %25 = tpu.matmul %10, %0, %cst_20 {dimension_numbers = #tpu.dot_dimension_numbers<[1], [0], [0], [1], [0, 0, 1, 1], [], []>, precision = #tpu.contract_precision<fp32>} : vector<8x24xf32>, vector<24x24xf32>, vector<8x24xf32> -> vector<8x24xf32>
      %26 = arith.index_cast %9 : i32 to index
      %c0_21 = arith.constant 0 : index
      %c0_22 = arith.constant 0 : index
      %27 = vector.load %arg3[%26, %c0_21, %c0_22] : memref<16x8x24xf32, #tpu.memory_space<vmem>>, vector<1x8x24xf32>
      %28 = vector.shape_cast %27 : vector<1x8x24xf32> to vector<8x24xf32>
      %29 = arith.addf %25, %28 : vector<8x24xf32>
      %30 = vector.extract_strided_slice %29 {offsets = [0, 0], sizes = [8, 16], strides = [1, 1]} : vector<8x24xf32> to vector<8x16xf32>
      %31 = vector.extract_strided_slice %29 {offsets = [0, 16], sizes = [8, 8], strides = [1, 1]} : vector<8x24xf32> to vector<8x8xf32>
      %cst_23 = arith.constant 1.000000e+00 : f32
      %32 = vector.broadcast %cst_23 : f32 to vector<8x8xf32>
      %33 = arith.divf %32, %13 : vector<8x8xf32>
      %34 = arith.subf %24, %12 : vector<8x8xf32>
      %cst_24 = arith.constant 1.000000e+00 : f32
      %35 = vector.broadcast %cst_24 : f32 to vector<8x8xf32>
      %36 = arith.addf %35, %33 : vector<8x8xf32>
      %cst_25 = arith.constant 5.000000e-01 : f32
      %37 = vector.broadcast %cst_25 : f32 to vector<8x8xf32>
      %38 = arith.mulf %37, %31 : vector<8x8xf32>
      %39 = arith.mulf %38, %36 : vector<8x8xf32>
      %40 = arith.addf %34, %39 : vector<8x8xf32>
      %41 = arith.mulf %31, %40 : vector<8x8xf32>
      %cst_26 = arith.constant 1.000000e+00 : f32
      %42 = vector.broadcast %cst_26 : f32 to vector<8x8xf32>
      %43 = arith.subf %42, %33 : vector<8x8xf32>
      %44 = arith.mulf %41, %43 : vector<8x8xf32>
      %45 = arith.mulf %13, %13 : vector<8x8xf32>
      %46 = arith.divf %22, %21 : f32
      %47 = vector.broadcast %46 : f32 to vector<8x8xf32>
      %48 = arith.subf %45, %47 : vector<8x8xf32>
      %49 = vector.broadcast %22 : f32 to vector<8x8xf32>
      %50 = arith.mulf %49, %48 : vector<8x8xf32>
      %51 = arith.mulf %31, %36 : vector<8x8xf32>
      %52 = arith.addf %34, %51 : vector<8x8xf32>
      %cst_27 = arith.constant 5.000000e-01 : f32
      %53 = vector.broadcast %cst_27 : f32 to vector<8x8xf32>
      %54 = arith.mulf %53, %31 : vector<8x8xf32>
      %55 = arith.mulf %54, %31 : vector<8x8xf32>
      %56 = arith.mulf %33, %33 : vector<8x8xf32>
      %cst_28 = arith.constant 1.000000e+00 : f32
      %57 = vector.broadcast %cst_28 : f32 to vector<8x8xf32>
      %58 = arith.addf %57, %56 : vector<8x8xf32>
      %59 = arith.mulf %55, %58 : vector<8x8xf32>
      %60 = arith.addf %52, %59 : vector<8x8xf32>
      %61 = arith.mulf %34, %60 : vector<8x8xf32>
      %62 = arith.addf %50, %61 : vector<8x8xf32>
      %63 = arith.cmpf oge, %62, %44 : vector<8x8xf32>
      %cst_29 = arith.constant 0.000000e+00 : f32
      %64 = vector.broadcast %cst_29 : f32 to vector<8x8xf32>
      %65 = arith.cmpf oge, %44, %64 : vector<8x8xf32>
      %66 = arith.andi %63, %65 : vector<8x8xi1>
      %67 = arith.cmpf olt, %62, %44 : vector<8x8xf32>
      %cst_30 = arith.constant 0.000000e+00 : f32
      %68 = vector.broadcast %cst_30 : f32 to vector<8x8xf32>
      %69 = arith.cmpf olt, %44, %68 : vector<8x8xf32>
      %70 = arith.andi %67, %69 : vector<8x8xi1>
      %71 = arith.cmpf olt, %44, %62 : vector<8x8xf32>
      %cst_31 = arith.constant 0.000000e+00 : f32
      %72 = vector.broadcast %cst_31 : f32 to vector<8x8xf32>
      %73 = arith.cmpf olt, %62, %72 : vector<8x8xf32>
      %74 = arith.andi %71, %73 : vector<8x8xi1>
      %75 = arith.mulf %44, %44 : vector<8x8xf32>
      %76 = arith.mulf %62, %62 : vector<8x8xf32>
      %77 = arith.subf %75, %76 : vector<8x8xf32>
      %cst_32 = arith.constant 2.000000e+00 : f32
      %78 = arith.mulf %cst_32, %22 : f32
      %79 = arith.mulf %78, %22 : f32
      %80 = arith.divf %79, %21 : f32
      %81 = vector.broadcast %80 : f32 to vector<8x8xf32>
      %82 = arith.mulf %81, %62 : vector<8x8xf32>
      %83 = arith.cmpf oge, %82, %77 : vector<8x8xf32>
      %cst_33 = arith.constant 0.000000e+00 : f32
      %84 = vector.broadcast %cst_33 : f32 to vector<8x8xf32>
      %85 = arith.cmpf ogt, %77, %84 : vector<8x8xf32>
      %86 = arith.andi %83, %85 : vector<8x8xi1>
      %87 = arith.ori %66, %70 : vector<8x8xi1>
      %88 = arith.ori %87, %74 : vector<8x8xi1>
      %89 = arith.ori %88, %86 : vector<8x8xi1>
      %cst_34 = arith.constant 1.000000e+00 : f32
      %90 = vector.broadcast %cst_34 : f32 to vector<8x8xf32>
      %91 = arith.select %89, %33, %90 : vector<8x8xi1>, vector<8x8xf32>
      %92 = arith.mulf %31, %91 : vector<8x8xf32>
      %93 = arith.addf %24, %92 : vector<8x8xf32>
      %94 = arith.addf %23, %30 : vector<8x16xf32>
      %95 = tpu.concatenate %94, %93 in 1 : vector<8x16xf32>, vector<8x8xf32> -> vector<8x24xf32>
      %cst_35 = arith.constant dense<0.000000e+00> : vector<8x4xf32>
      %96 = tpu.matmul %95, %1, %cst_35 {dimension_numbers = #tpu.dot_dimension_numbers<[1], [0], [0], [1], [0, 0, 1, 1], [], []>, precision = #tpu.contract_precision<fp32>} : vector<8x24xf32>, vector<24x4xf32>, vector<8x4xf32> -> vector<8x4xf32>
      %97 = vector.broadcast %2 : vector<1x4xf32> to vector<8x4xf32>
      %98 = arith.addf %96, %97 : vector<8x4xf32>
      %cst_36 = arith.constant -5.000000e+00 : f32
      %cst_37 = arith.constant 5.000000e+00 : f32
      %99 = vector.broadcast %cst_36 : f32 to vector<8x16xf32>
      %100 = arith.maximumf %99, %94 : vector<8x16xf32>
      %101 = vector.broadcast %cst_37 : f32 to vector<8x16xf32>
      %102 = arith.minimumf %101, %100 : vector<8x16xf32>
      %cst_38 = arith.constant -5.000000e+00 : f32
      %cst_39 = arith.constant 5.000000e+00 : f32
      %103 = vector.broadcast %cst_38 : f32 to vector<8x4xf32>
      %104 = arith.maximumf %103, %98 : vector<8x4xf32>
      %105 = vector.broadcast %cst_39 : f32 to vector<8x4xf32>
      %106 = arith.minimumf %105, %104 : vector<8x4xf32>
      %cst_40 = arith.constant -3.000000e+00 : f32
      %cst_41 = arith.constant 3.000000e+00 : f32
      %107 = vector.broadcast %cst_40 : f32 to vector<8x8xf32>
      %108 = arith.maximumf %107, %93 : vector<8x8xf32>
      %109 = vector.broadcast %cst_41 : f32 to vector<8x8xf32>
      %110 = arith.minimumf %109, %108 : vector<8x8xf32>
      %111 = arith.subf %110, %12 : vector<8x8xf32>
      %112 = arith.divf %21, %22 : f32
      %113 = vector.broadcast %112 : f32 to vector<8x8xf32>
      %114 = arith.mulf %113, %13 : vector<8x8xf32>
      %115 = arith.mulf %114, %13 : vector<8x8xf32>
      %116 = arith.mulf %22, %22 : f32
      %117 = arith.divf %21, %116 : f32
      %118 = vector.broadcast %117 : f32 to vector<8x8xf32>
      %119 = arith.mulf %118, %111 : vector<8x8xf32>
      %120 = arith.mulf %119, %111 : vector<8x8xf32>
      %121 = arith.addf %115, %120 : vector<8x8xf32>
      %122 = math.sqrt %121 : vector<8x8xf32>
      %123 = arith.divf %21, %22 : f32
      %124 = vector.broadcast %123 : f32 to vector<8x8xf32>
      %125 = arith.mulf %124, %12 : vector<8x8xf32>
      %cst_42 = arith.constant 1.000000e+00 : f32
      %126 = arith.divf %cst_42, %22 : f32
      %127 = vector.broadcast %126 : f32 to vector<8x8xf32>
      %128 = arith.mulf %127, %110 : vector<8x8xf32>
      %129 = arith.addf %125, %128 : vector<8x8xf32>
      %130 = tpu.concatenate %102, %110 in 1 : vector<8x16xf32>, vector<8x8xf32> -> vector<8x24xf32>
      %c0_43 = arith.constant 0 : index
      %c0_44 = arith.constant 0 : index
      %131 = vector.load %arg8[%c0_43, %c0_44] : memref<8x24xf32, #tpu.memory_space<vmem>>, vector<8x24xf32>
      tpu.vector_store %arg8[%c0_43, %c0_44], %130 {strides = array<i32>} : memref<8x24xf32, #tpu.memory_space<vmem>>, vector<8x24xf32>,
      %c0_45 = arith.constant 0 : index
      %c0_46 = arith.constant 0 : index
      %132 = vector.load %arg9[%c0_45, %c0_46] : memref<8x4xf32, #tpu.memory_space<vmem>>, vector<8x4xf32>
      tpu.vector_store %arg9[%c0_45, %c0_46], %106 {strides = array<i32>} : memref<8x4xf32, #tpu.memory_space<vmem>>, vector<8x4xf32>,
      %c0_47 = arith.constant 0 : index
      %c0_48 = arith.constant 0 : index
      %133 = vector.load %arg10[%c0_47, %c0_48] : memref<8x8xf32, #tpu.memory_space<vmem>>, vector<8x8xf32>
      tpu.vector_store %arg10[%c0_47, %c0_48], %129 {strides = array<i32>} : memref<8x8xf32, #tpu.memory_space<vmem>>, vector<8x8xf32>,
      %c0_49 = arith.constant 0 : index
      %c0_50 = arith.constant 0 : index
      %134 = vector.load %arg11[%c0_49, %c0_50] : memref<8x8xf32, #tpu.memory_space<vmem>>, vector<8x8xf32>
      tpu.vector_store %arg11[%c0_49, %c0_50], %122 {strides = array<i32>} : memref<8x8xf32, #tpu.memory_space<vmem>>, vector<8x8xf32>,
      %c1_i32_51 = arith.constant 1 : i32
      %135 = arith.addi %8, %c1_i32_51 : i32
      %c0_52 = arith.constant 0 : index
      %c0_53 = arith.constant 0 : index
      %136 = vector.load %arg8[%c0_52, %c0_53] : memref<8x24xf32, #tpu.memory_space<vmem>>, vector<8x24xf32>
      %c0_54 = arith.constant 0 : index
      %c0_55 = arith.constant 0 : index
      %137 = vector.load %arg9[%c0_54, %c0_55] : memref<8x4xf32, #tpu.memory_space<vmem>>, vector<8x4xf32>
      %c0_56 = arith.constant 0 : index
      %c0_57 = arith.constant 0 : index
      %138 = vector.load %arg10[%c0_56, %c0_57] : memref<8x8xf32, #tpu.memory_space<vmem>>, vector<8x8xf32>
      %c0_58 = arith.constant 0 : index
      %c0_59 = arith.constant 0 : index
      %139 = vector.load %arg11[%c0_58, %c0_59] : memref<8x8xf32, #tpu.memory_space<vmem>>, vector<8x8xf32>
      %140 = tpu.concatenate %136, %137 in 1 : vector<8x24xf32>, vector<8x4xf32> -> vector<8x28xf32>
      %141 = arith.index_cast %135 : i32 to index
      %c0_60 = arith.constant 0 : index
      %c0_61 = arith.constant 0 : index
      %142 = vector.load %arg7[%141, %c0_60, %c0_61] : memref<16x8x28xf32, #tpu.memory_space<vmem>>, vector<1x8x28xf32>
      %143 = vector.shape_cast %142 : vector<1x8x28xf32> to vector<8x28xf32>
      %144 = vector.shape_cast %140 : vector<8x28xf32> to vector<1x8x28xf32>
      tpu.vector_store %arg7[%141, %c0_60, %c0_61], %144 {strides = array<i32>} : memref<16x8x28xf32, #tpu.memory_space<vmem>>, vector<1x8x28xf32>,
      %145 = arith.addi %6, %135 : i32
      %146 = arith.sitofp %145 : i32 to f32
      %cst_62 = arith.constant 1.000000e+00 : f32
      %147 = arith.addf %146, %cst_62 : f32
      %cst_63 = arith.constant 2.000000e+00 : f32
      %148 = arith.addf %146, %cst_63 : f32
      %149 = vector.extract_strided_slice %136 {offsets = [0, 0], sizes = [8, 16], strides = [1, 1]} : vector<8x24xf32> to vector<8x16xf32>
      %150 = vector.extract_strided_slice %136 {offsets = [0, 16], sizes = [8, 8], strides = [1, 1]} : vector<8x24xf32> to vector<8x8xf32>
      %cst_64 = arith.constant dense<0.000000e+00> : vector<8x24xf32>
      %151 = tpu.matmul %136, %0, %cst_64 {dimension_numbers = #tpu.dot_dimension_numbers<[1], [0], [0], [1], [0, 0, 1, 1], [], []>, precision = #tpu.contract_precision<fp32>} : vector<8x24xf32>, vector<24x24xf32>, vector<8x24xf32> -> vector<8x24xf32>
      %152 = arith.index_cast %135 : i32 to index
      %c0_65 = arith.constant 0 : index
      %c0_66 = arith.constant 0 : index
      %153 = vector.load %arg3[%152, %c0_65, %c0_66] : memref<16x8x24xf32, #tpu.memory_space<vmem>>, vector<1x8x24xf32>
      %154 = vector.shape_cast %153 : vector<1x8x24xf32> to vector<8x24xf32>
      %155 = arith.addf %151, %154 : vector<8x24xf32>
      %156 = vector.extract_strided_slice %155 {offsets = [0, 0], sizes = [8, 16], strides = [1, 1]} : vector<8x24xf32> to vector<8x16xf32>
      %157 = vector.extract_strided_slice %155 {offsets = [0, 16], sizes = [8, 8], strides = [1, 1]} : vector<8x24xf32> to vector<8x8xf32>
      %cst_67 = arith.constant 1.000000e+00 : f32
      %158 = vector.broadcast %cst_67 : f32 to vector<8x8xf32>
      %159 = arith.divf %158, %139 : vector<8x8xf32>
      %160 = arith.subf %150, %138 : vector<8x8xf32>
      %cst_68 = arith.constant 1.000000e+00 : f32
      %161 = vector.broadcast %cst_68 : f32 to vector<8x8xf32>
      %162 = arith.addf %161, %159 : vector<8x8xf32>
      %cst_69 = arith.constant 5.000000e-01 : f32
      %163 = vector.broadcast %cst_69 : f32 to vector<8x8xf32>
      %164 = arith.mulf %163, %157 : vector<8x8xf32>
      %165 = arith.mulf %164, %162 : vector<8x8xf32>
      %166 = arith.addf %160, %165 : vector<8x8xf32>
      %167 = arith.mulf %157, %166 : vector<8x8xf32>
      %cst_70 = arith.constant 1.000000e+00 : f32
      %168 = vector.broadcast %cst_70 : f32 to vector<8x8xf32>
      %169 = arith.subf %168, %159 : vector<8x8xf32>
      %170 = arith.mulf %167, %169 : vector<8x8xf32>
      %171 = arith.mulf %139, %139 : vector<8x8xf32>
      %172 = arith.divf %148, %147 : f32
      %173 = vector.broadcast %172 : f32 to vector<8x8xf32>
      %174 = arith.subf %171, %173 : vector<8x8xf32>
      %175 = vector.broadcast %148 : f32 to vector<8x8xf32>
      %176 = arith.mulf %175, %174 : vector<8x8xf32>
      %177 = arith.mulf %157, %162 : vector<8x8xf32>
      %178 = arith.addf %160, %177 : vector<8x8xf32>
      %cst_71 = arith.constant 5.000000e-01 : f32
      %179 = vector.broadcast %cst_71 : f32 to vector<8x8xf32>
      %180 = arith.mulf %179, %157 : vector<8x8xf32>
      %181 = arith.mulf %180, %157 : vector<8x8xf32>
      %182 = arith.mulf %159, %159 : vector<8x8xf32>
      %cst_72 = arith.constant 1.000000e+00 : f32
      %183 = vector.broadcast %cst_72 : f32 to vector<8x8xf32>
      %184 = arith.addf %183, %182 : vector<8x8xf32>
      %185 = arith.mulf %181, %184 : vector<8x8xf32>
      %186 = arith.addf %178, %185 : vector<8x8xf32>
      %187 = arith.mulf %160, %186 : vector<8x8xf32>
      %188 = arith.addf %176, %187 : vector<8x8xf32>
      %189 = arith.cmpf oge, %188, %170 : vector<8x8xf32>
      %cst_73 = arith.constant 0.000000e+00 : f32
      %190 = vector.broadcast %cst_73 : f32 to vector<8x8xf32>
      %191 = arith.cmpf oge, %170, %190 : vector<8x8xf32>
      %192 = arith.andi %189, %191 : vector<8x8xi1>
      %193 = arith.cmpf olt, %188, %170 : vector<8x8xf32>
      %cst_74 = arith.constant 0.000000e+00 : f32
      %194 = vector.broadcast %cst_74 : f32 to vector<8x8xf32>
      %195 = arith.cmpf olt, %170, %194 : vector<8x8xf32>
      %196 = arith.andi %193, %195 : vector<8x8xi1>
      %197 = arith.cmpf olt, %170, %188 : vector<8x8xf32>
      %cst_75 = arith.constant 0.000000e+00 : f32
      %198 = vector.broadcast %cst_75 : f32 to vector<8x8xf32>
      %199 = arith.cmpf olt, %188, %198 : vector<8x8xf32>
      %200 = arith.andi %197, %199 : vector<8x8xi1>
      %201 = arith.mulf %170, %170 : vector<8x8xf32>
      %202 = arith.mulf %188, %188 : vector<8x8xf32>
      %203 = arith.subf %201, %202 : vector<8x8xf32>
      %cst_76 = arith.constant 2.000000e+00 : f32
      %204 = arith.mulf %cst_76, %148 : f32
      %205 = arith.mulf %204, %148 : f32
      %206 = arith.divf %205, %147 : f32
      %207 = vector.broadcast %206 : f32 to vector<8x8xf32>
      %208 = arith.mulf %207, %188 : vector<8x8xf32>
      %209 = arith.cmpf oge, %208, %203 : vector<8x8xf32>
      %cst_77 = arith.constant 0.000000e+00 : f32
      %210 = vector.broadcast %cst_77 : f32 to vector<8x8xf32>
      %211 = arith.cmpf ogt, %203, %210 : vector<8x8xf32>
      %212 = arith.andi %209, %211 : vector<8x8xi1>
      %213 = arith.ori %192, %196 : vector<8x8xi1>
      %214 = arith.ori %213, %200 : vector<8x8xi1>
      %215 = arith.ori %214, %212 : vector<8x8xi1>
      %cst_78 = arith.constant 1.000000e+00 : f32
      %216 = vector.broadcast %cst_78 : f32 to vector<8x8xf32>
      %217 = arith.select %215, %159, %216 : vector<8x8xi1>, vector<8x8xf32>
      %218 = arith.mulf %157, %217 : vector<8x8xf32>
      %219 = arith.addf %150, %218 : vector<8x8xf32>
      %220 = arith.addf %149, %156 : vector<8x16xf32>
      %221 = tpu.concatenate %220, %219 in 1 : vector<8x16xf32>, vector<8x8xf32> -> vector<8x24xf32>
      %cst_79 = arith.constant dense<0.000000e+00> : vector<8x4xf32>
      %222 = tpu.matmul %221, %1, %cst_79 {dimension_numbers = #tpu.dot_dimension_numbers<[1], [0], [0], [1], [0, 0, 1, 1], [], []>, precision = #tpu.contract_precision<fp32>} : vector<8x24xf32>, vector<24x4xf32>, vector<8x4xf32> -> vector<8x4xf32>
      %223 = vector.broadcast %2 : vector<1x4xf32> to vector<8x4xf32>
      %224 = arith.addf %222, %223 : vector<8x4xf32>
      %cst_80 = arith.constant -5.000000e+00 : f32
      %cst_81 = arith.constant 5.000000e+00 : f32
      %225 = vector.broadcast %cst_80 : f32 to vector<8x16xf32>
      %226 = arith.maximumf %225, %220 : vector<8x16xf32>
      %227 = vector.broadcast %cst_81 : f32 to vector<8x16xf32>
      %228 = arith.minimumf %227, %226 : vector<8x16xf32>
      %cst_82 = arith.constant -5.000000e+00 : f32
      %cst_83 = arith.constant 5.000000e+00 : f32
      %229 = vector.broadcast %cst_82 : f32 to vector<8x4xf32>
      %230 = arith.maximumf %229, %224 : vector<8x4xf32>
      %231 = vector.broadcast %cst_83 : f32 to vector<8x4xf32>
      %232 = arith.minimumf %231, %230 : vector<8x4xf32>
      %cst_84 = arith.constant -3.000000e+00 : f32
      %cst_85 = arith.constant 3.000000e+00 : f32
      %233 = vector.broadcast %cst_84 : f32 to vector<8x8xf32>
      %234 = arith.maximumf %233, %219 : vector<8x8xf32>
      %235 = vector.broadcast %cst_85 : f32 to vector<8x8xf32>
      %236 = arith.minimumf %235, %234 : vector<8x8xf32>
      %237 = arith.subf %236, %138 : vector<8x8xf32>
      %238 = arith.divf %147, %148 : f32
      %239 = vector.broadcast %238 : f32 to vector<8x8xf32>
      %240 = arith.mulf %239, %139 : vector<8x8xf32>
      %241 = arith.mulf %240, %139 : vector<8x8xf32>
      %242 = arith.mulf %148, %148 : f32
      %243 = arith.divf %147, %242 : f32
      %244 = vector.broadcast %243 : f32 to vector<8x8xf32>
      %245 = arith.mulf %244, %237 : vector<8x8xf32>
      %246 = arith.mulf %245, %237 : vector<8x8xf32>
      %247 = arith.addf %241, %246 : vector<8x8xf32>
      %248 = math.sqrt %247 : vector<8x8xf32>
      %249 = arith.divf %147, %148 : f32
      %250 = vector.broadcast %249 : f32 to vector<8x8xf32>
      %251 = arith.mulf %250, %138 : vector<8x8xf32>
      %cst_86 = arith.constant 1.000000e+00 : f32
      %252 = arith.divf %cst_86, %148 : f32
      %253 = vector.broadcast %252 : f32 to vector<8x8xf32>
      %254 = arith.mulf %253, %236 : vector<8x8xf32>
      %255 = arith.addf %251, %254 : vector<8x8xf32>
      %256 = tpu.concatenate %228, %236 in 1 : vector<8x16xf32>, vector<8x8xf32> -> vector<8x24xf32>
      %c0_87 = arith.constant 0 : index
      %c0_88 = arith.constant 0 : index
      %257 = vector.load %arg8[%c0_87, %c0_88] : memref<8x24xf32, #tpu.memory_space<vmem>>, vector<8x24xf32>
      tpu.vector_store %arg8[%c0_87, %c0_88], %256 {strides = array<i32>} : memref<8x24xf32, #tpu.memory_space<vmem>>, vector<8x24xf32>,
      %c0_89 = arith.constant 0 : index
      %c0_90 = arith.constant 0 : index
      %258 = vector.load %arg9[%c0_89, %c0_90] : memref<8x4xf32, #tpu.memory_space<vmem>>, vector<8x4xf32>
      tpu.vector_store %arg9[%c0_89, %c0_90], %232 {strides = array<i32>} : memref<8x4xf32, #tpu.memory_space<vmem>>, vector<8x4xf32>,
      %c0_91 = arith.constant 0 : index
      %c0_92 = arith.constant 0 : index
      %259 = vector.load %arg10[%c0_91, %c0_92] : memref<8x8xf32, #tpu.memory_space<vmem>>, vector<8x8xf32>
      tpu.vector_store %arg10[%c0_91, %c0_92], %255 {strides = array<i32>} : memref<8x8xf32, #tpu.memory_space<vmem>>, vector<8x8xf32>,
      %c0_93 = arith.constant 0 : index
      %c0_94 = arith.constant 0 : index
      %260 = vector.load %arg11[%c0_93, %c0_94] : memref<8x8xf32, #tpu.memory_space<vmem>>, vector<8x8xf32>
      tpu.vector_store %arg11[%c0_93, %c0_94], %248 {strides = array<i32>} : memref<8x8xf32, #tpu.memory_space<vmem>>, vector<8x8xf32>,
      %c2_i32_95 = arith.constant 2 : i32
      %261 = arith.addi %8, %c2_i32_95 : i32
      %c0_96 = arith.constant 0 : index
      %c0_97 = arith.constant 0 : index
      %262 = vector.load %arg8[%c0_96, %c0_97] : memref<8x24xf32, #tpu.memory_space<vmem>>, vector<8x24xf32>
      %c0_98 = arith.constant 0 : index
      %c0_99 = arith.constant 0 : index
      %263 = vector.load %arg9[%c0_98, %c0_99] : memref<8x4xf32, #tpu.memory_space<vmem>>, vector<8x4xf32>
      %c0_100 = arith.constant 0 : index
      %c0_101 = arith.constant 0 : index
      %264 = vector.load %arg10[%c0_100, %c0_101] : memref<8x8xf32, #tpu.memory_space<vmem>>, vector<8x8xf32>
      %c0_102 = arith.constant 0 : index
      %c0_103 = arith.constant 0 : index
      %265 = vector.load %arg11[%c0_102, %c0_103] : memref<8x8xf32, #tpu.memory_space<vmem>>, vector<8x8xf32>
      %266 = tpu.concatenate %262, %263 in 1 : vector<8x24xf32>, vector<8x4xf32> -> vector<8x28xf32>
      %267 = arith.index_cast %261 : i32 to index
      %c0_104 = arith.constant 0 : index
      %c0_105 = arith.constant 0 : index
      %268 = vector.load %arg7[%267, %c0_104, %c0_105] : memref<16x8x28xf32, #tpu.memory_space<vmem>>, vector<1x8x28xf32>
      %269 = vector.shape_cast %268 : vector<1x8x28xf32> to vector<8x28xf32>
      %270 = vector.shape_cast %266 : vector<8x28xf32> to vector<1x8x28xf32>
      tpu.vector_store %arg7[%267, %c0_104, %c0_105], %270 {strides = array<i32>} : memref<16x8x28xf32, #tpu.memory_space<vmem>>, vector<1x8x28xf32>,
      %271 = arith.addi %6, %261 : i32
      %272 = arith.sitofp %271 : i32 to f32
      %cst_106 = arith.constant 1.000000e+00 : f32
      %273 = arith.addf %272, %cst_106 : f32
      %cst_107 = arith.constant 2.000000e+00 : f32
      %274 = arith.addf %272, %cst_107 : f32
      %275 = vector.extract_strided_slice %262 {offsets = [0, 0], sizes = [8, 16], strides = [1, 1]} : vector<8x24xf32> to vector<8x16xf32>
      %276 = vector.extract_strided_slice %262 {offsets = [0, 16], sizes = [8, 8], strides = [1, 1]} : vector<8x24xf32> to vector<8x8xf32>
      %cst_108 = arith.constant dense<0.000000e+00> : vector<8x24xf32>
      %277 = tpu.matmul %262, %0, %cst_108 {dimension_numbers = #tpu.dot_dimension_numbers<[1], [0], [0], [1], [0, 0, 1, 1], [], []>, precision = #tpu.contract_precision<fp32>} : vector<8x24xf32>, vector<24x24xf32>, vector<8x24xf32> -> vector<8x24xf32>
      %278 = arith.index_cast %261 : i32 to index
      %c0_109 = arith.constant 0 : index
      %c0_110 = arith.constant 0 : index
      %279 = vector.load %arg3[%278, %c0_109, %c0_110] : memref<16x8x24xf32, #tpu.memory_space<vmem>>, vector<1x8x24xf32>
      %280 = vector.shape_cast %279 : vector<1x8x24xf32> to vector<8x24xf32>
      %281 = arith.addf %277, %280 : vector<8x24xf32>
      %282 = vector.extract_strided_slice %281 {offsets = [0, 0], sizes = [8, 16], strides = [1, 1]} : vector<8x24xf32> to vector<8x16xf32>
      %283 = vector.extract_strided_slice %281 {offsets = [0, 16], sizes = [8, 8], strides = [1, 1]} : vector<8x24xf32> to vector<8x8xf32>
      %cst_111 = arith.constant 1.000000e+00 : f32
      %284 = vector.broadcast %cst_111 : f32 to vector<8x8xf32>
      %285 = arith.divf %284, %265 : vector<8x8xf32>
      %286 = arith.subf %276, %264 : vector<8x8xf32>
      %cst_112 = arith.constant 1.000000e+00 : f32
      %287 = vector.broadcast %cst_112 : f32 to vector<8x8xf32>
      %288 = arith.addf %287, %285 : vector<8x8xf32>
      %cst_113 = arith.constant 5.000000e-01 : f32
      %289 = vector.broadcast %cst_113 : f32 to vector<8x8xf32>
      %290 = arith.mulf %289, %283 : vector<8x8xf32>
      %291 = arith.mulf %290, %288 : vector<8x8xf32>
      %292 = arith.addf %286, %291 : vector<8x8xf32>
      %293 = arith.mulf %283, %292 : vector<8x8xf32>
      %cst_114 = arith.constant 1.000000e+00 : f32
      %294 = vector.broadcast %cst_114 : f32 to vector<8x8xf32>
      %295 = arith.subf %294, %285 : vector<8x8xf32>
      %296 = arith.mulf %293, %295 : vector<8x8xf32>
      %297 = arith.mulf %265, %265 : vector<8x8xf32>
      %298 = arith.divf %274, %273 : f32
      %299 = vector.broadcast %298 : f32 to vector<8x8xf32>
      %300 = arith.subf %297, %299 : vector<8x8xf32>
      %301 = vector.broadcast %274 : f32 to vector<8x8xf32>
      %302 = arith.mulf %301, %300 : vector<8x8xf32>
      %303 = arith.mulf %283, %288 : vector<8x8xf32>
      %304 = arith.addf %286, %303 : vector<8x8xf32>
      %cst_115 = arith.constant 5.000000e-01 : f32
      %305 = vector.broadcast %cst_115 : f32 to vector<8x8xf32>
      %306 = arith.mulf %305, %283 : vector<8x8xf32>
      %307 = arith.mulf %306, %283 : vector<8x8xf32>
      %308 = arith.mulf %285, %285 : vector<8x8xf32>
      %cst_116 = arith.constant 1.000000e+00 : f32
      %309 = vector.broadcast %cst_116 : f32 to vector<8x8xf32>
      %310 = arith.addf %309, %308 : vector<8x8xf32>
      %311 = arith.mulf %307, %310 : vector<8x8xf32>
      %312 = arith.addf %304, %311 : vector<8x8xf32>
      %313 = arith.mulf %286, %312 : vector<8x8xf32>
      %314 = arith.addf %302, %313 : vector<8x8xf32>
      %315 = arith.cmpf oge, %314, %296 : vector<8x8xf32>
      %cst_117 = arith.constant 0.000000e+00 : f32
      %316 = vector.broadcast %cst_117 : f32 to vector<8x8xf32>
      %317 = arith.cmpf oge, %296, %316 : vector<8x8xf32>
      %318 = arith.andi %315, %317 : vector<8x8xi1>
      %319 = arith.cmpf olt, %314, %296 : vector<8x8xf32>
      %cst_118 = arith.constant 0.000000e+00 : f32
      %320 = vector.broadcast %cst_118 : f32 to vector<8x8xf32>
      %321 = arith.cmpf olt, %296, %320 : vector<8x8xf32>
      %322 = arith.andi %319, %321 : vector<8x8xi1>
      %323 = arith.cmpf olt, %296, %314 : vector<8x8xf32>
      %cst_119 = arith.constant 0.000000e+00 : f32
      %324 = vector.broadcast %cst_119 : f32 to vector<8x8xf32>
      %325 = arith.cmpf olt, %314, %324 : vector<8x8xf32>
      %326 = arith.andi %323, %325 : vector<8x8xi1>
      %327 = arith.mulf %296, %296 : vector<8x8xf32>
      %328 = arith.mulf %314, %314 : vector<8x8xf32>
      %329 = arith.subf %327, %328 : vector<8x8xf32>
      %cst_120 = arith.constant 2.000000e+00 : f32
      %330 = arith.mulf %cst_120, %274 : f32
      %331 = arith.mulf %330, %274 : f32
      %332 = arith.divf %331, %273 : f32
      %333 = vector.broadcast %332 : f32 to vector<8x8xf32>
      %334 = arith.mulf %333, %314 : vector<8x8xf32>
      %335 = arith.cmpf oge, %334, %329 : vector<8x8xf32>
      %cst_121 = arith.constant 0.000000e+00 : f32
      %336 = vector.broadcast %cst_121 : f32 to vector<8x8xf32>
      %337 = arith.cmpf ogt, %329, %336 : vector<8x8xf32>
      %338 = arith.andi %335, %337 : vector<8x8xi1>
      %339 = arith.ori %318, %322 : vector<8x8xi1>
      %340 = arith.ori %339, %326 : vector<8x8xi1>
      %341 = arith.ori %340, %338 : vector<8x8xi1>
      %cst_122 = arith.constant 1.000000e+00 : f32
      %342 = vector.broadcast %cst_122 : f32 to vector<8x8xf32>
      %343 = arith.select %341, %285, %342 : vector<8x8xi1>, vector<8x8xf32>
      %344 = arith.mulf %283, %343 : vector<8x8xf32>
      %345 = arith.addf %276, %344 : vector<8x8xf32>
      %346 = arith.addf %275, %282 : vector<8x16xf32>
      %347 = tpu.concatenate %346, %345 in 1 : vector<8x16xf32>, vector<8x8xf32> -> vector<8x24xf32>
      %cst_123 = arith.constant dense<0.000000e+00> : vector<8x4xf32>
      %348 = tpu.matmul %347, %1, %cst_123 {dimension_numbers = #tpu.dot_dimension_numbers<[1], [0], [0], [1], [0, 0, 1, 1], [], []>, precision = #tpu.contract_precision<fp32>} : vector<8x24xf32>, vector<24x4xf32>, vector<8x4xf32> -> vector<8x4xf32>
      %349 = vector.broadcast %2 : vector<1x4xf32> to vector<8x4xf32>
      %350 = arith.addf %348, %349 : vector<8x4xf32>
      %cst_124 = arith.constant -5.000000e+00 : f32
      %cst_125 = arith.constant 5.000000e+00 : f32
      %351 = vector.broadcast %cst_124 : f32 to vector<8x16xf32>
      %352 = arith.maximumf %351, %346 : vector<8x16xf32>
      %353 = vector.broadcast %cst_125 : f32 to vector<8x16xf32>
      %354 = arith.minimumf %353, %352 : vector<8x16xf32>
      %cst_126 = arith.constant -5.000000e+00 : f32
      %cst_127 = arith.constant 5.000000e+00 : f32
      %355 = vector.broadcast %cst_126 : f32 to vector<8x4xf32>
      %356 = arith.maximumf %355, %350 : vector<8x4xf32>
      %357 = vector.broadcast %cst_127 : f32 to vector<8x4xf32>
      %358 = arith.minimumf %357, %356 : vector<8x4xf32>
      %cst_128 = arith.constant -3.000000e+00 : f32
      %cst_129 = arith.constant 3.000000e+00 : f32
      %359 = vector.broadcast %cst_128 : f32 to vector<8x8xf32>
      %360 = arith.maximumf %359, %345 : vector<8x8xf32>
      %361 = vector.broadcast %cst_129 : f32 to vector<8x8xf32>
      %362 = arith.minimumf %361, %360 : vector<8x8xf32>
      %363 = arith.subf %362, %264 : vector<8x8xf32>
      %364 = arith.divf %273, %274 : f32
      %365 = vector.broadcast %364 : f32 to vector<8x8xf32>
      %366 = arith.mulf %365, %265 : vector<8x8xf32>
      %367 = arith.mulf %366, %265 : vector<8x8xf32>
      %368 = arith.mulf %274, %274 : f32
      %369 = arith.divf %273, %368 : f32
      %370 = vector.broadcast %369 : f32 to vector<8x8xf32>
      %371 = arith.mulf %370, %363 : vector<8x8xf32>
      %372 = arith.mulf %371, %363 : vector<8x8xf32>
      %373 = arith.addf %367, %372 : vector<8x8xf32>
      %374 = math.sqrt %373 : vector<8x8xf32>
      %375 = arith.divf %273, %274 : f32
      %376 = vector.broadcast %375 : f32 to vector<8x8xf32>
      %377 = arith.mulf %376, %264 : vector<8x8xf32>
      %cst_130 = arith.constant 1.000000e+00 : f32
      %378 = arith.divf %cst_130, %274 : f32
      %379 = vector.broadcast %378 : f32 to vector<8x8xf32>
      %380 = arith.mulf %379, %362 : vector<8x8xf32>
      %381 = arith.addf %377, %380 : vector<8x8xf32>
      %382 = tpu.concatenate %354, %362 in 1 : vector<8x16xf32>, vector<8x8xf32> -> vector<8x24xf32>
      %c0_131 = arith.constant 0 : index
      %c0_132 = arith.constant 0 : index
      %383 = vector.load %arg8[%c0_131, %c0_132] : memref<8x24xf32, #tpu.memory_space<vmem>>, vector<8x24xf32>
      tpu.vector_store %arg8[%c0_131, %c0_132], %382 {strides = array<i32>} : memref<8x24xf32, #tpu.memory_space<vmem>>, vector<8x24xf32>,
      %c0_133 = arith.constant 0 : index
      %c0_134 = arith.constant 0 : index
      %384 = vector.load %arg9[%c0_133, %c0_134] : memref<8x4xf32, #tpu.memory_space<vmem>>, vector<8x4xf32>
      tpu.vector_store %arg9[%c0_133, %c0_134], %358 {strides = array<i32>} : memref<8x4xf32, #tpu.memory_space<vmem>>, vector<8x4xf32>,
      %c0_135 = arith.constant 0 : index
      %c0_136 = arith.constant 0 : index
      %385 = vector.load %arg10[%c0_135, %c0_136] : memref<8x8xf32, #tpu.memory_space<vmem>>, vector<8x8xf32>
      tpu.vector_store %arg10[%c0_135, %c0_136], %381 {strides = array<i32>} : memref<8x8xf32, #tpu.memory_space<vmem>>, vector<8x8xf32>,
      %c0_137 = arith.constant 0 : index
      %c0_138 = arith.constant 0 : index
      %386 = vector.load %arg11[%c0_137, %c0_138] : memref<8x8xf32, #tpu.memory_space<vmem>>, vector<8x8xf32>
      tpu.vector_store %arg11[%c0_137, %c0_138], %374 {strides = array<i32>} : memref<8x8xf32, #tpu.memory_space<vmem>>, vector<8x8xf32>,
      %c3_i32 = arith.constant 3 : i32
      %387 = arith.addi %8, %c3_i32 : i32
      %c0_139 = arith.constant 0 : index
      %c0_140 = arith.constant 0 : index
      %388 = vector.load %arg8[%c0_139, %c0_140] : memref<8x24xf32, #tpu.memory_space<vmem>>, vector<8x24xf32>
      %c0_141 = arith.constant 0 : index
      %c0_142 = arith.constant 0 : index
      %389 = vector.load %arg9[%c0_141, %c0_142] : memref<8x4xf32, #tpu.memory_space<vmem>>, vector<8x4xf32>
      %c0_143 = arith.constant 0 : index
      %c0_144 = arith.constant 0 : index
      %390 = vector.load %arg10[%c0_143, %c0_144] : memref<8x8xf32, #tpu.memory_space<vmem>>, vector<8x8xf32>
      %c0_145 = arith.constant 0 : index
      %c0_146 = arith.constant 0 : index
      %391 = vector.load %arg11[%c0_145, %c0_146] : memref<8x8xf32, #tpu.memory_space<vmem>>, vector<8x8xf32>
      %392 = tpu.concatenate %388, %389 in 1 : vector<8x24xf32>, vector<8x4xf32> -> vector<8x28xf32>
      %393 = arith.index_cast %387 : i32 to index
      %c0_147 = arith.constant 0 : index
      %c0_148 = arith.constant 0 : index
      %394 = vector.load %arg7[%393, %c0_147, %c0_148] : memref<16x8x28xf32, #tpu.memory_space<vmem>>, vector<1x8x28xf32>
      %395 = vector.shape_cast %394 : vector<1x8x28xf32> to vector<8x28xf32>
      %396 = vector.shape_cast %392 : vector<8x28xf32> to vector<1x8x28xf32>
      tpu.vector_store %arg7[%393, %c0_147, %c0_148], %396 {strides = array<i32>} : memref<16x8x28xf32, #tpu.memory_space<vmem>>, vector<1x8x28xf32>,
      %397 = arith.addi %6, %387 : i32
      %398 = arith.sitofp %397 : i32 to f32
      %cst_149 = arith.constant 1.000000e+00 : f32
      %399 = arith.addf %398, %cst_149 : f32
      %cst_150 = arith.constant 2.000000e+00 : f32
      %400 = arith.addf %398, %cst_150 : f32
      %401 = vector.extract_strided_slice %388 {offsets = [0, 0], sizes = [8, 16], strides = [1, 1]} : vector<8x24xf32> to vector<8x16xf32>
      %402 = vector.extract_strided_slice %388 {offsets = [0, 16], sizes = [8, 8], strides = [1, 1]} : vector<8x24xf32> to vector<8x8xf32>
      %cst_151 = arith.constant dense<0.000000e+00> : vector<8x24xf32>
      %403 = tpu.matmul %388, %0, %cst_151 {dimension_numbers = #tpu.dot_dimension_numbers<[1], [0], [0], [1], [0, 0, 1, 1], [], []>, precision = #tpu.contract_precision<fp32>} : vector<8x24xf32>, vector<24x24xf32>, vector<8x24xf32> -> vector<8x24xf32>
      %404 = arith.index_cast %387 : i32 to index
      %c0_152 = arith.constant 0 : index
      %c0_153 = arith.constant 0 : index
      %405 = vector.load %arg3[%404, %c0_152, %c0_153] : memref<16x8x24xf32, #tpu.memory_space<vmem>>, vector<1x8x24xf32>
      %406 = vector.shape_cast %405 : vector<1x8x24xf32> to vector<8x24xf32>
      %407 = arith.addf %403, %406 : vector<8x24xf32>
      %408 = vector.extract_strided_slice %407 {offsets = [0, 0], sizes = [8, 16], strides = [1, 1]} : vector<8x24xf32> to vector<8x16xf32>
      %409 = vector.extract_strided_slice %407 {offsets = [0, 16], sizes = [8, 8], strides = [1, 1]} : vector<8x24xf32> to vector<8x8xf32>
      %cst_154 = arith.constant 1.000000e+00 : f32
      %410 = vector.broadcast %cst_154 : f32 to vector<8x8xf32>
      %411 = arith.divf %410, %391 : vector<8x8xf32>
      %412 = arith.subf %402, %390 : vector<8x8xf32>
      %cst_155 = arith.constant 1.000000e+00 : f32
      %413 = vector.broadcast %cst_155 : f32 to vector<8x8xf32>
      %414 = arith.addf %413, %411 : vector<8x8xf32>
      %cst_156 = arith.constant 5.000000e-01 : f32
      %415 = vector.broadcast %cst_156 : f32 to vector<8x8xf32>
      %416 = arith.mulf %415, %409 : vector<8x8xf32>
      %417 = arith.mulf %416, %414 : vector<8x8xf32>
      %418 = arith.addf %412, %417 : vector<8x8xf32>
      %419 = arith.mulf %409, %418 : vector<8x8xf32>
      %cst_157 = arith.constant 1.000000e+00 : f32
      %420 = vector.broadcast %cst_157 : f32 to vector<8x8xf32>
      %421 = arith.subf %420, %411 : vector<8x8xf32>
      %422 = arith.mulf %419, %421 : vector<8x8xf32>
      %423 = arith.mulf %391, %391 : vector<8x8xf32>
      %424 = arith.divf %400, %399 : f32
      %425 = vector.broadcast %424 : f32 to vector<8x8xf32>
      %426 = arith.subf %423, %425 : vector<8x8xf32>
      %427 = vector.broadcast %400 : f32 to vector<8x8xf32>
      %428 = arith.mulf %427, %426 : vector<8x8xf32>
      %429 = arith.mulf %409, %414 : vector<8x8xf32>
      %430 = arith.addf %412, %429 : vector<8x8xf32>
      %cst_158 = arith.constant 5.000000e-01 : f32
      %431 = vector.broadcast %cst_158 : f32 to vector<8x8xf32>
      %432 = arith.mulf %431, %409 : vector<8x8xf32>
      %433 = arith.mulf %432, %409 : vector<8x8xf32>
      %434 = arith.mulf %411, %411 : vector<8x8xf32>
      %cst_159 = arith.constant 1.000000e+00 : f32
      %435 = vector.broadcast %cst_159 : f32 to vector<8x8xf32>
      %436 = arith.addf %435, %434 : vector<8x8xf32>
      %437 = arith.mulf %433, %436 : vector<8x8xf32>
      %438 = arith.addf %430, %437 : vector<8x8xf32>
      %439 = arith.mulf %412, %438 : vector<8x8xf32>
      %440 = arith.addf %428, %439 : vector<8x8xf32>
      %441 = arith.cmpf oge, %440, %422 : vector<8x8xf32>
      %cst_160 = arith.constant 0.000000e+00 : f32
      %442 = vector.broadcast %cst_160 : f32 to vector<8x8xf32>
      %443 = arith.cmpf oge, %422, %442 : vector<8x8xf32>
      %444 = arith.andi %441, %443 : vector<8x8xi1>
      %445 = arith.cmpf olt, %440, %422 : vector<8x8xf32>
      %cst_161 = arith.constant 0.000000e+00 : f32
      %446 = vector.broadcast %cst_161 : f32 to vector<8x8xf32>
      %447 = arith.cmpf olt, %422, %446 : vector<8x8xf32>
      %448 = arith.andi %445, %447 : vector<8x8xi1>
      %449 = arith.cmpf olt, %422, %440 : vector<8x8xf32>
      %cst_162 = arith.constant 0.000000e+00 : f32
      %450 = vector.broadcast %cst_162 : f32 to vector<8x8xf32>
      %451 = arith.cmpf olt, %440, %450 : vector<8x8xf32>
      %452 = arith.andi %449, %451 : vector<8x8xi1>
      %453 = arith.mulf %422, %422 : vector<8x8xf32>
      %454 = arith.mulf %440, %440 : vector<8x8xf32>
      %455 = arith.subf %453, %454 : vector<8x8xf32>
      %cst_163 = arith.constant 2.000000e+00 : f32
      %456 = arith.mulf %cst_163, %400 : f32
      %457 = arith.mulf %456, %400 : f32
      %458 = arith.divf %457, %399 : f32
      %459 = vector.broadcast %458 : f32 to vector<8x8xf32>
      %460 = arith.mulf %459, %440 : vector<8x8xf32>
      %461 = arith.cmpf oge, %460, %455 : vector<8x8xf32>
      %cst_164 = arith.constant 0.000000e+00 : f32
      %462 = vector.broadcast %cst_164 : f32 to vector<8x8xf32>
      %463 = arith.cmpf ogt, %455, %462 : vector<8x8xf32>
      %464 = arith.andi %461, %463 : vector<8x8xi1>
      %465 = arith.ori %444, %448 : vector<8x8xi1>
      %466 = arith.ori %465, %452 : vector<8x8xi1>
      %467 = arith.ori %466, %464 : vector<8x8xi1>
      %cst_165 = arith.constant 1.000000e+00 : f32
      %468 = vector.broadcast %cst_165 : f32 to vector<8x8xf32>
      %469 = arith.select %467, %411, %468 : vector<8x8xi1>, vector<8x8xf32>
      %470 = arith.mulf %409, %469 : vector<8x8xf32>
      %471 = arith.addf %402, %470 : vector<8x8xf32>
      %472 = arith.addf %401, %408 : vector<8x16xf32>
      %473 = tpu.concatenate %472, %471 in 1 : vector<8x16xf32>, vector<8x8xf32> -> vector<8x24xf32>
      %cst_166 = arith.constant dense<0.000000e+00> : vector<8x4xf32>
      %474 = tpu.matmul %473, %1, %cst_166 {dimension_numbers = #tpu.dot_dimension_numbers<[1], [0], [0], [1], [0, 0, 1, 1], [], []>, precision = #tpu.contract_precision<fp32>} : vector<8x24xf32>, vector<24x4xf32>, vector<8x4xf32> -> vector<8x4xf32>
      %475 = vector.broadcast %2 : vector<1x4xf32> to vector<8x4xf32>
      %476 = arith.addf %474, %475 : vector<8x4xf32>
      %cst_167 = arith.constant -5.000000e+00 : f32
      %cst_168 = arith.constant 5.000000e+00 : f32
      %477 = vector.broadcast %cst_167 : f32 to vector<8x16xf32>
      %478 = arith.maximumf %477, %472 : vector<8x16xf32>
      %479 = vector.broadcast %cst_168 : f32 to vector<8x16xf32>
      %480 = arith.minimumf %479, %478 : vector<8x16xf32>
      %cst_169 = arith.constant -5.000000e+00 : f32
      %cst_170 = arith.constant 5.000000e+00 : f32
      %481 = vector.broadcast %cst_169 : f32 to vector<8x4xf32>
      %482 = arith.maximumf %481, %476 : vector<8x4xf32>
      %483 = vector.broadcast %cst_170 : f32 to vector<8x4xf32>
      %484 = arith.minimumf %483, %482 : vector<8x4xf32>
      %cst_171 = arith.constant -3.000000e+00 : f32
      %cst_172 = arith.constant 3.000000e+00 : f32
      %485 = vector.broadcast %cst_171 : f32 to vector<8x8xf32>
      %486 = arith.maximumf %485, %471 : vector<8x8xf32>
      %487 = vector.broadcast %cst_172 : f32 to vector<8x8xf32>
      %488 = arith.minimumf %487, %486 : vector<8x8xf32>
      %489 = arith.subf %488, %390 : vector<8x8xf32>
      %490 = arith.divf %399, %400 : f32
      %491 = vector.broadcast %490 : f32 to vector<8x8xf32>
      %492 = arith.mulf %491, %391 : vector<8x8xf32>
      %493 = arith.mulf %492, %391 : vector<8x8xf32>
      %494 = arith.mulf %400, %400 : f32
      %495 = arith.divf %399, %494 : f32
      %496 = vector.broadcast %495 : f32 to vector<8x8xf32>
      %497 = arith.mulf %496, %489 : vector<8x8xf32>
      %498 = arith.mulf %497, %489 : vector<8x8xf32>
      %499 = arith.addf %493, %498 : vector<8x8xf32>
      %500 = math.sqrt %499 : vector<8x8xf32>
      %501 = arith.divf %399, %400 : f32
      %502 = vector.broadcast %501 : f32 to vector<8x8xf32>
      %503 = arith.mulf %502, %390 : vector<8x8xf32>
      %cst_173 = arith.constant 1.000000e+00 : f32
      %504 = arith.divf %cst_173, %400 : f32
      %505 = vector.broadcast %504 : f32 to vector<8x8xf32>
      %506 = arith.mulf %505, %488 : vector<8x8xf32>
      %507 = arith.addf %503, %506 : vector<8x8xf32>
      %508 = tpu.concatenate %480, %488 in 1 : vector<8x16xf32>, vector<8x8xf32> -> vector<8x24xf32>
      %c0_174 = arith.constant 0 : index
      %c0_175 = arith.constant 0 : index
      %509 = vector.load %arg8[%c0_174, %c0_175] : memref<8x24xf32, #tpu.memory_space<vmem>>, vector<8x24xf32>
      tpu.vector_store %arg8[%c0_174, %c0_175], %508 {strides = array<i32>} : memref<8x24xf32, #tpu.memory_space<vmem>>, vector<8x24xf32>,
      %c0_176 = arith.constant 0 : index
      %c0_177 = arith.constant 0 : index
      %510 = vector.load %arg9[%c0_176, %c0_177] : memref<8x4xf32, #tpu.memory_space<vmem>>, vector<8x4xf32>
      tpu.vector_store %arg9[%c0_176, %c0_177], %484 {strides = array<i32>} : memref<8x4xf32, #tpu.memory_space<vmem>>, vector<8x4xf32>,
      %c0_178 = arith.constant 0 : index
      %c0_179 = arith.constant 0 : index
      %511 = vector.load %arg10[%c0_178, %c0_179] : memref<8x8xf32, #tpu.memory_space<vmem>>, vector<8x8xf32>
      tpu.vector_store %arg10[%c0_178, %c0_179], %507 {strides = array<i32>} : memref<8x8xf32, #tpu.memory_space<vmem>>, vector<8x8xf32>,
      %c0_180 = arith.constant 0 : index
      %c0_181 = arith.constant 0 : index
      %512 = vector.load %arg11[%c0_180, %c0_181] : memref<8x8xf32, #tpu.memory_space<vmem>>, vector<8x8xf32>
      tpu.vector_store %arg11[%c0_180, %c0_181], %500 {strides = array<i32>} : memref<8x8xf32, #tpu.memory_space<vmem>>, vector<8x8xf32>,
      %c4_i32 = arith.constant 4 : i32
      %513 = arith.addi %8, %c4_i32 : i32
      %c0_182 = arith.constant 0 : index
      %c0_183 = arith.constant 0 : index
      %514 = vector.load %arg8[%c0_182, %c0_183] : memref<8x24xf32, #tpu.memory_space<vmem>>, vector<8x24xf32>
      %c0_184 = arith.constant 0 : index
      %c0_185 = arith.constant 0 : index
      %515 = vector.load %arg9[%c0_184, %c0_185] : memref<8x4xf32, #tpu.memory_space<vmem>>, vector<8x4xf32>
      %c0_186 = arith.constant 0 : index
      %c0_187 = arith.constant 0 : index
      %516 = vector.load %arg10[%c0_186, %c0_187] : memref<8x8xf32, #tpu.memory_space<vmem>>, vector<8x8xf32>
      %c0_188 = arith.constant 0 : index
      %c0_189 = arith.constant 0 : index
      %517 = vector.load %arg11[%c0_188, %c0_189] : memref<8x8xf32, #tpu.memory_space<vmem>>, vector<8x8xf32>
      %518 = tpu.concatenate %514, %515 in 1 : vector<8x24xf32>, vector<8x4xf32> -> vector<8x28xf32>
      %519 = arith.index_cast %513 : i32 to index
      %c0_190 = arith.constant 0 : index
      %c0_191 = arith.constant 0 : index
      %520 = vector.load %arg7[%519, %c0_190, %c0_191] : memref<16x8x28xf32, #tpu.memory_space<vmem>>, vector<1x8x28xf32>
      %521 = vector.shape_cast %520 : vector<1x8x28xf32> to vector<8x28xf32>
      %522 = vector.shape_cast %518 : vector<8x28xf32> to vector<1x8x28xf32>
      tpu.vector_store %arg7[%519, %c0_190, %c0_191], %522 {strides = array<i32>} : memref<16x8x28xf32, #tpu.memory_space<vmem>>, vector<1x8x28xf32>,
      %523 = arith.addi %6, %513 : i32
      %524 = arith.sitofp %523 : i32 to f32
      %cst_192 = arith.constant 1.000000e+00 : f32
      %525 = arith.addf %524, %cst_192 : f32
      %cst_193 = arith.constant 2.000000e+00 : f32
      %526 = arith.addf %524, %cst_193 : f32
      %527 = vector.extract_strided_slice %514 {offsets = [0, 0], sizes = [8, 16], strides = [1, 1]} : vector<8x24xf32> to vector<8x16xf32>
      %528 = vector.extract_strided_slice %514 {offsets = [0, 16], sizes = [8, 8], strides = [1, 1]} : vector<8x24xf32> to vector<8x8xf32>
      %cst_194 = arith.constant dense<0.000000e+00> : vector<8x24xf32>
      %529 = tpu.matmul %514, %0, %cst_194 {dimension_numbers = #tpu.dot_dimension_numbers<[1], [0], [0], [1], [0, 0, 1, 1], [], []>, precision = #tpu.contract_precision<fp32>} : vector<8x24xf32>, vector<24x24xf32>, vector<8x24xf32> -> vector<8x24xf32>
      %530 = arith.index_cast %513 : i32 to index
      %c0_195 = arith.constant 0 : index
      %c0_196 = arith.constant 0 : index
      %531 = vector.load %arg3[%530, %c0_195, %c0_196] : memref<16x8x24xf32, #tpu.memory_space<vmem>>, vector<1x8x24xf32>
      %532 = vector.shape_cast %531 : vector<1x8x24xf32> to vector<8x24xf32>
      %533 = arith.addf %529, %532 : vector<8x24xf32>
      %534 = vector.extract_strided_slice %533 {offsets = [0, 0], sizes = [8, 16], strides = [1, 1]} : vector<8x24xf32> to vector<8x16xf32>
      %535 = vector.extract_strided_slice %533 {offsets = [0, 16], sizes = [8, 8], strides = [1, 1]} : vector<8x24xf32> to vector<8x8xf32>
      %cst_197 = arith.constant 1.000000e+00 : f32
      %536 = vector.broadcast %cst_197 : f32 to vector<8x8xf32>
      %537 = arith.divf %536, %517 : vector<8x8xf32>
      %538 = arith.subf %528, %516 : vector<8x8xf32>
      %cst_198 = arith.constant 1.000000e+00 : f32
      %539 = vector.broadcast %cst_198 : f32 to vector<8x8xf32>
      %540 = arith.addf %539, %537 : vector<8x8xf32>
      %cst_199 = arith.constant 5.000000e-01 : f32
      %541 = vector.broadcast %cst_199 : f32 to vector<8x8xf32>
      %542 = arith.mulf %541, %535 : vector<8x8xf32>
      %543 = arith.mulf %542, %540 : vector<8x8xf32>
      %544 = arith.addf %538, %543 : vector<8x8xf32>
      %545 = arith.mulf %535, %544 : vector<8x8xf32>
      %cst_200 = arith.constant 1.000000e+00 : f32
      %546 = vector.broadcast %cst_200 : f32 to vector<8x8xf32>
      %547 = arith.subf %546, %537 : vector<8x8xf32>
      %548 = arith.mulf %545, %547 : vector<8x8xf32>
      %549 = arith.mulf %517, %517 : vector<8x8xf32>
      %550 = arith.divf %526, %525 : f32
      %551 = vector.broadcast %550 : f32 to vector<8x8xf32>
      %552 = arith.subf %549, %551 : vector<8x8xf32>
      %553 = vector.broadcast %526 : f32 to vector<8x8xf32>
      %554 = arith.mulf %553, %552 : vector<8x8xf32>
      %555 = arith.mulf %535, %540 : vector<8x8xf32>
      %556 = arith.addf %538, %555 : vector<8x8xf32>
      %cst_201 = arith.constant 5.000000e-01 : f32
      %557 = vector.broadcast %cst_201 : f32 to vector<8x8xf32>
      %558 = arith.mulf %557, %535 : vector<8x8xf32>
      %559 = arith.mulf %558, %535 : vector<8x8xf32>
      %560 = arith.mulf %537, %537 : vector<8x8xf32>
      %cst_202 = arith.constant 1.000000e+00 : f32
      %561 = vector.broadcast %cst_202 : f32 to vector<8x8xf32>
      %562 = arith.addf %561, %560 : vector<8x8xf32>
      %563 = arith.mulf %559, %562 : vector<8x8xf32>
      %564 = arith.addf %556, %563 : vector<8x8xf32>
      %565 = arith.mulf %538, %564 : vector<8x8xf32>
      %566 = arith.addf %554, %565 : vector<8x8xf32>
      %567 = arith.cmpf oge, %566, %548 : vector<8x8xf32>
      %cst_203 = arith.constant 0.000000e+00 : f32
      %568 = vector.broadcast %cst_203 : f32 to vector<8x8xf32>
      %569 = arith.cmpf oge, %548, %568 : vector<8x8xf32>
      %570 = arith.andi %567, %569 : vector<8x8xi1>
      %571 = arith.cmpf olt, %566, %548 : vector<8x8xf32>
      %cst_204 = arith.constant 0.000000e+00 : f32
      %572 = vector.broadcast %cst_204 : f32 to vector<8x8xf32>
      %573 = arith.cmpf olt, %548, %572 : vector<8x8xf32>
      %574 = arith.andi %571, %573 : vector<8x8xi1>
      %575 = arith.cmpf olt, %548, %566 : vector<8x8xf32>
      %cst_205 = arith.constant 0.000000e+00 : f32
      %576 = vector.broadcast %cst_205 : f32 to vector<8x8xf32>
      %577 = arith.cmpf olt, %566, %576 : vector<8x8xf32>
      %578 = arith.andi %575, %577 : vector<8x8xi1>
      %579 = arith.mulf %548, %548 : vector<8x8xf32>
      %580 = arith.mulf %566, %566 : vector<8x8xf32>
      %581 = arith.subf %579, %580 : vector<8x8xf32>
      %cst_206 = arith.constant 2.000000e+00 : f32
      %582 = arith.mulf %cst_206, %526 : f32
      %583 = arith.mulf %582, %526 : f32
      %584 = arith.divf %583, %525 : f32
      %585 = vector.broadcast %584 : f32 to vector<8x8xf32>
      %586 = arith.mulf %585, %566 : vector<8x8xf32>
      %587 = arith.cmpf oge, %586, %581 : vector<8x8xf32>
      %cst_207 = arith.constant 0.000000e+00 : f32
      %588 = vector.broadcast %cst_207 : f32 to vector<8x8xf32>
      %589 = arith.cmpf ogt, %581, %588 : vector<8x8xf32>
      %590 = arith.andi %587, %589 : vector<8x8xi1>
      %591 = arith.ori %570, %574 : vector<8x8xi1>
      %592 = arith.ori %591, %578 : vector<8x8xi1>
      %593 = arith.ori %592, %590 : vector<8x8xi1>
      %cst_208 = arith.constant 1.000000e+00 : f32
      %594 = vector.broadcast %cst_208 : f32 to vector<8x8xf32>
      %595 = arith.select %593, %537, %594 : vector<8x8xi1>, vector<8x8xf32>
      %596 = arith.mulf %535, %595 : vector<8x8xf32>
      %597 = arith.addf %528, %596 : vector<8x8xf32>
      %598 = arith.addf %527, %534 : vector<8x16xf32>
      %599 = tpu.concatenate %598, %597 in 1 : vector<8x16xf32>, vector<8x8xf32> -> vector<8x24xf32>
      %cst_209 = arith.constant dense<0.000000e+00> : vector<8x4xf32>
      %600 = tpu.matmul %599, %1, %cst_209 {dimension_numbers = #tpu.dot_dimension_numbers<[1], [0], [0], [1], [0, 0, 1, 1], [], []>, precision = #tpu.contract_precision<fp32>} : vector<8x24xf32>, vector<24x4xf32>, vector<8x4xf32> -> vector<8x4xf32>
      %601 = vector.broadcast %2 : vector<1x4xf32> to vector<8x4xf32>
      %602 = arith.addf %600, %601 : vector<8x4xf32>
      %cst_210 = arith.constant -5.000000e+00 : f32
      %cst_211 = arith.constant 5.000000e+00 : f32
      %603 = vector.broadcast %cst_210 : f32 to vector<8x16xf32>
      %604 = arith.maximumf %603, %598 : vector<8x16xf32>
      %605 = vector.broadcast %cst_211 : f32 to vector<8x16xf32>
      %606 = arith.minimumf %605, %604 : vector<8x16xf32>
      %cst_212 = arith.constant -5.000000e+00 : f32
      %cst_213 = arith.constant 5.000000e+00 : f32
      %607 = vector.broadcast %cst_212 : f32 to vector<8x4xf32>
      %608 = arith.maximumf %607, %602 : vector<8x4xf32>
      %609 = vector.broadcast %cst_213 : f32 to vector<8x4xf32>
      %610 = arith.minimumf %609, %608 : vector<8x4xf32>
      %cst_214 = arith.constant -3.000000e+00 : f32
      %cst_215 = arith.constant 3.000000e+00 : f32
      %611 = vector.broadcast %cst_214 : f32 to vector<8x8xf32>
      %612 = arith.maximumf %611, %597 : vector<8x8xf32>
      %613 = vector.broadcast %cst_215 : f32 to vector<8x8xf32>
      %614 = arith.minimumf %613, %612 : vector<8x8xf32>
      %615 = arith.subf %614, %516 : vector<8x8xf32>
      %616 = arith.divf %525, %526 : f32
      %617 = vector.broadcast %616 : f32 to vector<8x8xf32>
      %618 = arith.mulf %617, %517 : vector<8x8xf32>
      %619 = arith.mulf %618, %517 : vector<8x8xf32>
      %620 = arith.mulf %526, %526 : f32
      %621 = arith.divf %525, %620 : f32
      %622 = vector.broadcast %621 : f32 to vector<8x8xf32>
      %623 = arith.mulf %622, %615 : vector<8x8xf32>
      %624 = arith.mulf %623, %615 : vector<8x8xf32>
      %625 = arith.addf %619, %624 : vector<8x8xf32>
      %626 = math.sqrt %625 : vector<8x8xf32>
      %627 = arith.divf %525, %526 : f32
      %628 = vector.broadcast %627 : f32 to vector<8x8xf32>
      %629 = arith.mulf %628, %516 : vector<8x8xf32>
      %cst_216 = arith.constant 1.000000e+00 : f32
      %630 = arith.divf %cst_216, %526 : f32
      %631 = vector.broadcast %630 : f32 to vector<8x8xf32>
      %632 = arith.mulf %631, %614 : vector<8x8xf32>
      %633 = arith.addf %629, %632 : vector<8x8xf32>
      %634 = tpu.concatenate %606, %614 in 1 : vector<8x16xf32>, vector<8x8xf32> -> vector<8x24xf32>
      %c0_217 = arith.constant 0 : index
      %c0_218 = arith.constant 0 : index
      %635 = vector.load %arg8[%c0_217, %c0_218] : memref<8x24xf32, #tpu.memory_space<vmem>>, vector<8x24xf32>
      tpu.vector_store %arg8[%c0_217, %c0_218], %634 {strides = array<i32>} : memref<8x24xf32, #tpu.memory_space<vmem>>, vector<8x24xf32>,
      %c0_219 = arith.constant 0 : index
      %c0_220 = arith.constant 0 : index
      %636 = vector.load %arg9[%c0_219, %c0_220] : memref<8x4xf32, #tpu.memory_space<vmem>>, vector<8x4xf32>
      tpu.vector_store %arg9[%c0_219, %c0_220], %610 {strides = array<i32>} : memref<8x4xf32, #tpu.memory_space<vmem>>, vector<8x4xf32>,
      %c0_221 = arith.constant 0 : index
      %c0_222 = arith.constant 0 : index
      %637 = vector.load %arg10[%c0_221, %c0_222] : memref<8x8xf32, #tpu.memory_space<vmem>>, vector<8x8xf32>
      tpu.vector_store %arg10[%c0_221, %c0_222], %633 {strides = array<i32>} : memref<8x8xf32, #tpu.memory_space<vmem>>, vector<8x8xf32>,
      %c0_223 = arith.constant 0 : index
      %c0_224 = arith.constant 0 : index
      %638 = vector.load %arg11[%c0_223, %c0_224] : memref<8x8xf32, #tpu.memory_space<vmem>>, vector<8x8xf32>
      tpu.vector_store %arg11[%c0_223, %c0_224], %626 {strides = array<i32>} : memref<8x8xf32, #tpu.memory_space<vmem>>, vector<8x8xf32>,
      %c5_i32 = arith.constant 5 : i32
      %639 = arith.addi %8, %c5_i32 : i32
      %c0_225 = arith.constant 0 : index
      %c0_226 = arith.constant 0 : index
      %640 = vector.load %arg8[%c0_225, %c0_226] : memref<8x24xf32, #tpu.memory_space<vmem>>, vector<8x24xf32>
      %c0_227 = arith.constant 0 : index
      %c0_228 = arith.constant 0 : index
      %641 = vector.load %arg9[%c0_227, %c0_228] : memref<8x4xf32, #tpu.memory_space<vmem>>, vector<8x4xf32>
      %c0_229 = arith.constant 0 : index
      %c0_230 = arith.constant 0 : index
      %642 = vector.load %arg10[%c0_229, %c0_230] : memref<8x8xf32, #tpu.memory_space<vmem>>, vector<8x8xf32>
      %c0_231 = arith.constant 0 : index
      %c0_232 = arith.constant 0 : index
      %643 = vector.load %arg11[%c0_231, %c0_232] : memref<8x8xf32, #tpu.memory_space<vmem>>, vector<8x8xf32>
      %644 = tpu.concatenate %640, %641 in 1 : vector<8x24xf32>, vector<8x4xf32> -> vector<8x28xf32>
      %645 = arith.index_cast %639 : i32 to index
      %c0_233 = arith.constant 0 : index
      %c0_234 = arith.constant 0 : index
      %646 = vector.load %arg7[%645, %c0_233, %c0_234] : memref<16x8x28xf32, #tpu.memory_space<vmem>>, vector<1x8x28xf32>
      %647 = vector.shape_cast %646 : vector<1x8x28xf32> to vector<8x28xf32>
      %648 = vector.shape_cast %644 : vector<8x28xf32> to vector<1x8x28xf32>
      tpu.vector_store %arg7[%645, %c0_233, %c0_234], %648 {strides = array<i32>} : memref<16x8x28xf32, #tpu.memory_space<vmem>>, vector<1x8x28xf32>,
      %649 = arith.addi %6, %639 : i32
      %650 = arith.sitofp %649 : i32 to f32
      %cst_235 = arith.constant 1.000000e+00 : f32
      %651 = arith.addf %650, %cst_235 : f32
      %cst_236 = arith.constant 2.000000e+00 : f32
      %652 = arith.addf %650, %cst_236 : f32
      %653 = vector.extract_strided_slice %640 {offsets = [0, 0], sizes = [8, 16], strides = [1, 1]} : vector<8x24xf32> to vector<8x16xf32>
      %654 = vector.extract_strided_slice %640 {offsets = [0, 16], sizes = [8, 8], strides = [1, 1]} : vector<8x24xf32> to vector<8x8xf32>
      %cst_237 = arith.constant dense<0.000000e+00> : vector<8x24xf32>
      %655 = tpu.matmul %640, %0, %cst_237 {dimension_numbers = #tpu.dot_dimension_numbers<[1], [0], [0], [1], [0, 0, 1, 1], [], []>, precision = #tpu.contract_precision<fp32>} : vector<8x24xf32>, vector<24x24xf32>, vector<8x24xf32> -> vector<8x24xf32>
      %656 = arith.index_cast %639 : i32 to index
      %c0_238 = arith.constant 0 : index
      %c0_239 = arith.constant 0 : index
      %657 = vector.load %arg3[%656, %c0_238, %c0_239] : memref<16x8x24xf32, #tpu.memory_space<vmem>>, vector<1x8x24xf32>
      %658 = vector.shape_cast %657 : vector<1x8x24xf32> to vector<8x24xf32>
      %659 = arith.addf %655, %658 : vector<8x24xf32>
      %660 = vector.extract_strided_slice %659 {offsets = [0, 0], sizes = [8, 16], strides = [1, 1]} : vector<8x24xf32> to vector<8x16xf32>
      %661 = vector.extract_strided_slice %659 {offsets = [0, 16], sizes = [8, 8], strides = [1, 1]} : vector<8x24xf32> to vector<8x8xf32>
      %cst_240 = arith.constant 1.000000e+00 : f32
      %662 = vector.broadcast %cst_240 : f32 to vector<8x8xf32>
      %663 = arith.divf %662, %643 : vector<8x8xf32>
      %664 = arith.subf %654, %642 : vector<8x8xf32>
      %cst_241 = arith.constant 1.000000e+00 : f32
      %665 = vector.broadcast %cst_241 : f32 to vector<8x8xf32>
      %666 = arith.addf %665, %663 : vector<8x8xf32>
      %cst_242 = arith.constant 5.000000e-01 : f32
      %667 = vector.broadcast %cst_242 : f32 to vector<8x8xf32>
      %668 = arith.mulf %667, %661 : vector<8x8xf32>
      %669 = arith.mulf %668, %666 : vector<8x8xf32>
      %670 = arith.addf %664, %669 : vector<8x8xf32>
      %671 = arith.mulf %661, %670 : vector<8x8xf32>
      %cst_243 = arith.constant 1.000000e+00 : f32
      %672 = vector.broadcast %cst_243 : f32 to vector<8x8xf32>
      %673 = arith.subf %672, %663 : vector<8x8xf32>
      %674 = arith.mulf %671, %673 : vector<8x8xf32>
      %675 = arith.mulf %643, %643 : vector<8x8xf32>
      %676 = arith.divf %652, %651 : f32
      %677 = vector.broadcast %676 : f32 to vector<8x8xf32>
      %678 = arith.subf %675, %677 : vector<8x8xf32>
      %679 = vector.broadcast %652 : f32 to vector<8x8xf32>
      %680 = arith.mulf %679, %678 : vector<8x8xf32>
      %681 = arith.mulf %661, %666 : vector<8x8xf32>
      %682 = arith.addf %664, %681 : vector<8x8xf32>
      %cst_244 = arith.constant 5.000000e-01 : f32
      %683 = vector.broadcast %cst_244 : f32 to vector<8x8xf32>
      %684 = arith.mulf %683, %661 : vector<8x8xf32>
      %685 = arith.mulf %684, %661 : vector<8x8xf32>
      %686 = arith.mulf %663, %663 : vector<8x8xf32>
      %cst_245 = arith.constant 1.000000e+00 : f32
      %687 = vector.broadcast %cst_245 : f32 to vector<8x8xf32>
      %688 = arith.addf %687, %686 : vector<8x8xf32>
      %689 = arith.mulf %685, %688 : vector<8x8xf32>
      %690 = arith.addf %682, %689 : vector<8x8xf32>
      %691 = arith.mulf %664, %690 : vector<8x8xf32>
      %692 = arith.addf %680, %691 : vector<8x8xf32>
      %693 = arith.cmpf oge, %692, %674 : vector<8x8xf32>
      %cst_246 = arith.constant 0.000000e+00 : f32
      %694 = vector.broadcast %cst_246 : f32 to vector<8x8xf32>
      %695 = arith.cmpf oge, %674, %694 : vector<8x8xf32>
      %696 = arith.andi %693, %695 : vector<8x8xi1>
      %697 = arith.cmpf olt, %692, %674 : vector<8x8xf32>
      %cst_247 = arith.constant 0.000000e+00 : f32
      %698 = vector.broadcast %cst_247 : f32 to vector<8x8xf32>
      %699 = arith.cmpf olt, %674, %698 : vector<8x8xf32>
      %700 = arith.andi %697, %699 : vector<8x8xi1>
      %701 = arith.cmpf olt, %674, %692 : vector<8x8xf32>
      %cst_248 = arith.constant 0.000000e+00 : f32
      %702 = vector.broadcast %cst_248 : f32 to vector<8x8xf32>
      %703 = arith.cmpf olt, %692, %702 : vector<8x8xf32>
      %704 = arith.andi %701, %703 : vector<8x8xi1>
      %705 = arith.mulf %674, %674 : vector<8x8xf32>
      %706 = arith.mulf %692, %692 : vector<8x8xf32>
      %707 = arith.subf %705, %706 : vector<8x8xf32>
      %cst_249 = arith.constant 2.000000e+00 : f32
      %708 = arith.mulf %cst_249, %652 : f32
      %709 = arith.mulf %708, %652 : f32
      %710 = arith.divf %709, %651 : f32
      %711 = vector.broadcast %710 : f32 to vector<8x8xf32>
      %712 = arith.mulf %711, %692 : vector<8x8xf32>
      %713 = arith.cmpf oge, %712, %707 : vector<8x8xf32>
      %cst_250 = arith.constant 0.000000e+00 : f32
      %714 = vector.broadcast %cst_250 : f32 to vector<8x8xf32>
      %715 = arith.cmpf ogt, %707, %714 : vector<8x8xf32>
      %716 = arith.andi %713, %715 : vector<8x8xi1>
      %717 = arith.ori %696, %700 : vector<8x8xi1>
      %718 = arith.ori %717, %704 : vector<8x8xi1>
      %719 = arith.ori %718, %716 : vector<8x8xi1>
      %cst_251 = arith.constant 1.000000e+00 : f32
      %720 = vector.broadcast %cst_251 : f32 to vector<8x8xf32>
      %721 = arith.select %719, %663, %720 : vector<8x8xi1>, vector<8x8xf32>
      %722 = arith.mulf %661, %721 : vector<8x8xf32>
      %723 = arith.addf %654, %722 : vector<8x8xf32>
      %724 = arith.addf %653, %660 : vector<8x16xf32>
      %725 = tpu.concatenate %724, %723 in 1 : vector<8x16xf32>, vector<8x8xf32> -> vector<8x24xf32>
      %cst_252 = arith.constant dense<0.000000e+00> : vector<8x4xf32>
      %726 = tpu.matmul %725, %1, %cst_252 {dimension_numbers = #tpu.dot_dimension_numbers<[1], [0], [0], [1], [0, 0, 1, 1], [], []>, precision = #tpu.contract_precision<fp32>} : vector<8x24xf32>, vector<24x4xf32>, vector<8x4xf32> -> vector<8x4xf32>
      %727 = vector.broadcast %2 : vector<1x4xf32> to vector<8x4xf32>
      %728 = arith.addf %726, %727 : vector<8x4xf32>
      %cst_253 = arith.constant -5.000000e+00 : f32
      %cst_254 = arith.constant 5.000000e+00 : f32
      %729 = vector.broadcast %cst_253 : f32 to vector<8x16xf32>
      %730 = arith.maximumf %729, %724 : vector<8x16xf32>
      %731 = vector.broadcast %cst_254 : f32 to vector<8x16xf32>
      %732 = arith.minimumf %731, %730 : vector<8x16xf32>
      %cst_255 = arith.constant -5.000000e+00 : f32
      %cst_256 = arith.constant 5.000000e+00 : f32
      %733 = vector.broadcast %cst_255 : f32 to vector<8x4xf32>
      %734 = arith.maximumf %733, %728 : vector<8x4xf32>
      %735 = vector.broadcast %cst_256 : f32 to vector<8x4xf32>
      %736 = arith.minimumf %735, %734 : vector<8x4xf32>
      %cst_257 = arith.constant -3.000000e+00 : f32
      %cst_258 = arith.constant 3.000000e+00 : f32
      %737 = vector.broadcast %cst_257 : f32 to vector<8x8xf32>
      %738 = arith.maximumf %737, %723 : vector<8x8xf32>
      %739 = vector.broadcast %cst_258 : f32 to vector<8x8xf32>
      %740 = arith.minimumf %739, %738 : vector<8x8xf32>
      %741 = arith.subf %740, %642 : vector<8x8xf32>
      %742 = arith.divf %651, %652 : f32
      %743 = vector.broadcast %742 : f32 to vector<8x8xf32>
      %744 = arith.mulf %743, %643 : vector<8x8xf32>
      %745 = arith.mulf %744, %643 : vector<8x8xf32>
      %746 = arith.mulf %652, %652 : f32
      %747 = arith.divf %651, %746 : f32
      %748 = vector.broadcast %747 : f32 to vector<8x8xf32>
      %749 = arith.mulf %748, %741 : vector<8x8xf32>
      %750 = arith.mulf %749, %741 : vector<8x8xf32>
      %751 = arith.addf %745, %750 : vector<8x8xf32>
      %752 = math.sqrt %751 : vector<8x8xf32>
      %753 = arith.divf %651, %652 : f32
      %754 = vector.broadcast %753 : f32 to vector<8x8xf32>
      %755 = arith.mulf %754, %642 : vector<8x8xf32>
      %cst_259 = arith.constant 1.000000e+00 : f32
      %756 = arith.divf %cst_259, %652 : f32
      %757 = vector.broadcast %756 : f32 to vector<8x8xf32>
      %758 = arith.mulf %757, %740 : vector<8x8xf32>
      %759 = arith.addf %755, %758 : vector<8x8xf32>
      %760 = tpu.concatenate %732, %740 in 1 : vector<8x16xf32>, vector<8x8xf32> -> vector<8x24xf32>
      %c0_260 = arith.constant 0 : index
      %c0_261 = arith.constant 0 : index
      %761 = vector.load %arg8[%c0_260, %c0_261] : memref<8x24xf32, #tpu.memory_space<vmem>>, vector<8x24xf32>
      tpu.vector_store %arg8[%c0_260, %c0_261], %760 {strides = array<i32>} : memref<8x24xf32, #tpu.memory_space<vmem>>, vector<8x24xf32>,
      %c0_262 = arith.constant 0 : index
      %c0_263 = arith.constant 0 : index
      %762 = vector.load %arg9[%c0_262, %c0_263] : memref<8x4xf32, #tpu.memory_space<vmem>>, vector<8x4xf32>
      tpu.vector_store %arg9[%c0_262, %c0_263], %736 {strides = array<i32>} : memref<8x4xf32, #tpu.memory_space<vmem>>, vector<8x4xf32>,
      %c0_264 = arith.constant 0 : index
      %c0_265 = arith.constant 0 : index
      %763 = vector.load %arg10[%c0_264, %c0_265] : memref<8x8xf32, #tpu.memory_space<vmem>>, vector<8x8xf32>
      tpu.vector_store %arg10[%c0_264, %c0_265], %759 {strides = array<i32>} : memref<8x8xf32, #tpu.memory_space<vmem>>, vector<8x8xf32>,
      %c0_266 = arith.constant 0 : index
      %c0_267 = arith.constant 0 : index
      %764 = vector.load %arg11[%c0_266, %c0_267] : memref<8x8xf32, #tpu.memory_space<vmem>>, vector<8x8xf32>
      tpu.vector_store %arg11[%c0_266, %c0_267], %752 {strides = array<i32>} : memref<8x8xf32, #tpu.memory_space<vmem>>, vector<8x8xf32>,
      %c6_i32 = arith.constant 6 : i32
      %765 = arith.addi %8, %c6_i32 : i32
      %c0_268 = arith.constant 0 : index
      %c0_269 = arith.constant 0 : index
      %766 = vector.load %arg8[%c0_268, %c0_269] : memref<8x24xf32, #tpu.memory_space<vmem>>, vector<8x24xf32>
      %c0_270 = arith.constant 0 : index
      %c0_271 = arith.constant 0 : index
      %767 = vector.load %arg9[%c0_270, %c0_271] : memref<8x4xf32, #tpu.memory_space<vmem>>, vector<8x4xf32>
      %c0_272 = arith.constant 0 : index
      %c0_273 = arith.constant 0 : index
      %768 = vector.load %arg10[%c0_272, %c0_273] : memref<8x8xf32, #tpu.memory_space<vmem>>, vector<8x8xf32>
      %c0_274 = arith.constant 0 : index
      %c0_275 = arith.constant 0 : index
      %769 = vector.load %arg11[%c0_274, %c0_275] : memref<8x8xf32, #tpu.memory_space<vmem>>, vector<8x8xf32>
      %770 = tpu.concatenate %766, %767 in 1 : vector<8x24xf32>, vector<8x4xf32> -> vector<8x28xf32>
      %771 = arith.index_cast %765 : i32 to index
      %c0_276 = arith.constant 0 : index
      %c0_277 = arith.constant 0 : index
      %772 = vector.load %arg7[%771, %c0_276, %c0_277] : memref<16x8x28xf32, #tpu.memory_space<vmem>>, vector<1x8x28xf32>
      %773 = vector.shape_cast %772 : vector<1x8x28xf32> to vector<8x28xf32>
      %774 = vector.shape_cast %770 : vector<8x28xf32> to vector<1x8x28xf32>
      tpu.vector_store %arg7[%771, %c0_276, %c0_277], %774 {strides = array<i32>} : memref<16x8x28xf32, #tpu.memory_space<vmem>>, vector<1x8x28xf32>,
      %775 = arith.addi %6, %765 : i32
      %776 = arith.sitofp %775 : i32 to f32
      %cst_278 = arith.constant 1.000000e+00 : f32
      %777 = arith.addf %776, %cst_278 : f32
      %cst_279 = arith.constant 2.000000e+00 : f32
      %778 = arith.addf %776, %cst_279 : f32
      %779 = vector.extract_strided_slice %766 {offsets = [0, 0], sizes = [8, 16], strides = [1, 1]} : vector<8x24xf32> to vector<8x16xf32>
      %780 = vector.extract_strided_slice %766 {offsets = [0, 16], sizes = [8, 8], strides = [1, 1]} : vector<8x24xf32> to vector<8x8xf32>
      %cst_280 = arith.constant dense<0.000000e+00> : vector<8x24xf32>
      %781 = tpu.matmul %766, %0, %cst_280 {dimension_numbers = #tpu.dot_dimension_numbers<[1], [0], [0], [1], [0, 0, 1, 1], [], []>, precision = #tpu.contract_precision<fp32>} : vector<8x24xf32>, vector<24x24xf32>, vector<8x24xf32> -> vector<8x24xf32>
      %782 = arith.index_cast %765 : i32 to index
      %c0_281 = arith.constant 0 : index
      %c0_282 = arith.constant 0 : index
      %783 = vector.load %arg3[%782, %c0_281, %c0_282] : memref<16x8x24xf32, #tpu.memory_space<vmem>>, vector<1x8x24xf32>
      %784 = vector.shape_cast %783 : vector<1x8x24xf32> to vector<8x24xf32>
      %785 = arith.addf %781, %784 : vector<8x24xf32>
      %786 = vector.extract_strided_slice %785 {offsets = [0, 0], sizes = [8, 16], strides = [1, 1]} : vector<8x24xf32> to vector<8x16xf32>
      %787 = vector.extract_strided_slice %785 {offsets = [0, 16], sizes = [8, 8], strides = [1, 1]} : vector<8x24xf32> to vector<8x8xf32>
      %cst_283 = arith.constant 1.000000e+00 : f32
      %788 = vector.broadcast %cst_283 : f32 to vector<8x8xf32>
      %789 = arith.divf %788, %769 : vector<8x8xf32>
      %790 = arith.subf %780, %768 : vector<8x8xf32>
      %cst_284 = arith.constant 1.000000e+00 : f32
      %791 = vector.broadcast %cst_284 : f32 to vector<8x8xf32>
      %792 = arith.addf %791, %789 : vector<8x8xf32>
      %cst_285 = arith.constant 5.000000e-01 : f32
      %793 = vector.broadcast %cst_285 : f32 to vector<8x8xf32>
      %794 = arith.mulf %793, %787 : vector<8x8xf32>
      %795 = arith.mulf %794, %792 : vector<8x8xf32>
      %796 = arith.addf %790, %795 : vector<8x8xf32>
      %797 = arith.mulf %787, %796 : vector<8x8xf32>
      %cst_286 = arith.constant 1.000000e+00 : f32
      %798 = vector.broadcast %cst_286 : f32 to vector<8x8xf32>
      %799 = arith.subf %798, %789 : vector<8x8xf32>
      %800 = arith.mulf %797, %799 : vector<8x8xf32>
      %801 = arith.mulf %769, %769 : vector<8x8xf32>
      %802 = arith.divf %778, %777 : f32
      %803 = vector.broadcast %802 : f32 to vector<8x8xf32>
      %804 = arith.subf %801, %803 : vector<8x8xf32>
      %805 = vector.broadcast %778 : f32 to vector<8x8xf32>
      %806 = arith.mulf %805, %804 : vector<8x8xf32>
      %807 = arith.mulf %787, %792 : vector<8x8xf32>
      %808 = arith.addf %790, %807 : vector<8x8xf32>
      %cst_287 = arith.constant 5.000000e-01 : f32
      %809 = vector.broadcast %cst_287 : f32 to vector<8x8xf32>
      %810 = arith.mulf %809, %787 : vector<8x8xf32>
      %811 = arith.mulf %810, %787 : vector<8x8xf32>
      %812 = arith.mulf %789, %789 : vector<8x8xf32>
      %cst_288 = arith.constant 1.000000e+00 : f32
      %813 = vector.broadcast %cst_288 : f32 to vector<8x8xf32>
      %814 = arith.addf %813, %812 : vector<8x8xf32>
      %815 = arith.mulf %811, %814 : vector<8x8xf32>
      %816 = arith.addf %808, %815 : vector<8x8xf32>
      %817 = arith.mulf %790, %816 : vector<8x8xf32>
      %818 = arith.addf %806, %817 : vector<8x8xf32>
      %819 = arith.cmpf oge, %818, %800 : vector<8x8xf32>
      %cst_289 = arith.constant 0.000000e+00 : f32
      %820 = vector.broadcast %cst_289 : f32 to vector<8x8xf32>
      %821 = arith.cmpf oge, %800, %820 : vector<8x8xf32>
      %822 = arith.andi %819, %821 : vector<8x8xi1>
      %823 = arith.cmpf olt, %818, %800 : vector<8x8xf32>
      %cst_290 = arith.constant 0.000000e+00 : f32
      %824 = vector.broadcast %cst_290 : f32 to vector<8x8xf32>
      %825 = arith.cmpf olt, %800, %824 : vector<8x8xf32>
      %826 = arith.andi %823, %825 : vector<8x8xi1>
      %827 = arith.cmpf olt, %800, %818 : vector<8x8xf32>
      %cst_291 = arith.constant 0.000000e+00 : f32
      %828 = vector.broadcast %cst_291 : f32 to vector<8x8xf32>
      %829 = arith.cmpf olt, %818, %828 : vector<8x8xf32>
      %830 = arith.andi %827, %829 : vector<8x8xi1>
      %831 = arith.mulf %800, %800 : vector<8x8xf32>
      %832 = arith.mulf %818, %818 : vector<8x8xf32>
      %833 = arith.subf %831, %832 : vector<8x8xf32>
      %cst_292 = arith.constant 2.000000e+00 : f32
      %834 = arith.mulf %cst_292, %778 : f32
      %835 = arith.mulf %834, %778 : f32
      %836 = arith.divf %835, %777 : f32
      %837 = vector.broadcast %836 : f32 to vector<8x8xf32>
      %838 = arith.mulf %837, %818 : vector<8x8xf32>
      %839 = arith.cmpf oge, %838, %833 : vector<8x8xf32>
      %cst_293 = arith.constant 0.000000e+00 : f32
      %840 = vector.broadcast %cst_293 : f32 to vector<8x8xf32>
      %841 = arith.cmpf ogt, %833, %840 : vector<8x8xf32>
      %842 = arith.andi %839, %841 : vector<8x8xi1>
      %843 = arith.ori %822, %826 : vector<8x8xi1>
      %844 = arith.ori %843, %830 : vector<8x8xi1>
      %845 = arith.ori %844, %842 : vector<8x8xi1>
      %cst_294 = arith.constant 1.000000e+00 : f32
      %846 = vector.broadcast %cst_294 : f32 to vector<8x8xf32>
      %847 = arith.select %845, %789, %846 : vector<8x8xi1>, vector<8x8xf32>
      %848 = arith.mulf %787, %847 : vector<8x8xf32>
      %849 = arith.addf %780, %848 : vector<8x8xf32>
      %850 = arith.addf %779, %786 : vector<8x16xf32>
      %851 = tpu.concatenate %850, %849 in 1 : vector<8x16xf32>, vector<8x8xf32> -> vector<8x24xf32>
      %cst_295 = arith.constant dense<0.000000e+00> : vector<8x4xf32>
      %852 = tpu.matmul %851, %1, %cst_295 {dimension_numbers = #tpu.dot_dimension_numbers<[1], [0], [0], [1], [0, 0, 1, 1], [], []>, precision = #tpu.contract_precision<fp32>} : vector<8x24xf32>, vector<24x4xf32>, vector<8x4xf32> -> vector<8x4xf32>
      %853 = vector.broadcast %2 : vector<1x4xf32> to vector<8x4xf32>
      %854 = arith.addf %852, %853 : vector<8x4xf32>
      %cst_296 = arith.constant -5.000000e+00 : f32
      %cst_297 = arith.constant 5.000000e+00 : f32
      %855 = vector.broadcast %cst_296 : f32 to vector<8x16xf32>
      %856 = arith.maximumf %855, %850 : vector<8x16xf32>
      %857 = vector.broadcast %cst_297 : f32 to vector<8x16xf32>
      %858 = arith.minimumf %857, %856 : vector<8x16xf32>
      %cst_298 = arith.constant -5.000000e+00 : f32
      %cst_299 = arith.constant 5.000000e+00 : f32
      %859 = vector.broadcast %cst_298 : f32 to vector<8x4xf32>
      %860 = arith.maximumf %859, %854 : vector<8x4xf32>
      %861 = vector.broadcast %cst_299 : f32 to vector<8x4xf32>
      %862 = arith.minimumf %861, %860 : vector<8x4xf32>
      %cst_300 = arith.constant -3.000000e+00 : f32
      %cst_301 = arith.constant 3.000000e+00 : f32
      %863 = vector.broadcast %cst_300 : f32 to vector<8x8xf32>
      %864 = arith.maximumf %863, %849 : vector<8x8xf32>
      %865 = vector.broadcast %cst_301 : f32 to vector<8x8xf32>
      %866 = arith.minimumf %865, %864 : vector<8x8xf32>
      %867 = arith.subf %866, %768 : vector<8x8xf32>
      %868 = arith.divf %777, %778 : f32
      %869 = vector.broadcast %868 : f32 to vector<8x8xf32>
      %870 = arith.mulf %869, %769 : vector<8x8xf32>
      %871 = arith.mulf %870, %769 : vector<8x8xf32>
      %872 = arith.mulf %778, %778 : f32
      %873 = arith.divf %777, %872 : f32
      %874 = vector.broadcast %873 : f32 to vector<8x8xf32>
      %875 = arith.mulf %874, %867 : vector<8x8xf32>
      %876 = arith.mulf %875, %867 : vector<8x8xf32>
      %877 = arith.addf %871, %876 : vector<8x8xf32>
      %878 = math.sqrt %877 : vector<8x8xf32>
      %879 = arith.divf %777, %778 : f32
      %880 = vector.broadcast %879 : f32 to vector<8x8xf32>
      %881 = arith.mulf %880, %768 : vector<8x8xf32>
      %cst_302 = arith.constant 1.000000e+00 : f32
      %882 = arith.divf %cst_302, %778 : f32
      %883 = vector.broadcast %882 : f32 to vector<8x8xf32>
      %884 = arith.mulf %883, %866 : vector<8x8xf32>
      %885 = arith.addf %881, %884 : vector<8x8xf32>
      %886 = tpu.concatenate %858, %866 in 1 : vector<8x16xf32>, vector<8x8xf32> -> vector<8x24xf32>
      %c0_303 = arith.constant 0 : index
      %c0_304 = arith.constant 0 : index
      %887 = vector.load %arg8[%c0_303, %c0_304] : memref<8x24xf32, #tpu.memory_space<vmem>>, vector<8x24xf32>
      tpu.vector_store %arg8[%c0_303, %c0_304], %886 {strides = array<i32>} : memref<8x24xf32, #tpu.memory_space<vmem>>, vector<8x24xf32>,
      %c0_305 = arith.constant 0 : index
      %c0_306 = arith.constant 0 : index
      %888 = vector.load %arg9[%c0_305, %c0_306] : memref<8x4xf32, #tpu.memory_space<vmem>>, vector<8x4xf32>
      tpu.vector_store %arg9[%c0_305, %c0_306], %862 {strides = array<i32>} : memref<8x4xf32, #tpu.memory_space<vmem>>, vector<8x4xf32>,
      %c0_307 = arith.constant 0 : index
      %c0_308 = arith.constant 0 : index
      %889 = vector.load %arg10[%c0_307, %c0_308] : memref<8x8xf32, #tpu.memory_space<vmem>>, vector<8x8xf32>
      tpu.vector_store %arg10[%c0_307, %c0_308], %885 {strides = array<i32>} : memref<8x8xf32, #tpu.memory_space<vmem>>, vector<8x8xf32>,
      %c0_309 = arith.constant 0 : index
      %c0_310 = arith.constant 0 : index
      %890 = vector.load %arg11[%c0_309, %c0_310] : memref<8x8xf32, #tpu.memory_space<vmem>>, vector<8x8xf32>
      tpu.vector_store %arg11[%c0_309, %c0_310], %878 {strides = array<i32>} : memref<8x8xf32, #tpu.memory_space<vmem>>, vector<8x8xf32>,
      %c7_i32 = arith.constant 7 : i32
      %891 = arith.addi %8, %c7_i32 : i32
      %c0_311 = arith.constant 0 : index
      %c0_312 = arith.constant 0 : index
      %892 = vector.load %arg8[%c0_311, %c0_312] : memref<8x24xf32, #tpu.memory_space<vmem>>, vector<8x24xf32>
      %c0_313 = arith.constant 0 : index
      %c0_314 = arith.constant 0 : index
      %893 = vector.load %arg9[%c0_313, %c0_314] : memref<8x4xf32, #tpu.memory_space<vmem>>, vector<8x4xf32>
      %c0_315 = arith.constant 0 : index
      %c0_316 = arith.constant 0 : index
      %894 = vector.load %arg10[%c0_315, %c0_316] : memref<8x8xf32, #tpu.memory_space<vmem>>, vector<8x8xf32>
      %c0_317 = arith.constant 0 : index
      %c0_318 = arith.constant 0 : index
      %895 = vector.load %arg11[%c0_317, %c0_318] : memref<8x8xf32, #tpu.memory_space<vmem>>, vector<8x8xf32>
      %896 = tpu.concatenate %892, %893 in 1 : vector<8x24xf32>, vector<8x4xf32> -> vector<8x28xf32>
      %897 = arith.index_cast %891 : i32 to index
      %c0_319 = arith.constant 0 : index
      %c0_320 = arith.constant 0 : index
      %898 = vector.load %arg7[%897, %c0_319, %c0_320] : memref<16x8x28xf32, #tpu.memory_space<vmem>>, vector<1x8x28xf32>
      %899 = vector.shape_cast %898 : vector<1x8x28xf32> to vector<8x28xf32>
      %900 = vector.shape_cast %896 : vector<8x28xf32> to vector<1x8x28xf32>
      tpu.vector_store %arg7[%897, %c0_319, %c0_320], %900 {strides = array<i32>} : memref<16x8x28xf32, #tpu.memory_space<vmem>>, vector<1x8x28xf32>,
      %901 = arith.addi %6, %891 : i32
      %902 = arith.sitofp %901 : i32 to f32
      %cst_321 = arith.constant 1.000000e+00 : f32
      %903 = arith.addf %902, %cst_321 : f32
      %cst_322 = arith.constant 2.000000e+00 : f32
      %904 = arith.addf %902, %cst_322 : f32
      %905 = vector.extract_strided_slice %892 {offsets = [0, 0], sizes = [8, 16], strides = [1, 1]} : vector<8x24xf32> to vector<8x16xf32>
      %906 = vector.extract_strided_slice %892 {offsets = [0, 16], sizes = [8, 8], strides = [1, 1]} : vector<8x24xf32> to vector<8x8xf32>
      %cst_323 = arith.constant dense<0.000000e+00> : vector<8x24xf32>
      %907 = tpu.matmul %892, %0, %cst_323 {dimension_numbers = #tpu.dot_dimension_numbers<[1], [0], [0], [1], [0, 0, 1, 1], [], []>, precision = #tpu.contract_precision<fp32>} : vector<8x24xf32>, vector<24x24xf32>, vector<8x24xf32> -> vector<8x24xf32>
      %908 = arith.index_cast %891 : i32 to index
      %c0_324 = arith.constant 0 : index
      %c0_325 = arith.constant 0 : index
      %909 = vector.load %arg3[%908, %c0_324, %c0_325] : memref<16x8x24xf32, #tpu.memory_space<vmem>>, vector<1x8x24xf32>
      %910 = vector.shape_cast %909 : vector<1x8x24xf32> to vector<8x24xf32>
      %911 = arith.addf %907, %910 : vector<8x24xf32>
      %912 = vector.extract_strided_slice %911 {offsets = [0, 0], sizes = [8, 16], strides = [1, 1]} : vector<8x24xf32> to vector<8x16xf32>
      %913 = vector.extract_strided_slice %911 {offsets = [0, 16], sizes = [8, 8], strides = [1, 1]} : vector<8x24xf32> to vector<8x8xf32>
      %cst_326 = arith.constant 1.000000e+00 : f32
      %914 = vector.broadcast %cst_326 : f32 to vector<8x8xf32>
      %915 = arith.divf %914, %895 : vector<8x8xf32>
      %916 = arith.subf %906, %894 : vector<8x8xf32>
      %cst_327 = arith.constant 1.000000e+00 : f32
      %917 = vector.broadcast %cst_327 : f32 to vector<8x8xf32>
      %918 = arith.addf %917, %915 : vector<8x8xf32>
      %cst_328 = arith.constant 5.000000e-01 : f32
      %919 = vector.broadcast %cst_328 : f32 to vector<8x8xf32>
      %920 = arith.mulf %919, %913 : vector<8x8xf32>
      %921 = arith.mulf %920, %918 : vector<8x8xf32>
      %922 = arith.addf %916, %921 : vector<8x8xf32>
      %923 = arith.mulf %913, %922 : vector<8x8xf32>
      %cst_329 = arith.constant 1.000000e+00 : f32
      %924 = vector.broadcast %cst_329 : f32 to vector<8x8xf32>
      %925 = arith.subf %924, %915 : vector<8x8xf32>
      %926 = arith.mulf %923, %925 : vector<8x8xf32>
      %927 = arith.mulf %895, %895 : vector<8x8xf32>
      %928 = arith.divf %904, %903 : f32
      %929 = vector.broadcast %928 : f32 to vector<8x8xf32>
      %930 = arith.subf %927, %929 : vector<8x8xf32>
      %931 = vector.broadcast %904 : f32 to vector<8x8xf32>
      %932 = arith.mulf %931, %930 : vector<8x8xf32>
      %933 = arith.mulf %913, %918 : vector<8x8xf32>
      %934 = arith.addf %916, %933 : vector<8x8xf32>
      %cst_330 = arith.constant 5.000000e-01 : f32
      %935 = vector.broadcast %cst_330 : f32 to vector<8x8xf32>
      %936 = arith.mulf %935, %913 : vector<8x8xf32>
      %937 = arith.mulf %936, %913 : vector<8x8xf32>
      %938 = arith.mulf %915, %915 : vector<8x8xf32>
      %cst_331 = arith.constant 1.000000e+00 : f32
      %939 = vector.broadcast %cst_331 : f32 to vector<8x8xf32>
      %940 = arith.addf %939, %938 : vector<8x8xf32>
      %941 = arith.mulf %937, %940 : vector<8x8xf32>
      %942 = arith.addf %934, %941 : vector<8x8xf32>
      %943 = arith.mulf %916, %942 : vector<8x8xf32>
      %944 = arith.addf %932, %943 : vector<8x8xf32>
      %945 = arith.cmpf oge, %944, %926 : vector<8x8xf32>
      %cst_332 = arith.constant 0.000000e+00 : f32
      %946 = vector.broadcast %cst_332 : f32 to vector<8x8xf32>
      %947 = arith.cmpf oge, %926, %946 : vector<8x8xf32>
      %948 = arith.andi %945, %947 : vector<8x8xi1>
      %949 = arith.cmpf olt, %944, %926 : vector<8x8xf32>
      %cst_333 = arith.constant 0.000000e+00 : f32
      %950 = vector.broadcast %cst_333 : f32 to vector<8x8xf32>
      %951 = arith.cmpf olt, %926, %950 : vector<8x8xf32>
      %952 = arith.andi %949, %951 : vector<8x8xi1>
      %953 = arith.cmpf olt, %926, %944 : vector<8x8xf32>
      %cst_334 = arith.constant 0.000000e+00 : f32
      %954 = vector.broadcast %cst_334 : f32 to vector<8x8xf32>
      %955 = arith.cmpf olt, %944, %954 : vector<8x8xf32>
      %956 = arith.andi %953, %955 : vector<8x8xi1>
      %957 = arith.mulf %926, %926 : vector<8x8xf32>
      %958 = arith.mulf %944, %944 : vector<8x8xf32>
      %959 = arith.subf %957, %958 : vector<8x8xf32>
      %cst_335 = arith.constant 2.000000e+00 : f32
      %960 = arith.mulf %cst_335, %904 : f32
      %961 = arith.mulf %960, %904 : f32
      %962 = arith.divf %961, %903 : f32
      %963 = vector.broadcast %962 : f32 to vector<8x8xf32>
      %964 = arith.mulf %963, %944 : vector<8x8xf32>
      %965 = arith.cmpf oge, %964, %959 : vector<8x8xf32>
      %cst_336 = arith.constant 0.000000e+00 : f32
      %966 = vector.broadcast %cst_336 : f32 to vector<8x8xf32>
      %967 = arith.cmpf ogt, %959, %966 : vector<8x8xf32>
      %968 = arith.andi %965, %967 : vector<8x8xi1>
      %969 = arith.ori %948, %952 : vector<8x8xi1>
      %970 = arith.ori %969, %956 : vector<8x8xi1>
      %971 = arith.ori %970, %968 : vector<8x8xi1>
      %cst_337 = arith.constant 1.000000e+00 : f32
      %972 = vector.broadcast %cst_337 : f32 to vector<8x8xf32>
      %973 = arith.select %971, %915, %972 : vector<8x8xi1>, vector<8x8xf32>
      %974 = arith.mulf %913, %973 : vector<8x8xf32>
      %975 = arith.addf %906, %974 : vector<8x8xf32>
      %976 = arith.addf %905, %912 : vector<8x16xf32>
      %977 = tpu.concatenate %976, %975 in 1 : vector<8x16xf32>, vector<8x8xf32> -> vector<8x24xf32>
      %cst_338 = arith.constant dense<0.000000e+00> : vector<8x4xf32>
      %978 = tpu.matmul %977, %1, %cst_338 {dimension_numbers = #tpu.dot_dimension_numbers<[1], [0], [0], [1], [0, 0, 1, 1], [], []>, precision = #tpu.contract_precision<fp32>} : vector<8x24xf32>, vector<24x4xf32>, vector<8x4xf32> -> vector<8x4xf32>
      %979 = vector.broadcast %2 : vector<1x4xf32> to vector<8x4xf32>
      %980 = arith.addf %978, %979 : vector<8x4xf32>
      %cst_339 = arith.constant -5.000000e+00 : f32
      %cst_340 = arith.constant 5.000000e+00 : f32
      %981 = vector.broadcast %cst_339 : f32 to vector<8x16xf32>
      %982 = arith.maximumf %981, %976 : vector<8x16xf32>
      %983 = vector.broadcast %cst_340 : f32 to vector<8x16xf32>
      %984 = arith.minimumf %983, %982 : vector<8x16xf32>
      %cst_341 = arith.constant -5.000000e+00 : f32
      %cst_342 = arith.constant 5.000000e+00 : f32
      %985 = vector.broadcast %cst_341 : f32 to vector<8x4xf32>
      %986 = arith.maximumf %985, %980 : vector<8x4xf32>
      %987 = vector.broadcast %cst_342 : f32 to vector<8x4xf32>
      %988 = arith.minimumf %987, %986 : vector<8x4xf32>
      %cst_343 = arith.constant -3.000000e+00 : f32
      %cst_344 = arith.constant 3.000000e+00 : f32
      %989 = vector.broadcast %cst_343 : f32 to vector<8x8xf32>
      %990 = arith.maximumf %989, %975 : vector<8x8xf32>
      %991 = vector.broadcast %cst_344 : f32 to vector<8x8xf32>
      %992 = arith.minimumf %991, %990 : vector<8x8xf32>
      %993 = arith.subf %992, %894 : vector<8x8xf32>
      %994 = arith.divf %903, %904 : f32
      %995 = vector.broadcast %994 : f32 to vector<8x8xf32>
      %996 = arith.mulf %995, %895 : vector<8x8xf32>
      %997 = arith.mulf %996, %895 : vector<8x8xf32>
      %998 = arith.mulf %904, %904 : f32
      %999 = arith.divf %903, %998 : f32
      %1000 = vector.broadcast %999 : f32 to vector<8x8xf32>
      %1001 = arith.mulf %1000, %993 : vector<8x8xf32>
      %1002 = arith.mulf %1001, %993 : vector<8x8xf32>
      %1003 = arith.addf %997, %1002 : vector<8x8xf32>
      %1004 = math.sqrt %1003 : vector<8x8xf32>
      %1005 = arith.divf %903, %904 : f32
      %1006 = vector.broadcast %1005 : f32 to vector<8x8xf32>
      %1007 = arith.mulf %1006, %894 : vector<8x8xf32>
      %cst_345 = arith.constant 1.000000e+00 : f32
      %1008 = arith.divf %cst_345, %904 : f32
      %1009 = vector.broadcast %1008 : f32 to vector<8x8xf32>
      %1010 = arith.mulf %1009, %992 : vector<8x8xf32>
      %1011 = arith.addf %1007, %1010 : vector<8x8xf32>
      %1012 = tpu.concatenate %984, %992 in 1 : vector<8x16xf32>, vector<8x8xf32> -> vector<8x24xf32>
      %c0_346 = arith.constant 0 : index
      %c0_347 = arith.constant 0 : index
      %1013 = vector.load %arg8[%c0_346, %c0_347] : memref<8x24xf32, #tpu.memory_space<vmem>>, vector<8x24xf32>
      tpu.vector_store %arg8[%c0_346, %c0_347], %1012 {strides = array<i32>} : memref<8x24xf32, #tpu.memory_space<vmem>>, vector<8x24xf32>,
      %c0_348 = arith.constant 0 : index
      %c0_349 = arith.constant 0 : index
      %1014 = vector.load %arg9[%c0_348, %c0_349] : memref<8x4xf32, #tpu.memory_space<vmem>>, vector<8x4xf32>
      tpu.vector_store %arg9[%c0_348, %c0_349], %988 {strides = array<i32>} : memref<8x4xf32, #tpu.memory_space<vmem>>, vector<8x4xf32>,
      %c0_350 = arith.constant 0 : index
      %c0_351 = arith.constant 0 : index
      %1015 = vector.load %arg10[%c0_350, %c0_351] : memref<8x8xf32, #tpu.memory_space<vmem>>, vector<8x8xf32>
      tpu.vector_store %arg10[%c0_350, %c0_351], %1011 {strides = array<i32>} : memref<8x8xf32, #tpu.memory_space<vmem>>, vector<8x8xf32>,
      %c0_352 = arith.constant 0 : index
      %c0_353 = arith.constant 0 : index
      %1016 = vector.load %arg11[%c0_352, %c0_353] : memref<8x8xf32, #tpu.memory_space<vmem>>, vector<8x8xf32>
      tpu.vector_store %arg11[%c0_352, %c0_353], %1004 {strides = array<i32>} : memref<8x8xf32, #tpu.memory_space<vmem>>, vector<8x8xf32>,
    }
    %c2_i32_7 = arith.constant 2 : i32
    return
  }
  func.func @transform_0(%arg0: i32, %arg1: i32) -> (i32, i32) {
    %c0_i32 = arith.constant 0 : i32
    %c0_i32_0 = arith.constant 0 : i32
    return %arg0, %c0_i32 : i32, i32
  }
  func.func @transform_1(%arg0: i32, %arg1: i32) -> (i32, i32, i32) {
    %c0_i32 = arith.constant 0 : i32
    %c0_i32_0 = arith.constant 0 : i32
    return %arg1, %arg0, %c0_i32 : i32, i32, i32
  }
  func.func @transform_2(%arg0: i32, %arg1: i32) -> (i32, i32) {
    %c0_i32 = arith.constant 0 : i32
    %c0_i32_0 = arith.constant 0 : i32
    %c0_i32_1 = arith.constant 0 : i32
    return %c0_i32, %c0_i32_0 : i32, i32
  }
  func.func @transform_3(%arg0: i32, %arg1: i32) -> (i32, i32) {
    %c0_i32 = arith.constant 0 : i32
    %c0_i32_0 = arith.constant 0 : i32
    %c0_i32_1 = arith.constant 0 : i32
    return %c0_i32, %c0_i32_0 : i32, i32
  }
  func.func @transform_4(%arg0: i32, %arg1: i32) -> (i32, i32) {
    %c0_i32 = arith.constant 0 : i32
    %c0_i32_0 = arith.constant 0 : i32
    %c0_i32_1 = arith.constant 0 : i32
    return %c0_i32, %c0_i32_0 : i32, i32
  }
  func.func @transform_5(%arg0: i32, %arg1: i32) -> (i32, i32, i32) {
    %c0_i32 = arith.constant 0 : i32
    %c0_i32_0 = arith.constant 0 : i32
    return %arg1, %arg0, %c0_i32 : i32, i32, i32
  }
}

</mosaic_0001>

<llo_original>
// kernel: tpu_custom_call.1
$region0: #{tpu_custom_call.1}
  #allocation0 [shape = 'u32[]', space=smem, size = 0x4, offset = 0x4, fixed_abs, tag = 'smem constant byte address 0x4 - core index']
  #allocation1 [shape = 'u32[144,128]{1,0:T(1,128)}', space=vmem, size = 0x12000, scoped, tag = 'internal scratch']
  #allocation2 [shape = 'f32[8,24]{1,0:T(8,128)}', space=vmem, size = 0x1000, scoped, tag = 'scratch operand']
  #allocation3 [shape = 'f32[8,4]{1,0:T(8,128)}', space=vmem, size = 0x1000, scoped, tag = 'scratch operand']
  #allocation4 [shape = 'f32[8,8]{1,0:T(8,128)}', space=vmem, size = 0x1000, scoped, tag = 'scratch operand']
  #allocation5 [shape = 'f32[8,8]{1,0:T(8,128)}', space=vmem, size = 0x1000, scoped, tag = 'scratch operand']
  %s0 = inlined_call_operand.hbm [shape: f32[8,24], index: 0, kind: input, shape index: {}]
  %s1 = inlined_call_operand.hbm [shape: f32[16,8,24], index: 1, kind: input, shape index: {}]
  %s2 = inlined_call_operand.vmem [shape: f32[24,24], index: 2, kind: input, shape index: {}]
  %s3 = inlined_call_operand.vmem [shape: f32[24,4], index: 3, kind: input, shape index: {}]
  %s4 = inlined_call_operand.vmem [shape: f32[1,4], index: 4, kind: input, shape index: {}]
  %s5 = inlined_call_operand.hbm [shape: f32[16,8,28], index: 5, kind: output, shape index: {}]
  %s6 = sld [smem:[#allocation0]]
  $region49: #{tpu_custom_call.1} parent=0
    _
  %s8 = ssub.s32 1, %s6
  %s9 = scalar_select 0, %s8, %s6
  $region1: #{tpu_custom_call.1} parent=0
    #allocation6 [shape = 'u8[4096]{0}', space=vmem, size = 0x1000, scoped, tag = 'input window, operand 0, single buffered']
    #allocation7 [shape = 's32[1]{0}', space=sflag, size = 0x4, scoped, tag = 'scoped memory for tpu_custom_call.1']
    #allocation8 [shape = 's32[1]{0}', space=sflag, size = 0x4, scoped, tag = 'scoped memory for tpu_custom_call.1']
    #allocation9 [shape = 'u8[65536]{0}', space=vmem, size = 0x10000, scoped, tag = 'input window, operand 1, single buffered']
    #allocation10 [shape = 's32[1]{0}', space=sflag, size = 0x4, scoped, tag = 'scoped memory for tpu_custom_call.1']
    #allocation11 [shape = 'u8[65536]{0}', space=vmem, size = 0x10000, scoped, tag = 'output window, operand 0, single buffered']
    %10 = vsyncpa [#allocation7], 0
    %11 = vsyncpa [#allocation10], 0
    %12 = vsyncpa [#allocation8], 0
    // Predicated region
    $region2: #{tpu_custom_call.1} parent=1 // pred_check
      _
    $region3: #{tpu_custom_call.1} parent=1 // pred_check_branch
      %14 = sbr.rel (0) target = $region5
    $region4: #{tpu_custom_call.1} parent=1 // pred_region
      %s16 = ssub.s32 128, 128
      %17 = vsyncadd [#allocation7], %s16
      %s19 = sshll.u32 [#allocation6], 4
      %s20 = int_to_ptr.vmem [resolvable:$true] %s19
      %22 = dma.hbm_to_vmem [thread:$0]  %s0, 128, %s20, [#allocation7]
    $region5: #{tpu_custom_call.1} parent=1 // pred_fallthru
      _
    // Predicated region
    $region6: #{tpu_custom_call.1} parent=1 // pred_check
      _
    $region7: #{tpu_custom_call.1} parent=1 // pred_check_branch
      %24 = sbr.rel (0) target = $region9
    $region8: #{tpu_custom_call.1} parent=1 // pred_region
      %s26 = ssub.s32 2048, 2048
      %27 = vsyncadd [#allocation10], %s26
      %s28 = sshll.u32 [#allocation9], 4
      %s29 = int_to_ptr.vmem [resolvable:$true] %s28
      %34 = dma.hbm_to_vmem [thread:$0]  %s1, 2048, %s29, [#allocation10], 128, 128, 8
    $region9: #{tpu_custom_call.1} parent=1 // pred_fallthru
      _
    // Predicated region
    $region10: #{tpu_custom_call.1} parent=1 // pred_check
      _
    $region11: #{tpu_custom_call.1} parent=1 // pred_check_branch
      %36 = sbr.rel (0) target = $region13
    $region12: #{tpu_custom_call.1} parent=1 // pred_region
      _
    $region13: #{tpu_custom_call.1} parent=1 // pred_fallthru
      _
    // Predicated region
    $region14: #{tpu_custom_call.1} parent=1 // pred_check
      _
    $region15: #{tpu_custom_call.1} parent=1 // pred_check_branch
      %38 = sbr.rel (0) target = $region17
    $region16: #{tpu_custom_call.1} parent=1 // pred_region
      _
    $region17: #{tpu_custom_call.1} parent=1 // pred_fallthru
      _
    // Predicated region
    $region18: #{tpu_custom_call.1} parent=1 // pred_check
      _
    $region19: #{tpu_custom_call.1} parent=1 // pred_check_branch
      %40 = sbr.rel (0) target = $region21
    $region20: #{tpu_custom_call.1} parent=1 // pred_region
      _
    $region21: #{tpu_custom_call.1} parent=1 // pred_fallthru
      _
    // Predicated region
    $region22: #{tpu_custom_call.1} parent=1 // pred_check
      _
    $region23: #{tpu_custom_call.1} parent=1 // pred_check_branch
      %42 = sbr.rel (0) target = $region25
    $region24: #{tpu_custom_call.1} parent=1 // pred_region
      %43 = dma.done [#allocation7], 128
    $region25: #{tpu_custom_call.1} parent=1 // pred_fallthru
      _
    // Predicated region
    $region26: #{tpu_custom_call.1} parent=1 // pred_check
      _
    $region27: #{tpu_custom_call.1} parent=1 // pred_check_branch
      %45 = sbr.rel (0) target = $region29
    $region28: #{tpu_custom_call.1} parent=1 // pred_region
      %46 = dma.done [#allocation10], 2048
    $region29: #{tpu_custom_call.1} parent=1 // pred_fallthru
      _
    %v47 = vld [vmem:[%s2] sm:$0xff]
    %v48 = vld [vmem:[%s2 + $0x8] sm:$0xff]
    %v49 = vld [vmem:[%s2 + $0x10] sm:$0xff]
    %v50 = vld [vmem:[%s3] sm:$0xff]
    %v51 = vld [vmem:[%s3 + $0x8] sm:$0xff]
    %v52 = vld [vmem:[%s3 + $0x10] sm:$0xff]
    %v53 = vld [vmem:[%s4] sm:$0x1]
    %p54 = scmp.eq.s32.totalorder 0, 0
    // Predicated region
    $region30: #{tpu_custom_call.1} parent=1 // pred_check
      %p55 = pneg %p54
    $region31: #{tpu_custom_call.1} parent=1 // pred_check_branch
      %57 = sbr.rel (%p55) target = $region33
    $region32: #{tpu_custom_call.1} parent=1 // pred_region
      %v58 = vld [vmem:[#allocation6] sm:$0xff]
      %vm59 = vcmask 195584
      %60 = vst.msk [vmem:[#allocation2] sm:$0xff] %vm59, %v58
      %62 = vrot.lane.b32.xlu0 %v58, 112
      %v63 = vpop.permute.xlu0 %62
      %vm65 = vcmask 64512
      %66 = vst.msk [vmem:[#allocation4] sm:$0xff] %vm65, %v63
      %67 = vst.msk [vmem:[#allocation5] sm:$0xff] %vm65, 1.0
      %v69 = vlaneseq
      %v70 = vshrl.u32 %v69, 7
      %v71 = vsub.s32 0, %v70
      %v72 = vrot.slane %v53, %v71
      %v74 = vsel %vm59, %v58, 0
      %76 = vmatprep.subr.mxu0 0.0
      %77 = vmatpush1.msra.mxu0 0.0
      %78 = vmatprep.subr.mxu0 0.0
      %79 = vmatpush1.msra.mxu0 0.0
      %80 = vmatprep.subr.mxu0 0.0
      %81 = vmatpush1.msra.mxu0 0.0
      %82 = vmatprep.subr.mxu0 0.0
      %83 = vmatpush1.msra.mxu0 0.0
      %84 = vmatprep.subr.mxu0 0.0
      %85 = vmatpush1.msra.mxu0 0.0
      %86 = vmatprep.subr.mxu0 0.0
      %87 = vmatpush1.msra.mxu0 0.0
      %88 = vmatprep.subr.mxu0 0.0
      %89 = vmatpush1.msra.mxu0 0.0
      %90 = vmatprep.subr.mxu0 0.0
      %91 = vmatpush1.msra.mxu0 0.0
      %92 = vmatprep.subr.mxu0 0.0
      %93 = vmatpush1.msra.mxu0 0.0
      %94 = vmatprep.subr.mxu0 0.0
      %95 = vmatpush1.msra.mxu0 0.0
      %96 = vmatprep.subr.mxu0 0.0
      %97 = vmatpush1.msra.mxu0 0.0
      %98 = vmatprep.subr.mxu0 0.0
      %99 = vmatpush1.msra.mxu0 0.0
      %100 = vmatprep.subr.mxu0 0.0
      %101 = vmatpush1.msra.mxu0 0.0
      %102 = vmatprep.subr.mxu0 0.0
      %v103 = vand.u32 %v52, 4294901760
      %104 = vmatpush1.msra.mxu0 %v103
      %105 = vmatprep.subr.mxu0 0.0
      %v106 = vand.u32 %v51, 4294901760
      %107 = vmatpush1.msra.mxu0 %v106
      %108 = vmatprep.subr.mxu0 0.0
      %v109 = vand.u32 %v50, 4294901760
      %110 = vmatpush1.msra.mxu0 %v109
      %111 = vmatprep.subr.mxu0 0.0
      %112 = vmatpush2.msra.mxu0 0.0
      %113 = vmatprep.subr.mxu0 0.0
      %114 = vmatpush2.msra.mxu0 0.0
      %115 = vmatprep.subr.mxu0 0.0
      %116 = vmatpush2.msra.mxu0 0.0
      %117 = vmatprep.subr.mxu0 0.0
      %118 = vmatpush2.msra.mxu0 0.0
      %119 = vmatprep.subr.mxu0 0.0
      %120 = vmatpush2.msra.mxu0 0.0
      %121 = vmatprep.subr.mxu0 0.0
      %122 = vmatpush2.msra.mxu0 0.0
      %123 = vmatprep.subr.mxu0 0.0
      %124 = vmatpush2.msra.mxu0 0.0
      %125 = vmatprep.subr.mxu0 0.0
      %126 = vmatpush2.msra.mxu0 0.0
      %127 = vmatprep.subr.mxu0 0.0
      %128 = vmatpush2.msra.mxu0 0.0
      %129 = vmatprep.subr.mxu0 0.0
      %130 = vmatpush2.msra.mxu0 0.0
      %131 = vmatprep.subr.mxu0 0.0
      %132 = vmatpush2.msra.mxu0 0.0
      %133 = vmatprep.subr.mxu0 0.0
      %134 = vmatpush2.msra.mxu0 0.0
      %135 = vmatprep.subr.mxu0 0.0
      %136 = vmatpush2.msra.mxu0 0.0
      %137 = vmatprep.subr.mxu0 0.0
      %138 = vmatpush2.msra.mxu0 0.0
      %139 = vmatprep.subr.mxu0 0.0
      %140 = vmatpush2.msra.mxu0 0.0
      %141 = vmatprep.subr.mxu0 0.0
      %142 = vmatpush2.msra.mxu0 0.0
      %143 = vmatprep.mubr.f32.mxu0 0.0
      %v144 = vand.u32 %v74, 4294901760
      %v145 = vsub.f32 %v74, %v144
      %v146 = vand.u32 %v145, 4294901760
      %v147 = vsub.f32 %v145, %v146
      %v148 = vand.u32 %v147, 4294901760
      %149 = vmatmul.mubr.f32.gmra.mxu0 %v148
      %v150 = vpop.f32.mrf.mxu0
      %v151 = vadd.f32 %v72, %v150
      %v152 = vpop.f32.mrf.mxu0
      %153 = vdwg.mxu0
      %154 = vmatprep.subr.mxu0 0.0
      %155 = vmatpush1.msra.mxu0 0.0
      %156 = vmatprep.subr.mxu0 0.0
      %157 = vmatpush1.msra.mxu0 0.0
      %158 = vmatprep.subr.mxu0 0.0
      %159 = vmatpush1.msra.mxu0 0.0
      %160 = vmatprep.subr.mxu0 0.0
      %161 = vmatpush1.msra.mxu0 0.0
      %162 = vmatprep.subr.mxu0 0.0
      %163 = vmatpush1.msra.mxu0 0.0
      %164 = vmatprep.subr.mxu0 0.0
      %165 = vmatpush1.msra.mxu0 0.0
      %166 = vmatprep.subr.mxu0 0.0
      %167 = vmatpush1.msra.mxu0 0.0
      %168 = vmatprep.subr.mxu0 0.0
      %169 = vmatpush1.msra.mxu0 0.0
      %170 = vmatprep.subr.mxu0 0.0
      %171 = vmatpush1.msra.mxu0 0.0
      %172 = vmatprep.subr.mxu0 0.0
      %173 = vmatpush1.msra.mxu0 0.0
      %174 = vmatprep.subr.mxu0 0.0
      %175 = vmatpush1.msra.mxu0 0.0
      %176 = vmatprep.subr.mxu0 0.0
      %177 = vmatpush1.msra.mxu0 0.0
      %178 = vmatprep.subr.mxu0 0.0
      %179 = vmatpush1.msra.mxu0 0.0
      %180 = vmatprep.subr.mxu0 0.0
      %v181 = vand.u32 %v52, 4294901760
      %v182 = vsub.f32 %v52, %v181
      %v183 = vand.u32 %v182, 4294901760
      %v184 = vsub.f32 %v182, %v183
      %v185 = vand.u32 %v184, 4294901760
      %186 = vmatpush1.msra.mxu0 %v185
      %187 = vmatprep.subr.mxu0 0.0
      %v188 = vand.u32 %v51, 4294901760
      %v189 = vsub.f32 %v51, %v188
      %v190 = vand.u32 %v189, 4294901760
      %v191 = vsub.f32 %v189, %v190
      %v192 = vand.u32 %v191, 4294901760
      %193 = vmatpush1.msra.mxu0 %v192
      %194 = vmatprep.subr.mxu0 0.0
      %v195 = vand.u32 %v50, 4294901760
      %v196 = vsub.f32 %v50, %v195
      %v197 = vand.u32 %v196, 4294901760
      %v198 = vsub.f32 %v196, %v197
      %v199 = vand.u32 %v198, 4294901760
      %200 = vmatpush1.msra.mxu0 %v199
      %201 = vmatprep.subr.mxu0 0.0
      %202 = vmatpush2.msra.mxu0 0.0
      %203 = vmatprep.subr.mxu0 0.0
      %204 = vmatpush2.msra.mxu0 0.0
      %205 = vmatprep.subr.mxu0 0.0
      %206 = vmatpush2.msra.mxu0 0.0
      %207 = vmatprep.subr.mxu0 0.0
      %208 = vmatpush2.msra.mxu0 0.0
      %209 = vmatprep.subr.mxu0 0.0
      %210 = vmatpush2.msra.mxu0 0.0
      %211 = vmatprep.subr.mxu0 0.0
      %212 = vmatpush2.msra.mxu0 0.0
      %213 = vmatprep.subr.mxu0 0.0
      %214 = vmatpush2.msra.mxu0 0.0
      %215 = vmatprep.subr.mxu0 0.0
      %216 = vmatpush2.msra.mxu0 0.0
      %217 = vmatprep.subr.mxu0 0.0
      %218 = vmatpush2.msra.mxu0 0.0
      %219 = vmatprep.subr.mxu0 0.0
      %220 = vmatpush2.msra.mxu0 0.0
      %221 = vmatprep.subr.mxu0 0.0
      %222 = vmatpush2.msra.mxu0 0.0
      %223 = vmatprep.subr.mxu0 0.0
      %224 = vmatpush2.msra.mxu0 0.0
      %225 = vmatprep.subr.mxu0 0.0
      %226 = vmatpush2.msra.mxu0 0.0
      %227 = vmatprep.subr.mxu0 0.0
      %228 = vmatpush2.msra.mxu0 0.0
      %229 = vmatprep.subr.mxu0 0.0
      %230 = vmatpush2.msra.mxu0 0.0
      %231 = vmatprep.subr.mxu0 0.0
      %232 = vmatpush2.msra.mxu0 0.0
      %233 = vmatprep.mubr.f32.mxu0 0.0
      %v234 = vand.u32 %v74, 4294901760
      %235 = vmatmul.mubr.f32.gmra.mxu0 %v234
      %v236 = vpop.f32.mrf.mxu0
      %v237 = vadd.f32 %v151, %v236
      %v238 = vpop.f32.mrf.mxu0
      %239 = vdwg.mxu0
      %240 = vmatprep.subr.mxu0 0.0
      %241 = vmatpush1.msra.mxu0 0.0
      %242 = vmatprep.subr.mxu0 0.0
      %243 = vmatpush1.msra.mxu0 0.0
      %244 = vmatprep.subr.mxu0 0.0
      %245 = vmatpush1.msra.mxu0 0.0
      %246 = vmatprep.subr.mxu0 0.0
      %247 = vmatpush1.msra.mxu0 0.0
      %248 = vmatprep.subr.mxu0 0.0
      %249 = vmatpush1.msra.mxu0 0.0
      %250 = vmatprep.subr.mxu0 0.0
      %251 = vmatpush1.msra.mxu0 0.0
      %252 = vmatprep.subr.mxu0 0.0
      %253 = vmatpush1.msra.mxu0 0.0
      %254 = vmatprep.subr.mxu0 0.0
      %255 = vmatpush1.msra.mxu0 0.0
      %256 = vmatprep.subr.mxu0 0.0
      %257 = vmatpush1.msra.mxu0 0.0
      %258 = vmatprep.subr.mxu0 0.0
      %259 = vmatpush1.msra.mxu0 0.0
      %260 = vmatprep.subr.mxu0 0.0
      %261 = vmatpush1.msra.mxu0 0.0
      %262 = vmatprep.subr.mxu0 0.0
      %263 = vmatpush1.msra.mxu0 0.0
      %264 = vmatprep.subr.mxu0 0.0
      %265 = vmatpush1.msra.mxu0 0.0
      %266 = vmatprep.subr.mxu0 0.0
      %v267 = vand.u32 %v52, 4294901760
      %v268 = vsub.f32 %v52, %v267
      %269 = vmatpush1.msra.mxu0 %v268
      %270 = vmatprep.subr.mxu0 0.0
      %v271 = vand.u32 %v51, 4294901760
      %v272 = vsub.f32 %v51, %v271
      %273 = vmatpush1.msra.mxu0 %v272
      %274 = vmatprep.subr.mxu0 0.0
      %v275 = vand.u32 %v50, 4294901760
      %v276 = vsub.f32 %v50, %v275
      %277 = vmatpush1.msra.mxu0 %v276
      %278 = vmatprep.subr.mxu0 0.0
      %279 = vmatpush2.msra.mxu0 0.0
      %280 = vmatprep.subr.mxu0 0.0
      %281 = vmatpush2.msra.mxu0 0.0
      %282 = vmatprep.subr.mxu0 0.0
      %283 = vmatpush2.msra.mxu0 0.0
      %284 = vmatprep.subr.mxu0 0.0
      %285 = vmatpush2.msra.mxu0 0.0
      %286 = vmatprep.subr.mxu0 0.0
      %287 = vmatpush2.msra.mxu0 0.0
      %288 = vmatprep.subr.mxu0 0.0
      %289 = vmatpush2.msra.mxu0 0.0
      %290 = vmatprep.subr.mxu0 0.0
      %291 = vmatpush2.msra.mxu0 0.0
      %292 = vmatprep.subr.mxu0 0.0
      %293 = vmatpush2.msra.mxu0 0.0
      %294 = vmatprep.subr.mxu0 0.0
      %295 = vmatpush2.msra.mxu0 0.0
      %296 = vmatprep.subr.mxu0 0.0
      %297 = vmatpush2.msra.mxu0 0.0
      %298 = vmatprep.subr.mxu0 0.0
      %299 = vmatpush2.msra.mxu0 0.0
      %300 = vmatprep.subr.mxu0 0.0
      %301 = vmatpush2.msra.mxu0 0.0
      %302 = vmatprep.subr.mxu0 0.0
      %303 = vmatpush2.msra.mxu0 0.0
      %304 = vmatprep.subr.mxu0 0.0
      %305 = vmatpush2.msra.mxu0 0.0
      %306 = vmatprep.subr.mxu0 0.0
      %307 = vmatpush2.msra.mxu0 0.0
      %308 = vmatprep.subr.mxu0 0.0
      %309 = vmatpush2.msra.mxu0 0.0
      %310 = vmatprep.mubr.f32.mxu0 0.0
      %v311 = vand.u32 %v74, 4294901760
      %v312 = vsub.f32 %v74, %v311
      %313 = vmatmul.mubr.f32.gmra.mxu0 %v312
      %v314 = vpop.f32.mrf.mxu0
      %v315 = vadd.f32 %v237, %v314
      %v316 = vpop.f32.mrf.mxu0
      %317 = vdwg.mxu0
      %318 = vmatprep.subr.mxu0 0.0
      %319 = vmatpush1.msra.mxu0 0.0
      %320 = vmatprep.subr.mxu0 0.0
      %321 = vmatpush1.msra.mxu0 0.0
      %322 = vmatprep.subr.mxu0 0.0
      %323 = vmatpush1.msra.mxu0 0.0
      %324 = vmatprep.subr.mxu0 0.0
      %325 = vmatpush1.msra.mxu0 0.0
      %326 = vmatprep.subr.mxu0 0.0
      %327 = vmatpush1.msra.mxu0 0.0
      %328 = vmatprep.subr.mxu0 0.0
      %329 = vmatpush1.msra.mxu0 0.0
      %330 = vmatprep.subr.mxu0 0.0
      %331 = vmatpush1.msra.mxu0 0.0
      %332 = vmatprep.subr.mxu0 0.0
      %333 = vmatpush1.msra.mxu0 0.0
      %334 = vmatprep.subr.mxu0 0.0
      %335 = vmatpush1.msra.mxu0 0.0
      %336 = vmatprep.subr.mxu0 0.0
      %337 = vmatpush1.msra.mxu0 0.0
      %338 = vmatprep.subr.mxu0 0.0
      %339 = vmatpush1.msra.mxu0 0.0
      %340 = vmatprep.subr.mxu0 0.0
      %341 = vmatpush1.msra.mxu0 0.0
      %342 = vmatprep.subr.mxu0 0.0
      %343 = vmatpush1.msra.mxu0 0.0
      %344 = vmatprep.subr.mxu0 0.0
      %v345 = vand.u32 %v52, 4294901760
      %346 = vmatpush1.msra.mxu0 %v345
      %347 = vmatprep.subr.mxu0 0.0
      %v348 = vand.u32 %v51, 4294901760
      %349 = vmatpush1.msra.mxu0 %v348
      %350 = vmatprep.subr.mxu0 0.0
      %v351 = vand.u32 %v50, 4294901760
      %352 = vmatpush1.msra.mxu0 %v351
      %353 = vmatprep.subr.mxu0 0.0
      %354 = vmatpush2.msra.mxu0 0.0
      %355 = vmatprep.subr.mxu0 0.0
      %356 = vmatpush2.msra.mxu0 0.0
      %357 = vmatprep.subr.mxu0 0.0
      %358 = vmatpush2.msra.mxu0 0.0
      %359 = vmatprep.subr.mxu0 0.0
      %360 = vmatpush2.msra.mxu0 0.0
      %361 = vmatprep.subr.mxu0 0.0
      %362 = vmatpush2.msra.mxu0 0.0
      %363 = vmatprep.subr.mxu0 0.0
      %364 = vmatpush2.msra.mxu0 0.0
      %365 = vmatprep.subr.mxu0 0.0
      %366 = vmatpush2.msra.mxu0 0.0
      %367 = vmatprep.subr.mxu0 0.0
      %368 = vmatpush2.msra.mxu0 0.0
      %369 = vmatprep.subr.mxu0 0.0
      %370 = vmatpush2.msra.mxu0 0.0
      %371 = vmatprep.subr.mxu0 0.0
      %372 = vmatpush2.msra.mxu0 0.0
      %373 = vmatprep.subr.mxu0 0.0
      %374 = vmatpush2.msra.mxu0 0.0
      %375 = vmatprep.subr.mxu0 0.0
      %376 = vmatpush2.msra.mxu0 0.0
      %377 = vmatprep.subr.mxu0 0.0
      %378 = vmatpush2.msra.mxu0 0.0
      %379 = vmatprep.subr.mxu0 0.0
      %380 = vmatpush2.msra.mxu0 0.0
      %381 = vmatprep.subr.mxu0 0.0
      %382 = vmatpush2.msra.mxu0 0.0
      %383 = vmatprep.subr.mxu0 0.0
      %384 = vmatpush2.msra.mxu0 0.0
      %385 = vmatprep.mubr.f32.mxu0 0.0
      %v386 = vand.u32 %v74, 4294901760
      %v387 = vsub.f32 %v74, %v386
      %v388 = vand.u32 %v387, 4294901760
      %389 = vmatmul.mubr.f32.gmra.mxu0 %v388
      %v390 = vpop.f32.mrf.mxu0
      %v391 = vadd.f32 %v315, %v390
      %v392 = vpop.f32.mrf.mxu0
      %393 = vdwg.mxu0
      %394 = vmatprep.subr.mxu0 0.0
      %395 = vmatpush1.msra.mxu0 0.0
      %396 = vmatprep.subr.mxu0 0.0
      %397 = vmatpush1.msra.mxu0 0.0
      %398 = vmatprep.subr.mxu0 0.0
      %399 = vmatpush1.msra.mxu0 0.0
      %400 = vmatprep.subr.mxu0 0.0
      %401 = vmatpush1.msra.mxu0 0.0
      %402 = vmatprep.subr.mxu0 0.0
      %403 = vmatpush1.msra.mxu0 0.0
      %404 = vmatprep.subr.mxu0 0.0
      %405 = vmatpush1.msra.mxu0 0.0
      %406 = vmatprep.subr.mxu0 0.0
      %407 = vmatpush1.msra.mxu0 0.0
      %408 = vmatprep.subr.mxu0 0.0
      %409 = vmatpush1.msra.mxu0 0.0
      %410 = vmatprep.subr.mxu0 0.0
      %411 = vmatpush1.msra.mxu0 0.0
      %412 = vmatprep.subr.mxu0 0.0
      %413 = vmatpush1.msra.mxu0 0.0
      %414 = vmatprep.subr.mxu0 0.0
      %415 = vmatpush1.msra.mxu0 0.0
      %416 = vmatprep.subr.mxu0 0.0
      %417 = vmatpush1.msra.mxu0 0.0
      %418 = vmatprep.subr.mxu0 0.0
      %419 = vmatpush1.msra.mxu0 0.0
      %420 = vmatprep.subr.mxu0 0.0
      %v421 = vand.u32 %v52, 4294901760
      %v422 = vsub.f32 %v52, %v421
      %v423 = vand.u32 %v422, 4294901760
      %424 = vmatpush1.msra.mxu0 %v423
      %425 = vmatprep.subr.mxu0 0.0
      %v426 = vand.u32 %v51, 4294901760
      %v427 = vsub.f32 %v51, %v426
      %v428 = vand.u32 %v427, 4294901760
      %429 = vmatpush1.msra.mxu0 %v428
      %430 = vmatprep.subr.mxu0 0.0
      %v431 = vand.u32 %v50, 4294901760
      %v432 = vsub.f32 %v50, %v431
      %v433 = vand.u32 %v432, 4294901760
      %434 = vmatpush1.msra.mxu0 %v433
      %435 = vmatprep.subr.mxu0 0.0
      %436 = vmatpush2.msra.mxu0 0.0
      %437 = vmatprep.subr.mxu0 0.0
      %438 = vmatpush2.msra.mxu0 0.0
      %439 = vmatprep.subr.mxu0 0.0
      %440 = vmatpush2.msra.mxu0 0.0
      %441 = vmatprep.subr.mxu0 0.0
      %442 = vmatpush2.msra.mxu0 0.0
      %443 = vmatprep.subr.mxu0 0.0
      %444 = vmatpush2.msra.mxu0 0.0
      %445 = vmatprep.subr.mxu0 0.0
      %446 = vmatpush2.msra.mxu0 0.0
      %447 = vmatprep.subr.mxu0 0.0
      %448 = vmatpush2.msra.mxu0 0.0
      %449 = vmatprep.subr.mxu0 0.0
      %450 = vmatpush2.msra.mxu0 0.0
      %451 = vmatprep.subr.mxu0 0.0
      %452 = vmatpush2.msra.mxu0 0.0
      %453 = vmatprep.subr.mxu0 0.0
      %454 = vmatpush2.msra.mxu0 0.0
      %455 = vmatprep.subr.mxu0 0.0
      %456 = vmatpush2.msra.mxu0 0.0
      %457 = vmatprep.subr.mxu0 0.0
      %458 = vmatpush2.msra.mxu0 0.0
      %459 = vmatprep.subr.mxu0 0.0
      %460 = vmatpush2.msra.mxu0 0.0
      %461 = vmatprep.subr.mxu0 0.0
      %462 = vmatpush2.msra.mxu0 0.0
      %463 = vmatprep.subr.mxu0 0.0
      %464 = vmatpush2.msra.mxu0 0.0
      %465 = vmatprep.subr.mxu0 0.0
      %466 = vmatpush2.msra.mxu0 0.0
      %467 = vmatprep.mubr.f32.mxu0 0.0
      %v468 = vand.u32 %v74, 4294901760
      %469 = vmatmul.mubr.f32.gmra.mxu0 %v468
      %v470 = vpop.f32.mrf.mxu0
      %v471 = vadd.f32 %v391, %v470
      %v472 = vpop.f32.mrf.mxu0
      %473 = vdwg.mxu0
      %474 = vmatprep.subr.mxu0 0.0
      %475 = vmatpush1.msra.mxu0 0.0
      %476 = vmatprep.subr.mxu0 0.0
      %477 = vmatpush1.msra.mxu0 0.0
      %478 = vmatprep.subr.mxu0 0.0
      %479 = vmatpush1.msra.mxu0 0.0
      %480 = vmatprep.subr.mxu0 0.0
      %481 = vmatpush1.msra.mxu0 0.0
      %482 = vmatprep.subr.mxu0 0.0
      %483 = vmatpush1.msra.mxu0 0.0
      %484 = vmatprep.subr.mxu0 0.0
      %485 = vmatpush1.msra.mxu0 0.0
      %486 = vmatprep.subr.mxu0 0.0
      %487 = vmatpush1.msra.mxu0 0.0
      %488 = vmatprep.subr.mxu0 0.0
      %489 = vmatpush1.msra.mxu0 0.0
      %490 = vmatprep.subr.mxu0 0.0
      %491 = vmatpush1.msra.mxu0 0.0
      %492 = vmatprep.subr.mxu0 0.0
      %493 = vmatpush1.msra.mxu0 0.0
      %494 = vmatprep.subr.mxu0 0.0
      %495 = vmatpush1.msra.mxu0 0.0
      %496 = vmatprep.subr.mxu0 0.0
      %497 = vmatpush1.msra.mxu0 0.0
      %498 = vmatprep.subr.mxu0 0.0
      %499 = vmatpush1.msra.mxu0 0.0
      %500 = vmatprep.subr.mxu0 0.0
      %v501 = vand.u32 %v52, 4294901760
      %502 = vmatpush1.msra.mxu0 %v501
      %503 = vmatprep.subr.mxu0 0.0
      %v504 = vand.u32 %v51, 4294901760
      %505 = vmatpush1.msra.mxu0 %v504
      %506 = vmatprep.subr.mxu0 0.0
      %v507 = vand.u32 %v50, 4294901760
      %508 = vmatpush1.msra.mxu0 %v507
      %509 = vmatprep.subr.mxu0 0.0
      %510 = vmatpush2.msra.mxu0 0.0
      %511 = vmatprep.subr.mxu0 0.0
      %512 = vmatpush2.msra.mxu0 0.0
      %513 = vmatprep.subr.mxu0 0.0
      %514 = vmatpush2.msra.mxu0 0.0
      %515 = vmatprep.subr.mxu0 0.0
      %516 = vmatpush2.msra.mxu0 0.0
      %517 = vmatprep.subr.mxu0 0.0
      %518 = vmatpush2.msra.mxu0 0.0
      %519 = vmatprep.subr.mxu0 0.0
      %520 = vmatpush2.msra.mxu0 0.0
      %521 = vmatprep.subr.mxu0 0.0
      %522 = vmatpush2.msra.mxu0 0.0
      %523 = vmatprep.subr.mxu0 0.0
      %524 = vmatpush2.msra.mxu0 0.0
      %525 = vmatprep.subr.mxu0 0.0
      %526 = vmatpush2.msra.mxu0 0.0
      %527 = vmatprep.subr.mxu0 0.0
      %528 = vmatpush2.msra.mxu0 0.0
      %529 = vmatprep.subr.mxu0 0.0
      %530 = vmatpush2.msra.mxu0 0.0
      %531 = vmatprep.subr.mxu0 0.0
      %532 = vmatpush2.msra.mxu0 0.0
      %533 = vmatprep.subr.mxu0 0.0
      %534 = vmatpush2.msra.mxu0 0.0
      %535 = vmatprep.subr.mxu0 0.0
      %536 = vmatpush2.msra.mxu0 0.0
      %537 = vmatprep.subr.mxu0 0.0
      %538 = vmatpush2.msra.mxu0 0.0
      %539 = vmatprep.subr.mxu0 0.0
      %540 = vmatpush2.msra.mxu0 0.0
      %541 = vmatprep.mubr.f32.mxu0 0.0
      %v542 = vand.u32 %v74, 4294901760
      %543 = vmatmul.mubr.f32.gmra.mxu0 %v542
      %v544 = vpop.f32.mrf.mxu0
      %v545 = vadd.f32 %v471, %v544
      %v546 = vpop.f32.mrf.mxu0
      %547 = vdwg.mxu0
      %vm548 = vcmask 31744
      %549 = vst.msk [vmem:[#allocation3] sm:$0xff] %vm548, %v545
    $region33: #{tpu_custom_call.1} parent=1 // pred_fallthru
      _
    %s550 = smul.u32 0, 16
    loop: start=0, step=1, limit=2
    $region34: #{tpu_custom_call.1} parent=1 // loop_pre_header
      _
    $region35: #{tpu_custom_call.1} parent=1 // loop_header
      %s552 = sphi 0, %s556
      %p553 = scmp.ge.s32.totalorder %s552, 2
    $region36: #{tpu_custom_call.1} parent=1 // loop_header_branch
      %555 = sbr.rel (%p553) target = $region40
    $region37: #{tpu_custom_call.1} parent=1 // loop_body
      %s557 = smul.u32 %s552, 8
      %v558 = vld [vmem:[#allocation2] sm:$0xff]
      %v559 = vld [vmem:[#allocation3] sm:$0xff]
      %v560 = vld [vmem:[#allocation4] sm:$0xff]
      %v561 = vld [vmem:[#allocation5] sm:$0xff]
      %563 = vrot.lane.b32.xlu0 %v559, 24
      %v564 = vpop.permute.xlu0 %563
      %vm566 = vcmask 195584
      %v567 = vsel %vm566, %v558, %v564
      %s568 = smul.u32 %s557, 8
      %s569 = scalar_lea.vmem [#allocation11], %s568
      %vm570 = vcmask 228352
      %571 = vst.msk [vmem:[%s569] sm:$0xff] %vm570, %v567
      %s572 = sadd.s32 %s550, %s557
      %s573 = scvt.s32.f32 %s572
      %s574 = sadd.f32 %s573, 1.0
      %s575 = sadd.f32 %s573, 2.0
      %s576 = scalar_lea.vmem [#allocation9], %s568
      %v577 = vld [vmem:[%s576] sm:$0xff]
      %v579 = vsel %vm566, %v558, 0
      %581 = vmatprep.subr.mxu0 0.0
      %582 = vmatpush1.msra.mxu0 0.0
      %583 = vmatprep.subr.mxu0 0.0
      %584 = vmatpush1.msra.mxu0 0.0
      %585 = vmatprep.subr.mxu0 0.0
      %586 = vmatpush1.msra.mxu0 0.0
      %587 = vmatprep.subr.mxu0 0.0
      %588 = vmatpush1.msra.mxu0 0.0
      %589 = vmatprep.subr.mxu0 0.0
      %590 = vmatpush1.msra.mxu0 0.0
      %591 = vmatprep.subr.mxu0 0.0
      %592 = vmatpush1.msra.mxu0 0.0
      %593 = vmatprep.subr.mxu0 0.0
      %594 = vmatpush1.msra.mxu0 0.0
      %595 = vmatprep.subr.mxu0 0.0
      %596 = vmatpush1.msra.mxu0 0.0
      %597 = vmatprep.subr.mxu0 0.0
      %598 = vmatpush1.msra.mxu0 0.0
      %599 = vmatprep.subr.mxu0 0.0
      %600 = vmatpush1.msra.mxu0 0.0
      %601 = vmatprep.subr.mxu0 0.0
      %602 = vmatpush1.msra.mxu0 0.0
      %603 = vmatprep.subr.mxu0 0.0
      %604 = vmatpush1.msra.mxu0 0.0
      %605 = vmatprep.subr.mxu0 0.0
      %606 = vmatpush1.msra.mxu0 0.0
      %607 = vmatprep.subr.mxu0 0.0
      %v608 = vand.u32 %v49, 4294901760
      %609 = vmatpush1.msra.mxu0 %v608
      %610 = vmatprep.subr.mxu0 0.0
      %v611 = vand.u32 %v48, 4294901760
      %612 = vmatpush1.msra.mxu0 %v611
      %613 = vmatprep.subr.mxu0 0.0
      %v614 = vand.u32 %v47, 4294901760
      %615 = vmatpush1.msra.mxu0 %v614
      %616 = vmatprep.subr.mxu0 0.0
      %617 = vmatpush2.msra.mxu0 0.0
      %618 = vmatprep.subr.mxu0 0.0
      %619 = vmatpush2.msra.mxu0 0.0
      %620 = vmatprep.subr.mxu0 0.0
      %621 = vmatpush2.msra.mxu0 0.0
      %622 = vmatprep.subr.mxu0 0.0
      %623 = vmatpush2.msra.mxu0 0.0
      %624 = vmatprep.subr.mxu0 0.0
      %625 = vmatpush2.msra.mxu0 0.0
      %626 = vmatprep.subr.mxu0 0.0
      %627 = vmatpush2.msra.mxu0 0.0
      %628 = vmatprep.subr.mxu0 0.0
      %629 = vmatpush2.msra.mxu0 0.0
      %630 = vmatprep.subr.mxu0 0.0
      %631 = vmatpush2.msra.mxu0 0.0
      %632 = vmatprep.subr.mxu0 0.0
      %633 = vmatpush2.msra.mxu0 0.0
      %634 = vmatprep.subr.mxu0 0.0
      %635 = vmatpush2.msra.mxu0 0.0
      %636 = vmatprep.subr.mxu0 0.0
      %637 = vmatpush2.msra.mxu0 0.0
      %638 = vmatprep.subr.mxu0 0.0
      %639 = vmatpush2.msra.mxu0 0.0
      %640 = vmatprep.subr.mxu0 0.0
      %641 = vmatpush2.msra.mxu0 0.0
      %642 = vmatprep.subr.mxu0 0.0
      %643 = vmatpush2.msra.mxu0 0.0
      %644 = vmatprep.subr.mxu0 0.0
      %645 = vmatpush2.msra.mxu0 0.0
      %646 = vmatprep.subr.mxu0 0.0
      %647 = vmatpush2.msra.mxu0 0.0
      %648 = vmatprep.mubr.f32.mxu0 0.0
      %v649 = vand.u32 %v579, 4294901760
      %v650 = vsub.f32 %v579, %v649
      %v651 = vand.u32 %v650, 4294901760
      %v652 = vsub.f32 %v650, %v651
      %v653 = vand.u32 %v652, 4294901760
      %654 = vmatmul.mubr.f32.gmra.mxu0 %v653
      %v655 = vpop.f32.mrf.mxu0
      %v656 = vadd.f32 %v577, %v655
      %v657 = vpop.f32.mrf.mxu0
      %658 = vdwg.mxu0
      %659 = vmatprep.subr.mxu0 0.0
      %660 = vmatpush1.msra.mxu0 0.0
      %661 = vmatprep.subr.mxu0 0.0
      %662 = vmatpush1.msra.mxu0 0.0
      %663 = vmatprep.subr.mxu0 0.0
      %664 = vmatpush1.msra.mxu0 0.0
      %665 = vmatprep.subr.mxu0 0.0
      %666 = vmatpush1.msra.mxu0 0.0
      %667 = vmatprep.subr.mxu0 0.0
      %668 = vmatpush1.msra.mxu0 0.0
      %669 = vmatprep.subr.mxu0 0.0
      %670 = vmatpush1.msra.mxu0 0.0
      %671 = vmatprep.subr.mxu0 0.0
      %672 = vmatpush1.msra.mxu0 0.0
      %673 = vmatprep.subr.mxu0 0.0
      %674 = vmatpush1.msra.mxu0 0.0
      %675 = vmatprep.subr.mxu0 0.0
      %676 = vmatpush1.msra.mxu0 0.0
      %677 = vmatprep.subr.mxu0 0.0
      %678 = vmatpush1.msra.mxu0 0.0
      %679 = vmatprep.subr.mxu0 0.0
      %680 = vmatpush1.msra.mxu0 0.0
      %681 = vmatprep.subr.mxu0 0.0
      %682 = vmatpush1.msra.mxu0 0.0
      %683 = vmatprep.subr.mxu0 0.0
      %684 = vmatpush1.msra.mxu0 0.0
      %685 = vmatprep.subr.mxu0 0.0
      %v686 = vand.u32 %v49, 4294901760
      %v687 = vsub.f32 %v49, %v686
      %v688 = vand.u32 %v687, 4294901760
      %v689 = vsub.f32 %v687, %v688
      %v690 = vand.u32 %v689, 4294901760
      %691 = vmatpush1.msra.mxu0 %v690
      %692 = vmatprep.subr.mxu0 0.0
      %v693 = vand.u32 %v48, 4294901760
      %v694 = vsub.f32 %v48, %v693
      %v695 = vand.u32 %v694, 4294901760
      %v696 = vsub.f32 %v694, %v695
      %v697 = vand.u32 %v696, 4294901760
      %698 = vmatpush1.msra.mxu0 %v697
      %699 = vmatprep.subr.mxu0 0.0
      %v700 = vand.u32 %v47, 4294901760
      %v701 = vsub.f32 %v47, %v700
      %v702 = vand.u32 %v701, 4294901760
      %v703 = vsub.f32 %v701, %v702
      %v704 = vand.u32 %v703, 4294901760
      %705 = vmatpush1.msra.mxu0 %v704
      %706 = vmatprep.subr.mxu0 0.0
      %707 = vmatpush2.msra.mxu0 0.0
      %708 = vmatprep.subr.mxu0 0.0
      %709 = vmatpush2.msra.mxu0 0.0
      %710 = vmatprep.subr.mxu0 0.0
      %711 = vmatpush2.msra.mxu0 0.0
      %712 = vmatprep.subr.mxu0 0.0
      %713 = vmatpush2.msra.mxu0 0.0
      %714 = vmatprep.subr.mxu0 0.0
      %715 = vmatpush2.msra.mxu0 0.0
      %716 = vmatprep.subr.mxu0 0.0
      %717 = vmatpush2.msra.mxu0 0.0
      %718 = vmatprep.subr.mxu0 0.0
      %719 = vmatpush2.msra.mxu0 0.0
      %720 = vmatprep.subr.mxu0 0.0
      %721 = vmatpush2.msra.mxu0 0.0
      %722 = vmatprep.subr.mxu0 0.0
      %723 = vmatpush2.msra.mxu0 0.0
      %724 = vmatprep.subr.mxu0 0.0
      %725 = vmatpush2.msra.mxu0 0.0
      %726 = vmatprep.subr.mxu0 0.0
      %727 = vmatpush2.msra.mxu0 0.0
      %728 = vmatprep.subr.mxu0 0.0
      %729 = vmatpush2.msra.mxu0 0.0
      %730 = vmatprep.subr.mxu0 0.0
      %731 = vmatpush2.msra.mxu0 0.0
      %732 = vmatprep.subr.mxu0 0.0
      %733 = vmatpush2.msra.mxu0 0.0
      %734 = vmatprep.subr.mxu0 0.0
      %735 = vmatpush2.msra.mxu0 0.0
      %736 = vmatprep.subr.mxu0 0.0
      %737 = vmatpush2.msra.mxu0 0.0
      %738 = vmatprep.mubr.f32.mxu0 0.0
      %v739 = vand.u32 %v579, 4294901760
      %740 = vmatmul.mubr.f32.gmra.mxu0 %v739
      %v741 = vpop.f32.mrf.mxu0
      %v742 = vadd.f32 %v656, %v741
      %v743 = vpop.f32.mrf.mxu0
      %744 = vdwg.mxu0
      %745 = vmatprep.subr.mxu0 0.0
      %746 = vmatpush1.msra.mxu0 0.0
      %747 = vmatprep.subr.mxu0 0.0
      %748 = vmatpush1.msra.mxu0 0.0
      %749 = vmatprep.subr.mxu0 0.0
      %750 = vmatpush1.msra.mxu0 0.0
      %751 = vmatprep.subr.mxu0 0.0
      %752 = vmatpush1.msra.mxu0 0.0
      %753 = vmatprep.subr.mxu0 0.0
      %754 = vmatpush1.msra.mxu0 0.0
      %755 = vmatprep.subr.mxu0 0.0
      %756 = vmatpush1.msra.mxu0 0.0
      %757 = vmatprep.subr.mxu0 0.0
      %758 = vmatpush1.msra.mxu0 0.0
      %759 = vmatprep.subr.mxu0 0.0
      %760 = vmatpush1.msra.mxu0 0.0
      %761 = vmatprep.subr.mxu0 0.0
      %762 = vmatpush1.msra.mxu0 0.0
      %763 = vmatprep.subr.mxu0 0.0
      %764 = vmatpush1.msra.mxu0 0.0
      %765 = vmatprep.subr.mxu0 0.0
      %766 = vmatpush1.msra.mxu0 0.0
      %767 = vmatprep.subr.mxu0 0.0
      %768 = vmatpush1.msra.mxu0 0.0
      %769 = vmatprep.subr.mxu0 0.0
      %770 = vmatpush1.msra.mxu0 0.0
      %771 = vmatprep.subr.mxu0 0.0
      %v772 = vand.u32 %v49, 4294901760
      %v773 = vsub.f32 %v49, %v772
      %774 = vmatpush1.msra.mxu0 %v773
      %775 = vmatprep.subr.mxu0 0.0
      %v776 = vand.u32 %v48, 4294901760
      %v777 = vsub.f32 %v48, %v776
      %778 = vmatpush1.msra.mxu0 %v777
      %779 = vmatprep.subr.mxu0 0.0
      %v780 = vand.u32 %v47, 4294901760
      %v781 = vsub.f32 %v47, %v780
      %782 = vmatpush1.msra.mxu0 %v781
      %783 = vmatprep.subr.mxu0 0.0
      %784 = vmatpush2.msra.mxu0 0.0
      %785 = vmatprep.subr.mxu0 0.0
      %786 = vmatpush2.msra.mxu0 0.0
      %787 = vmatprep.subr.mxu0 0.0
      %788 = vmatpush2.msra.mxu0 0.0
      %789 = vmatprep.subr.mxu0 0.0
      %790 = vmatpush2.msra.mxu0 0.0
      %791 = vmatprep.subr.mxu0 0.0
      %792 = vmatpush2.msra.mxu0 0.0
      %793 = vmatprep.subr.mxu0 0.0
      %794 = vmatpush2.msra.mxu0 0.0
      %795 = vmatprep.subr.mxu0 0.0
      %796 = vmatpush2.msra.mxu0 0.0
      %797 = vmatprep.subr.mxu0 0.0
      %798 = vmatpush2.msra.mxu0 0.0
      %799 = vmatprep.subr.mxu0 0.0
      %800 = vmatpush2.msra.mxu0 0.0
      %801 = vmatprep.subr.mxu0 0.0
      %802 = vmatpush2.msra.mxu0 0.0
      %803 = vmatprep.subr.mxu0 0.0
      %804 = vmatpush2.msra.mxu0 0.0
      %805 = vmatprep.subr.mxu0 0.0
      %806 = vmatpush2.msra.mxu0 0.0
      %807 = vmatprep.subr.mxu0 0.0
      %808 = vmatpush2.msra.mxu0 0.0
      %809 = vmatprep.subr.mxu0 0.0
      %810 = vmatpush2.msra.mxu0 0.0
      %811 = vmatprep.subr.mxu0 0.0
      %812 = vmatpush2.msra.mxu0 0.0
      %813 = vmatprep.subr.mxu0 0.0
      %814 = vmatpush2.msra.mxu0 0.0
      %815 = vmatprep.mubr.f32.mxu0 0.0
      %v816 = vand.u32 %v579, 4294901760
      %v817 = vsub.f32 %v579, %v816
      %818 = vmatmul.mubr.f32.gmra.mxu0 %v817
      %v819 = vpop.f32.mrf.mxu0
      %v820 = vadd.f32 %v742, %v819
      %v821 = vpop.f32.mrf.mxu0
      %822 = vdwg.mxu0
      %823 = vmatprep.subr.mxu0 0.0
      %824 = vmatpush1.msra.mxu0 0.0
      %825 = vmatprep.subr.mxu0 0.0
      %826 = vmatpush1.msra.mxu0 0.0
      %827 = vmatprep.subr.mxu0 0.0
      %828 = vmatpush1.msra.mxu0 0.0
      %829 = vmatprep.subr.mxu0 0.0
      %830 = vmatpush1.msra.mxu0 0.0
      %831 = vmatprep.subr.mxu0 0.0
      %832 = vmatpush1.msra.mxu0 0.0
      %833 = vmatprep.subr.mxu0 0.0
      %834 = vmatpush1.msra.mxu0 0.0
      %835 = vmatprep.subr.mxu0 0.0
      %836 = vmatpush1.msra.mxu0 0.0
      %837 = vmatprep.subr.mxu0 0.0
      %838 = vmatpush1.msra.mxu0 0.0
      %839 = vmatprep.subr.mxu0 0.0
      %840 = vmatpush1.msra.mxu0 0.0
      %841 = vmatprep.subr.mxu0 0.0
      %842 = vmatpush1.msra.mxu0 0.0
      %843 = vmatprep.subr.mxu0 0.0
      %844 = vmatpush1.msra.mxu0 0.0
      %845 = vmatprep.subr.mxu0 0.0
      %846 = vmatpush1.msra.mxu0 0.0
      %847 = vmatprep.subr.mxu0 0.0
      %848 = vmatpush1.msra.mxu0 0.0
      %849 = vmatprep.subr.mxu0 0.0
      %v850 = vand.u32 %v49, 4294901760
      %851 = vmatpush1.msra.mxu0 %v850
      %852 = vmatprep.subr.mxu0 0.0
      %v853 = vand.u32 %v48, 4294901760
      %854 = vmatpush1.msra.mxu0 %v853
      %855 = vmatprep.subr.mxu0 0.0
      %v856 = vand.u32 %v47, 4294901760
      %857 = vmatpush1.msra.mxu0 %v856
      %858 = vmatprep.subr.mxu0 0.0
      %859 = vmatpush2.msra.mxu0 0.0
      %860 = vmatprep.subr.mxu0 0.0
      %861 = vmatpush2.msra.mxu0 0.0
      %862 = vmatprep.subr.mxu0 0.0
      %863 = vmatpush2.msra.mxu0 0.0
      %864 = vmatprep.subr.mxu0 0.0
      %865 = vmatpush2.msra.mxu0 0.0
      %866 = vmatprep.subr.mxu0 0.0
      %867 = vmatpush2.msra.mxu0 0.0
      %868 = vmatprep.subr.mxu0 0.0
      %869 = vmatpush2.msra.mxu0 0.0
      %870 = vmatprep.subr.mxu0 0.0
      %871 = vmatpush2.msra.mxu0 0.0
      %872 = vmatprep.subr.mxu0 0.0
      %873 = vmatpush2.msra.mxu0 0.0
      %874 = vmatprep.subr.mxu0 0.0
      %875 = vmatpush2.msra.mxu0 0.0
      %876 = vmatprep.subr.mxu0 0.0
      %877 = vmatpush2.msra.mxu0 0.0
      %878 = vmatprep.subr.mxu0 0.0
      %879 = vmatpush2.msra.mxu0 0.0
      %880 = vmatprep.subr.mxu0 0.0
      %881 = vmatpush2.msra.mxu0 0.0
      %882 = vmatprep.subr.mxu0 0.0
      %883 = vmatpush2.msra.mxu0 0.0
      %884 = vmatprep.subr.mxu0 0.0
      %885 = vmatpush2.msra.mxu0 0.0
      %886 = vmatprep.subr.mxu0 0.0
      %887 = vmatpush2.msra.mxu0 0.0
      %888 = vmatprep.subr.mxu0 0.0
      %889 = vmatpush2.msra.mxu0 0.0
      %890 = vmatprep.mubr.f32.mxu0 0.0
      %v891 = vand.u32 %v579, 4294901760
      %v892 = vsub.f32 %v579, %v891
      %v893 = vand.u32 %v892, 4294901760
      %894 = vmatmul.mubr.f32.gmra.mxu0 %v893
      %v895 = vpop.f32.mrf.mxu0
      %v896 = vadd.f32 %v820, %v895
      %v897 = vpop.f32.mrf.mxu0
      %898 = vdwg.mxu0
      %899 = vmatprep.subr.mxu0 0.0
      %900 = vmatpush1.msra.mxu0 0.0
      %901 = vmatprep.subr.mxu0 0.0
      %902 = vmatpush1.msra.mxu0 0.0
      %903 = vmatprep.subr.mxu0 0.0
      %904 = vmatpush1.msra.mxu0 0.0
      %905 = vmatprep.subr.mxu0 0.0
      %906 = vmatpush1.msra.mxu0 0.0
      %907 = vmatprep.subr.mxu0 0.0
      %908 = vmatpush1.msra.mxu0 0.0
      %909 = vmatprep.subr.mxu0 0.0
      %910 = vmatpush1.msra.mxu0 0.0
      %911 = vmatprep.subr.mxu0 0.0
      %912 = vmatpush1.msra.mxu0 0.0
      %913 = vmatprep.subr.mxu0 0.0
      %914 = vmatpush1.msra.mxu0 0.0
      %915 = vmatprep.subr.mxu0 0.0
      %916 = vmatpush1.msra.mxu0 0.0
      %917 = vmatprep.subr.mxu0 0.0
      %918 = vmatpush1.msra.mxu0 0.0
      %919 = vmatprep.subr.mxu0 0.0
      %920 = vmatpush1.msra.mxu0 0.0
      %921 = vmatprep.subr.mxu0 0.0
      %922 = vmatpush1.msra.mxu0 0.0
      %923 = vmatprep.subr.mxu0 0.0
      %924 = vmatpush1.msra.mxu0 0.0
      %925 = vmatprep.subr.mxu0 0.0
      %v926 = vand.u32 %v49, 4294901760
      %v927 = vsub.f32 %v49, %v926
      %v928 = vand.u32 %v927, 4294901760
      %929 = vmatpush1.msra.mxu0 %v928
      %930 = vmatprep.subr.mxu0 0.0
      %v931 = vand.u32 %v48, 4294901760
      %v932 = vsub.f32 %v48, %v931
      %v933 = vand.u32 %v932, 4294901760
      %934 = vmatpush1.msra.mxu0 %v933
      %935 = vmatprep.subr.mxu0 0.0
      %v936 = vand.u32 %v47, 4294901760
      %v937 = vsub.f32 %v47, %v936
      %v938 = vand.u32 %v937, 4294901760
      %939 = vmatpush1.msra.mxu0 %v938
      %940 = vmatprep.subr.mxu0 0.0
      %941 = vmatpush2.msra.mxu0 0.0
      %942 = vmatprep.subr.mxu0 0.0
      %943 = vmatpush2.msra.mxu0 0.0
      %944 = vmatprep.subr.mxu0 0.0
      %945 = vmatpush2.msra.mxu0 0.0
      %946 = vmatprep.subr.mxu0 0.0
      %947 = vmatpush2.msra.mxu0 0.0
      %948 = vmatprep.subr.mxu0 0.0
      %949 = vmatpush2.msra.mxu0 0.0
      %950 = vmatprep.subr.mxu0 0.0
      %951 = vmatpush2.msra.mxu0 0.0
      %952 = vmatprep.subr.mxu0 0.0
      %953 = vmatpush2.msra.mxu0 0.0
      %954 = vmatprep.subr.mxu0 0.0
      %955 = vmatpush2.msra.mxu0 0.0
      %956 = vmatprep.subr.mxu0 0.0
      %957 = vmatpush2.msra.mxu0 0.0
      %958 = vmatprep.subr.mxu0 0.0
      %959 = vmatpush2.msra.mxu0 0.0
      %960 = vmatprep.subr.mxu0 0.0
      %961 = vmatpush2.msra.mxu0 0.0
      %962 = vmatprep.subr.mxu0 0.0
      %963 = vmatpush2.msra.mxu0 0.0
      %964 = vmatprep.subr.mxu0 0.0
      %965 = vmatpush2.msra.mxu0 0.0
      %966 = vmatprep.subr.mxu0 0.0
      %967 = vmatpush2.msra.mxu0 0.0
      %968 = vmatprep.subr.mxu0 0.0
      %969 = vmatpush2.msra.mxu0 0.0
      %970 = vmatprep.subr.mxu0 0.0
      %971 = vmatpush2.msra.mxu0 0.0
      %972 = vmatprep.mubr.f32.mxu0 0.0
      %v973 = vand.u32 %v579, 4294901760
      %974 = vmatmul.mubr.f32.gmra.mxu0 %v973
      %v975 = vpop.f32.mrf.mxu0
      %v976 = vadd.f32 %v896, %v975
      %v977 = vpop.f32.mrf.mxu0
      %978 = vdwg.mxu0
      %979 = vmatprep.subr.mxu0 0.0
      %980 = vmatpush1.msra.mxu0 0.0
      %981 = vmatprep.subr.mxu0 0.0
      %982 = vmatpush1.msra.mxu0 0.0
      %983 = vmatprep.subr.mxu0 0.0
      %984 = vmatpush1.msra.mxu0 0.0
      %985 = vmatprep.subr.mxu0 0.0
      %986 = vmatpush1.msra.mxu0 0.0
      %987 = vmatprep.subr.mxu0 0.0
      %988 = vmatpush1.msra.mxu0 0.0
      %989 = vmatprep.subr.mxu0 0.0
      %990 = vmatpush1.msra.mxu0 0.0
      %991 = vmatprep.subr.mxu0 0.0
      %992 = vmatpush1.msra.mxu0 0.0
      %993 = vmatprep.subr.mxu0 0.0
      %994 = vmatpush1.msra.mxu0 0.0
      %995 = vmatprep.subr.mxu0 0.0
      %996 = vmatpush1.msra.mxu0 0.0
      %997 = vmatprep.subr.mxu0 0.0
      %998 = vmatpush1.msra.mxu0 0.0
      %999 = vmatprep.subr.mxu0 0.0
      %1000 = vmatpush1.msra.mxu0 0.0
      %1001 = vmatprep.subr.mxu0 0.0
      %1002 = vmatpush1.msra.mxu0 0.0
      %1003 = vmatprep.subr.mxu0 0.0
      %1004 = vmatpush1.msra.mxu0 0.0
      %1005 = vmatprep.subr.mxu0 0.0
      %v1006 = vand.u32 %v49, 4294901760
      %1007 = vmatpush1.msra.mxu0 %v1006
      %1008 = vmatprep.subr.mxu0 0.0
      %v1009 = vand.u32 %v48, 4294901760
      %1010 = vmatpush1.msra.mxu0 %v1009
      %1011 = vmatprep.subr.mxu0 0.0
      %v1012 = vand.u32 %v47, 4294901760
      %1013 = vmatpush1.msra.mxu0 %v1012
      %1014 = vmatprep.subr.mxu0 0.0
      %1015 = vmatpush2.msra.mxu0 0.0
      %1016 = vmatprep.subr.mxu0 0.0
      %1017 = vmatpush2.msra.mxu0 0.0
      %1018 = vmatprep.subr.mxu0 0.0
      %1019 = vmatpush2.msra.mxu0 0.0
      %1020 = vmatprep.subr.mxu0 0.0
      %1021 = vmatpush2.msra.mxu0 0.0
      %1022 = vmatprep.subr.mxu0 0.0
      %1023 = vmatpush2.msra.mxu0 0.0
      %1024 = vmatprep.subr.mxu0 0.0
      %1025 = vmatpush2.msra.mxu0 0.0
      %1026 = vmatprep.subr.mxu0 0.0
      %1027 = vmatpush2.msra.mxu0 0.0
      %1028 = vmatprep.subr.mxu0 0.0
      %1029 = vmatpush2.msra.mxu0 0.0
      %1030 = vmatprep.subr.mxu0 0.0
      %1031 = vmatpush2.msra.mxu0 0.0
      %1032 = vmatprep.subr.mxu0 0.0
      %1033 = vmatpush2.msra.mxu0 0.0
      %1034 = vmatprep.subr.mxu0 0.0
      %1035 = vmatpush2.msra.mxu0 0.0
      %1036 = vmatprep.subr.mxu0 0.0
      %1037 = vmatpush2.msra.mxu0 0.0
      %1038 = vmatprep.subr.mxu0 0.0
      %1039 = vmatpush2.msra.mxu0 0.0
      %1040 = vmatprep.subr.mxu0 0.0
      %1041 = vmatpush2.msra.mxu0 0.0
      %1042 = vmatprep.subr.mxu0 0.0
      %1043 = vmatpush2.msra.mxu0 0.0
      %1044 = vmatprep.subr.mxu0 0.0
      %1045 = vmatpush2.msra.mxu0 0.0
      %1046 = vmatprep.mubr.f32.mxu0 0.0
      %v1047 = vand.u32 %v579, 4294901760
      %1048 = vmatmul.mubr.f32.gmra.mxu0 %v1047
      %v1049 = vpop.f32.mrf.mxu0
      %v1050 = vadd.f32 %v976, %v1049
      %v1051 = vpop.f32.mrf.mxu0
      %1052 = vdwg.mxu0
      %v1053 = vrcp.pop %v561
      %v1054 = vmul.f32 1.0, %v1053
      %1056 = vrot.lane.b32.xlu0 %v560, 16
      %v1057 = vpop.permute.xlu0 %1056
      %v1059 = vsub.f32 %v558, %v1057
      %v1060 = vadd.f32 %v1054, 1.0
      %v1061 = vmul.f32 %v1050, 0.5
      %1063 = vrot.lane.b32.xlu0 %v1060, 16
      %v1064 = vpop.permute.xlu0 %1063
      %v1066 = vmul.f32 %v1061, %v1064
      %v1067 = vadd.f32 %v1059, %v1066
      %v1068 = vmul.f32 %v1050, %v1067
      %v1069 = vsub.f32 1.0, %v1054
      %1071 = vrot.lane.b32.xlu0 %v1069, 16
      %v1072 = vpop.permute.xlu0 %1071
      %v1074 = vmul.f32 %v1068, %v1072
      %v1075 = vmul.f32 %v561, %v561
      %v1076 = vstv %s574
      %v1077 = vrcp.pop %v1076
      %s1078 = vtos %v1077
      %s1079 = smul.f32 %s575, %s1078
      %v1080 = vstv %s1079
      %v1081 = vsub.f32 %v1075, %v1080
      %v1082 = vstv %s575
      %v1083 = vmul.f32 %v1082, %v1081
      %v1084 = vmul.f32 %v1050, %v1064
      %v1085 = vadd.f32 %v1059, %v1084
      %v1086 = vmul.f32 %v1061, %v1050
      %v1087 = vmul.f32 %v1054, %v1054
      %v1088 = vadd.f32 %v1087, 1.0
      %1090 = vrot.lane.b32.xlu0 %v1088, 16
      %v1091 = vpop.permute.xlu0 %1090
      %v1093 = vmul.f32 %v1086, %v1091
      %v1094 = vadd.f32 %v1085, %v1093
      %v1095 = vmul.f32 %v1059, %v1094
      %1097 = vrot.lane.b32.xlu0 %v1095, 112
      %v1098 = vpop.permute.xlu0 %1097
      %v1100 = vadd.f32 %v1083, %v1098
      %1102 = vrot.lane.b32.xlu0 %v1074, 112
      %v1103 = vpop.permute.xlu0 %1102
      %vm1105 = vcmp.ge.f32.partialorder %v1100, %v1103
      %vm1106 = vcmp.ge.f32.partialorder %v1074, 0.0
      %v1107 = vsel %vm1106, 1, 0
      %1108 = vrot.lane.b32.xlu0 %v1107, 112
      %v1109 = vpop.permute.xlu0 %1108
      %vm1110 = vcmp.ne.s32.totalorder %v1109, 0
      %vm1111 = vmand %vm1105, %vm1110
      %vm1112 = vcmp.lt.f32.partialorder %v1100, %v1103
      %vm1113 = vcmp.lt.f32.partialorder %v1074, 0.0
      %v1114 = vsel %vm1113, 1, 0
      %1115 = vrot.lane.b32.xlu0 %v1114, 112
      %v1116 = vpop.permute.xlu0 %1115
      %vm1117 = vcmp.ne.s32.totalorder %v1116, 0
      %vm1118 = vmand %vm1112, %vm1117
      %1120 = vrot.lane.b32.xlu0 %v1100, 16
      %v1121 = vpop.permute.xlu0 %1120
      %vm1123 = vcmp.lt.f32.partialorder %v1074, %v1121
      %vm1124 = vcmp.lt.f32.partialorder %v1100, 0.0
      %v1125 = vsel %vm1124, 1, 0
      %1126 = vrot.lane.b32.xlu0 %v1125, 16
      %v1127 = vpop.permute.xlu0 %1126
      %vm1128 = vcmp.ne.s32.totalorder %v1127, 0
      %vm1129 = vmand %vm1123, %vm1128
      %v1130 = vmul.f32 %v1074, %v1074
      %v1131 = vmul.f32 %v1100, %v1100
      %1133 = vrot.lane.b32.xlu0 %v1131, 16
      %v1134 = vpop.permute.xlu0 %1133
      %v1136 = vsub.f32 %v1130, %v1134
      %s1137 = smul.f32 %s575, 2.0
      %s1138 = smul.f32 %s1137, %s575
      %v1139 = vstv %s574
      %v1140 = vrcp.pop %v1139
      %s1141 = vtos %v1140
      %s1142 = smul.f32 %s1138, %s1141
      %v1143 = vstv %s1142
      %v1144 = vmul.f32 %v1143, %v1100
      %1146 = vrot.lane.b32.xlu0 %v1136, 112
      %v1147 = vpop.permute.xlu0 %1146
      %vm1149 = vcmp.ge.f32.partialorder %v1144, %v1147
      %vm1150 = vcmp.gt.f32.partialorder %v1136, 0.0
      %v1151 = vsel %vm1150, 1, 0
      %1152 = vrot.lane.b32.xlu0 %v1151, 112
      %v1153 = vpop.permute.xlu0 %1152
      %vm1154 = vcmp.ne.s32.totalorder %v1153, 0
      %vm1155 = vmand %vm1149, %vm1154
      %vm1156 = vmor %vm1111, %vm1118
      %v1157 = vsel %vm1129, 1, 0
      %1158 = vrot.lane.b32.xlu0 %v1157, 112
      %v1159 = vpop.permute.xlu0 %1158
      %vm1160 = vcmp.ne.s32.totalorder %v1159, 0
      %vm1161 = vmor %vm1156, %vm1160
      %vm1162 = vmor %vm1161, %vm1155
      %v1163 = vsel %vm1162, %v1054, 1.0
      %1165 = vrot.lane.b32.xlu0 %v1163, 16
      %v1166 = vpop.permute.xlu0 %1165
      %v1168 = vmul.f32 %v1050, %v1166
      %v1169 = vadd.f32 %v558, %v1168
      %v1170 = vadd.f32 %v558, %v1050
      %vm1171 = vcmask 130048
      %v1172 = vsel %vm1171, %v1170, %v1169
      %v1174 = vlaneseq
      %v1175 = vshrl.u32 %v1174, 7
      %v1176 = vsub.s32 0, %v1175
      %v1177 = vrot.slane %v53, %v1176
      %v1180 = vsel %vm566, %v1172, 0
      %1182 = vmatprep.subr.mxu0 0.0
      %1183 = vmatpush1.msra.mxu0 0.0
      %1184 = vmatprep.subr.mxu0 0.0
      %1185 = vmatpush1.msra.mxu0 0.0
      %1186 = vmatprep.subr.mxu0 0.0
      %1187 = vmatpush1.msra.mxu0 0.0
      %1188 = vmatprep.subr.mxu0 0.0
      %1189 = vmatpush1.msra.mxu0 0.0
      %1190 = vmatprep.subr.mxu0 0.0
      %1191 = vmatpush1.msra.mxu0 0.0
      %1192 = vmatprep.subr.mxu0 0.0
      %1193 = vmatpush1.msra.mxu0 0.0
      %1194 = vmatprep.subr.mxu0 0.0
      %1195 = vmatpush1.msra.mxu0 0.0
      %1196 = vmatprep.subr.mxu0 0.0
      %1197 = vmatpush1.msra.mxu0 0.0
      %1198 = vmatprep.subr.mxu0 0.0
      %1199 = vmatpush1.msra.mxu0 0.0
      %1200 = vmatprep.subr.mxu0 0.0
      %1201 = vmatpush1.msra.mxu0 0.0
      %1202 = vmatprep.subr.mxu0 0.0
      %1203 = vmatpush1.msra.mxu0 0.0
      %1204 = vmatprep.subr.mxu0 0.0
      %1205 = vmatpush1.msra.mxu0 0.0
      %1206 = vmatprep.subr.mxu0 0.0
      %1207 = vmatpush1.msra.mxu0 0.0
      %1208 = vmatprep.subr.mxu0 0.0
      %v1209 = vand.u32 %v52, 4294901760
      %1210 = vmatpush1.msra.mxu0 %v1209
      %1211 = vmatprep.subr.mxu0 0.0
      %v1212 = vand.u32 %v51, 4294901760
      %1213 = vmatpush1.msra.mxu0 %v1212
      %1214 = vmatprep.subr.mxu0 0.0
      %v1215 = vand.u32 %v50, 4294901760
      %1216 = vmatpush1.msra.mxu0 %v1215
      %1217 = vmatprep.subr.mxu0 0.0
      %1218 = vmatpush2.msra.mxu0 0.0
      %1219 = vmatprep.subr.mxu0 0.0
      %1220 = vmatpush2.msra.mxu0 0.0
      %1221 = vmatprep.subr.mxu0 0.0
      %1222 = vmatpush2.msra.mxu0 0.0
      %1223 = vmatprep.subr.mxu0 0.0
      %1224 = vmatpush2.msra.mxu0 0.0
      %1225 = vmatprep.subr.mxu0 0.0
      %1226 = vmatpush2.msra.mxu0 0.0
      %1227 = vmatprep.subr.mxu0 0.0
      %1228 = vmatpush2.msra.mxu0 0.0
      %1229 = vmatprep.subr.mxu0 0.0
      %1230 = vmatpush2.msra.mxu0 0.0
      %1231 = vmatprep.subr.mxu0 0.0
      %1232 = vmatpush2.msra.mxu0 0.0
      %1233 = vmatprep.subr.mxu0 0.0
      %1234 = vmatpush2.msra.mxu0 0.0
      %1235 = vmatprep.subr.mxu0 0.0
      %1236 = vmatpush2.msra.mxu0 0.0
      %1237 = vmatprep.subr.mxu0 0.0
      %1238 = vmatpush2.msra.mxu0 0.0
      %1239 = vmatprep.subr.mxu0 0.0
      %1240 = vmatpush2.msra.mxu0 0.0
      %1241 = vmatprep.subr.mxu0 0.0
      %1242 = vmatpush2.msra.mxu0 0.0
      %1243 = vmatprep.subr.mxu0 0.0
      %1244 = vmatpush2.msra.mxu0 0.0
      %1245 = vmatprep.subr.mxu0 0.0
      %1246 = vmatpush2.msra.mxu0 0.0
      %1247 = vmatprep.subr.mxu0 0.0
      %1248 = vmatpush2.msra.mxu0 0.0
      %1249 = vmatprep.mubr.f32.mxu0 0.0
      %v1250 = vand.u32 %v1180, 4294901760
      %v1251 = vsub.f32 %v1180, %v1250
      %v1252 = vand.u32 %v1251, 4294901760
      %v1253 = vsub.f32 %v1251, %v1252
      %v1254 = vand.u32 %v1253, 4294901760
      %1255 = vmatmul.mubr.f32.gmra.mxu0 %v1254
      %v1256 = vpop.f32.mrf.mxu0
      %v1257 = vadd.f32 %v1177, %v1256
      %v1258 = vpop.f32.mrf.mxu0
      %1259 = vdwg.mxu0
      %1260 = vmatprep.subr.mxu0 0.0
      %1261 = vmatpush1.msra.mxu0 0.0
      %1262 = vmatprep.subr.mxu0 0.0
      %1263 = vmatpush1.msra.mxu0 0.0
      %1264 = vmatprep.subr.mxu0 0.0
      %1265 = vmatpush1.msra.mxu0 0.0
      %1266 = vmatprep.subr.mxu0 0.0
      %1267 = vmatpush1.msra.mxu0 0.0
      %1268 = vmatprep.subr.mxu0 0.0
      %1269 = vmatpush1.msra.mxu0 0.0
      %1270 = vmatprep.subr.mxu0 0.0
      %1271 = vmatpush1.msra.mxu0 0.0
      %1272 = vmatprep.subr.mxu0 0.0
      %1273 = vmatpush1.msra.mxu0 0.0
      %1274 = vmatprep.subr.mxu0 0.0
      %1275 = vmatpush1.msra.mxu0 0.0
      %1276 = vmatprep.subr.mxu0 0.0
      %1277 = vmatpush1.msra.mxu0 0.0
      %1278 = vmatprep.subr.mxu0 0.0
      %1279 = vmatpush1.msra.mxu0 0.0
      %1280 = vmatprep.subr.mxu0 0.0
      %1281 = vmatpush1.msra.mxu0 0.0
      %1282 = vmatprep.subr.mxu0 0.0
      %1283 = vmatpush1.msra.mxu0 0.0
      %1284 = vmatprep.subr.mxu0 0.0
      %1285 = vmatpush1.msra.mxu0 0.0
      %1286 = vmatprep.subr.mxu0 0.0
      %v1287 = vand.u32 %v52, 4294901760
      %v1288 = vsub.f32 %v52, %v1287
      %v1289 = vand.u32 %v1288, 4294901760
      %v1290 = vsub.f32 %v1288, %v1289
      %v1291 = vand.u32 %v1290, 4294901760
      %1292 = vmatpush1.msra.mxu0 %v1291
      %1293 = vmatprep.subr.mxu0 0.0
      %v1294 = vand.u32 %v51, 4294901760
      %v1295 = vsub.f32 %v51, %v1294
      %v1296 = vand.u32 %v1295, 4294901760
      %v1297 = vsub.f32 %v1295, %v1296
      %v1298 = vand.u32 %v1297, 4294901760
      %1299 = vmatpush1.msra.mxu0 %v1298
      %1300 = vmatprep.subr.mxu0 0.0
      %v1301 = vand.u32 %v50, 4294901760
      %v1302 = vsub.f32 %v50, %v1301
      %v1303 = vand.u32 %v1302, 4294901760
      %v1304 = vsub.f32 %v1302, %v1303
      %v1305 = vand.u32 %v1304, 4294901760
      %1306 = vmatpush1.msra.mxu0 %v1305
      %1307 = vmatprep.subr.mxu0 0.0
      %1308 = vmatpush2.msra.mxu0 0.0
      %1309 = vmatprep.subr.mxu0 0.0
      %1310 = vmatpush2.msra.mxu0 0.0
      %1311 = vmatprep.subr.mxu0 0.0
      %1312 = vmatpush2.msra.mxu0 0.0
      %1313 = vmatprep.subr.mxu0 0.0
      %1314 = vmatpush2.msra.mxu0 0.0
      %1315 = vmatprep.subr.mxu0 0.0
      %1316 = vmatpush2.msra.mxu0 0.0
      %1317 = vmatprep.subr.mxu0 0.0
      %1318 = vmatpush2.msra.mxu0 0.0
      %1319 = vmatprep.subr.mxu0 0.0
      %1320 = vmatpush2.msra.mxu0 0.0
      %1321 = vmatprep.subr.mxu0 0.0
      %1322 = vmatpush2.msra.mxu0 0.0
      %1323 = vmatprep.subr.mxu0 0.0
      %1324 = vmatpush2.msra.mxu0 0.0
      %1325 = vmatprep.subr.mxu0 0.0
      %1326 = vmatpush2.msra.mxu0 0.0
      %1327 = vmatprep.subr.mxu0 0.0
      %1328 = vmatpush2.msra.mxu0 0.0
      %1329 = vmatprep.subr.mxu0 0.0
      %1330 = vmatpush2.msra.mxu0 0.0
      %1331 = vmatprep.subr.mxu0 0.0
      %1332 = vmatpush2.msra.mxu0 0.0
      %1333 = vmatprep.subr.mxu0 0.0
      %1334 = vmatpush2.msra.mxu0 0.0
      %1335 = vmatprep.subr.mxu0 0.0
      %1336 = vmatpush2.msra.mxu0 0.0
      %1337 = vmatprep.subr.mxu0 0.0
      %1338 = vmatpush2.msra.mxu0 0.0
      %1339 = vmatprep.mubr.f32.mxu0 0.0
      %v1340 = vand.u32 %v1180, 4294901760
      %1341 = vmatmul.mubr.f32.gmra.mxu0 %v1340
      %v1342 = vpop.f32.mrf.mxu0
      %v1343 = vadd.f32 %v1257, %v1342
      %v1344 = vpop.f32.mrf.mxu0
      %1345 = vdwg.mxu0
      %1346 = vmatprep.subr.mxu0 0.0
      %1347 = vmatpush1.msra.mxu0 0.0
      %1348 = vmatprep.subr.mxu0 0.0
      %1349 = vmatpush1.msra.mxu0 0.0
      %1350 = vmatprep.subr.mxu0 0.0
      %1351 = vmatpush1.msra.mxu0 0.0
      %1352 = vmatprep.subr.mxu0 0.0
      %1353 = vmatpush1.msra.mxu0 0.0
      %1354 = vmatprep.subr.mxu0 0.0
      %1355 = vmatpush1.msra.mxu0 0.0
      %1356 = vmatprep.subr.mxu0 0.0
      %1357 = vmatpush1.msra.mxu0 0.0
      %1358 = vmatprep.subr.mxu0 0.0
      %1359 = vmatpush1.msra.mxu0 0.0
      %1360 = vmatprep.subr.mxu0 0.0
      %1361 = vmatpush1.msra.mxu0 0.0
      %1362 = vmatprep.subr.mxu0 0.0
      %1363 = vmatpush1.msra.mxu0 0.0
      %1364 = vmatprep.subr.mxu0 0.0
      %1365 = vmatpush1.msra.mxu0 0.0
      %1366 = vmatprep.subr.mxu0 0.0
      %1367 = vmatpush1.msra.mxu0 0.0
      %1368 = vmatprep.subr.mxu0 0.0
      %1369 = vmatpush1.msra.mxu0 0.0
      %1370 = vmatprep.subr.mxu0 0.0
      %1371 = vmatpush1.msra.mxu0 0.0
      %1372 = vmatprep.subr.mxu0 0.0
      %v1373 = vand.u32 %v52, 4294901760
      %v1374 = vsub.f32 %v52, %v1373
      %1375 = vmatpush1.msra.mxu0 %v1374
      %1376 = vmatprep.subr.mxu0 0.0
      %v1377 = vand.u32 %v51, 4294901760
      %v1378 = vsub.f32 %v51, %v1377
      %1379 = vmatpush1.msra.mxu0 %v1378
      %1380 = vmatprep.subr.mxu0 0.0
      %v1381 = vand.u32 %v50, 4294901760
      %v1382 = vsub.f32 %v50, %v1381
      %1383 = vmatpush1.msra.mxu0 %v1382
      %1384 = vmatprep.subr.mxu0 0.0
      %1385 = vmatpush2.msra.mxu0 0.0
      %1386 = vmatprep.subr.mxu0 0.0
      %1387 = vmatpush2.msra.mxu0 0.0
      %1388 = vmatprep.subr.mxu0 0.0
      %1389 = vmatpush2.msra.mxu0 0.0
      %1390 = vmatprep.subr.mxu0 0.0
      %1391 = vmatpush2.msra.mxu0 0.0
      %1392 = vmatprep.subr.mxu0 0.0
      %1393 = vmatpush2.msra.mxu0 0.0
      %1394 = vmatprep.subr.mxu0 0.0
      %1395 = vmatpush2.msra.mxu0 0.0
      %1396 = vmatprep.subr.mxu0 0.0
      %1397 = vmatpush2.msra.mxu0 0.0
      %1398 = vmatprep.subr.mxu0 0.0
      %1399 = vmatpush2.msra.mxu0 0.0
      %1400 = vmatprep.subr.mxu0 0.0
      %1401 = vmatpush2.msra.mxu0 0.0
      %1402 = vmatprep.subr.mxu0 0.0
      %1403 = vmatpush2.msra.mxu0 0.0
      %1404 = vmatprep.subr.mxu0 0.0
      %1405 = vmatpush2.msra.mxu0 0.0
      %1406 = vmatprep.subr.mxu0 0.0
      %1407 = vmatpush2.msra.mxu0 0.0
      %1408 = vmatprep.subr.mxu0 0.0
      %1409 = vmatpush2.msra.mxu0 0.0
      %1410 = vmatprep.subr.mxu0 0.0
      %1411 = vmatpush2.msra.mxu0 0.0
      %1412 = vmatprep.subr.mxu0 0.0
      %1413 = vmatpush2.msra.mxu0 0.0
      %1414 = vmatprep.subr.mxu0 0.0
      %1415 = vmatpush2.msra.mxu0 0.0
      %1416 = vmatprep.mubr.f32.mxu0 0.0
      %v1417 = vand.u32 %v1180, 4294901760
      %v1418 = vsub.f32 %v1180, %v1417
      %1419 = vmatmul.mubr.f32.gmra.mxu0 %v1418
      %v1420 = vpop.f32.mrf.mxu0
      %v1421 = vadd.f32 %v1343, %v1420
      %v1422 = vpop.f32.mrf.mxu0
      %1423 = vdwg.mxu0
      %1424 = vmatprep.subr.mxu0 0.0
      %1425 = vmatpush1.msra.mxu0 0.0
      %1426 = vmatprep.subr.mxu0 0.0
      %1427 = vmatpush1.msra.mxu0 0.0
      %1428 = vmatprep.subr.mxu0 0.0
      %1429 = vmatpush1.msra.mxu0 0.0
      %1430 = vmatprep.subr.mxu0 0.0
      %1431 = vmatpush1.msra.mxu0 0.0
      %1432 = vmatprep.subr.mxu0 0.0
      %1433 = vmatpush1.msra.mxu0 0.0
      %1434 = vmatprep.subr.mxu0 0.0
      %1435 = vmatpush1.msra.mxu0 0.0
      %1436 = vmatprep.subr.mxu0 0.0
      %1437 = vmatpush1.msra.mxu0 0.0
      %1438 = vmatprep.subr.mxu0 0.0
      %1439 = vmatpush1.msra.mxu0 0.0
      %1440 = vmatprep.subr.mxu0 0.0
      %1441 = vmatpush1.msra.mxu0 0.0
      %1442 = vmatprep.subr.mxu0 0.0
      %1443 = vmatpush1.msra.mxu0 0.0
      %1444 = vmatprep.subr.mxu0 0.0
      %1445 = vmatpush1.msra.mxu0 0.0
      %1446 = vmatprep.subr.mxu0 0.0
      %1447 = vmatpush1.msra.mxu0 0.0
      %1448 = vmatprep.subr.mxu0 0.0
      %1449 = vmatpush1.msra.mxu0 0.0
      %1450 = vmatprep.subr.mxu0 0.0
      %v1451 = vand.u32 %v52, 4294901760
      %1452 = vmatpush1.msra.mxu0 %v1451
      %1453 = vmatprep.subr.mxu0 0.0
      %v1454 = vand.u32 %v51, 4294901760
      %1455 = vmatpush1.msra.mxu0 %v1454
      %1456 = vmatprep.subr.mxu0 0.0
      %v1457 = vand.u32 %v50, 4294901760
      %1458 = vmatpush1.msra.mxu0 %v1457
      %1459 = vmatprep.subr.mxu0 0.0
      %1460 = vmatpush2.msra.mxu0 0.0
      %1461 = vmatprep.subr.mxu0 0.0
      %1462 = vmatpush2.msra.mxu0 0.0
      %1463 = vmatprep.subr.mxu0 0.0
      %1464 = vmatpush2.msra.mxu0 0.0
      %1465 = vmatprep.subr.mxu0 0.0
      %1466 = vmatpush2.msra.mxu0 0.0
      %1467 = vmatprep.subr.mxu0 0.0
      %1468 = vmatpush2.msra.mxu0 0.0
      %1469 = vmatprep.subr.mxu0 0.0
      %1470 = vmatpush2.msra.mxu0 0.0
      %1471 = vmatprep.subr.mxu0 0.0
      %1472 = vmatpush2.msra.mxu0 0.0
      %1473 = vmatprep.subr.mxu0 0.0
      %1474 = vmatpush2.msra.mxu0 0.0
      %1475 = vmatprep.subr.mxu0 0.0
      %1476 = vmatpush2.msra.mxu0 0.0
      %1477 = vmatprep.subr.mxu0 0.0
      %1478 = vmatpush2.msra.mxu0 0.0
      %1479 = vmatprep.subr.mxu0 0.0
      %1480 = vmatpush2.msra.mxu0 0.0
      %1481 = vmatprep.subr.mxu0 0.0
      %1482 = vmatpush2.msra.mxu0 0.0
      %1483 = vmatprep.subr.mxu0 0.0
      %1484 = vmatpush2.msra.mxu0 0.0
      %1485 = vmatprep.subr.mxu0 0.0
      %1486 = vmatpush2.msra.mxu0 0.0
      %1487 = vmatprep.subr.mxu0 0.0
      %1488 = vmatpush2.msra.mxu0 0.0
      %1489 = vmatprep.subr.mxu0 0.0
      %1490 = vmatpush2.msra.mxu0 0.0
      %1491 = vmatprep.mubr.f32.mxu0 0.0
      %v1492 = vand.u32 %v1180, 4294901760
      %v1493 = vsub.f32 %v1180, %v1492
      %v1494 = vand.u32 %v1493, 4294901760
      %1495 = vmatmul.mubr.f32.gmra.mxu0 %v1494
      %v1496 = vpop.f32.mrf.mxu0
      %v1497 = vadd.f32 %v1421, %v1496
      %v1498 = vpop.f32.mrf.mxu0
      %1499 = vdwg.mxu0
      %1500 = vmatprep.subr.mxu0 0.0
      %1501 = vmatpush1.msra.mxu0 0.0
      %1502 = vmatprep.subr.mxu0 0.0
      %1503 = vmatpush1.msra.mxu0 0.0
      %1504 = vmatprep.subr.mxu0 0.0
      %1505 = vmatpush1.msra.mxu0 0.0
      %1506 = vmatprep.subr.mxu0 0.0
      %1507 = vmatpush1.msra.mxu0 0.0
      %1508 = vmatprep.subr.mxu0 0.0
      %1509 = vmatpush1.msra.mxu0 0.0
      %1510 = vmatprep.subr.mxu0 0.0
      %1511 = vmatpush1.msra.mxu0 0.0
      %1512 = vmatprep.subr.mxu0 0.0
      %1513 = vmatpush1.msra.mxu0 0.0
      %1514 = vmatprep.subr.mxu0 0.0
      %1515 = vmatpush1.msra.mxu0 0.0
      %1516 = vmatprep.subr.mxu0 0.0
      %1517 = vmatpush1.msra.mxu0 0.0
      %1518 = vmatprep.subr.mxu0 0.0
      %1519 = vmatpush1.msra.mxu0 0.0
      %1520 = vmatprep.subr.mxu0 0.0
      %1521 = vmatpush1.msra.mxu0 0.0
      %1522 = vmatprep.subr.mxu0 0.0
      %1523 = vmatpush1.msra.mxu0 0.0
      %1524 = vmatprep.subr.mxu0 0.0
      %1525 = vmatpush1.msra.mxu0 0.0
      %1526 = vmatprep.subr.mxu0 0.0
      %v1527 = vand.u32 %v52, 4294901760
      %v1528 = vsub.f32 %v52, %v1527
      %v1529 = vand.u32 %v1528, 4294901760
      %1530 = vmatpush1.msra.mxu0 %v1529
      %1531 = vmatprep.subr.mxu0 0.0
      %v1532 = vand.u32 %v51, 4294901760
      %v1533 = vsub.f32 %v51, %v1532
      %v1534 = vand.u32 %v1533, 4294901760
      %1535 = vmatpush1.msra.mxu0 %v1534
      %1536 = vmatprep.subr.mxu0 0.0
      %v1537 = vand.u32 %v50, 4294901760
      %v1538 = vsub.f32 %v50, %v1537
      %v1539 = vand.u32 %v1538, 4294901760
      %1540 = vmatpush1.msra.mxu0 %v1539
      %1541 = vmatprep.subr.mxu0 0.0
      %1542 = vmatpush2.msra.mxu0 0.0
      %1543 = vmatprep.subr.mxu0 0.0
      %1544 = vmatpush2.msra.mxu0 0.0
      %1545 = vmatprep.subr.mxu0 0.0
      %1546 = vmatpush2.msra.mxu0 0.0
      %1547 = vmatprep.subr.mxu0 0.0
      %1548 = vmatpush2.msra.mxu0 0.0
      %1549 = vmatprep.subr.mxu0 0.0
      %1550 = vmatpush2.msra.mxu0 0.0
      %1551 = vmatprep.subr.mxu0 0.0
      %1552 = vmatpush2.msra.mxu0 0.0
      %1553 = vmatprep.subr.mxu0 0.0
      %1554 = vmatpush2.msra.mxu0 0.0
      %1555 = vmatprep.subr.mxu0 0.0
      %1556 = vmatpush2.msra.mxu0 0.0
      %1557 = vmatprep.subr.mxu0 0.0
      %1558 = vmatpush2.msra.mxu0 0.0
      %1559 = vmatprep.subr.mxu0 0.0
      %1560 = vmatpush2.msra.mxu0 0.0
      %1561 = vmatprep.subr.mxu0 0.0
      %1562 = vmatpush2.msra.mxu0 0.0
      %1563 = vmatprep.subr.mxu0 0.0
      %1564 = vmatpush2.msra.mxu0 0.0
      %1565 = vmatprep.subr.mxu0 0.0
      %1566 = vmatpush2.msra.mxu0 0.0
      %1567 = vmatprep.subr.mxu0 0.0
      %1568 = vmatpush2.msra.mxu0 0.0
      %1569 = vmatprep.subr.mxu0 0.0
      %1570 = vmatpush2.msra.mxu0 0.0
      %1571 = vmatprep.subr.mxu0 0.0
      %1572 = vmatpush2.msra.mxu0 0.0
      %1573 = vmatprep.mubr.f32.mxu0 0.0
      %v1574 = vand.u32 %v1180, 4294901760
      %1575 = vmatmul.mubr.f32.gmra.mxu0 %v1574
      %v1576 = vpop.f32.mrf.mxu0
      %v1577 = vadd.f32 %v1497, %v1576
      %v1578 = vpop.f32.mrf.mxu0
      %1579 = vdwg.mxu0
      %1580 = vmatprep.subr.mxu0 0.0
      %1581 = vmatpush1.msra.mxu0 0.0
      %1582 = vmatprep.subr.mxu0 0.0
      %1583 = vmatpush1.msra.mxu0 0.0
      %1584 = vmatprep.subr.mxu0 0.0
      %1585 = vmatpush1.msra.mxu0 0.0
      %1586 = vmatprep.subr.mxu0 0.0
      %1587 = vmatpush1.msra.mxu0 0.0
      %1588 = vmatprep.subr.mxu0 0.0
      %1589 = vmatpush1.msra.mxu0 0.0
      %1590 = vmatprep.subr.mxu0 0.0
      %1591 = vmatpush1.msra.mxu0 0.0
      %1592 = vmatprep.subr.mxu0 0.0
      %1593 = vmatpush1.msra.mxu0 0.0
      %1594 = vmatprep.subr.mxu0 0.0
      %1595 = vmatpush1.msra.mxu0 0.0
      %1596 = vmatprep.subr.mxu0 0.0
      %1597 = vmatpush1.msra.mxu0 0.0
      %1598 = vmatprep.subr.mxu0 0.0
      %1599 = vmatpush1.msra.mxu0 0.0
      %1600 = vmatprep.subr.mxu0 0.0
      %1601 = vmatpush1.msra.mxu0 0.0
      %1602 = vmatprep.subr.mxu0 0.0
      %1603 = vmatpush1.msra.mxu0 0.0
      %1604 = vmatprep.subr.mxu0 0.0
      %1605 = vmatpush1.msra.mxu0 0.0
      %1606 = vmatprep.subr.mxu0 0.0
      %v1607 = vand.u32 %v52, 4294901760
      %1608 = vmatpush1.msra.mxu0 %v1607
      %1609 = vmatprep.subr.mxu0 0.0
      %v1610 = vand.u32 %v51, 4294901760
      %1611 = vmatpush1.msra.mxu0 %v1610
      %1612 = vmatprep.subr.mxu0 0.0
      %v1613 = vand.u32 %v50, 4294901760
      %1614 = vmatpush1.msra.mxu0 %v1613
      %1615 = vmatprep.subr.mxu0 0.0
      %1616 = vmatpush2.msra.mxu0 0.0
      %1617 = vmatprep.subr.mxu0 0.0
      %1618 = vmatpush2.msra.mxu0 0.0
      %1619 = vmatprep.subr.mxu0 0.0
      %1620 = vmatpush2.msra.mxu0 0.0
      %1621 = vmatprep.subr.mxu0 0.0
      %1622 = vmatpush2.msra.mxu0 0.0
      %1623 = vmatprep.subr.mxu0 0.0
      %1624 = vmatpush2.msra.mxu0 0.0
      %1625 = vmatprep.subr.mxu0 0.0
      %1626 = vmatpush2.msra.mxu0 0.0
      %1627 = vmatprep.subr.mxu0 0.0
      %1628 = vmatpush2.msra.mxu0 0.0
      %1629 = vmatprep.subr.mxu0 0.0
      %1630 = vmatpush2.msra.mxu0 0.0
      %1631 = vmatprep.subr.mxu0 0.0
      %1632 = vmatpush2.msra.mxu0 0.0
      %1633 = vmatprep.subr.mxu0 0.0
      %1634 = vmatpush2.msra.mxu0 0.0
      %1635 = vmatprep.subr.mxu0 0.0
      %1636 = vmatpush2.msra.mxu0 0.0
      %1637 = vmatprep.subr.mxu0 0.0
      %1638 = vmatpush2.msra.mxu0 0.0
      %1639 = vmatprep.subr.mxu0 0.0
      %1640 = vmatpush2.msra.mxu0 0.0
      %1641 = vmatprep.subr.mxu0 0.0
      %1642 = vmatpush2.msra.mxu0 0.0
      %1643 = vmatprep.subr.mxu0 0.0
      %1644 = vmatpush2.msra.mxu0 0.0
      %1645 = vmatprep.subr.mxu0 0.0
      %1646 = vmatpush2.msra.mxu0 0.0
      %1647 = vmatprep.mubr.f32.mxu0 0.0
      %v1648 = vand.u32 %v1180, 4294901760
      %1649 = vmatmul.mubr.f32.gmra.mxu0 %v1648
      %v1650 = vpop.f32.mrf.mxu0
      %v1651 = vadd.f32 %v1577, %v1650
      %v1652 = vpop.f32.mrf.mxu0
      %1653 = vdwg.mxu0
      %v1654 = vmax.f32 %v1170, -5.0
      %v1655 = vmin.f32 %v1654, 5.0
      %v1656 = vmax.f32 %v1651, -5.0
      %v1657 = vmin.f32 %v1656, 5.0
      %v1658 = vmax.f32 %v1169, -3.0
      %v1659 = vmin.f32 %v1658, 3.0
      %v1660 = vsub.f32 %v1659, %v1057
      %v1661 = vstv %s575
      %v1662 = vrcp.pop %v1661
      %s1663 = vtos %v1662
      %s1664 = smul.f32 %s574, %s1663
      %v1665 = vstv %s1664
      %v1666 = vmul.f32 %v1665, %v561
      %v1667 = vmul.f32 %v1666, %v561
      %s1668 = smul.f32 %s575, %s575
      %v1669 = vstv %s1668
      %v1670 = vrcp.pop %v1669
      %s1671 = vtos %v1670
      %s1672 = smul.f32 %s574, %s1671
      %v1673 = vstv %s1672
      %v1674 = vmul.f32 %v1673, %v1660
      %v1675 = vmul.f32 %v1674, %v1660
      %1677 = vrot.lane.b32.xlu0 %v1675, 112
      %v1678 = vpop.permute.xlu0 %1677
      %v1680 = vadd.f32 %v1667, %v1678
      %v1681 = vrsqrt.pop %v1680
      %v1682 = vmul.f32 %v1680, %v1681
      %vm1683 = vcmp.eq.f32.partialorder %v1680, inf
      %v1684 = vsel %vm1683, %v1680, %v1682
      %vm1685 = vcmp.eq.f32.partialorder %v1680, 0.0
      %v1686 = vand.u32 %v1680, 2147483648
      %v1687 = vsel %vm1685, %v1686, %v1684
      %v1688 = vmul.f32 %v1665, %v560
      %v1689 = vstv %s575
      %v1690 = vrcp.pop %v1689
      %s1691 = vtos %v1690
      %v1692 = vstv %s1691
      %v1693 = vmul.f32 %v1692, %v1659
      %1695 = vrot.lane.b32.xlu0 %v1693, 112
      %v1696 = vpop.permute.xlu0 %1695
      %v1698 = vadd.f32 %v1688, %v1696
      %v1699 = vsel %vm1171, %v1655, %v1659
      %1700 = vst.msk [vmem:[#allocation2] sm:$0xff] %vm566, %v1699
      %vm1701 = vcmask 31744
      %1702 = vst.msk [vmem:[#allocation3] sm:$0xff] %vm1701, %v1657
      %vm1703 = vcmask 64512
      %1704 = vst.msk [vmem:[#allocation4] sm:$0xff] %vm1703, %v1698
      %1705 = vst.msk [vmem:[#allocation5] sm:$0xff] %vm1703, %v1687
      %s1706 = sadd.s32 %s557, 1
      %v1707 = vld [vmem:[#allocation2] sm:$0xff]
      %v1708 = vld [vmem:[#allocation3] sm:$0xff]
      %v1709 = vld [vmem:[#allocation4] sm:$0xff]
      %v1710 = vld [vmem:[#allocation5] sm:$0xff]
      %1712 = vrot.lane.b32.xlu0 %v1708, 24
      %v1713 = vpop.permute.xlu0 %1712
      %v1715 = vsel %vm566, %v1707, %v1713
      %s1716 = smul.u32 %s1706, 8
      %s1717 = scalar_lea.vmem [#allocation11], %s1716
      %1718 = vst.msk [vmem:[%s1717] sm:$0xff] %vm570, %v1715
      %s1719 = sadd.s32 %s550, %s1706
      %s1720 = scvt.s32.f32 %s1719
      %s1721 = sadd.f32 %s1720, 1.0
      %s1722 = sadd.f32 %s1720, 2.0
      %s1723 = scalar_lea.vmem [#allocation9], %s1716
      %v1724 = vld [vmem:[%s1723] sm:$0xff]
      %v1726 = vsel %vm566, %v1707, 0
      %1728 = vmatprep.subr.mxu0 0.0
      %1729 = vmatpush1.msra.mxu0 0.0
      %1730 = vmatprep.subr.mxu0 0.0
      %1731 = vmatpush1.msra.mxu0 0.0
      %1732 = vmatprep.subr.mxu0 0.0
      %1733 = vmatpush1.msra.mxu0 0.0
      %1734 = vmatprep.subr.mxu0 0.0
      %1735 = vmatpush1.msra.mxu0 0.0
      %1736 = vmatprep.subr.mxu0 0.0
      %1737 = vmatpush1.msra.mxu0 0.0
      %1738 = vmatprep.subr.mxu0 0.0
      %1739 = vmatpush1.msra.mxu0 0.0
      %1740 = vmatprep.subr.mxu0 0.0
      %1741 = vmatpush1.msra.mxu0 0.0
      %1742 = vmatprep.subr.mxu0 0.0
      %1743 = vmatpush1.msra.mxu0 0.0
      %1744 = vmatprep.subr.mxu0 0.0
      %1745 = vmatpush1.msra.mxu0 0.0
      %1746 = vmatprep.subr.mxu0 0.0
      %1747 = vmatpush1.msra.mxu0 0.0
      %1748 = vmatprep.subr.mxu0 0.0
      %1749 = vmatpush1.msra.mxu0 0.0
      %1750 = vmatprep.subr.mxu0 0.0
      %1751 = vmatpush1.msra.mxu0 0.0
      %1752 = vmatprep.subr.mxu0 0.0
      %1753 = vmatpush1.msra.mxu0 0.0
      %1754 = vmatprep.subr.mxu0 0.0
      %v1755 = vand.u32 %v49, 4294901760
      %1756 = vmatpush1.msra.mxu0 %v1755
      %1757 = vmatprep.subr.mxu0 0.0
      %v1758 = vand.u32 %v48, 4294901760
      %1759 = vmatpush1.msra.mxu0 %v1758
      %1760 = vmatprep.subr.mxu0 0.0
      %v1761 = vand.u32 %v47, 4294901760
      %1762 = vmatpush1.msra.mxu0 %v1761
      %1763 = vmatprep.subr.mxu0 0.0
      %1764 = vmatpush2.msra.mxu0 0.0
      %1765 = vmatprep.subr.mxu0 0.0
      %1766 = vmatpush2.msra.mxu0 0.0
      %1767 = vmatprep.subr.mxu0 0.0
      %1768 = vmatpush2.msra.mxu0 0.0
      %1769 = vmatprep.subr.mxu0 0.0
      %1770 = vmatpush2.msra.mxu0 0.0
      %1771 = vmatprep.subr.mxu0 0.0
      %1772 = vmatpush2.msra.mxu0 0.0
      %1773 = vmatprep.subr.mxu0 0.0
      %1774 = vmatpush2.msra.mxu0 0.0
      %1775 = vmatprep.subr.mxu0 0.0
      %1776 = vmatpush2.msra.mxu0 0.0
      %1777 = vmatprep.subr.mxu0 0.0
      %1778 = vmatpush2.msra.mxu0 0.0
      %1779 = vmatprep.subr.mxu0 0.0
      %1780 = vmatpush2.msra.mxu0 0.0
      %1781 = vmatprep.subr.mxu0 0.0
      %1782 = vmatpush2.msra.mxu0 0.0
      %1783 = vmatprep.subr.mxu0 0.0
      %1784 = vmatpush2.msra.mxu0 0.0
      %1785 = vmatprep.subr.mxu0 0.0
      %1786 = vmatpush2.msra.mxu0 0.0
      %1787 = vmatprep.subr.mxu0 0.0
      %1788 = vmatpush2.msra.mxu0 0.0
      %1789 = vmatprep.subr.mxu0 0.0
      %1790 = vmatpush2.msra.mxu0 0.0
      %1791 = vmatprep.subr.mxu0 0.0
      %1792 = vmatpush2.msra.mxu0 0.0
      %1793 = vmatprep.subr.mxu0 0.0
      %1794 = vmatpush2.msra.mxu0 0.0
      %1795 = vmatprep.mubr.f32.mxu0 0.0
      %v1796 = vand.u32 %v1726, 4294901760
      %v1797 = vsub.f32 %v1726, %v1796
      %v1798 = vand.u32 %v1797, 4294901760
      %v1799 = vsub.f32 %v1797, %v1798
      %v1800 = vand.u32 %v1799, 4294901760
      %1801 = vmatmul.mubr.f32.gmra.mxu0 %v1800
      %v1802 = vpop.f32.mrf.mxu0
      %v1803 = vadd.f32 %v1724, %v1802
      %v1804 = vpop.f32.mrf.mxu0
      %1805 = vdwg.mxu0
      %1806 = vmatprep.subr.mxu0 0.0
      %1807 = vmatpush1.msra.mxu0 0.0
      %1808 = vmatprep.subr.mxu0 0.0
      %1809 = vmatpush1.msra.mxu0 0.0
      %1810 = vmatprep.subr.mxu0 0.0
      %1811 = vmatpush1.msra.mxu0 0.0
      %1812 = vmatprep.subr.mxu0 0.0
      %1813 = vmatpush1.msra.mxu0 0.0
      %1814 = vmatprep.subr.mxu0 0.0
      %1815 = vmatpush1.msra.mxu0 0.0
      %1816 = vmatprep.subr.mxu0 0.0
      %1817 = vmatpush1.msra.mxu0 0.0
      %1818 = vmatprep.subr.mxu0 0.0
      %1819 = vmatpush1.msra.mxu0 0.0
      %1820 = vmatprep.subr.mxu0 0.0
      %1821 = vmatpush1.msra.mxu0 0.0
      %1822 = vmatprep.subr.mxu0 0.0
      %1823 = vmatpush1.msra.mxu0 0.0
      %1824 = vmatprep.subr.mxu0 0.0
      %1825 = vmatpush1.msra.mxu0 0.0
      %1826 = vmatprep.subr.mxu0 0.0
      %1827 = vmatpush1.msra.mxu0 0.0
      %1828 = vmatprep.subr.mxu0 0.0
      %1829 = vmatpush1.msra.mxu0 0.0
      %1830 = vmatprep.subr.mxu0 0.0
      %1831 = vmatpush1.msra.mxu0 0.0
      %1832 = vmatprep.subr.mxu0 0.0
      %v1833 = vand.u32 %v49, 4294901760
      %v1834 = vsub.f32 %v49, %v1833
      %v1835 = vand.u32 %v1834, 4294901760
      %v1836 = vsub.f32 %v1834, %v1835
      %v1837 = vand.u32 %v1836, 4294901760
      %1838 = vmatpush1.msra.mxu0 %v1837
      %1839 = vmatprep.subr.mxu0 0.0
      %v1840 = vand.u32 %v48, 4294901760
      %v1841 = vsub.f32 %v48, %v1840
      %v1842 = vand.u32 %v1841, 4294901760
      %v1843 = vsub.f32 %v1841, %v1842
      %v1844 = vand.u32 %v1843, 4294901760
      %1845 = vmatpush1.msra.mxu0 %v1844
      %1846 = vmatprep.subr.mxu0 0.0
      %v1847 = vand.u32 %v47, 4294901760
      %v1848 = vsub.f32 %v47, %v1847
      %v1849 = vand.u32 %v1848, 4294901760
      %v1850 = vsub.f32 %v1848, %v1849
      %v1851 = vand.u32 %v1850, 4294901760
      %1852 = vmatpush1.msra.mxu0 %v1851
      %1853 = vmatprep.subr.mxu0 0.0
      %1854 = vmatpush2.msra.mxu0 0.0
      %1855 = vmatprep.subr.mxu0 0.0
      %1856 = vmatpush2.msra.mxu0 0.0
      %1857 = vmatprep.subr.mxu0 0.0
      %1858 = vmatpush2.msra.mxu0 0.0
      %1859 = vmatprep.subr.mxu0 0.0
      %1860 = vmatpush2.msra.mxu0 0.0
      %1861 = vmatprep.subr.mxu0 0.0
      %1862 = vmatpush2.msra.mxu0 0.0
      %1863 = vmatprep.subr.mxu0 0.0
      %1864 = vmatpush2.msra.mxu0 0.0
      %1865 = vmatprep.subr.mxu0 0.0
      %1866 = vmatpush2.msra.mxu0 0.0
      %1867 = vmatprep.subr.mxu0 0.0
      %1868 = vmatpush2.msra.mxu0 0.0
      %1869 = vmatprep.subr.mxu0 0.0
      %1870 = vmatpush2.msra.mxu0 0.0
      %1871 = vmatprep.subr.mxu0 0.0
      %1872 = vmatpush2.msra.mxu0 0.0
      %1873 = vmatprep.subr.mxu0 0.0
      %1874 = vmatpush2.msra.mxu0 0.0
      %1875 = vmatprep.subr.mxu0 0.0
      %1876 = vmatpush2.msra.mxu0 0.0
      %1877 = vmatprep.subr.mxu0 0.0
      %1878 = vmatpush2.msra.mxu0 0.0
      %1879 = vmatprep.subr.mxu0 0.0
      %1880 = vmatpush2.msra.mxu0 0.0
      %1881 = vmatprep.subr.mxu0 0.0
      %1882 = vmatpush2.msra.mxu0 0.0
      %1883 = vmatprep.subr.mxu0 0.0
      %1884 = vmatpush2.msra.mxu0 0.0
      %1885 = vmatprep.mubr.f32.mxu0 0.0
      %v1886 = vand.u32 %v1726, 4294901760
      %1887 = vmatmul.mubr.f32.gmra.mxu0 %v1886
      %v1888 = vpop.f32.mrf.mxu0
      %v1889 = vadd.f32 %v1803, %v1888
      %v1890 = vpop.f32.mrf.mxu0
      %1891 = vdwg.mxu0
      %1892 = vmatprep.subr.mxu0 0.0
      %1893 = vmatpush1.msra.mxu0 0.0
      %1894 = vmatprep.subr.mxu0 0.0
      %1895 = vmatpush1.msra.mxu0 0.0
      %1896 = vmatprep.subr.mxu0 0.0
      %1897 = vmatpush1.msra.mxu0 0.0
      %1898 = vmatprep.subr.mxu0 0.0
      %1899 = vmatpush1.msra.mxu0 0.0
      %1900 = vmatprep.subr.mxu0 0.0
      %1901 = vmatpush1.msra.mxu0 0.0
      %1902 = vmatprep.subr.mxu0 0.0
      %1903 = vmatpush1.msra.mxu0 0.0
      %1904 = vmatprep.subr.mxu0 0.0
      %1905 = vmatpush1.msra.mxu0 0.0
      %1906 = vmatprep.subr.mxu0 0.0
      %1907 = vmatpush1.msra.mxu0 0.0
      %1908 = vmatprep.subr.mxu0 0.0
      %1909 = vmatpush1.msra.mxu0 0.0
      %1910 = vmatprep.subr.mxu0 0.0
      %1911 = vmatpush1.msra.mxu0 0.0
      %1912 = vmatprep.subr.mxu0 0.0
      %1913 = vmatpush1.msra.mxu0 0.0
      %1914 = vmatprep.subr.mxu0 0.0
      %1915 = vmatpush1.msra.mxu0 0.0
      %1916 = vmatprep.subr.mxu0 0.0
      %1917 = vmatpush1.msra.mxu0 0.0
      %1918 = vmatprep.subr.mxu0 0.0
      %v1919 = vand.u32 %v49, 4294901760
      %v1920 = vsub.f32 %v49, %v1919
      %1921 = vmatpush1.msra.mxu0 %v1920
      %1922 = vmatprep.subr.mxu0 0.0
      %v1923 = vand.u32 %v48, 4294901760
      %v1924 = vsub.f32 %v48, %v1923
      %1925 = vmatpush1.msra.mxu0 %v1924
      %1926 = vmatprep.subr.mxu0 0.0
      %v1927 = vand.u32 %v47, 4294901760
      %v1928 = vsub.f32 %v47, %v1927
      %1929 = vmatpush1.msra.mxu0 %v1928
      %1930 = vmatprep.subr.mxu0 0.0
      %1931 = vmatpush2.msra.mxu0 0.0
      %1932 = vmatprep.subr.mxu0 0.0
      %1933 = vmatpush2.msra.mxu0 0.0
      %1934 = vmatprep.subr.mxu0 0.0
      %1935 = vmatpush2.msra.mxu0 0.0
      %1936 = vmatprep.subr.mxu0 0.0
      %1937 = vmatpush2.msra.mxu0 0.0
      %1938 = vmatprep.subr.mxu0 0.0
      %1939 = vmatpush2.msra.mxu0 0.0
      %1940 = vmatprep.subr.mxu0 0.0
      %1941 = vmatpush2.msra.mxu0 0.0
      %1942 = vmatprep.subr.mxu0 0.0
      %1943 = vmatpush2.msra.mxu0 0.0
      %1944 = vmatprep.subr.mxu0 0.0
      %1945 = vmatpush2.msra.mxu0 0.0
      %1946 = vmatprep.subr.mxu0 0.0
      %1947 = vmatpush2.msra.mxu0 0.0
      %1948 = vmatprep.subr.mxu0 0.0
      %1949 = vmatpush2.msra.mxu0 0.0
      %1950 = vmatprep.subr.mxu0 0.0
      %1951 = vmatpush2.msra.mxu0 0.0
      %1952 = vmatprep.subr.mxu0 0.0
      %1953 = vmatpush2.msra.mxu0 0.0
      %1954 = vmatprep.subr.mxu0 0.0
      %1955 = vmatpush2.msra.mxu0 0.0
      %1956 = vmatprep.subr.mxu0 0.0
      %1957 = vmatpush2.msra.mxu0 0.0
      %1958 = vmatprep.subr.mxu0 0.0
      %1959 = vmatpush2.msra.mxu0 0.0
      %1960 = vmatprep.subr.mxu0 0.0
      %1961 = vmatpush2.msra.mxu0 0.0
      %1962 = vmatprep.mubr.f32.mxu0 0.0
      %v1963 = vand.u32 %v1726, 4294901760
      %v1964 = vsub.f32 %v1726, %v1963
      %1965 = vmatmul.mubr.f32.gmra.mxu0 %v1964
      %v1966 = vpop.f32.mrf.mxu0
      %v1967 = vadd.f32 %v1889, %v1966
      %v1968 = vpop.f32.mrf.mxu0
      %1969 = vdwg.mxu0
      %1970 = vmatprep.subr.mxu0 0.0
      %1971 = vmatpush1.msra.mxu0 0.0
      %1972 = vmatprep.subr.mxu0 0.0
      %1973 = vmatpush1.msra.mxu0 0.0
      %1974 = vmatprep.subr.mxu0 0.0
      %1975 = vmatpush1.msra.mxu0 0.0
      %1976 = vmatprep.subr.mxu0 0.0
      %1977 = vmatpush1.msra.mxu0 0.0
      %1978 = vmatprep.subr.mxu0 0.0
      %1979 = vmatpush1.msra.mxu0 0.0
      %1980 = vmatprep.subr.mxu0 0.0
      %1981 = vmatpush1.msra.mxu0 0.0
      %1982 = vmatprep.subr.mxu0 0.0
      %1983 = vmatpush1.msra.mxu0 0.0
      %1984 = vmatprep.subr.mxu0 0.0
      %1985 = vmatpush1.msra.mxu0 0.0
      %1986 = vmatprep.subr.mxu0 0.0
      %1987 = vmatpush1.msra.mxu0 0.0
      %1988 = vmatprep.subr.mxu0 0.0
      %1989 = vmatpush1.msra.mxu0 0.0
      %1990 = vmatprep.subr.mxu0 0.0
      %1991 = vmatpush1.msra.mxu0 0.0
      %1992 = vmatprep.subr.mxu0 0.0
      %1993 = vmatpush1.msra.mxu0 0.0
      %1994 = vmatprep.subr.mxu0 0.0
      %1995 = vmatpush1.msra.mxu0 0.0
      %1996 = vmatprep.subr.mxu0 0.0
      %v1997 = vand.u32 %v49, 4294901760
      %1998 = vmatpush1.msra.mxu0 %v1997
      %1999 = vmatprep.subr.mxu0 0.0
      %v2000 = vand.u32 %v48, 4294901760
      %2001 = vmatpush1.msra.mxu0 %v2000
      %2002 = vmatprep.subr.mxu0 0.0
      %v2003 = vand.u32 %v47, 4294901760
      %2004 = vmatpush1.msra.mxu0 %v2003
      %2005 = vmatprep.subr.mxu0 0.0
      %2006 = vmatpush2.msra.mxu0 0.0
      %2007 = vmatprep.subr.mxu0 0.0
      %2008 = vmatpush2.msra.mxu0 0.0
      %2009 = vmatprep.subr.mxu0 0.0
      %2010 = vmatpush2.msra.mxu0 0.0
      %2011 = vmatprep.subr.mxu0 0.0
      %2012 = vmatpush2.msra.mxu0 0.0
      %2013 = vmatprep.subr.mxu0 0.0
      %2014 = vmatpush2.msra.mxu0 0.0
      %2015 = vmatprep.subr.mxu0 0.0
      %2016 = vmatpush2.msra.mxu0 0.0
      %2017 = vmatprep.subr.mxu0 0.0
      %2018 = vmatpush2.msra.mxu0 0.0
      %2019 = vmatprep.subr.mxu0 0.0
      %2020 = vmatpush2.msra.mxu0 0.0
      %2021 = vmatprep.subr.mxu0 0.0
      %2022 = vmatpush2.msra.mxu0 0.0
      %2023 = vmatprep.subr.mxu0 0.0
      %2024 = vmatpush2.msra.mxu0 0.0
      %2025 = vmatprep.subr.mxu0 0.0
      %2026 = vmatpush2.msra.mxu0 0.0
      %2027 = vmatprep.subr.mxu0 0.0
      %2028 = vmatpush2.msra.mxu0 0.0
      %2029 = vmatprep.subr.mxu0 0.0
      %2030 = vmatpush2.msra.mxu0 0.0
      %2031 = vmatprep.subr.mxu0 0.0
      %2032 = vmatpush2.msra.mxu0 0.0
      %2033 = vmatprep.subr.mxu0 0.0
      %2034 = vmatpush2.msra.mxu0 0.0
      %2035 = vmatprep.subr.mxu0 0.0
      %2036 = vmatpush2.msra.mxu0 0.0
      %2037 = vmatprep.mubr.f32.mxu0 0.0
      %v2038 = vand.u32 %v1726, 4294901760
      %v2039 = vsub.f32 %v1726, %v2038
      %v2040 = vand.u32 %v2039, 4294901760
      %2041 = vmatmul.mubr.f32.gmra.mxu0 %v2040
      %v2042 = vpop.f32.mrf.mxu0
      %v2043 = vadd.f32 %v1967, %v2042
      %v2044 = vpop.f32.mrf.mxu0
      %2045 = vdwg.mxu0
      %2046 = vmatprep.subr.mxu0 0.0
      %2047 = vmatpush1.msra.mxu0 0.0
      %2048 = vmatprep.subr.mxu0 0.0
      %2049 = vmatpush1.msra.mxu0 0.0
      %2050 = vmatprep.subr.mxu0 0.0
      %2051 = vmatpush1.msra.mxu0 0.0
      %2052 = vmatprep.subr.mxu0 0.0
      %2053 = vmatpush1.msra.mxu0 0.0
      %2054 = vmatprep.subr.mxu0 0.0
      %2055 = vmatpush1.msra.mxu0 0.0
      %2056 = vmatprep.subr.mxu0 0.0
      %2057 = vmatpush1.msra.mxu0 0.0
      %2058 = vmatprep.subr.mxu0 0.0
      %2059 = vmatpush1.msra.mxu0 0.0
      %2060 = vmatprep.subr.mxu0 0.0
      %2061 = vmatpush1.msra.mxu0 0.0
      %2062 = vmatprep.subr.mxu0 0.0
      %2063 = vmatpush1.msra.mxu0 0.0
      %2064 = vmatprep.subr.mxu0 0.0
      %2065 = vmatpush1.msra.mxu0 0.0
      %2066 = vmatprep.subr.mxu0 0.0
      %2067 = vmatpush1.msra.mxu0 0.0
      %2068 = vmatprep.subr.mxu0 0.0
      %2069 = vmatpush1.msra.mxu0 0.0
      %2070 = vmatprep.subr.mxu0 0.0
      %2071 = vmatpush1.msra.mxu0 0.0
      %2072 = vmatprep.subr.mxu0 0.0
      %v2073 = vand.u32 %v49, 4294901760
      %v2074 = vsub.f32 %v49, %v2073
      %v2075 = vand.u32 %v2074, 4294901760
      %2076 = vmatpush1.msra.mxu0 %v2075
      %2077 = vmatprep.subr.mxu0 0.0
      %v2078 = vand.u32 %v48, 4294901760
      %v2079 = vsub.f32 %v48, %v2078
      %v2080 = vand.u32 %v2079, 4294901760
      %2081 = vmatpush1.msra.mxu0 %v2080
      %2082 = vmatprep.subr.mxu0 0.0
      %v2083 = vand.u32 %v47, 4294901760
      %v2084 = vsub.f32 %v47, %v2083
      %v2085 = vand.u32 %v2084, 4294901760
      %2086 = vmatpush1.msra.mxu0 %v2085
      %2087 = vmatprep.subr.mxu0 0.0
      %2088 = vmatpush2.msra.mxu0 0.0
      %2089 = vmatprep.subr.mxu0 0.0
      %2090 = vmatpush2.msra.mxu0 0.0
      %2091 = vmatprep.subr.mxu0 0.0
      %2092 = vmatpush2.msra.mxu0 0.0
      %2093 = vmatprep.subr.mxu0 0.0
      %2094 = vmatpush2.msra.mxu0 0.0
      %2095 = vmatprep.subr.mxu0 0.0
      %2096 = vmatpush2.msra.mxu0 0.0
      %2097 = vmatprep.subr.mxu0 0.0
      %2098 = vmatpush2.msra.mxu0 0.0
      %2099 = vmatprep.subr.mxu0 0.0
      %2100 = vmatpush2.msra.mxu0 0.0
      %2101 = vmatprep.subr.mxu0 0.0
      %2102 = vmatpush2.msra.mxu0 0.0
      %2103 = vmatprep.subr.mxu0 0.0
      %2104 = vmatpush2.msra.mxu0 0.0
      %2105 = vmatprep.subr.mxu0 0.0
      %2106 = vmatpush2.msra.mxu0 0.0
      %2107 = vmatprep.subr.mxu0 0.0
      %2108 = vmatpush2.msra.mxu0 0.0
      %2109 = vmatprep.subr.mxu0 0.0
      %2110 = vmatpush2.msra.mxu0 0.0
      %2111 = vmatprep.subr.mxu0 0.0
      %2112 = vmatpush2.msra.mxu0 0.0
      %2113 = vmatprep.subr.mxu0 0.0
      %2114 = vmatpush2.msra.mxu0 0.0
      %2115 = vmatprep.subr.mxu0 0.0
      %2116 = vmatpush2.msra.mxu0 0.0
      %2117 = vmatprep.subr.mxu0 0.0
      %2118 = vmatpush2.msra.mxu0 0.0
      %2119 = vmatprep.mubr.f32.mxu0 0.0
      %v2120 = vand.u32 %v1726, 4294901760
      %2121 = vmatmul.mubr.f32.gmra.mxu0 %v2120
      %v2122 = vpop.f32.mrf.mxu0
      %v2123 = vadd.f32 %v2043, %v2122
      %v2124 = vpop.f32.mrf.mxu0
      %2125 = vdwg.mxu0
      %2126 = vmatprep.subr.mxu0 0.0
      %2127 = vmatpush1.msra.mxu0 0.0
      %2128 = vmatprep.subr.mxu0 0.0
      %2129 = vmatpush1.msra.mxu0 0.0
      %2130 = vmatprep.subr.mxu0 0.0
      %2131 = vmatpush1.msra.mxu0 0.0
      %2132 = vmatprep.subr.mxu0 0.0
      %2133 = vmatpush1.msra.mxu0 0.0
      %2134 = vmatprep.subr.mxu0 0.0
      %2135 = vmatpush1.msra.mxu0 0.0
      %2136 = vmatprep.subr.mxu0 0.0
      %2137 = vmatpush1.msra.mxu0 0.0
      %2138 = vmatprep.subr.mxu0 0.0
      %2139 = vmatpush1.msra.mxu0 0.0
      %2140 = vmatprep.subr.mxu0 0.0
      %2141 = vmatpush1.msra.mxu0 0.0
      %2142 = vmatprep.subr.mxu0 0.0
      %2143 = vmatpush1.msra.mxu0 0.0
      %2144 = vmatprep.subr.mxu0 0.0
      %2145 = vmatpush1.msra.mxu0 0.0
      %2146 = vmatprep.subr.mxu0 0.0
      %2147 = vmatpush1.msra.mxu0 0.0
      %2148 = vmatprep.subr.mxu0 0.0
      %2149 = vmatpush1.msra.mxu0 0.0
      %2150 = vmatprep.subr.mxu0 0.0
      %2151 = vmatpush1.msra.mxu0 0.0
      %2152 = vmatprep.subr.mxu0 0.0
      %v2153 = vand.u32 %v49, 4294901760
      %2154 = vmatpush1.msra.mxu0 %v2153
      %2155 = vmatprep.subr.mxu0 0.0
      %v2156 = vand.u32 %v48, 4294901760
      %2157 = vmatpush1.msra.mxu0 %v2156
      %2158 = vmatprep.subr.mxu0 0.0
      %v2159 = vand.u32 %v47, 4294901760
      %2160 = vmatpush1.msra.mxu0 %v2159
      %2161 = vmatprep.subr.mxu0 0.0
      %2162 = vmatpush2.msra.mxu0 0.0
      %2163 = vmatprep.subr.mxu0 0.0
      %2164 = vmatpush2.msra.mxu0 0.0
      %2165 = vmatprep.subr.mxu0 0.0
      %2166 = vmatpush2.msra.mxu0 0.0
      %2167 = vmatprep.subr.mxu0 0.0
      %2168 = vmatpush2.msra.mxu0 0.0
      %2169 = vmatprep.subr.mxu0 0.0
      %2170 = vmatpush2.msra.mxu0 0.0
      %2171 = vmatprep.subr.mxu0 0.0
      %2172 = vmatpush2.msra.mxu0 0.0
      %2173 = vmatprep.subr.mxu0 0.0
      %2174 = vmatpush2.msra.mxu0 0.0
      %2175 = vmatprep.subr.mxu0 0.0
      %2176 = vmatpush2.msra.mxu0 0.0
      %2177 = vmatprep.subr.mxu0 0.0
      %2178 = vmatpush2.msra.mxu0 0.0
      %2179 = vmatprep.subr.mxu0 0.0
      %2180 = vmatpush2.msra.mxu0 0.0
      %2181 = vmatprep.subr.mxu0 0.0
      %2182 = vmatpush2.msra.mxu0 0.0
      %2183 = vmatprep.subr.mxu0 0.0
      %2184 = vmatpush2.msra.mxu0 0.0
      %2185 = vmatprep.subr.mxu0 0.0
      %2186 = vmatpush2.msra.mxu0 0.0
      %2187 = vmatprep.subr.mxu0 0.0
      %2188 = vmatpush2.msra.mxu0 0.0
      %2189 = vmatprep.subr.mxu0 0.0
      %2190 = vmatpush2.msra.mxu0 0.0
      %2191 = vmatprep.subr.mxu0 0.0
      %2192 = vmatpush2.msra.mxu0 0.0
      %2193 = vmatprep.mubr.f32.mxu0 0.0
      %v2194 = vand.u32 %v1726, 4294901760
      %2195 = vmatmul.mubr.f32.gmra.mxu0 %v2194
      %v2196 = vpop.f32.mrf.mxu0
      %v2197 = vadd.f32 %v2123, %v2196
      %v2198 = vpop.f32.mrf.mxu0
      %2199 = vdwg.mxu0
      %v2200 = vrcp.pop %v1710
      %v2201 = vmul.f32 1.0, %v2200
      %2203 = vrot.lane.b32.xlu0 %v1709, 16
      %v2204 = vpop.permute.xlu0 %2203
      %v2206 = vsub.f32 %v1707, %v2204
      %v2207 = vadd.f32 %v2201, 1.0
      %v2208 = vmul.f32 %v2197, 0.5
      %2210 = vrot.lane.b32.xlu0 %v2207, 16
      %v2211 = vpop.permute.xlu0 %2210
      %v2213 = vmul.f32 %v2208, %v2211
      %v2214 = vadd.f32 %v2206, %v2213
      %v2215 = vmul.f32 %v2197, %v2214
      %v2216 = vsub.f32 1.0, %v2201
      %2218 = vrot.lane.b32.xlu0 %v2216, 16
      %v2219 = vpop.permute.xlu0 %2218
      %v2221 = vmul.f32 %v2215, %v2219
      %v2222 = vmul.f32 %v1710, %v1710
      %v2223 = vstv %s1721
      %v2224 = vrcp.pop %v2223
      %s2225 = vtos %v2224
      %s2226 = smul.f32 %s1722, %s2225
      %v2227 = vstv %s2226
      %v2228 = vsub.f32 %v2222, %v2227
      %v2229 = vstv %s1722
      %v2230 = vmul.f32 %v2229, %v2228
      %v2231 = vmul.f32 %v2197, %v2211
      %v2232 = vadd.f32 %v2206, %v2231
      %v2233 = vmul.f32 %v2208, %v2197
      %v2234 = vmul.f32 %v2201, %v2201
      %v2235 = vadd.f32 %v2234, 1.0
      %2237 = vrot.lane.b32.xlu0 %v2235, 16
      %v2238 = vpop.permute.xlu0 %2237
      %v2240 = vmul.f32 %v2233, %v2238
      %v2241 = vadd.f32 %v2232, %v2240
      %v2242 = vmul.f32 %v2206, %v2241
      %2244 = vrot.lane.b32.xlu0 %v2242, 112
      %v2245 = vpop.permute.xlu0 %2244
      %v2247 = vadd.f32 %v2230, %v2245
      %2249 = vrot.lane.b32.xlu0 %v2221, 112
      %v2250 = vpop.permute.xlu0 %2249
      %vm2252 = vcmp.ge.f32.partialorder %v2247, %v2250
      %vm2253 = vcmp.ge.f32.partialorder %v2221, 0.0
      %v2254 = vsel %vm2253, 1, 0
      %2255 = vrot.lane.b32.xlu0 %v2254, 112
      %v2256 = vpop.permute.xlu0 %2255
      %vm2257 = vcmp.ne.s32.totalorder %v2256, 0
      %vm2258 = vmand %vm2252, %vm2257
      %vm2259 = vcmp.lt.f32.partialorder %v2247, %v2250
      %vm2260 = vcmp.lt.f32.partialorder %v2221, 0.0
      %v2261 = vsel %vm2260, 1, 0
      %2262 = vrot.lane.b32.xlu0 %v2261, 112
      %v2263 = vpop.permute.xlu0 %2262
      %vm2264 = vcmp.ne.s32.totalorder %v2263, 0
      %vm2265 = vmand %vm2259, %vm2264
      %2267 = vrot.lane.b32.xlu0 %v2247, 16
      %v2268 = vpop.permute.xlu0 %2267
      %vm2270 = vcmp.lt.f32.partialorder %v2221, %v2268
      %vm2271 = vcmp.lt.f32.partialorder %v2247, 0.0
      %v2272 = vsel %vm2271, 1, 0
      %2273 = vrot.lane.b32.xlu0 %v2272, 16
      %v2274 = vpop.permute.xlu0 %2273
      %vm2275 = vcmp.ne.s32.totalorder %v2274, 0
      %vm2276 = vmand %vm2270, %vm2275
      %v2277 = vmul.f32 %v2221, %v2221
      %v2278 = vmul.f32 %v2247, %v2247
      %2280 = vrot.lane.b32.xlu0 %v2278, 16
      %v2281 = vpop.permute.xlu0 %2280
      %v2283 = vsub.f32 %v2277, %v2281
      %s2284 = smul.f32 %s1722, 2.0
      %s2285 = smul.f32 %s2284, %s1722
      %v2286 = vstv %s1721
      %v2287 = vrcp.pop %v2286
      %s2288 = vtos %v2287
      %s2289 = smul.f32 %s2285, %s2288
      %v2290 = vstv %s2289
      %v2291 = vmul.f32 %v2290, %v2247
      %2293 = vrot.lane.b32.xlu0 %v2283, 112
      %v2294 = vpop.permute.xlu0 %2293
      %vm2296 = vcmp.ge.f32.partialorder %v2291, %v2294
      %vm2297 = vcmp.gt.f32.partialorder %v2283, 0.0
      %v2298 = vsel %vm2297, 1, 0
      %2299 = vrot.lane.b32.xlu0 %v2298, 112
      %v2300 = vpop.permute.xlu0 %2299
      %vm2301 = vcmp.ne.s32.totalorder %v2300, 0
      %vm2302 = vmand %vm2296, %vm2301
      %vm2303 = vmor %vm2258, %vm2265
      %v2304 = vsel %vm2276, 1, 0
      %2305 = vrot.lane.b32.xlu0 %v2304, 112
      %v2306 = vpop.permute.xlu0 %2305
      %vm2307 = vcmp.ne.s32.totalorder %v2306, 0
      %vm2308 = vmor %vm2303, %vm2307
      %vm2309 = vmor %vm2308, %vm2302
      %v2310 = vsel %vm2309, %v2201, 1.0
      %2312 = vrot.lane.b32.xlu0 %v2310, 16
      %v2313 = vpop.permute.xlu0 %2312
      %v2315 = vmul.f32 %v2197, %v2313
      %v2316 = vadd.f32 %v1707, %v2315
      %v2317 = vadd.f32 %v1707, %v2197
      %v2318 = vsel %vm1171, %v2317, %v2316
      %v2320 = vsel %vm566, %v2318, 0
      %2322 = vmatprep.subr.mxu0 0.0
      %2323 = vmatpush1.msra.mxu0 0.0
      %2324 = vmatprep.subr.mxu0 0.0
      %2325 = vmatpush1.msra.mxu0 0.0
      %2326 = vmatprep.subr.mxu0 0.0
      %2327 = vmatpush1.msra.mxu0 0.0
      %2328 = vmatprep.subr.mxu0 0.0
      %2329 = vmatpush1.msra.mxu0 0.0
      %2330 = vmatprep.subr.mxu0 0.0
      %2331 = vmatpush1.msra.mxu0 0.0
      %2332 = vmatprep.subr.mxu0 0.0
      %2333 = vmatpush1.msra.mxu0 0.0
      %2334 = vmatprep.subr.mxu0 0.0
      %2335 = vmatpush1.msra.mxu0 0.0
      %2336 = vmatprep.subr.mxu0 0.0
      %2337 = vmatpush1.msra.mxu0 0.0
      %2338 = vmatprep.subr.mxu0 0.0
      %2339 = vmatpush1.msra.mxu0 0.0
      %2340 = vmatprep.subr.mxu0 0.0
      %2341 = vmatpush1.msra.mxu0 0.0
      %2342 = vmatprep.subr.mxu0 0.0
      %2343 = vmatpush1.msra.mxu0 0.0
      %2344 = vmatprep.subr.mxu0 0.0
      %2345 = vmatpush1.msra.mxu0 0.0
      %2346 = vmatprep.subr.mxu0 0.0
      %2347 = vmatpush1.msra.mxu0 0.0
      %2348 = vmatprep.subr.mxu0 0.0
      %v2349 = vand.u32 %v52, 4294901760
      %2350 = vmatpush1.msra.mxu0 %v2349
      %2351 = vmatprep.subr.mxu0 0.0
      %v2352 = vand.u32 %v51, 4294901760
      %2353 = vmatpush1.msra.mxu0 %v2352
      %2354 = vmatprep.subr.mxu0 0.0
      %v2355 = vand.u32 %v50, 4294901760
      %2356 = vmatpush1.msra.mxu0 %v2355
      %2357 = vmatprep.subr.mxu0 0.0
      %2358 = vmatpush2.msra.mxu0 0.0
      %2359 = vmatprep.subr.mxu0 0.0
      %2360 = vmatpush2.msra.mxu0 0.0
      %2361 = vmatprep.subr.mxu0 0.0
      %2362 = vmatpush2.msra.mxu0 0.0
      %2363 = vmatprep.subr.mxu0 0.0
      %2364 = vmatpush2.msra.mxu0 0.0
      %2365 = vmatprep.subr.mxu0 0.0
      %2366 = vmatpush2.msra.mxu0 0.0
      %2367 = vmatprep.subr.mxu0 0.0
      %2368 = vmatpush2.msra.mxu0 0.0
      %2369 = vmatprep.subr.mxu0 0.0
      %2370 = vmatpush2.msra.mxu0 0.0
      %2371 = vmatprep.subr.mxu0 0.0
      %2372 = vmatpush2.msra.mxu0 0.0
      %2373 = vmatprep.subr.mxu0 0.0
      %2374 = vmatpush2.msra.mxu0 0.0
      %2375 = vmatprep.subr.mxu0 0.0
      %2376 = vmatpush2.msra.mxu0 0.0
      %2377 = vmatprep.subr.mxu0 0.0
      %2378 = vmatpush2.msra.mxu0 0.0
      %2379 = vmatprep.subr.mxu0 0.0
      %2380 = vmatpush2.msra.mxu0 0.0
      %2381 = vmatprep.subr.mxu0 0.0
      %2382 = vmatpush2.msra.mxu0 0.0
      %2383 = vmatprep.subr.mxu0 0.0
      %2384 = vmatpush2.msra.mxu0 0.0
      %2385 = vmatprep.subr.mxu0 0.0
      %2386 = vmatpush2.msra.mxu0 0.0
      %2387 = vmatprep.subr.mxu0 0.0
      %2388 = vmatpush2.msra.mxu0 0.0
      %2389 = vmatprep.mubr.f32.mxu0 0.0
      %v2390 = vand.u32 %v2320, 4294901760
      %v2391 = vsub.f32 %v2320, %v2390
      %v2392 = vand.u32 %v2391, 4294901760
      %v2393 = vsub.f32 %v2391, %v2392
      %v2394 = vand.u32 %v2393, 4294901760
      %2395 = vmatmul.mubr.f32.gmra.mxu0 %v2394
      %v2396 = vpop.f32.mrf.mxu0
      %v2397 = vadd.f32 %v1177, %v2396
      %v2398 = vpop.f32.mrf.mxu0
      %2399 = vdwg.mxu0
      %2400 = vmatprep.subr.mxu0 0.0
      %2401 = vmatpush1.msra.mxu0 0.0
      %2402 = vmatprep.subr.mxu0 0.0
      %2403 = vmatpush1.msra.mxu0 0.0
      %2404 = vmatprep.subr.mxu0 0.0
      %2405 = vmatpush1.msra.mxu0 0.0
      %2406 = vmatprep.subr.mxu0 0.0
      %2407 = vmatpush1.msra.mxu0 0.0
      %2408 = vmatprep.subr.mxu0 0.0
      %2409 = vmatpush1.msra.mxu0 0.0
      %2410 = vmatprep.subr.mxu0 0.0
      %2411 = vmatpush1.msra.mxu0 0.0
      %2412 = vmatprep.subr.mxu0 0.0
      %2413 = vmatpush1.msra.mxu0 0.0
      %2414 = vmatprep.subr.mxu0 0.0
      %2415 = vmatpush1.msra.mxu0 0.0
      %2416 = vmatprep.subr.mxu0 0.0
      %2417 = vmatpush1.msra.mxu0 0.0
      %2418 = vmatprep.subr.mxu0 0.0
      %2419 = vmatpush1.msra.mxu0 0.0
      %2420 = vmatprep.subr.mxu0 0.0
      %2421 = vmatpush1.msra.mxu0 0.0
      %2422 = vmatprep.subr.mxu0 0.0
      %2423 = vmatpush1.msra.mxu0 0.0
      %2424 = vmatprep.subr.mxu0 0.0
      %2425 = vmatpush1.msra.mxu0 0.0
      %2426 = vmatprep.subr.mxu0 0.0
      %v2427 = vand.u32 %v52, 4294901760
      %v2428 = vsub.f32 %v52, %v2427
      %v2429 = vand.u32 %v2428, 4294901760
      %v2430 = vsub.f32 %v2428, %v2429
      %v2431 = vand.u32 %v2430, 4294901760
      %2432 = vmatpush1.msra.mxu0 %v2431
      %2433 = vmatprep.subr.mxu0 0.0
      %v2434 = vand.u32 %v51, 4294901760
      %v2435 = vsub.f32 %v51, %v2434
      %v2436 = vand.u32 %v2435, 4294901760
      %v2437 = vsub.f32 %v2435, %v2436
      %v2438 = vand.u32 %v2437, 4294901760
      %2439 = vmatpush1.msra.mxu0 %v2438
      %2440 = vmatprep.subr.mxu0 0.0
      %v2441 = vand.u32 %v50, 4294901760
      %v2442 = vsub.f32 %v50, %v2441
      %v2443 = vand.u32 %v2442, 4294901760
      %v2444 = vsub.f32 %v2442, %v2443
      %v2445 = vand.u32 %v2444, 4294901760
      %2446 = vmatpush1.msra.mxu0 %v2445
      %2447 = vmatprep.subr.mxu0 0.0
      %2448 = vmatpush2.msra.mxu0 0.0
      %2449 = vmatprep.subr.mxu0 0.0
      %2450 = vmatpush2.msra.mxu0 0.0
      %2451 = vmatprep.subr.mxu0 0.0
      %2452 = vmatpush2.msra.mxu0 0.0
      %2453 = vmatprep.subr.mxu0 0.0
      %2454 = vmatpush2.msra.mxu0 0.0
      %2455 = vmatprep.subr.mxu0 0.0
      %2456 = vmatpush2.msra.mxu0 0.0
      %2457 = vmatprep.subr.mxu0 0.0
      %2458 = vmatpush2.msra.mxu0 0.0
      %2459 = vmatprep.subr.mxu0 0.0
      %2460 = vmatpush2.msra.mxu0 0.0
      %2461 = vmatprep.subr.mxu0 0.0
      %2462 = vmatpush2.msra.mxu0 0.0
      %2463 = vmatprep.subr.mxu0 0.0
      %2464 = vmatpush2.msra.mxu0 0.0
      %2465 = vmatprep.subr.mxu0 0.0
      %2466 = vmatpush2.msra.mxu0 0.0
      %2467 = vmatprep.subr.mxu0 0.0
      %2468 = vmatpush2.msra.mxu0 0.0
      %2469 = vmatprep.subr.mxu0 0.0
      %2470 = vmatpush2.msra.mxu0 0.0
      %2471 = vmatprep.subr.mxu0 0.0
      %2472 = vmatpush2.msra.mxu0 0.0
      %2473 = vmatprep.subr.mxu0 0.0
      %2474 = vmatpush2.msra.mxu0 0.0
      %2475 = vmatprep.subr.mxu0 0.0
      %2476 = vmatpush2.msra.mxu0 0.0
      %2477 = vmatprep.subr.mxu0 0.0
      %2478 = vmatpush2.msra.mxu0 0.0
      %2479 = vmatprep.mubr.f32.mxu0 0.0
      %v2480 = vand.u32 %v2320, 4294901760
      %2481 = vmatmul.mubr.f32.gmra.mxu0 %v2480
      %v2482 = vpop.f32.mrf.mxu0
      %v2483 = vadd.f32 %v2397, %v2482
      %v2484 = vpop.f32.mrf.mxu0
      %2485 = vdwg.mxu0
      %2486 = vmatprep.subr.mxu0 0.0
      %2487 = vmatpush1.msra.mxu0 0.0
      %2488 = vmatprep.subr.mxu0 0.0
      %2489 = vmatpush1.msra.mxu0 0.0
      %2490 = vmatprep.subr.mxu0 0.0
      %2491 = vmatpush1.msra.mxu0 0.0
      %2492 = vmatprep.subr.mxu0 0.0
      %2493 = vmatpush1.msra.mxu0 0.0
      %2494 = vmatprep.subr.mxu0 0.0
      %2495 = vmatpush1.msra.mxu0 0.0
      %2496 = vmatprep.subr.mxu0 0.0
      %2497 = vmatpush1.msra.mxu0 0.0
      %2498 = vmatprep.subr.mxu0 0.0
      %2499 = vmatpush1.msra.mxu0 0.0
      %2500 = vmatprep.subr.mxu0 0.0
      %2501 = vmatpush1.msra.mxu0 0.0
      %2502 = vmatprep.subr.mxu0 0.0
      %2503 = vmatpush1.msra.mxu0 0.0
      %2504 = vmatprep.subr.mxu0 0.0
      %2505 = vmatpush1.msra.mxu0 0.0
      %2506 = vmatprep.subr.mxu0 0.0
      %2507 = vmatpush1.msra.mxu0 0.0
      %2508 = vmatprep.subr.mxu0 0.0
      %2509 = vmatpush1.msra.mxu0 0.0
      %2510 = vmatprep.subr.mxu0 0.0
      %2511 = vmatpush1.msra.mxu0 0.0
      %2512 = vmatprep.subr.mxu0 0.0
      %v2513 = vand.u32 %v52, 4294901760
      %v2514 = vsub.f32 %v52, %v2513
      %2515 = vmatpush1.msra.mxu0 %v2514
      %2516 = vmatprep.subr.mxu0 0.0
      %v2517 = vand.u32 %v51, 4294901760
      %v2518 = vsub.f32 %v51, %v2517
      %2519 = vmatpush1.msra.mxu0 %v2518
      %2520 = vmatprep.subr.mxu0 0.0
      %v2521 = vand.u32 %v50, 4294901760
      %v2522 = vsub.f32 %v50, %v2521
      %2523 = vmatpush1.msra.mxu0 %v2522
      %2524 = vmatprep.subr.mxu0 0.0
      %2525 = vmatpush2.msra.mxu0 0.0
      %2526 = vmatprep.subr.mxu0 0.0
      %2527 = vmatpush2.msra.mxu0 0.0
      %2528 = vmatprep.subr.mxu0 0.0
      %2529 = vmatpush2.msra.mxu0 0.0
      %2530 = vmatprep.subr.mxu0 0.0
      %2531 = vmatpush2.msra.mxu0 0.0
      %2532 = vmatprep.subr.mxu0 0.0
      %2533 = vmatpush2.msra.mxu0 0.0
      %2534 = vmatprep.subr.mxu0 0.0
      %2535 = vmatpush2.msra.mxu0 0.0
      %2536 = vmatprep.subr.mxu0 0.0
      %2537 = vmatpush2.msra.mxu0 0.0
      %2538 = vmatprep.subr.mxu0 0.0
      %2539 = vmatpush2.msra.mxu0 0.0
      %2540 = vmatprep.subr.mxu0 0.0
      %2541 = vmatpush2.msra.mxu0 0.0
      %2542 = vmatprep.subr.mxu0 0.0
      %2543 = vmatpush2.msra.mxu0 0.0
      %2544 = vmatprep.subr.mxu0 0.0
      %2545 = vmatpush2.msra.mxu0 0.0
      %2546 = vmatprep.subr.mxu0 0.0
      %2547 = vmatpush2.msra.mxu0 0.0
      %2548 = vmatprep.subr.mxu0 0.0
      %2549 = vmatpush2.msra.mxu0 0.0
      %2550 = vmatprep.subr.mxu0 0.0
      %2551 = vmatpush2.msra.mxu0 0.0
      %2552 = vmatprep.subr.mxu0 0.0
      %2553 = vmatpush2.msra.mxu0 0.0
      %2554 = vmatprep.subr.mxu0 0.0
      %2555 = vmatpush2.msra.mxu0 0.0
      %2556 = vmatprep.mubr.f32.mxu0 0.0
      %v2557 = vand.u32 %v2320, 4294901760
      %v2558 = vsub.f32 %v2320, %v2557
      %2559 = vmatmul.mubr.f32.gmra.mxu0 %v2558
      %v2560 = vpop.f32.mrf.mxu0
      %v2561 = vadd.f32 %v2483, %v2560
      %v2562 = vpop.f32.mrf.mxu0
      %2563 = vdwg.mxu0
      %2564 = vmatprep.subr.mxu0 0.0
      %2565 = vmatpush1.msra.mxu0 0.0
      %2566 = vmatprep.subr.mxu0 0.0
      %2567 = vmatpush1.msra.mxu0 0.0
      %2568 = vmatprep.subr.mxu0 0.0
      %2569 = vmatpush1.msra.mxu0 0.0
      %2570 = vmatprep.subr.mxu0 0.0
      %2571 = vmatpush1.msra.mxu0 0.0
      %2572 = vmatprep.subr.mxu0 0.0
      %2573 = vmatpush1.msra.mxu0 0.0
      %2574 = vmatprep.subr.mxu0 0.0
      %2575 = vmatpush1.msra.mxu0 0.0
      %2576 = vmatprep.subr.mxu0 0.0
      %2577 = vmatpush1.msra.mxu0 0.0
      %2578 = vmatprep.subr.mxu0 0.0
      %2579 = vmatpush1.msra.mxu0 0.0
      %2580 = vmatprep.subr.mxu0 0.0
      %2581 = vmatpush1.msra.mxu0 0.0
      %2582 = vmatprep.subr.mxu0 0.0
      %2583 = vmatpush1.msra.mxu0 0.0
      %2584 = vmatprep.subr.mxu0 0.0
      %2585 = vmatpush1.msra.mxu0 0.0
      %2586 = vmatprep.subr.mxu0 0.0
      %2587 = vmatpush1.msra.mxu0 0.0
      %2588 = vmatprep.subr.mxu0 0.0
      %2589 = vmatpush1.msra.mxu0 0.0
      %2590 = vmatprep.subr.mxu0 0.0
      %v2591 = vand.u32 %v52, 4294901760
      %2592 = vmatpush1.msra.mxu0 %v2591
      %2593 = vmatprep.subr.mxu0 0.0
      %v2594 = vand.u32 %v51, 4294901760
      %2595 = vmatpush1.msra.mxu0 %v2594
      %2596 = vmatprep.subr.mxu0 0.0
      %v2597 = vand.u32 %v50, 4294901760
      %2598 = vmatpush1.msra.mxu0 %v2597
      %2599 = vmatprep.subr.mxu0 0.0
      %2600 = vmatpush2.msra.mxu0 0.0
      %2601 = vmatprep.subr.mxu0 0.0
      %2602 = vmatpush2.msra.mxu0 0.0
      %2603 = vmatprep.subr.mxu0 0.0
      %2604 = vmatpush2.msra.mxu0 0.0
      %2605 = vmatprep.subr.mxu0 0.0
      %2606 = vmatpush2.msra.mxu0 0.0
      %2607 = vmatprep.subr.mxu0 0.0
      %2608 = vmatpush2.msra.mxu0 0.0
      %2609 = vmatprep.subr.mxu0 0.0
      %2610 = vmatpush2.msra.mxu0 0.0
      %2611 = vmatprep.subr.mxu0 0.0
      %2612 = vmatpush2.msra.mxu0 0.0
      %2613 = vmatprep.subr.mxu0 0.0
      %2614 = vmatpush2.msra.mxu0 0.0
      %2615 = vmatprep.subr.mxu0 0.0
      %2616 = vmatpush2.msra.mxu0 0.0
      %2617 = vmatprep.subr.mxu0 0.0
      %2618 = vmatpush2.msra.mxu0 0.0
      %2619 = vmatprep.subr.mxu0 0.0
      %2620 = vmatpush2.msra.mxu0 0.0
      %2621 = vmatprep.subr.mxu0 0.0
      %2622 = vmatpush2.msra.mxu0 0.0
      %2623 = vmatprep.subr.mxu0 0.0
      %2624 = vmatpush2.msra.mxu0 0.0
      %2625 = vmatprep.subr.mxu0 0.0
      %2626 = vmatpush2.msra.mxu0 0.0
      %2627 = vmatprep.subr.mxu0 0.0
      %2628 = vmatpush2.msra.mxu0 0.0
      %2629 = vmatprep.subr.mxu0 0.0
      %2630 = vmatpush2.msra.mxu0 0.0
      %2631 = vmatprep.mubr.f32.mxu0 0.0
      %v2632 = vand.u32 %v2320, 4294901760
      %v2633 = vsub.f32 %v2320, %v2632
      %v2634 = vand.u32 %v2633, 4294901760
      %2635 = vmatmul.mubr.f32.gmra.mxu0 %v2634
      %v2636 = vpop.f32.mrf.mxu0
      %v2637 = vadd.f32 %v2561, %v2636
      %v2638 = vpop.f32.mrf.mxu0
      %2639 = vdwg.mxu0
      %2640 = vmatprep.subr.mxu0 0.0
      %2641 = vmatpush1.msra.mxu0 0.0
      %2642 = vmatprep.subr.mxu0 0.0
      %2643 = vmatpush1.msra.mxu0 0.0
      %2644 = vmatprep.subr.mxu0 0.0
      %2645 = vmatpush1.msra.mxu0 0.0
      %2646 = vmatprep.subr.mxu0 0.0
      %2647 = vmatpush1.msra.mxu0 0.0
      %2648 = vmatprep.subr.mxu0 0.0
      %2649 = vmatpush1.msra.mxu0 0.0
      %2650 = vmatprep.subr.mxu0 0.0
      %2651 = vmatpush1.msra.mxu0 0.0
      %2652 = vmatprep.subr.mxu0 0.0
      %2653 = vmatpush1.msra.mxu0 0.0
      %2654 = vmatprep.subr.mxu0 0.0
      %2655 = vmatpush1.msra.mxu0 0.0
      %2656 = vmatprep.subr.mxu0 0.0
      %2657 = vmatpush1.msra.mxu0 0.0
      %2658 = vmatprep.subr.mxu0 0.0
      %2659 = vmatpush1.msra.mxu0 0.0
      %2660 = vmatprep.subr.mxu0 0.0
      %2661 = vmatpush1.msra.mxu0 0.0
      %2662 = vmatprep.subr.mxu0 0.0
      %2663 = vmatpush1.msra.mxu0 0.0
      %2664 = vmatprep.subr.mxu0 0.0
      %2665 = vmatpush1.msra.mxu0 0.0
      %2666 = vmatprep.subr.mxu0 0.0
      %v2667 = vand.u32 %v52, 4294901760
      %v2668 = vsub.f32 %v52, %v2667
      %v2669 = vand.u32 %v2668, 4294901760
      %2670 = vmatpush1.msra.mxu0 %v2669
      %2671 = vmatprep.subr.mxu0 0.0
      %v2672 = vand.u32 %v51, 4294901760
      %v2673 = vsub.f32 %v51, %v2672
      %v2674 = vand.u32 %v2673, 4294901760
      %2675 = vmatpush1.msra.mxu0 %v2674
      %2676 = vmatprep.subr.mxu0 0.0
      %v2677 = vand.u32 %v50, 4294901760
      %v2678 = vsub.f32 %v50, %v2677
      %v2679 = vand.u32 %v2678, 4294901760
      %2680 = vmatpush1.msra.mxu0 %v2679
      %2681 = vmatprep.subr.mxu0 0.0
      %2682 = vmatpush2.msra.mxu0 0.0
      %2683 = vmatprep.subr.mxu0 0.0
      %2684 = vmatpush2.msra.mxu0 0.0
      %2685 = vmatprep.subr.mxu0 0.0
      %2686 = vmatpush2.msra.mxu0 0.0
      %2687 = vmatprep.subr.mxu0 0.0
      %2688 = vmatpush2.msra.mxu0 0.0
      %2689 = vmatprep.subr.mxu0 0.0
      %2690 = vmatpush2.msra.mxu0 0.0
      %2691 = vmatprep.subr.mxu0 0.0
      %2692 = vmatpush2.msra.mxu0 0.0
      %2693 = vmatprep.subr.mxu0 0.0
      %2694 = vmatpush2.msra.mxu0 0.0
      %2695 = vmatprep.subr.mxu0 0.0
      %2696 = vmatpush2.msra.mxu0 0.0
      %2697 = vmatprep.subr.mxu0 0.0
      %2698 = vmatpush2.msra.mxu0 0.0
      %2699 = vmatprep.subr.mxu0 0.0
      %2700 = vmatpush2.msra.mxu0 0.0
      %2701 = vmatprep.subr.mxu0 0.0
      %2702 = vmatpush2.msra.mxu0 0.0
      %2703 = vmatprep.subr.mxu0 0.0
      %2704 = vmatpush2.msra.mxu0 0.0
      %2705 = vmatprep.subr.mxu0 0.0
      %2706 = vmatpush2.msra.mxu0 0.0
      %2707 = vmatprep.subr.mxu0 0.0
      %2708 = vmatpush2.msra.mxu0 0.0
      %2709 = vmatprep.subr.mxu0 0.0
      %2710 = vmatpush2.msra.mxu0 0.0
      %2711 = vmatprep.subr.mxu0 0.0
      %2712 = vmatpush2.msra.mxu0 0.0
      %2713 = vmatprep.mubr.f32.mxu0 0.0
      %v2714 = vand.u32 %v2320, 4294901760
      %2715 = vmatmul.mubr.f32.gmra.mxu0 %v2714
      %v2716 = vpop.f32.mrf.mxu0
      %v2717 = vadd.f32 %v2637, %v2716
      %v2718 = vpop.f32.mrf.mxu0
      %2719 = vdwg.mxu0
      %2720 = vmatprep.subr.mxu0 0.0
      %2721 = vmatpush1.msra.mxu0 0.0
      %2722 = vmatprep.subr.mxu0 0.0
      %2723 = vmatpush1.msra.mxu0 0.0
      %2724 = vmatprep.subr.mxu0 0.0
      %2725 = vmatpush1.msra.mxu0 0.0
      %2726 = vmatprep.subr.mxu0 0.0
      %2727 = vmatpush1.msra.mxu0 0.0
      %2728 = vmatprep.subr.mxu0 0.0
      %2729 = vmatpush1.msra.mxu0 0.0
      %2730 = vmatprep.subr.mxu0 0.0
      %2731 = vmatpush1.msra.mxu0 0.0
      %2732 = vmatprep.subr.mxu0 0.0
      %2733 = vmatpush1.msra.mxu0 0.0
      %2734 = vmatprep.subr.mxu0 0.0
      %2735 = vmatpush1.msra.mxu0 0.0
      %2736 = vmatprep.subr.mxu0 0.0
      %2737 = vmatpush1.msra.mxu0 0.0
      %2738 = vmatprep.subr.mxu0 0.0
      %2739 = vmatpush1.msra.mxu0 0.0
      %2740 = vmatprep.subr.mxu0 0.0
      %2741 = vmatpush1.msra.mxu0 0.0
      %2742 = vmatprep.subr.mxu0 0.0
      %2743 = vmatpush1.msra.mxu0 0.0
      %2744 = vmatprep.subr.mxu0 0.0
      %2745 = vmatpush1.msra.mxu0 0.0
      %2746 = vmatprep.subr.mxu0 0.0
      %v2747 = vand.u32 %v52, 4294901760
      %2748 = vmatpush1.msra.mxu0 %v2747
      %2749 = vmatprep.subr.mxu0 0.0
      %v2750 = vand.u32 %v51, 4294901760
      %2751 = vmatpush1.msra.mxu0 %v2750
      %2752 = vmatprep.subr.mxu0 0.0
      %v2753 = vand.u32 %v50, 4294901760
      %2754 = vmatpush1.msra.mxu0 %v2753
      %2755 = vmatprep.subr.mxu0 0.0
      %2756 = vmatpush2.msra.mxu0 0.0
      %2757 = vmatprep.subr.mxu0 0.0
      %2758 = vmatpush2.msra.mxu0 0.0
      %2759 = vmatprep.subr.mxu0 0.0
      %2760 = vmatpush2.msra.mxu0 0.0
      %2761 = vmatprep.subr.mxu0 0.0
      %2762 = vmatpush2.msra.mxu0 0.0
      %2763 = vmatprep.subr.mxu0 0.0
      %2764 = vmatpush2.msra.mxu0 0.0
      %2765 = vmatprep.subr.mxu0 0.0
      %2766 = vmatpush2.msra.mxu0 0.0
      %2767 = vmatprep.subr.mxu0 0.0
      %2768 = vmatpush2.msra.mxu0 0.0
      %2769 = vmatprep.subr.mxu0 0.0
      %2770 = vmatpush2.msra.mxu0 0.0
      %2771 = vmatprep.subr.mxu0 0.0
      %2772 = vmatpush2.msra.mxu0 0.0
      %2773 = vmatprep.subr.mxu0 0.0
      %2774 = vmatpush2.msra.mxu0 0.0
      %2775 = vmatprep.subr.mxu0 0.0
      %2776 = vmatpush2.msra.mxu0 0.0
      %2777 = vmatprep.subr.mxu0 0.0
      %2778 = vmatpush2.msra.mxu0 0.0
      %2779 = vmatprep.subr.mxu0 0.0
      %2780 = vmatpush2.msra.mxu0 0.0
      %2781 = vmatprep.subr.mxu0 0.0
      %2782 = vmatpush2.msra.mxu0 0.0
      %2783 = vmatprep.subr.mxu0 0.0
      %2784 = vmatpush2.msra.mxu0 0.0
      %2785 = vmatprep.subr.mxu0 0.0
      %2786 = vmatpush2.msra.mxu0 0.0
      %2787 = vmatprep.mubr.f32.mxu0 0.0
      %v2788 = vand.u32 %v2320, 4294901760
      %2789 = vmatmul.mubr.f32.gmra.mxu0 %v2788
      %v2790 = vpop.f32.mrf.mxu0
      %v2791 = vadd.f32 %v2717, %v2790
      %v2792 = vpop.f32.mrf.mxu0
      %2793 = vdwg.mxu0
      %v2794 = vmax.f32 %v2317, -5.0
      %v2795 = vmin.f32 %v2794, 5.0
      %v2796 = vmax.f32 %v2791, -5.0
      %v2797 = vmin.f32 %v2796, 5.0
      %v2798 = vmax.f32 %v2316, -3.0
      %v2799 = vmin.f32 %v2798, 3.0
      %v2800 = vsub.f32 %v2799, %v2204
      %v2801 = vstv %s1722
      %v2802 = vrcp.pop %v2801
      %s2803 = vtos %v2802
      %s2804 = smul.f32 %s1721, %s2803
      %v2805 = vstv %s2804
      %v2806 = vmul.f32 %v2805, %v1710
      %v2807 = vmul.f32 %v2806, %v1710
      %s2808 = smul.f32 %s1722, %s1722
      %v2809 = vstv %s2808
      %v2810 = vrcp.pop %v2809
      %s2811 = vtos %v2810
      %s2812 = smul.f32 %s1721, %s2811
      %v2813 = vstv %s2812
      %v2814 = vmul.f32 %v2813, %v2800
      %v2815 = vmul.f32 %v2814, %v2800
      %2817 = vrot.lane.b32.xlu0 %v2815, 112
      %v2818 = vpop.permute.xlu0 %2817
      %v2820 = vadd.f32 %v2807, %v2818
      %v2821 = vrsqrt.pop %v2820
      %v2822 = vmul.f32 %v2820, %v2821
      %vm2823 = vcmp.eq.f32.partialorder %v2820, inf
      %v2824 = vsel %vm2823, %v2820, %v2822
      %vm2825 = vcmp.eq.f32.partialorder %v2820, 0.0
      %v2826 = vand.u32 %v2820, 2147483648
      %v2827 = vsel %vm2825, %v2826, %v2824
      %v2828 = vmul.f32 %v2805, %v1709
      %v2829 = vstv %s1722
      %v2830 = vrcp.pop %v2829
      %s2831 = vtos %v2830
      %v2832 = vstv %s2831
      %v2833 = vmul.f32 %v2832, %v2799
      %2835 = vrot.lane.b32.xlu0 %v2833, 112
      %v2836 = vpop.permute.xlu0 %2835
      %v2838 = vadd.f32 %v2828, %v2836
      %v2839 = vsel %vm1171, %v2795, %v2799
      %2840 = vst.msk [vmem:[#allocation2] sm:$0xff] %vm566, %v2839
      %2841 = vst.msk [vmem:[#allocation3] sm:$0xff] %vm1701, %v2797
      %2842 = vst.msk [vmem:[#allocation4] sm:$0xff] %vm1703, %v2838
      %2843 = vst.msk [vmem:[#allocation5] sm:$0xff] %vm1703, %v2827
      %s2844 = sadd.s32 %s557, 2
      %v2845 = vld [vmem:[#allocation2] sm:$0xff]
      %v2846 = vld [vmem:[#allocation3] sm:$0xff]
      %v2847 = vld [vmem:[#allocation4] sm:$0xff]
      %v2848 = vld [vmem:[#allocation5] sm:$0xff]
      %2850 = vrot.lane.b32.xlu0 %v2846, 24
      %v2851 = vpop.permute.xlu0 %2850
      %v2853 = vsel %vm566, %v2845, %v2851
      %s2854 = smul.u32 %s2844, 8
      %s2855 = scalar_lea.vmem [#allocation11], %s2854
      %2856 = vst.msk [vmem:[%s2855] sm:$0xff] %vm570, %v2853
      %s2857 = sadd.s32 %s550, %s2844
      %s2858 = scvt.s32.f32 %s2857
      %s2859 = sadd.f32 %s2858, 1.0
      %s2860 = sadd.f32 %s2858, 2.0
      %s2861 = scalar_lea.vmem [#allocation9], %s2854
      %v2862 = vld [vmem:[%s2861] sm:$0xff]
      %v2864 = vsel %vm566, %v2845, 0
      %2866 = vmatprep.subr.mxu0 0.0
      %2867 = vmatpush1.msra.mxu0 0.0
      %2868 = vmatprep.subr.mxu0 0.0
      %2869 = vmatpush1.msra.mxu0 0.0
      %2870 = vmatprep.subr.mxu0 0.0
      %2871 = vmatpush1.msra.mxu0 0.0
      %2872 = vmatprep.subr.mxu0 0.0
      %2873 = vmatpush1.msra.mxu0 0.0
      %2874 = vmatprep.subr.mxu0 0.0
      %2875 = vmatpush1.msra.mxu0 0.0
      %2876 = vmatprep.subr.mxu0 0.0
      %2877 = vmatpush1.msra.mxu0 0.0
      %2878 = vmatprep.subr.mxu0 0.0
      %2879 = vmatpush1.msra.mxu0 0.0
      %2880 = vmatprep.subr.mxu0 0.0
      %2881 = vmatpush1.msra.mxu0 0.0
      %2882 = vmatprep.subr.mxu0 0.0
      %2883 = vmatpush1.msra.mxu0 0.0
      %2884 = vmatprep.subr.mxu0 0.0
      %2885 = vmatpush1.msra.mxu0 0.0
      %2886 = vmatprep.subr.mxu0 0.0
      %2887 = vmatpush1.msra.mxu0 0.0
      %2888 = vmatprep.subr.mxu0 0.0
      %2889 = vmatpush1.msra.mxu0 0.0
      %2890 = vmatprep.subr.mxu0 0.0
      %2891 = vmatpush1.msra.mxu0 0.0
      %2892 = vmatprep.subr.mxu0 0.0
      %v2893 = vand.u32 %v49, 4294901760
      %2894 = vmatpush1.msra.mxu0 %v2893
      %2895 = vmatprep.subr.mxu0 0.0
      %v2896 = vand.u32 %v48, 4294901760
      %2897 = vmatpush1.msra.mxu0 %v2896
      %2898 = vmatprep.subr.mxu0 0.0
      %v2899 = vand.u32 %v47, 4294901760
      %2900 = vmatpush1.msra.mxu0 %v2899
      %2901 = vmatprep.subr.mxu0 0.0
      %2902 = vmatpush2.msra.mxu0 0.0
      %2903 = vmatprep.subr.mxu0 0.0
      %2904 = vmatpush2.msra.mxu0 0.0
      %2905 = vmatprep.subr.mxu0 0.0
      %2906 = vmatpush2.msra.mxu0 0.0
      %2907 = vmatprep.subr.mxu0 0.0
      %2908 = vmatpush2.msra.mxu0 0.0
      %2909 = vmatprep.subr.mxu0 0.0
      %2910 = vmatpush2.msra.mxu0 0.0
      %2911 = vmatprep.subr.mxu0 0.0
      %2912 = vmatpush2.msra.mxu0 0.0
      %2913 = vmatprep.subr.mxu0 0.0
      %2914 = vmatpush2.msra.mxu0 0.0
      %2915 = vmatprep.subr.mxu0 0.0
      %2916 = vmatpush2.msra.mxu0 0.0
      %2917 = vmatprep.subr.mxu0 0.0
      %2918 = vmatpush2.msra.mxu0 0.0
      %2919 = vmatprep.subr.mxu0 0.0
      %2920 = vmatpush2.msra.mxu0 0.0
      %2921 = vmatprep.subr.mxu0 0.0
      %2922 = vmatpush2.msra.mxu0 0.0
      %2923 = vmatprep.subr.mxu0 0.0
      %2924 = vmatpush2.msra.mxu0 0.0
      %2925 = vmatprep.subr.mxu0 0.0
      %2926 = vmatpush2.msra.mxu0 0.0
      %2927 = vmatprep.subr.mxu0 0.0
      %2928 = vmatpush2.msra.mxu0 0.0
      %2929 = vmatprep.subr.mxu0 0.0
      %2930 = vmatpush2.msra.mxu0 0.0
      %2931 = vmatprep.subr.mxu0 0.0
      %2932 = vmatpush2.msra.mxu0 0.0
      %2933 = vmatprep.mubr.f32.mxu0 0.0
      %v2934 = vand.u32 %v2864, 4294901760
      %v2935 = vsub.f32 %v2864, %v2934
      %v2936 = vand.u32 %v2935, 4294901760
      %v2937 = vsub.f32 %v2935, %v2936
      %v2938 = vand.u32 %v2937, 4294901760
      %2939 = vmatmul.mubr.f32.gmra.mxu0 %v2938
      %v2940 = vpop.f32.mrf.mxu0
      %v2941 = vadd.f32 %v2862, %v2940
      %v2942 = vpop.f32.mrf.mxu0
      %2943 = vdwg.mxu0
      %2944 = vmatprep.subr.mxu0 0.0
      %2945 = vmatpush1.msra.mxu0 0.0
      %2946 = vmatprep.subr.mxu0 0.0
      %2947 = vmatpush1.msra.mxu0 0.0
      %2948 = vmatprep.subr.mxu0 0.0
      %2949 = vmatpush1.msra.mxu0 0.0
      %2950 = vmatprep.subr.mxu0 0.0
      %2951 = vmatpush1.msra.mxu0 0.0
      %2952 = vmatprep.subr.mxu0 0.0
      %2953 = vmatpush1.msra.mxu0 0.0
      %2954 = vmatprep.subr.mxu0 0.0
      %2955 = vmatpush1.msra.mxu0 0.0
      %2956 = vmatprep.subr.mxu0 0.0
      %2957 = vmatpush1.msra.mxu0 0.0
      %2958 = vmatprep.subr.mxu0 0.0
      %2959 = vmatpush1.msra.mxu0 0.0
      %2960 = vmatprep.subr.mxu0 0.0
      %2961 = vmatpush1.msra.mxu0 0.0
      %2962 = vmatprep.subr.mxu0 0.0
      %2963 = vmatpush1.msra.mxu0 0.0
      %2964 = vmatprep.subr.mxu0 0.0
      %2965 = vmatpush1.msra.mxu0 0.0
      %2966 = vmatprep.subr.mxu0 0.0
      %2967 = vmatpush1.msra.mxu0 0.0
      %2968 = vmatprep.subr.mxu0 0.0
      %2969 = vmatpush1.msra.mxu0 0.0
      %2970 = vmatprep.subr.mxu0 0.0
      %v2971 = vand.u32 %v49, 4294901760
      %v2972 = vsub.f32 %v49, %v2971
      %v2973 = vand.u32 %v2972, 4294901760
      %v2974 = vsub.f32 %v2972, %v2973
      %v2975 = vand.u32 %v2974, 4294901760
      %2976 = vmatpush1.msra.mxu0 %v2975
      %2977 = vmatprep.subr.mxu0 0.0
      %v2978 = vand.u32 %v48, 4294901760
      %v2979 = vsub.f32 %v48, %v2978
      %v2980 = vand.u32 %v2979, 4294901760
      %v2981 = vsub.f32 %v2979, %v2980
      %v2982 = vand.u32 %v2981, 4294901760
      %2983 = vmatpush1.msra.mxu0 %v2982
      %2984 = vmatprep.subr.mxu0 0.0
      %v2985 = vand.u32 %v47, 4294901760
      %v2986 = vsub.f32 %v47, %v2985
      %v2987 = vand.u32 %v2986, 4294901760
      %v2988 = vsub.f32 %v2986, %v2987
      %v2989 = vand.u32 %v2988, 4294901760
      %2990 = vmatpush1.msra.mxu0 %v2989
      %2991 = vmatprep.subr.mxu0 0.0
      %2992 = vmatpush2.msra.mxu0 0.0
      %2993 = vmatprep.subr.mxu0 0.0
      %2994 = vmatpush2.msra.mxu0 0.0
      %2995 = vmatprep.subr.mxu0 0.0
      %2996 = vmatpush2.msra.mxu0 0.0
      %2997 = vmatprep.subr.mxu0 0.0
      %2998 = vmatpush2.msra.mxu0 0.0
      %2999 = vmatprep.subr.mxu0 0.0
      %3000 = vmatpush2.msra.mxu0 0.0
      %3001 = vmatprep.subr.mxu0 0.0
      %3002 = vmatpush2.msra.mxu0 0.0
      %3003 = vmatprep.subr.mxu0 0.0
      %3004 = vmatpush2.msra.mxu0 0.0
      %3005 = vmatprep.subr.mxu0 0.0
      %3006 = vmatpush2.msra.mxu0 0.0
      %3007 = vmatprep.subr.mxu0 0.0
      %3008 = vmatpush2.msra.mxu0 0.0
      %3009 = vmatprep.subr.mxu0 0.0
      %3010 = vmatpush2.msra.mxu0 0.0
      %3011 = vmatprep.subr.mxu0 0.0
      %3012 = vmatpush2.msra.mxu0 0.0
      %3013 = vmatprep.subr.mxu0 0.0
      %3014 = vmatpush2.msra.mxu0 0.0
      %3015 = vmatprep.subr.mxu0 0.0
      %3016 = vmatpush2.msra.mxu0 0.0
      %3017 = vmatprep.subr.mxu0 0.0
      %3018 = vmatpush2.msra.mxu0 0.0
      %3019 = vmatprep.subr.mxu0 0.0
      %3020 = vmatpush2.msra.mxu0 0.0
      %3021 = vmatprep.subr.mxu0 0.0
      %3022 = vmatpush2.msra.mxu0 0.0
      %3023 = vmatprep.mubr.f32.mxu0 0.0
      %v3024 = vand.u32 %v2864, 4294901760
      %3025 = vmatmul.mubr.f32.gmra.mxu0 %v3024
      %v3026 = vpop.f32.mrf.mxu0
      %v3027 = vadd.f32 %v2941, %v3026
      %v3028 = vpop.f32.mrf.mxu0
      %3029 = vdwg.mxu0
      %3030 = vmatprep.subr.mxu0 0.0
      %3031 = vmatpush1.msra.mxu0 0.0
      %3032 = vmatprep.subr.mxu0 0.0
      %3033 = vmatpush1.msra.mxu0 0.0
      %3034 = vmatprep.subr.mxu0 0.0
      %3035 = vmatpush1.msra.mxu0 0.0
      %3036 = vmatprep.subr.mxu0 0.0
      %3037 = vmatpush1.msra.mxu0 0.0
      %3038 = vmatprep.subr.mxu0 0.0
      %3039 = vmatpush1.msra.mxu0 0.0
      %3040 = vmatprep.subr.mxu0 0.0
      %3041 = vmatpush1.msra.mxu0 0.0
      %3042 = vmatprep.subr.mxu0 0.0
      %3043 = vmatpush1.msra.mxu0 0.0
      %3044 = vmatprep.subr.mxu0 0.0
      %3045 = vmatpush1.msra.mxu0 0.0
      %3046 = vmatprep.subr.mxu0 0.0
      %3047 = vmatpush1.msra.mxu0 0.0
      %3048 = vmatprep.subr.mxu0 0.0
      %3049 = vmatpush1.msra.mxu0 0.0
      %3050 = vmatprep.subr.mxu0 0.0
      %3051 = vmatpush1.msra.mxu0 0.0
      %3052 = vmatprep.subr.mxu0 0.0
      %3053 = vmatpush1.msra.mxu0 0.0
      %3054 = vmatprep.subr.mxu0 0.0
      %3055 = vmatpush1.msra.mxu0 0.0
      %3056 = vmatprep.subr.mxu0 0.0
      %v3057 = vand.u32 %v49, 4294901760
      %v3058 = vsub.f32 %v49, %v3057
      %3059 = vmatpush1.msra.mxu0 %v3058
      %3060 = vmatprep.subr.mxu0 0.0
      %v3061 = vand.u32 %v48, 4294901760
      %v3062 = vsub.f32 %v48, %v3061
      %3063 = vmatpush1.msra.mxu0 %v3062
      %3064 = vmatprep.subr.mxu0 0.0
      %v3065 = vand.u32 %v47, 4294901760
      %v3066 = vsub.f32 %v47, %v3065
      %3067 = vmatpush1.msra.mxu0 %v3066
      %3068 = vmatprep.subr.mxu0 0.0
      %3069 = vmatpush2.msra.mxu0 0.0
      %3070 = vmatprep.subr.mxu0 0.0
      %3071 = vmatpush2.msra.mxu0 0.0
      %3072 = vmatprep.subr.mxu0 0.0
      %3073 = vmatpush2.msra.mxu0 0.0
      %3074 = vmatprep.subr.mxu0 0.0
      %3075 = vmatpush2.msra.mxu0 0.0
      %3076 = vmatprep.subr.mxu0 0.0
      %3077 = vmatpush2.msra.mxu0 0.0
      %3078 = vmatprep.subr.mxu0 0.0
      %3079 = vmatpush2.msra.mxu0 0.0
      %3080 = vmatprep.subr.mxu0 0.0
      %3081 = vmatpush2.msra.mxu0 0.0
      %3082 = vmatprep.subr.mxu0 0.0
      %3083 = vmatpush2.msra.mxu0 0.0
      %3084 = vmatprep.subr.mxu0 0.0
      %3085 = vmatpush2.msra.mxu0 0.0
      %3086 = vmatprep.subr.mxu0 0.0
      %3087 = vmatpush2.msra.mxu0 0.0
      %3088 = vmatprep.subr.mxu0 0.0
      %3089 = vmatpush2.msra.mxu0 0.0
      %3090 = vmatprep.subr.mxu0 0.0
      %3091 = vmatpush2.msra.mxu0 0.0
      %3092 = vmatprep.subr.mxu0 0.0
      %3093 = vmatpush2.msra.mxu0 0.0
      %3094 = vmatprep.subr.mxu0 0.0
      %3095 = vmatpush2.msra.mxu0 0.0
      %3096 = vmatprep.subr.mxu0 0.0
      %3097 = vmatpush2.msra.mxu0 0.0
      %3098 = vmatprep.subr.mxu0 0.0
      %3099 = vmatpush2.msra.mxu0 0.0
      %3100 = vmatprep.mubr.f32.mxu0 0.0
      %v3101 = vand.u32 %v2864, 4294901760
      %v3102 = vsub.f32 %v2864, %v3101
      %3103 = vmatmul.mubr.f32.gmra.mxu0 %v3102
      %v3104 = vpop.f32.mrf.mxu0
      %v3105 = vadd.f32 %v3027, %v3104
      %v3106 = vpop.f32.mrf.mxu0
      %3107 = vdwg.mxu0
      %3108 = vmatprep.subr.mxu0 0.0
      %3109 = vmatpush1.msra.mxu0 0.0
      %3110 = vmatprep.subr.mxu0 0.0
      %3111 = vmatpush1.msra.mxu0 0.0
      %3112 = vmatprep.subr.mxu0 0.0
      %3113 = vmatpush1.msra.mxu0 0.0
      %3114 = vmatprep.subr.mxu0 0.0
      %3115 = vmatpush1.msra.mxu0 0.0
      %3116 = vmatprep.subr.mxu0 0.0
      %3117 = vmatpush1.msra.mxu0 0.0
      %3118 = vmatprep.subr.mxu0 0.0
      %3119 = vmatpush1.msra.mxu0 0.0
      %3120 = vmatprep.subr.mxu0 0.0
      %3121 = vmatpush1.msra.mxu0 0.0
      %3122 = vmatprep.subr.mxu0 0.0
      %3123 = vmatpush1.msra.mxu0 0.0
      %3124 = vmatprep.subr.mxu0 0.0
      %3125 = vmatpush1.msra.mxu0 0.0
      %3126 = vmatprep.subr.mxu0 0.0
      %3127 = vmatpush1.msra.mxu0 0.0
      %3128 = vmatprep.subr.mxu0 0.0
      %3129 = vmatpush1.msra.mxu0 0.0
      %3130 = vmatprep.subr.mxu0 0.0
      %3131 = vmatpush1.msra.mxu0 0.0
      %3132 = vmatprep.subr.mxu0 0.0
      %3133 = vmatpush1.msra.mxu0 0.0
      %3134 = vmatprep.subr.mxu0 0.0
      %v3135 = vand.u32 %v49, 4294901760
      %3136 = vmatpush1.msra.mxu0 %v3135
      %3137 = vmatprep.subr.mxu0 0.0
      %v3138 = vand.u32 %v48, 4294901760
      %3139 = vmatpush1.msra.mxu0 %v3138
      %3140 = vmatprep.subr.mxu0 0.0
      %v3141 = vand.u32 %v47, 4294901760
      %3142 = vmatpush1.msra.mxu0 %v3141
      %3143 = vmatprep.subr.mxu0 0.0
      %3144 = vmatpush2.msra.mxu0 0.0
      %3145 = vmatprep.subr.mxu0 0.0
      %3146 = vmatpush2.msra.mxu0 0.0
      %3147 = vmatprep.subr.mxu0 0.0
      %3148 = vmatpush2.msra.mxu0 0.0
      %3149 = vmatprep.subr.mxu0 0.0
      %3150 = vmatpush2.msra.mxu0 0.0
      %3151 = vmatprep.subr.mxu0 0.0
      %3152 = vmatpush2.msra.mxu0 0.0
      %3153 = vmatprep.subr.mxu0 0.0
      %3154 = vmatpush2.msra.mxu0 0.0
      %3155 = vmatprep.subr.mxu0 0.0
      %3156 = vmatpush2.msra.mxu0 0.0
      %3157 = vmatprep.subr.mxu0 0.0
      %3158 = vmatpush2.msra.mxu0 0.0
      %3159 = vmatprep.subr.mxu0 0.0
      %3160 = vmatpush2.msra.mxu0 0.0
      %3161 = vmatprep.subr.mxu0 0.0
      %3162 = vmatpush2.msra.mxu0 0.0
      %3163 = vmatprep.subr.mxu0 0.0
      %3164 = vmatpush2.msra.mxu0 0.0
      %3165 = vmatprep.subr.mxu0 0.0
      %3166 = vmatpush2.msra.mxu0 0.0
      %3167 = vmatprep.subr.mxu0 0.0
      %3168 = vmatpush2.msra.mxu0 0.0
      %3169 = vmatprep.subr.mxu0 0.0
      %3170 = vmatpush2.msra.mxu0 0.0
      %3171 = vmatprep.subr.mxu0 0.0
      %3172 = vmatpush2.msra.mxu0 0.0
      %3173 = vmatprep.subr.mxu0 0.0
      %3174 = vmatpush2.msra.mxu0 0.0
      %3175 = vmatprep.mubr.f32.mxu0 0.0
      %v3176 = vand.u32 %v2864, 4294901760
      %v3177 = vsub.f32 %v2864, %v3176
      %v3178 = vand.u32 %v3177, 4294901760
      %3179 = vmatmul.mubr.f32.gmra.mxu0 %v3178
      %v3180 = vpop.f32.mrf.mxu0
      %v3181 = vadd.f32 %v3105, %v3180
      %v3182 = vpop.f32.mrf.mxu0
      %3183 = vdwg.mxu0
      %3184 = vmatprep.subr.mxu0 0.0
      %3185 = vmatpush1.msra.mxu0 0.0
      %3186 = vmatprep.subr.mxu0 0.0
      %3187 = vmatpush1.msra.mxu0 0.0
      %3188 = vmatprep.subr.mxu0 0.0
      %3189 = vmatpush1.msra.mxu0 0.0
      %3190 = vmatprep.subr.mxu0 0.0
      %3191 = vmatpush1.msra.mxu0 0.0
      %3192 = vmatprep.subr.mxu0 0.0
      %3193 = vmatpush1.msra.mxu0 0.0
      %3194 = vmatprep.subr.mxu0 0.0
      %3195 = vmatpush1.msra.mxu0 0.0
      %3196 = vmatprep.subr.mxu0 0.0
      %3197 = vmatpush1.msra.mxu0 0.0
      %3198 = vmatprep.subr.mxu0 0.0
      %3199 = vmatpush1.msra.mxu0 0.0
      %3200 = vmatprep.subr.mxu0 0.0
      %3201 = vmatpush1.msra.mxu0 0.0
      %3202 = vmatprep.subr.mxu0 0.0
      %3203 = vmatpush1.msra.mxu0 0.0
      %3204 = vmatprep.subr.mxu0 0.0
      %3205 = vmatpush1.msra.mxu0 0.0
      %3206 = vmatprep.subr.mxu0 0.0
      %3207 = vmatpush1.msra.mxu0 0.0
      %3208 = vmatprep.subr.mxu0 0.0
      %3209 = vmatpush1.msra.mxu0 0.0
      %3210 = vmatprep.subr.mxu0 0.0
      %v3211 = vand.u32 %v49, 4294901760
      %v3212 = vsub.f32 %v49, %v3211
      %v3213 = vand.u32 %v3212, 4294901760
      %3214 = vmatpush1.msra.mxu0 %v3213
      %3215 = vmatprep.subr.mxu0 0.0
      %v3216 = vand.u32 %v48, 4294901760
      %v3217 = vsub.f32 %v48, %v3216
      %v3218 = vand.u32 %v3217, 4294901760
      %3219 = vmatpush1.msra.mxu0 %v3218
      %3220 = vmatprep.subr.mxu0 0.0
      %v3221 = vand.u32 %v47, 4294901760
      %v3222 = vsub.f32 %v47, %v3221
      %v3223 = vand.u32 %v3222, 4294901760
      %3224 = vmatpush1.msra.mxu0 %v3223
      %3225 = vmatprep.subr.mxu0 0.0
      %3226 = vmatpush2.msra.mxu0 0.0
      %3227 = vmatprep.subr.mxu0 0.0
      %3228 = vmatpush2.msra.mxu0 0.0
      %3229 = vmatprep.subr.mxu0 0.0
      %3230 = vmatpush2.msra.mxu0 0.0
      %3231 = vmatprep.subr.mxu0 0.0
      %3232 = vmatpush2.msra.mxu0 0.0
      %3233 = vmatprep.subr.mxu0 0.0
      %3234 = vmatpush2.msra.mxu0 0.0
      %3235 = vmatprep.subr.mxu0 0.0
      %3236 = vmatpush2.msra.mxu0 0.0
      %3237 = vmatprep.subr.mxu0 0.0
      %3238 = vmatpush2.msra.mxu0 0.0
      %3239 = vmatprep.subr.mxu0 0.0
      %3240 = vmatpush2.msra.mxu0 0.0
      %3241 = vmatprep.subr.mxu0 0.0
      %3242 = vmatpush2.msra.mxu0 0.0
      %3243 = vmatprep.subr.mxu0 0.0
      %3244 = vmatpush2.msra.mxu0 0.0
      %3245 = vmatprep.subr.mxu0 0.0
      %3246 = vmatpush2.msra.mxu0 0.0
      %3247 = vmatprep.subr.mxu0 0.0
      %3248 = vmatpush2.msra.mxu0 0.0
      %3249 = vmatprep.subr.mxu0 0.0
      %3250 = vmatpush2.msra.mxu0 0.0
      %3251 = vmatprep.subr.mxu0 0.0
      %3252 = vmatpush2.msra.mxu0 0.0
      %3253 = vmatprep.subr.mxu0 0.0
      %3254 = vmatpush2.msra.mxu0 0.0
      %3255 = vmatprep.subr.mxu0 0.0
      %3256 = vmatpush2.msra.mxu0 0.0
      %3257 = vmatprep.mubr.f32.mxu0 0.0
      %v3258 = vand.u32 %v2864, 4294901760
      %3259 = vmatmul.mubr.f32.gmra.mxu0 %v3258
      %v3260 = vpop.f32.mrf.mxu0
      %v3261 = vadd.f32 %v3181, %v3260
      %v3262 = vpop.f32.mrf.mxu0
      %3263 = vdwg.mxu0
      %3264 = vmatprep.subr.mxu0 0.0
      %3265 = vmatpush1.msra.mxu0 0.0
      %3266 = vmatprep.subr.mxu0 0.0
      %3267 = vmatpush1.msra.mxu0 0.0
      %3268 = vmatprep.subr.mxu0 0.0
      %3269 = vmatpush1.msra.mxu0 0.0
      %3270 = vmatprep.subr.mxu0 0.0
      %3271 = vmatpush1.msra.mxu0 0.0
      %3272 = vmatprep.subr.mxu0 0.0
      %3273 = vmatpush1.msra.mxu0 0.0
      %3274 = vmatprep.subr.mxu0 0.0
      %3275 = vmatpush1.msra.mxu0 0.0
      %3276 = vmatprep.subr.mxu0 0.0
      %3277 = vmatpush1.msra.mxu0 0.0
      %3278 = vmatprep.subr.mxu0 0.0
      %3279 = vmatpush1.msra.mxu0 0.0
      %3280 = vmatprep.subr.mxu0 0.0
      %3281 = vmatpush1.msra.mxu0 0.0
      %3282 = vmatprep.subr.mxu0 0.0
      %3283 = vmatpush1.msra.mxu0 0.0
      %3284 = vmatprep.subr.mxu0 0.0
      %3285 = vmatpush1.msra.mxu0 0.0
      %3286 = vmatprep.subr.mxu0 0.0
      %3287 = vmatpush1.msra.mxu0 0.0
      %3288 = vmatprep.subr.mxu0 0.0
      %3289 = vmatpush1.msra.mxu0 0.0
      %3290 = vmatprep.subr.mxu0 0.0
      %v3291 = vand.u32 %v49, 4294901760
      %3292 = vmatpush1.msra.mxu0 %v3291
      %3293 = vmatprep.subr.mxu0 0.0
      %v3294 = vand.u32 %v48, 4294901760
      %3295 = vmatpush1.msra.mxu0 %v3294
      %3296 = vmatprep.subr.mxu0 0.0
      %v3297 = vand.u32 %v47, 4294901760
      %3298 = vmatpush1.msra.mxu0 %v3297
      %3299 = vmatprep.subr.mxu0 0.0
      %3300 = vmatpush2.msra.mxu0 0.0
      %3301 = vmatprep.subr.mxu0 0.0
      %3302 = vmatpush2.msra.mxu0 0.0
      %3303 = vmatprep.subr.mxu0 0.0
      %3304 = vmatpush2.msra.mxu0 0.0
      %3305 = vmatprep.subr.mxu0 0.0
      %3306 = vmatpush2.msra.mxu0 0.0
      %3307 = vmatprep.subr.mxu0 0.0
      %3308 = vmatpush2.msra.mxu0 0.0
      %3309 = vmatprep.subr.mxu0 0.0
      %3310 = vmatpush2.msra.mxu0 0.0
      %3311 = vmatprep.subr.mxu0 0.0
      %3312 = vmatpush2.msra.mxu0 0.0
      %3313 = vmatprep.subr.mxu0 0.0
      %3314 = vmatpush2.msra.mxu0 0.0
      %3315 = vmatprep.subr.mxu0 0.0
      %3316 = vmatpush2.msra.mxu0 0.0
      %3317 = vmatprep.subr.mxu0 0.0
      %3318 = vmatpush2.msra.mxu0 0.0
      %3319 = vmatprep.subr.mxu0 0.0
      %3320 = vmatpush2.msra.mxu0 0.0
      %3321 = vmatprep.subr.mxu0 0.0
      %3322 = vmatpush2.msra.mxu0 0.0
      %3323 = vmatprep.subr.mxu0 0.0
      %3324 = vmatpush2.msra.mxu0 0.0
      %3325 = vmatprep.subr.mxu0 0.0
      %3326 = vmatpush2.msra.mxu0 0.0
      %3327 = vmatprep.subr.mxu0 0.0
      %3328 = vmatpush2.msra.mxu0 0.0
      %3329 = vmatprep.subr.mxu0 0.0
      %3330 = vmatpush2.msra.mxu0 0.0
      %3331 = vmatprep.mubr.f32.mxu0 0.0
      %v3332 = vand.u32 %v2864, 4294901760
      %3333 = vmatmul.mubr.f32.gmra.mxu0 %v3332
      %v3334 = vpop.f32.mrf.mxu0
      %v3335 = vadd.f32 %v3261, %v3334
      %v3336 = vpop.f32.mrf.mxu0
      %3337 = vdwg.mxu0
      %v3338 = vrcp.pop %v2848
      %v3339 = vmul.f32 1.0, %v3338
      %3341 = vrot.lane.b32.xlu0 %v2847, 16
      %v3342 = vpop.permute.xlu0 %3341
      %v3344 = vsub.f32 %v2845, %v3342
      %v3345 = vadd.f32 %v3339, 1.0
      %v3346 = vmul.f32 %v3335, 0.5
      %3348 = vrot.lane.b32.xlu0 %v3345, 16
      %v3349 = vpop.permute.xlu0 %3348
      %v3351 = vmul.f32 %v3346, %v3349
      %v3352 = vadd.f32 %v3344, %v3351
      %v3353 = vmul.f32 %v3335, %v3352
      %v3354 = vsub.f32 1.0, %v3339
      %3356 = vrot.lane.b32.xlu0 %v3354, 16
      %v3357 = vpop.permute.xlu0 %3356
      %v3359 = vmul.f32 %v3353, %v3357
      %v3360 = vmul.f32 %v2848, %v2848
      %v3361 = vstv %s2859
      %v3362 = vrcp.pop %v3361
      %s3363 = vtos %v3362
      %s3364 = smul.f32 %s2860, %s3363
      %v3365 = vstv %s3364
      %v3366 = vsub.f32 %v3360, %v3365
      %v3367 = vstv %s2860
      %v3368 = vmul.f32 %v3367, %v3366
      %v3369 = vmul.f32 %v3335, %v3349
      %v3370 = vadd.f32 %v3344, %v3369
      %v3371 = vmul.f32 %v3346, %v3335
      %v3372 = vmul.f32 %v3339, %v3339
      %v3373 = vadd.f32 %v3372, 1.0
      %3375 = vrot.lane.b32.xlu0 %v3373, 16
      %v3376 = vpop.permute.xlu0 %3375
      %v3378 = vmul.f32 %v3371, %v3376
      %v3379 = vadd.f32 %v3370, %v3378
      %v3380 = vmul.f32 %v3344, %v3379
      %3382 = vrot.lane.b32.xlu0 %v3380, 112
      %v3383 = vpop.permute.xlu0 %3382
      %v3385 = vadd.f32 %v3368, %v3383
      %3387 = vrot.lane.b32.xlu0 %v3359, 112
      %v3388 = vpop.permute.xlu0 %3387
      %vm3390 = vcmp.ge.f32.partialorder %v3385, %v3388
      %vm3391 = vcmp.ge.f32.partialorder %v3359, 0.0
      %v3392 = vsel %vm3391, 1, 0
      %3393 = vrot.lane.b32.xlu0 %v3392, 112
      %v3394 = vpop.permute.xlu0 %3393
      %vm3395 = vcmp.ne.s32.totalorder %v3394, 0
      %vm3396 = vmand %vm3390, %vm3395
      %vm3397 = vcmp.lt.f32.partialorder %v3385, %v3388
      %vm3398 = vcmp.lt.f32.partialorder %v3359, 0.0
      %v3399 = vsel %vm3398, 1, 0
      %3400 = vrot.lane.b32.xlu0 %v3399, 112
      %v3401 = vpop.permute.xlu0 %3400
      %vm3402 = vcmp.ne.s32.totalorder %v3401, 0
      %vm3403 = vmand %vm3397, %vm3402
      %3405 = vrot.lane.b32.xlu0 %v3385, 16
      %v3406 = vpop.permute.xlu0 %3405
      %vm3408 = vcmp.lt.f32.partialorder %v3359, %v3406
      %vm3409 = vcmp.lt.f32.partialorder %v3385, 0.0
      %v3410 = vsel %vm3409, 1, 0
      %3411 = vrot.lane.b32.xlu0 %v3410, 16
      %v3412 = vpop.permute.xlu0 %3411
      %vm3413 = vcmp.ne.s32.totalorder %v3412, 0
      %vm3414 = vmand %vm3408, %vm3413
      %v3415 = vmul.f32 %v3359, %v3359
      %v3416 = vmul.f32 %v3385, %v3385
      %3418 = vrot.lane.b32.xlu0 %v3416, 16
      %v3419 = vpop.permute.xlu0 %3418
      %v3421 = vsub.f32 %v3415, %v3419
      %s3422 = smul.f32 %s2860, 2.0
      %s3423 = smul.f32 %s3422, %s2860
      %v3424 = vstv %s2859
      %v3425 = vrcp.pop %v3424
      %s3426 = vtos %v3425
      %s3427 = smul.f32 %s3423, %s3426
      %v3428 = vstv %s3427
      %v3429 = vmul.f32 %v3428, %v3385
      %3431 = vrot.lane.b32.xlu0 %v3421, 112
      %v3432 = vpop.permute.xlu0 %3431
      %vm3434 = vcmp.ge.f32.partialorder %v3429, %v3432
      %vm3435 = vcmp.gt.f32.partialorder %v3421, 0.0
      %v3436 = vsel %vm3435, 1, 0
      %3437 = vrot.lane.b32.xlu0 %v3436, 112
      %v3438 = vpop.permute.xlu0 %3437
      %vm3439 = vcmp.ne.s32.totalorder %v3438, 0
      %vm3440 = vmand %vm3434, %vm3439
      %vm3441 = vmor %vm3396, %vm3403
      %v3442 = vsel %vm3414, 1, 0
      %3443 = vrot.lane.b32.xlu0 %v3442, 112
      %v3444 = vpop.permute.xlu0 %3443
      %vm3445 = vcmp.ne.s32.totalorder %v3444, 0
      %vm3446 = vmor %vm3441, %vm3445
      %vm3447 = vmor %vm3446, %vm3440
      %v3448 = vsel %vm3447, %v3339, 1.0
      %3450 = vrot.lane.b32.xlu0 %v3448, 16
      %v3451 = vpop.permute.xlu0 %3450
      %v3453 = vmul.f32 %v3335, %v3451
      %v3454 = vadd.f32 %v2845, %v3453
      %v3455 = vadd.f32 %v2845, %v3335
      %v3456 = vsel %vm1171, %v3455, %v3454
      %v3458 = vsel %vm566, %v3456, 0
      %3460 = vmatprep.subr.mxu0 0.0
      %3461 = vmatpush1.msra.mxu0 0.0
      %3462 = vmatprep.subr.mxu0 0.0
      %3463 = vmatpush1.msra.mxu0 0.0
      %3464 = vmatprep.subr.mxu0 0.0
      %3465 = vmatpush1.msra.mxu0 0.0
      %3466 = vmatprep.subr.mxu0 0.0
      %3467 = vmatpush1.msra.mxu0 0.0
      %3468 = vmatprep.subr.mxu0 0.0
      %3469 = vmatpush1.msra.mxu0 0.0
      %3470 = vmatprep.subr.mxu0 0.0
      %3471 = vmatpush1.msra.mxu0 0.0
      %3472 = vmatprep.subr.mxu0 0.0
      %3473 = vmatpush1.msra.mxu0 0.0
      %3474 = vmatprep.subr.mxu0 0.0
      %3475 = vmatpush1.msra.mxu0 0.0
      %3476 = vmatprep.subr.mxu0 0.0
      %3477 = vmatpush1.msra.mxu0 0.0
      %3478 = vmatprep.subr.mxu0 0.0
      %3479 = vmatpush1.msra.mxu0 0.0
      %3480 = vmatprep.subr.mxu0 0.0
      %3481 = vmatpush1.msra.mxu0 0.0
      %3482 = vmatprep.subr.mxu0 0.0
      %3483 = vmatpush1.msra.mxu0 0.0
      %3484 = vmatprep.subr.mxu0 0.0
      %3485 = vmatpush1.msra.mxu0 0.0
      %3486 = vmatprep.subr.mxu0 0.0
      %v3487 = vand.u32 %v52, 4294901760
      %3488 = vmatpush1.msra.mxu0 %v3487
      %3489 = vmatprep.subr.mxu0 0.0
      %v3490 = vand.u32 %v51, 4294901760
      %3491 = vmatpush1.msra.mxu0 %v3490
      %3492 = vmatprep.subr.mxu0 0.0
      %v3493 = vand.u32 %v50, 4294901760
      %3494 = vmatpush1.msra.mxu0 %v3493
      %3495 = vmatprep.subr.mxu0 0.0
      %3496 = vmatpush2.msra.mxu0 0.0
      %3497 = vmatprep.subr.mxu0 0.0
      %3498 = vmatpush2.msra.mxu0 0.0
      %3499 = vmatprep.subr.mxu0 0.0
      %3500 = vmatpush2.msra.mxu0 0.0
      %3501 = vmatprep.subr.mxu0 0.0
      %3502 = vmatpush2.msra.mxu0 0.0
      %3503 = vmatprep.subr.mxu0 0.0
      %3504 = vmatpush2.msra.mxu0 0.0
      %3505 = vmatprep.subr.mxu0 0.0
      %3506 = vmatpush2.msra.mxu0 0.0
      %3507 = vmatprep.subr.mxu0 0.0
      %3508 = vmatpush2.msra.mxu0 0.0
      %3509 = vmatprep.subr.mxu0 0.0
      %3510 = vmatpush2.msra.mxu0 0.0
      %3511 = vmatprep.subr.mxu0 0.0
      %3512 = vmatpush2.msra.mxu0 0.0
      %3513 = vmatprep.subr.mxu0 0.0
      %3514 = vmatpush2.msra.mxu0 0.0
      %3515 = vmatprep.subr.mxu0 0.0
      %3516 = vmatpush2.msra.mxu0 0.0
      %3517 = vmatprep.subr.mxu0 0.0
      %3518 = vmatpush2.msra.mxu0 0.0
      %3519 = vmatprep.subr.mxu0 0.0
      %3520 = vmatpush2.msra.mxu0 0.0
      %3521 = vmatprep.subr.mxu0 0.0
      %3522 = vmatpush2.msra.mxu0 0.0
      %3523 = vmatprep.subr.mxu0 0.0
      %3524 = vmatpush2.msra.mxu0 0.0
      %3525 = vmatprep.subr.mxu0 0.0
      %3526 = vmatpush2.msra.mxu0 0.0
      %3527 = vmatprep.mubr.f32.mxu0 0.0
      %v3528 = vand.u32 %v3458, 4294901760
      %v3529 = vsub.f32 %v3458, %v3528
      %v3530 = vand.u32 %v3529, 4294901760
      %v3531 = vsub.f32 %v3529, %v3530
      %v3532 = vand.u32 %v3531, 4294901760
      %3533 = vmatmul.mubr.f32.gmra.mxu0 %v3532
      %v3534 = vpop.f32.mrf.mxu0
      %v3535 = vadd.f32 %v1177, %v3534
      %v3536 = vpop.f32.mrf.mxu0
      %3537 = vdwg.mxu0
      %3538 = vmatprep.subr.mxu0 0.0
      %3539 = vmatpush1.msra.mxu0 0.0
      %3540 = vmatprep.subr.mxu0 0.0
      %3541 = vmatpush1.msra.mxu0 0.0
      %3542 = vmatprep.subr.mxu0 0.0
      %3543 = vmatpush1.msra.mxu0 0.0
      %3544 = vmatprep.subr.mxu0 0.0
      %3545 = vmatpush1.msra.mxu0 0.0
      %3546 = vmatprep.subr.mxu0 0.0
      %3547 = vmatpush1.msra.mxu0 0.0
      %3548 = vmatprep.subr.mxu0 0.0
      %3549 = vmatpush1.msra.mxu0 0.0
      %3550 = vmatprep.subr.mxu0 0.0
      %3551 = vmatpush1.msra.mxu0 0.0
      %3552 = vmatprep.subr.mxu0 0.0
      %3553 = vmatpush1.msra.mxu0 0.0
      %3554 = vmatprep.subr.mxu0 0.0
      %3555 = vmatpush1.msra.mxu0 0.0
      %3556 = vmatprep.subr.mxu0 0.0
      %3557 = vmatpush1.msra.mxu0 0.0
      %3558 = vmatprep.subr.mxu0 0.0
      %3559 = vmatpush1.msra.mxu0 0.0
      %3560 = vmatprep.subr.mxu0 0.0
      %3561 = vmatpush1.msra.mxu0 0.0
      %3562 = vmatprep.subr.mxu0 0.0
      %3563 = vmatpush1.msra.mxu0 0.0
      %3564 = vmatprep.subr.mxu0 0.0
      %v3565 = vand.u32 %v52, 4294901760
      %v3566 = vsub.f32 %v52, %v3565
      %v3567 = vand.u32 %v3566, 4294901760
      %v3568 = vsub.f32 %v3566, %v3567
      %v3569 = vand.u32 %v3568, 4294901760
      %3570 = vmatpush1.msra.mxu0 %v3569
      %3571 = vmatprep.subr.mxu0 0.0
      %v3572 = vand.u32 %v51, 4294901760
      %v3573 = vsub.f32 %v51, %v3572
      %v3574 = vand.u32 %v3573, 4294901760
      %v3575 = vsub.f32 %v3573, %v3574
      %v3576 = vand.u32 %v3575, 4294901760
      %3577 = vmatpush1.msra.mxu0 %v3576
      %3578 = vmatprep.subr.mxu0 0.0
      %v3579 = vand.u32 %v50, 4294901760
      %v3580 = vsub.f32 %v50, %v3579
      %v3581 = vand.u32 %v3580, 4294901760
      %v3582 = vsub.f32 %v3580, %v3581
      %v3583 = vand.u32 %v3582, 4294901760
      %3584 = vmatpush1.msra.mxu0 %v3583
      %3585 = vmatprep.subr.mxu0 0.0
      %3586 = vmatpush2.msra.mxu0 0.0
      %3587 = vmatprep.subr.mxu0 0.0
      %3588 = vmatpush2.msra.mxu0 0.0
      %3589 = vmatprep.subr.mxu0 0.0
      %3590 = vmatpush2.msra.mxu0 0.0
      %3591 = vmatprep.subr.mxu0 0.0
      %3592 = vmatpush2.msra.mxu0 0.0
      %3593 = vmatprep.subr.mxu0 0.0
      %3594 = vmatpush2.msra.mxu0 0.0
      %3595 = vmatprep.subr.mxu0 0.0
      %3596 = vmatpush2.msra.mxu0 0.0
      %3597 = vmatprep.subr.mxu0 0.0
      %3598 = vmatpush2.msra.mxu0 0.0
      %3599 = vmatprep.subr.mxu0 0.0
      %3600 = vmatpush2.msra.mxu0 0.0
      %3601 = vmatprep.subr.mxu0 0.0
      %3602 = vmatpush2.msra.mxu0 0.0
      %3603 = vmatprep.subr.mxu0 0.0
      %3604 = vmatpush2.msra.mxu0 0.0
      %3605 = vmatprep.subr.mxu0 0.0
      %3606 = vmatpush2.msra.mxu0 0.0
      %3607 = vmatprep.subr.mxu0 0.0
      %3608 = vmatpush2.msra.mxu0 0.0
      %3609 = vmatprep.subr.mxu0 0.0
      %3610 = vmatpush2.msra.mxu0 0.0
      %3611 = vmatprep.subr.mxu0 0.0
      %3612 = vmatpush2.msra.mxu0 0.0
      %3613 = vmatprep.subr.mxu0 0.0
      %3614 = vmatpush2.msra.mxu0 0.0
      %3615 = vmatprep.subr.mxu0 0.0
      %3616 = vmatpush2.msra.mxu0 0.0
      %3617 = vmatprep.mubr.f32.mxu0 0.0
      %v3618 = vand.u32 %v3458, 4294901760
      %3619 = vmatmul.mubr.f32.gmra.mxu0 %v3618
      %v3620 = vpop.f32.mrf.mxu0
      %v3621 = vadd.f32 %v3535, %v3620
      %v3622 = vpop.f32.mrf.mxu0
      %3623 = vdwg.mxu0
      %3624 = vmatprep.subr.mxu0 0.0
      %3625 = vmatpush1.msra.mxu0 0.0
      %3626 = vmatprep.subr.mxu0 0.0
      %3627 = vmatpush1.msra.mxu0 0.0
      %3628 = vmatprep.subr.mxu0 0.0
      %3629 = vmatpush1.msra.mxu0 0.0
      %3630 = vmatprep.subr.mxu0 0.0
      %3631 = vmatpush1.msra.mxu0 0.0
      %3632 = vmatprep.subr.mxu0 0.0
      %3633 = vmatpush1.msra.mxu0 0.0
      %3634 = vmatprep.subr.mxu0 0.0
      %3635 = vmatpush1.msra.mxu0 0.0
      %3636 = vmatprep.subr.mxu0 0.0
      %3637 = vmatpush1.msra.mxu0 0.0
      %3638 = vmatprep.subr.mxu0 0.0
      %3639 = vmatpush1.msra.mxu0 0.0
      %3640 = vmatprep.subr.mxu0 0.0
      %3641 = vmatpush1.msra.mxu0 0.0
      %3642 = vmatprep.subr.mxu0 0.0
      %3643 = vmatpush1.msra.mxu0 0.0
      %3644 = vmatprep.subr.mxu0 0.0
      %3645 = vmatpush1.msra.mxu0 0.0
      %3646 = vmatprep.subr.mxu0 0.0
      %3647 = vmatpush1.msra.mxu0 0.0
      %3648 = vmatprep.subr.mxu0 0.0
      %3649 = vmatpush1.msra.mxu0 0.0
      %3650 = vmatprep.subr.mxu0 0.0
      %v3651 = vand.u32 %v52, 4294901760
      %v3652 = vsub.f32 %v52, %v3651
      %3653 = vmatpush1.msra.mxu0 %v3652
      %3654 = vmatprep.subr.mxu0 0.0
      %v3655 = vand.u32 %v51, 4294901760
      %v3656 = vsub.f32 %v51, %v3655
      %3657 = vmatpush1.msra.mxu0 %v3656
      %3658 = vmatprep.subr.mxu0 0.0
      %v3659 = vand.u32 %v50, 4294901760
      %v3660 = vsub.f32 %v50, %v3659
      %3661 = vmatpush1.msra.mxu0 %v3660
      %3662 = vmatprep.subr.mxu0 0.0
      %3663 = vmatpush2.msra.mxu0 0.0
      %3664 = vmatprep.subr.mxu0 0.0
      %3665 = vmatpush2.msra.mxu0 0.0
      %3666 = vmatprep.subr.mxu0 0.0
      %3667 = vmatpush2.msra.mxu0 0.0
      %3668 = vmatprep.subr.mxu0 0.0
      %3669 = vmatpush2.msra.mxu0 0.0
      %3670 = vmatprep.subr.mxu0 0.0
      %3671 = vmatpush2.msra.mxu0 0.0
      %3672 = vmatprep.subr.mxu0 0.0
      %3673 = vmatpush2.msra.mxu0 0.0
      %3674 = vmatprep.subr.mxu0 0.0
      %3675 = vmatpush2.msra.mxu0 0.0
      %3676 = vmatprep.subr.mxu0 0.0
      %3677 = vmatpush2.msra.mxu0 0.0
      %3678 = vmatprep.subr.mxu0 0.0
      %3679 = vmatpush2.msra.mxu0 0.0
      %3680 = vmatprep.subr.mxu0 0.0
      %3681 = vmatpush2.msra.mxu0 0.0
      %3682 = vmatprep.subr.mxu0 0.0
      %3683 = vmatpush2.msra.mxu0 0.0
      %3684 = vmatprep.subr.mxu0 0.0
      %3685 = vmatpush2.msra.mxu0 0.0
      %3686 = vmatprep.subr.mxu0 0.0
      %3687 = vmatpush2.msra.mxu0 0.0
      %3688 = vmatprep.subr.mxu0 0.0
      %3689 = vmatpush2.msra.mxu0 0.0
      %3690 = vmatprep.subr.mxu0 0.0
      %3691 = vmatpush2.msra.mxu0 0.0
      %3692 = vmatprep.subr.mxu0 0.0
      %3693 = vmatpush2.msra.mxu0 0.0
      %3694 = vmatprep.mubr.f32.mxu0 0.0
      %v3695 = vand.u32 %v3458, 4294901760
      %v3696 = vsub.f32 %v3458, %v3695
      %3697 = vmatmul.mubr.f32.gmra.mxu0 %v3696
      %v3698 = vpop.f32.mrf.mxu0
      %v3699 = vadd.f32 %v3621, %v3698
      %v3700 = vpop.f32.mrf.mxu0
      %3701 = vdwg.mxu0
      %3702 = vmatprep.subr.mxu0 0.0
      %3703 = vmatpush1.msra.mxu0 0.0
      %3704 = vmatprep.subr.mxu0 0.0
      %3705 = vmatpush1.msra.mxu0 0.0
      %3706 = vmatprep.subr.mxu0 0.0
      %3707 = vmatpush1.msra.mxu0 0.0
      %3708 = vmatprep.subr.mxu0 0.0
      %3709 = vmatpush1.msra.mxu0 0.0
      %3710 = vmatprep.subr.mxu0 0.0
      %3711 = vmatpush1.msra.mxu0 0.0
      %3712 = vmatprep.subr.mxu0 0.0
      %3713 = vmatpush1.msra.mxu0 0.0
      %3714 = vmatprep.subr.mxu0 0.0
      %3715 = vmatpush1.msra.mxu0 0.0
      %3716 = vmatprep.subr.mxu0 0.0
      %3717 = vmatpush1.msra.mxu0 0.0
      %3718 = vmatprep.subr.mxu0 0.0
      %3719 = vmatpush1.msra.mxu0 0.0
      %3720 = vmatprep.subr.mxu0 0.0
      %3721 = vmatpush1.msra.mxu0 0.0
      %3722 = vmatprep.subr.mxu0 0.0
      %3723 = vmatpush1.msra.mxu0 0.0
      %3724 = vmatprep.subr.mxu0 0.0
      %3725 = vmatpush1.msra.mxu0 0.0
      %3726 = vmatprep.subr.mxu0 0.0
      %3727 = vmatpush1.msra.mxu0 0.0
      %3728 = vmatprep.subr.mxu0 0.0
      %v3729 = vand.u32 %v52, 4294901760
      %3730 = vmatpush1.msra.mxu0 %v3729
      %3731 = vmatprep.subr.mxu0 0.0
      %v3732 = vand.u32 %v51, 4294901760
      %3733 = vmatpush1.msra.mxu0 %v3732
      %3734 = vmatprep.subr.mxu0 0.0
      %v3735 = vand.u32 %v50, 4294901760
      %3736 = vmatpush1.msra.mxu0 %v3735
      %3737 = vmatprep.subr.mxu0 0.0
      %3738 = vmatpush2.msra.mxu0 0.0
      %3739 = vmatprep.subr.mxu0 0.0
      %3740 = vmatpush2.msra.mxu0 0.0
      %3741 = vmatprep.subr.mxu0 0.0
      %3742 = vmatpush2.msra.mxu0 0.0
      %3743 = vmatprep.subr.mxu0 0.0
      %3744 = vmatpush2.msra.mxu0 0.0
      %3745 = vmatprep.subr.mxu0 0.0
      %3746 = vmatpush2.msra.mxu0 0.0
      %3747 = vmatprep.subr.mxu0 0.0
      %3748 = vmatpush2.msra.mxu0 0.0
      %3749 = vmatprep.subr.mxu0 0.0
      %3750 = vmatpush2.msra.mxu0 0.0
      %3751 = vmatprep.subr.mxu0 0.0
      %3752 = vmatpush2.msra.mxu0 0.0
      %3753 = vmatprep.subr.mxu0 0.0
      %3754 = vmatpush2.msra.mxu0 0.0
      %3755 = vmatprep.subr.mxu0 0.0
      %3756 = vmatpush2.msra.mxu0 0.0
      %3757 = vmatprep.subr.mxu0 0.0
      %3758 = vmatpush2.msra.mxu0 0.0
      %3759 = vmatprep.subr.mxu0 0.0
      %3760 = vmatpush2.msra.mxu0 0.0
      %3761 = vmatprep.subr.mxu0 0.0
      %3762 = vmatpush2.msra.mxu0 0.0
      %3763 = vmatprep.subr.mxu0 0.0
      %3764 = vmatpush2.msra.mxu0 0.0
      %3765 = vmatprep.subr.mxu0 0.0
      %3766 = vmatpush2.msra.mxu0 0.0
      %3767 = vmatprep.subr.mxu0 0.0
      %3768 = vmatpush2.msra.mxu0 0.0
      %3769 = vmatprep.mubr.f32.mxu0 0.0
      %v3770 = vand.u32 %v3458, 4294901760
      %v3771 = vsub.f32 %v3458, %v3770
      %v3772 = vand.u32 %v3771, 4294901760
      %3773 = vmatmul.mubr.f32.gmra.mxu0 %v3772
      %v3774 = vpop.f32.mrf.mxu0
      %v3775 = vadd.f32 %v3699, %v3774
      %v3776 = vpop.f32.mrf.mxu0
      %3777 = vdwg.mxu0
      %3778 = vmatprep.subr.mxu0 0.0
      %3779 = vmatpush1.msra.mxu0 0.0
      %3780 = vmatprep.subr.mxu0 0.0
      %3781 = vmatpush1.msra.mxu0 0.0
      %3782 = vmatprep.subr.mxu0 0.0
      %3783 = vmatpush1.msra.mxu0 0.0
      %3784 = vmatprep.subr.mxu0 0.0
      %3785 = vmatpush1.msra.mxu0 0.0
      %3786 = vmatprep.subr.mxu0 0.0
      %3787 = vmatpush1.msra.mxu0 0.0
      %3788 = vmatprep.subr.mxu0 0.0
      %3789 = vmatpush1.msra.mxu0 0.0
      %3790 = vmatprep.subr.mxu0 0.0
      %3791 = vmatpush1.msra.mxu0 0.0
      %3792 = vmatprep.subr.mxu0 0.0
      %3793 = vmatpush1.msra.mxu0 0.0
      %3794 = vmatprep.subr.mxu0 0.0
      %3795 = vmatpush1.msra.mxu0 0.0
      %3796 = vmatprep.subr.mxu0 0.0
      %3797 = vmatpush1.msra.mxu0 0.0
      %3798 = vmatprep.subr.mxu0 0.0
      %3799 = vmatpush1.msra.mxu0 0.0
      %3800 = vmatprep.subr.mxu0 0.0
      %3801 = vmatpush1.msra.mxu0 0.0
      %3802 = vmatprep.subr.mxu0 0.0
      %3803 = vmatpush1.msra.mxu0 0.0
      %3804 = vmatprep.subr.mxu0 0.0
      %v3805 = vand.u32 %v52, 4294901760
      %v3806 = vsub.f32 %v52, %v3805
      %v3807 = vand.u32 %v3806, 4294901760
      %3808 = vmatpush1.msra.mxu0 %v3807
      %3809 = vmatprep.subr.mxu0 0.0
      %v3810 = vand.u32 %v51, 4294901760
      %v3811 = vsub.f32 %v51, %v3810
      %v3812 = vand.u32 %v3811, 4294901760
      %3813 = vmatpush1.msra.mxu0 %v3812
      %3814 = vmatprep.subr.mxu0 0.0
      %v3815 = vand.u32 %v50, 4294901760
      %v3816 = vsub.f32 %v50, %v3815
      %v3817 = vand.u32 %v3816, 4294901760
      %3818 = vmatpush1.msra.mxu0 %v3817
      %3819 = vmatprep.subr.mxu0 0.0
      %3820 = vmatpush2.msra.mxu0 0.0
      %3821 = vmatprep.subr.mxu0 0.0
      %3822 = vmatpush2.msra.mxu0 0.0
      %3823 = vmatprep.subr.mxu0 0.0
      %3824 = vmatpush2.msra.mxu0 0.0
      %3825 = vmatprep.subr.mxu0 0.0
      %3826 = vmatpush2.msra.mxu0 0.0
      %3827 = vmatprep.subr.mxu0 0.0
      %3828 = vmatpush2.msra.mxu0 0.0
      %3829 = vmatprep.subr.mxu0 0.0
      %3830 = vmatpush2.msra.mxu0 0.0
      %3831 = vmatprep.subr.mxu0 0.0
      %3832 = vmatpush2.msra.mxu0 0.0
      %3833 = vmatprep.subr.mxu0 0.0
      %3834 = vmatpush2.msra.mxu0 0.0
      %3835 = vmatprep.subr.mxu0 0.0
      %3836 = vmatpush2.msra.mxu0 0.0
      %3837 = vmatprep.subr.mxu0 0.0
      %3838 = vmatpush2.msra.mxu0 0.0
      %3839 = vmatprep.subr.mxu0 0.0
      %3840 = vmatpush2.msra.mxu0 0.0
      %3841 = vmatprep.subr.mxu0 0.0
      %3842 = vmatpush2.msra.mxu0 0.0
      %3843 = vmatprep.subr.mxu0 0.0
      %3844 = vmatpush2.msra.mxu0 0.0
      %3845 = vmatprep.subr.mxu0 0.0
      %3846 = vmatpush2.msra.mxu0 0.0
      %3847 = vmatprep.subr.mxu0 0.0
      %3848 = vmatpush2.msra.mxu0 0.0
      %3849 = vmatprep.subr.mxu0 0.0
      %3850 = vmatpush2.msra.mxu0 0.0
      %3851 = vmatprep.mubr.f32.mxu0 0.0
      %v3852 = vand.u32 %v3458, 4294901760
      %3853 = vmatmul.mubr.f32.gmra.mxu0 %v3852
      %v3854 = vpop.f32.mrf.mxu0
      %v3855 = vadd.f32 %v3775, %v3854
      %v3856 = vpop.f32.mrf.mxu0
      %3857 = vdwg.mxu0
      %3858 = vmatprep.subr.mxu0 0.0
      %3859 = vmatpush1.msra.mxu0 0.0
      %3860 = vmatprep.subr.mxu0 0.0
      %3861 = vmatpush1.msra.mxu0 0.0
      %3862 = vmatprep.subr.mxu0 0.0
      %3863 = vmatpush1.msra.mxu0 0.0
      %3864 = vmatprep.subr.mxu0 0.0
      %3865 = vmatpush1.msra.mxu0 0.0
      %3866 = vmatprep.subr.mxu0 0.0
      %3867 = vmatpush1.msra.mxu0 0.0
      %3868 = vmatprep.subr.mxu0 0.0
      %3869 = vmatpush1.msra.mxu0 0.0
      %3870 = vmatprep.subr.mxu0 0.0
      %3871 = vmatpush1.msra.mxu0 0.0
      %3872 = vmatprep.subr.mxu0 0.0
      %3873 = vmatpush1.msra.mxu0 0.0
      %3874 = vmatprep.subr.mxu0 0.0
      %3875 = vmatpush1.msra.mxu0 0.0
      %3876 = vmatprep.subr.mxu0 0.0
      %3877 = vmatpush1.msra.mxu0 0.0
      %3878 = vmatprep.subr.mxu0 0.0
      %3879 = vmatpush1.msra.mxu0 0.0
      %3880 = vmatprep.subr.mxu0 0.0
      %3881 = vmatpush1.msra.mxu0 0.0
      %3882 = vmatprep.subr.mxu0 0.0
      %3883 = vmatpush1.msra.mxu0 0.0
      %3884 = vmatprep.subr.mxu0 0.0
      %v3885 = vand.u32 %v52, 4294901760
      %3886 = vmatpush1.msra.mxu0 %v3885
      %3887 = vmatprep.subr.mxu0 0.0
      %v3888 = vand.u32 %v51, 4294901760
      %3889 = vmatpush1.msra.mxu0 %v3888
      %3890 = vmatprep.subr.mxu0 0.0
      %v3891 = vand.u32 %v50, 4294901760
      %3892 = vmatpush1.msra.mxu0 %v3891
      %3893 = vmatprep.subr.mxu0 0.0
      %3894 = vmatpush2.msra.mxu0 0.0
      %3895 = vmatprep.subr.mxu0 0.0
      %3896 = vmatpush2.msra.mxu0 0.0
      %3897 = vmatprep.subr.mxu0 0.0
      %3898 = vmatpush2.msra.mxu0 0.0
      %3899 = vmatprep.subr.mxu0 0.0
      %3900 = vmatpush2.msra.mxu0 0.0
      %3901 = vmatprep.subr.mxu0 0.0
      %3902 = vmatpush2.msra.mxu0 0.0
      %3903 = vmatprep.subr.mxu0 0.0
      %3904 = vmatpush2.msra.mxu0 0.0
      %3905 = vmatprep.subr.mxu0 0.0
      %3906 = vmatpush2.msra.mxu0 0.0
      %3907 = vmatprep.subr.mxu0 0.0
      %3908 = vmatpush2.msra.mxu0 0.0
      %3909 = vmatprep.subr.mxu0 0.0
      %3910 = vmatpush2.msra.mxu0 0.0
      %3911 = vmatprep.subr.mxu0 0.0
      %3912 = vmatpush2.msra.mxu0 0.0
      %3913 = vmatprep.subr.mxu0 0.0
      %3914 = vmatpush2.msra.mxu0 0.0
      %3915 = vmatprep.subr.mxu0 0.0
      %3916 = vmatpush2.msra.mxu0 0.0
      %3917 = vmatprep.subr.mxu0 0.0
      %3918 = vmatpush2.msra.mxu0 0.0
      %3919 = vmatprep.subr.mxu0 0.0
      %3920 = vmatpush2.msra.mxu0 0.0
      %3921 = vmatprep.subr.mxu0 0.0
      %3922 = vmatpush2.msra.mxu0 0.0
      %3923 = vmatprep.subr.mxu0 0.0
      %3924 = vmatpush2.msra.mxu0 0.0
      %3925 = vmatprep.mubr.f32.mxu0 0.0
      %v3926 = vand.u32 %v3458, 4294901760
      %3927 = vmatmul.mubr.f32.gmra.mxu0 %v3926
      %v3928 = vpop.f32.mrf.mxu0
      %v3929 = vadd.f32 %v3855, %v3928
      %v3930 = vpop.f32.mrf.mxu0
      %3931 = vdwg.mxu0
      %v3932 = vmax.f32 %v3455, -5.0
      %v3933 = vmin.f32 %v3932, 5.0
      %v3934 = vmax.f32 %v3929, -5.0
      %v3935 = vmin.f32 %v3934, 5.0
      %v3936 = vmax.f32 %v3454, -3.0
      %v3937 = vmin.f32 %v3936, 3.0
      %v3938 = vsub.f32 %v3937, %v3342
      %v3939 = vstv %s2860
      %v3940 = vrcp.pop %v3939
      %s3941 = vtos %v3940
      %s3942 = smul.f32 %s2859, %s3941
      %v3943 = vstv %s3942
      %v3944 = vmul.f32 %v3943, %v2848
      %v3945 = vmul.f32 %v3944, %v2848
      %s3946 = smul.f32 %s2860, %s2860
      %v3947 = vstv %s3946
      %v3948 = vrcp.pop %v3947
      %s3949 = vtos %v3948
      %s3950 = smul.f32 %s2859, %s3949
      %v3951 = vstv %s3950
      %v3952 = vmul.f32 %v3951, %v3938
      %v3953 = vmul.f32 %v3952, %v3938
      %3955 = vrot.lane.b32.xlu0 %v3953, 112
      %v3956 = vpop.permute.xlu0 %3955
      %v3958 = vadd.f32 %v3945, %v3956
      %v3959 = vrsqrt.pop %v3958
      %v3960 = vmul.f32 %v3958, %v3959
      %vm3961 = vcmp.eq.f32.partialorder %v3958, inf
      %v3962 = vsel %vm3961, %v3958, %v3960
      %vm3963 = vcmp.eq.f32.partialorder %v3958, 0.0
      %v3964 = vand.u32 %v3958, 2147483648
      %v3965 = vsel %vm3963, %v3964, %v3962
      %v3966 = vmul.f32 %v3943, %v2847
      %v3967 = vstv %s2860
      %v3968 = vrcp.pop %v3967
      %s3969 = vtos %v3968
      %v3970 = vstv %s3969
      %v3971 = vmul.f32 %v3970, %v3937
      %3973 = vrot.lane.b32.xlu0 %v3971, 112
      %v3974 = vpop.permute.xlu0 %3973
      %v3976 = vadd.f32 %v3966, %v3974
      %v3977 = vsel %vm1171, %v3933, %v3937
      %3978 = vst.msk [vmem:[#allocation2] sm:$0xff] %vm566, %v3977
      %3979 = vst.msk [vmem:[#allocation3] sm:$0xff] %vm1701, %v3935
      %3980 = vst.msk [vmem:[#allocation4] sm:$0xff] %vm1703, %v3976
      %3981 = vst.msk [vmem:[#allocation5] sm:$0xff] %vm1703, %v3965
      %s3982 = sadd.s32 %s557, 3
      %v3983 = vld [vmem:[#allocation2] sm:$0xff]
      %v3984 = vld [vmem:[#allocation3] sm:$0xff]
      %v3985 = vld [vmem:[#allocation4] sm:$0xff]
      %v3986 = vld [vmem:[#allocation5] sm:$0xff]
      %3988 = vrot.lane.b32.xlu0 %v3984, 24
      %v3989 = vpop.permute.xlu0 %3988
      %v3991 = vsel %vm566, %v3983, %v3989
      %s3992 = smul.u32 %s3982, 8
      %s3993 = scalar_lea.vmem [#allocation11], %s3992
      %3994 = vst.msk [vmem:[%s3993] sm:$0xff] %vm570, %v3991
      %s3995 = sadd.s32 %s550, %s3982
      %s3996 = scvt.s32.f32 %s3995
      %s3997 = sadd.f32 %s3996, 1.0
      %s3998 = sadd.f32 %s3996, 2.0
      %s3999 = scalar_lea.vmem [#allocation9], %s3992
      %v4000 = vld [vmem:[%s3999] sm:$0xff]
      %v4002 = vsel %vm566, %v3983, 0
      %4004 = vmatprep.subr.mxu0 0.0
      %4005 = vmatpush1.msra.mxu0 0.0
      %4006 = vmatprep.subr.mxu0 0.0
      %4007 = vmatpush1.msra.mxu0 0.0
      %4008 = vmatprep.subr.mxu0 0.0
      %4009 = vmatpush1.msra.mxu0 0.0
      %4010 = vmatprep.subr.mxu0 0.0
      %4011 = vmatpush1.msra.mxu0 0.0
      %4012 = vmatprep.subr.mxu0 0.0
      %4013 = vmatpush1.msra.mxu0 0.0
      %4014 = vmatprep.subr.mxu0 0.0
      %4015 = vmatpush1.msra.mxu0 0.0
      %4016 = vmatprep.subr.mxu0 0.0
      %4017 = vmatpush1.msra.mxu0 0.0
      %4018 = vmatprep.subr.mxu0 0.0
      %4019 = vmatpush1.msra.mxu0 0.0
      %4020 = vmatprep.subr.mxu0 0.0
      %4021 = vmatpush1.msra.mxu0 0.0
      %4022 = vmatprep.subr.mxu0 0.0
      %4023 = vmatpush1.msra.mxu0 0.0
      %4024 = vmatprep.subr.mxu0 0.0
      %4025 = vmatpush1.msra.mxu0 0.0
      %4026 = vmatprep.subr.mxu0 0.0
      %4027 = vmatpush1.msra.mxu0 0.0
      %4028 = vmatprep.subr.mxu0 0.0
      %4029 = vmatpush1.msra.mxu0 0.0
      %4030 = vmatprep.subr.mxu0 0.0
      %v4031 = vand.u32 %v49, 4294901760
      %4032 = vmatpush1.msra.mxu0 %v4031
      %4033 = vmatprep.subr.mxu0 0.0
      %v4034 = vand.u32 %v48, 4294901760
      %4035 = vmatpush1.msra.mxu0 %v4034
      %4036 = vmatprep.subr.mxu0 0.0
      %v4037 = vand.u32 %v47, 4294901760
      %4038 = vmatpush1.msra.mxu0 %v4037
      %4039 = vmatprep.subr.mxu0 0.0
      %4040 = vmatpush2.msra.mxu0 0.0
      %4041 = vmatprep.subr.mxu0 0.0
      %4042 = vmatpush2.msra.mxu0 0.0
      %4043 = vmatprep.subr.mxu0 0.0
      %4044 = vmatpush2.msra.mxu0 0.0
      %4045 = vmatprep.subr.mxu0 0.0
      %4046 = vmatpush2.msra.mxu0 0.0
      %4047 = vmatprep.subr.mxu0 0.0
      %4048 = vmatpush2.msra.mxu0 0.0
      %4049 = vmatprep.subr.mxu0 0.0
      %4050 = vmatpush2.msra.mxu0 0.0
      %4051 = vmatprep.subr.mxu0 0.0
      %4052 = vmatpush2.msra.mxu0 0.0
      %4053 = vmatprep.subr.mxu0 0.0
      %4054 = vmatpush2.msra.mxu0 0.0
      %4055 = vmatprep.subr.mxu0 0.0
      %4056 = vmatpush2.msra.mxu0 0.0
      %4057 = vmatprep.subr.mxu0 0.0
      %4058 = vmatpush2.msra.mxu0 0.0
      %4059 = vmatprep.subr.mxu0 0.0
      %4060 = vmatpush2.msra.mxu0 0.0
      %4061 = vmatprep.subr.mxu0 0.0
      %4062 = vmatpush2.msra.mxu0 0.0
      %4063 = vmatprep.subr.mxu0 0.0
      %4064 = vmatpush2.msra.mxu0 0.0
      %4065 = vmatprep.subr.mxu0 0.0
      %4066 = vmatpush2.msra.mxu0 0.0
      %4067 = vmatprep.subr.mxu0 0.0
      %4068 = vmatpush2.msra.mxu0 0.0
      %4069 = vmatprep.subr.mxu0 0.0
      %4070 = vmatpush2.msra.mxu0 0.0
      %4071 = vmatprep.mubr.f32.mxu0 0.0
      %v4072 = vand.u32 %v4002, 4294901760
      %v4073 = vsub.f32 %v4002, %v4072
      %v4074 = vand.u32 %v4073, 4294901760
      %v4075 = vsub.f32 %v4073, %v4074
      %v4076 = vand.u32 %v4075, 4294901760
      %4077 = vmatmul.mubr.f32.gmra.mxu0 %v4076
      %v4078 = vpop.f32.mrf.mxu0
      %v4079 = vadd.f32 %v4000, %v4078
      %v4080 = vpop.f32.mrf.mxu0
      %4081 = vdwg.mxu0
      %4082 = vmatprep.subr.mxu0 0.0
      %4083 = vmatpush1.msra.mxu0 0.0
      %4084 = vmatprep.subr.mxu0 0.0
      %4085 = vmatpush1.msra.mxu0 0.0
      %4086 = vmatprep.subr.mxu0 0.0
      %4087 = vmatpush1.msra.mxu0 0.0
      %4088 = vmatprep.subr.mxu0 0.0
      %4089 = vmatpush1.msra.mxu0 0.0
      %4090 = vmatprep.subr.mxu0 0.0
      %4091 = vmatpush1.msra.mxu0 0.0
      %4092 = vmatprep.subr.mxu0 0.0
      %4093 = vmatpush1.msra.mxu0 0.0
      %4094 = vmatprep.subr.mxu0 0.0
      %4095 = vmatpush1.msra.mxu0 0.0
      %4096 = vmatprep.subr.mxu0 0.0
      %4097 = vmatpush1.msra.mxu0 0.0
      %4098 = vmatprep.subr.mxu0 0.0
      %4099 = vmatpush1.msra.mxu0 0.0
      %4100 = vmatprep.subr.mxu0 0.0
      %4101 = vmatpush1.msra.mxu0 0.0
      %4102 = vmatprep.subr.mxu0 0.0
      %4103 = vmatpush1.msra.mxu0 0.0
      %4104 = vmatprep.subr.mxu0 0.0
      %4105 = vmatpush1.msra.mxu0 0.0
      %4106 = vmatprep.subr.mxu0 0.0
      %4107 = vmatpush1.msra.mxu0 0.0
      %4108 = vmatprep.subr.mxu0 0.0
      %v4109 = vand.u32 %v49, 4294901760
      %v4110 = vsub.f32 %v49, %v4109
      %v4111 = vand.u32 %v4110, 4294901760
      %v4112 = vsub.f32 %v4110, %v4111
      %v4113 = vand.u32 %v4112, 4294901760
      %4114 = vmatpush1.msra.mxu0 %v4113
      %4115 = vmatprep.subr.mxu0 0.0
      %v4116 = vand.u32 %v48, 4294901760
      %v4117 = vsub.f32 %v48, %v4116
      %v4118 = vand.u32 %v4117, 4294901760
      %v4119 = vsub.f32 %v4117, %v4118
      %v4120 = vand.u32 %v4119, 4294901760
      %4121 = vmatpush1.msra.mxu0 %v4120
      %4122 = vmatprep.subr.mxu0 0.0
      %v4123 = vand.u32 %v47, 4294901760
      %v4124 = vsub.f32 %v47, %v4123
      %v4125 = vand.u32 %v4124, 4294901760
      %v4126 = vsub.f32 %v4124, %v4125
      %v4127 = vand.u32 %v4126, 4294901760
      %4128 = vmatpush1.msra.mxu0 %v4127
      %4129 = vmatprep.subr.mxu0 0.0
      %4130 = vmatpush2.msra.mxu0 0.0
      %4131 = vmatprep.subr.mxu0 0.0
      %4132 = vmatpush2.msra.mxu0 0.0
      %4133 = vmatprep.subr.mxu0 0.0
      %4134 = vmatpush2.msra.mxu0 0.0
      %4135 = vmatprep.subr.mxu0 0.0
      %4136 = vmatpush2.msra.mxu0 0.0
      %4137 = vmatprep.subr.mxu0 0.0
      %4138 = vmatpush2.msra.mxu0 0.0
      %4139 = vmatprep.subr.mxu0 0.0
      %4140 = vmatpush2.msra.mxu0 0.0
      %4141 = vmatprep.subr.mxu0 0.0
      %4142 = vmatpush2.msra.mxu0 0.0
      %4143 = vmatprep.subr.mxu0 0.0
      %4144 = vmatpush2.msra.mxu0 0.0
      %4145 = vmatprep.subr.mxu0 0.0
      %4146 = vmatpush2.msra.mxu0 0.0
      %4147 = vmatprep.subr.mxu0 0.0
      %4148 = vmatpush2.msra.mxu0 0.0
      %4149 = vmatprep.subr.mxu0 0.0
      %4150 = vmatpush2.msra.mxu0 0.0
      %4151 = vmatprep.subr.mxu0 0.0
      %4152 = vmatpush2.msra.mxu0 0.0
      %4153 = vmatprep.subr.mxu0 0.0
      %4154 = vmatpush2.msra.mxu0 0.0
      %4155 = vmatprep.subr.mxu0 0.0
      %4156 = vmatpush2.msra.mxu0 0.0
      %4157 = vmatprep.subr.mxu0 0.0
      %4158 = vmatpush2.msra.mxu0 0.0
      %4159 = vmatprep.subr.mxu0 0.0
      %4160 = vmatpush2.msra.mxu0 0.0
      %4161 = vmatprep.mubr.f32.mxu0 0.0
      %v4162 = vand.u32 %v4002, 4294901760
      %4163 = vmatmul.mubr.f32.gmra.mxu0 %v4162
      %v4164 = vpop.f32.mrf.mxu0
      %v4165 = vadd.f32 %v4079, %v4164
      %v4166 = vpop.f32.mrf.mxu0
      %4167 = vdwg.mxu0
      %4168 = vmatprep.subr.mxu0 0.0
      %4169 = vmatpush1.msra.mxu0 0.0
      %4170 = vmatprep.subr.mxu0 0.0
      %4171 = vmatpush1.msra.mxu0 0.0
      %4172 = vmatprep.subr.mxu0 0.0
      %4173 = vmatpush1.msra.mxu0 0.0
      %4174 = vmatprep.subr.mxu0 0.0
      %4175 = vmatpush1.msra.mxu0 0.0
      %4176 = vmatprep.subr.mxu0 0.0
      %4177 = vmatpush1.msra.mxu0 0.0
      %4178 = vmatprep.subr.mxu0 0.0
      %4179 = vmatpush1.msra.mxu0 0.0
      %4180 = vmatprep.subr.mxu0 0.0
      %4181 = vmatpush1.msra.mxu0 0.0
      %4182 = vmatprep.subr.mxu0 0.0
      %4183 = vmatpush1.msra.mxu0 0.0
      %4184 = vmatprep.subr.mxu0 0.0
      %4185 = vmatpush1.msra.mxu0 0.0
      %4186 = vmatprep.subr.mxu0 0.0
      %4187 = vmatpush1.msra.mxu0 0.0
      %4188 = vmatprep.subr.mxu0 0.0
      %4189 = vmatpush1.msra.mxu0 0.0
      %4190 = vmatprep.subr.mxu0 0.0
      %4191 = vmatpush1.msra.mxu0 0.0
      %4192 = vmatprep.subr.mxu0 0.0
      %4193 = vmatpush1.msra.mxu0 0.0
      %4194 = vmatprep.subr.mxu0 0.0
      %v4195 = vand.u32 %v49, 4294901760
      %v4196 = vsub.f32 %v49, %v4195
      %4197 = vmatpush1.msra.mxu0 %v4196
      %4198 = vmatprep.subr.mxu0 0.0
      %v4199 = vand.u32 %v48, 4294901760
      %v4200 = vsub.f32 %v48, %v4199
      %4201 = vmatpush1.msra.mxu0 %v4200
      %4202 = vmatprep.subr.mxu0 0.0
      %v4203 = vand.u32 %v47, 4294901760
      %v4204 = vsub.f32 %v47, %v4203
      %4205 = vmatpush1.msra.mxu0 %v4204
      %4206 = vmatprep.subr.mxu0 0.0
      %4207 = vmatpush2.msra.mxu0 0.0
      %4208 = vmatprep.subr.mxu0 0.0
      %4209 = vmatpush2.msra.mxu0 0.0
      %4210 = vmatprep.subr.mxu0 0.0
      %4211 = vmatpush2.msra.mxu0 0.0
      %4212 = vmatprep.subr.mxu0 0.0
      %4213 = vmatpush2.msra.mxu0 0.0
      %4214 = vmatprep.subr.mxu0 0.0
      %4215 = vmatpush2.msra.mxu0 0.0
      %4216 = vmatprep.subr.mxu0 0.0
      %4217 = vmatpush2.msra.mxu0 0.0
      %4218 = vmatprep.subr.mxu0 0.0
      %4219 = vmatpush2.msra.mxu0 0.0
      %4220 = vmatprep.subr.mxu0 0.0
      %4221 = vmatpush2.msra.mxu0 0.0
      %4222 = vmatprep.subr.mxu0 0.0
      %4223 = vmatpush2.msra.mxu0 0.0
      %4224 = vmatprep.subr.mxu0 0.0
      %4225 = vmatpush2.msra.mxu0 0.0
      %4226 = vmatprep.subr.mxu0 0.0
      %4227 = vmatpush2.msra.mxu0 0.0
      %4228 = vmatprep.subr.mxu0 0.0
      %4229 = vmatpush2.msra.mxu0 0.0
      %4230 = vmatprep.subr.mxu0 0.0
      %4231 = vmatpush2.msra.mxu0 0.0
      %4232 = vmatprep.subr.mxu0 0.0
      %4233 = vmatpush2.msra.mxu0 0.0
      %4234 = vmatprep.subr.mxu0 0.0
      %4235 = vmatpush2.msra.mxu0 0.0
      %4236 = vmatprep.subr.mxu0 0.0
      %4237 = vmatpush2.msra.mxu0 0.0
      %4238 = vmatprep.mubr.f32.mxu0 0.0
      %v4239 = vand.u32 %v4002, 4294901760
      %v4240 = vsub.f32 %v4002, %v4239
      %4241 = vmatmul.mubr.f32.gmra.mxu0 %v4240
      %v4242 = vpop.f32.mrf.mxu0
      %v4243 = vadd.f32 %v4165, %v4242
      %v4244 = vpop.f32.mrf.mxu0
      %4245 = vdwg.mxu0
      %4246 = vmatprep.subr.mxu0 0.0
      %4247 = vmatpush1.msra.mxu0 0.0
      %4248 = vmatprep.subr.mxu0 0.0
      %4249 = vmatpush1.msra.mxu0 0.0
      %4250 = vmatprep.subr.mxu0 0.0
      %4251 = vmatpush1.msra.mxu0 0.0
      %4252 = vmatprep.subr.mxu0 0.0
      %4253 = vmatpush1.msra.mxu0 0.0
      %4254 = vmatprep.subr.mxu0 0.0
      %4255 = vmatpush1.msra.mxu0 0.0
      %4256 = vmatprep.subr.mxu0 0.0
      %4257 = vmatpush1.msra.mxu0 0.0
      %4258 = vmatprep.subr.mxu0 0.0
      %4259 = vmatpush1.msra.mxu0 0.0
      %4260 = vmatprep.subr.mxu0 0.0
      %4261 = vmatpush1.msra.mxu0 0.0
      %4262 = vmatprep.subr.mxu0 0.0
      %4263 = vmatpush1.msra.mxu0 0.0
      %4264 = vmatprep.subr.mxu0 0.0
      %4265 = vmatpush1.msra.mxu0 0.0
      %4266 = vmatprep.subr.mxu0 0.0
      %4267 = vmatpush1.msra.mxu0 0.0
      %4268 = vmatprep.subr.mxu0 0.0
      %4269 = vmatpush1.msra.mxu0 0.0
      %4270 = vmatprep.subr.mxu0 0.0
      %4271 = vmatpush1.msra.mxu0 0.0
      %4272 = vmatprep.subr.mxu0 0.0
      %v4273 = vand.u32 %v49, 4294901760
      %4274 = vmatpush1.msra.mxu0 %v4273
      %4275 = vmatprep.subr.mxu0 0.0
      %v4276 = vand.u32 %v48, 4294901760
      %4277 = vmatpush1.msra.mxu0 %v4276
      %4278 = vmatprep.subr.mxu0 0.0
      %v4279 = vand.u32 %v47, 4294901760
      %4280 = vmatpush1.msra.mxu0 %v4279
      %4281 = vmatprep.subr.mxu0 0.0
      %4282 = vmatpush2.msra.mxu0 0.0
      %4283 = vmatprep.subr.mxu0 0.0
      %4284 = vmatpush2.msra.mxu0 0.0
      %4285 = vmatprep.subr.mxu0 0.0
      %4286 = vmatpush2.msra.mxu0 0.0
      %4287 = vmatprep.subr.mxu0 0.0
      %4288 = vmatpush2.msra.mxu0 0.0
      %4289 = vmatprep.subr.mxu0 0.0
      %4290 = vmatpush2.msra.mxu0 0.0
      %4291 = vmatprep.subr.mxu0 0.0
      %4292 = vmatpush2.msra.mxu0 0.0
      %4293 = vmatprep.subr.mxu0 0.0
      %4294 = vmatpush2.msra.mxu0 0.0
      %4295 = vmatprep.subr.mxu0 0.0
      %4296 = vmatpush2.msra.mxu0 0.0
      %4297 = vmatprep.subr.mxu0 0.0
      %4298 = vmatpush2.msra.mxu0 0.0
      %4299 = vmatprep.subr.mxu0 0.0
      %4300 = vmatpush2.msra.mxu0 0.0
      %4301 = vmatprep.subr.mxu0 0.0
      %4302 = vmatpush2.msra.mxu0 0.0
      %4303 = vmatprep.subr.mxu0 0.0
      %4304 = vmatpush2.msra.mxu0 0.0
      %4305 = vmatprep.subr.mxu0 0.0
      %4306 = vmatpush2.msra.mxu0 0.0
      %4307 = vmatprep.subr.mxu0 0.0
      %4308 = vmatpush2.msra.mxu0 0.0
      %4309 = vmatprep.subr.mxu0 0.0
      %4310 = vmatpush2.msra.mxu0 0.0
      %4311 = vmatprep.subr.mxu0 0.0
      %4312 = vmatpush2.msra.mxu0 0.0
      %4313 = vmatprep.mubr.f32.mxu0 0.0
      %v4314 = vand.u32 %v4002, 4294901760
      %v4315 = vsub.f32 %v4002, %v4314
      %v4316 = vand.u32 %v4315, 4294901760
      %4317 = vmatmul.mubr.f32.gmra.mxu0 %v4316
      %v4318 = vpop.f32.mrf.mxu0
      %v4319 = vadd.f32 %v4243, %v4318
      %v4320 = vpop.f32.mrf.mxu0
      %4321 = vdwg.mxu0
      %4322 = vmatprep.subr.mxu0 0.0
      %4323 = vmatpush1.msra.mxu0 0.0
      %4324 = vmatprep.subr.mxu0 0.0
      %4325 = vmatpush1.msra.mxu0 0.0
      %4326 = vmatprep.subr.mxu0 0.0
      %4327 = vmatpush1.msra.mxu0 0.0
      %4328 = vmatprep.subr.mxu0 0.0
      %4329 = vmatpush1.msra.mxu0 0.0
      %4330 = vmatprep.subr.mxu0 0.0
      %4331 = vmatpush1.msra.mxu0 0.0
      %4332 = vmatprep.subr.mxu0 0.0
      %4333 = vmatpush1.msra.mxu0 0.0
      %4334 = vmatprep.subr.mxu0 0.0
      %4335 = vmatpush1.msra.mxu0 0.0
      %4336 = vmatprep.subr.mxu0 0.0
      %4337 = vmatpush1.msra.mxu0 0.0
      %4338 = vmatprep.subr.mxu0 0.0
      %4339 = vmatpush1.msra.mxu0 0.0
      %4340 = vmatprep.subr.mxu0 0.0
      %4341 = vmatpush1.msra.mxu0 0.0
      %4342 = vmatprep.subr.mxu0 0.0
      %4343 = vmatpush1.msra.mxu0 0.0
      %4344 = vmatprep.subr.mxu0 0.0
      %4345 = vmatpush1.msra.mxu0 0.0
      %4346 = vmatprep.subr.mxu0 0.0
      %4347 = vmatpush1.msra.mxu0 0.0
      %4348 = vmatprep.subr.mxu0 0.0
      %v4349 = vand.u32 %v49, 4294901760
      %v4350 = vsub.f32 %v49, %v4349
      %v4351 = vand.u32 %v4350, 4294901760
      %4352 = vmatpush1.msra.mxu0 %v4351
      %4353 = vmatprep.subr.mxu0 0.0
      %v4354 = vand.u32 %v48, 4294901760
      %v4355 = vsub.f32 %v48, %v4354
      %v4356 = vand.u32 %v4355, 4294901760
      %4357 = vmatpush1.msra.mxu0 %v4356
      %4358 = vmatprep.subr.mxu0 0.0
      %v4359 = vand.u32 %v47, 4294901760
      %v4360 = vsub.f32 %v47, %v4359
      %v4361 = vand.u32 %v4360, 4294901760
      %4362 = vmatpush1.msra.mxu0 %v4361
      %4363 = vmatprep.subr.mxu0 0.0
      %4364 = vmatpush2.msra.mxu0 0.0
      %4365 = vmatprep.subr.mxu0 0.0
      %4366 = vmatpush2.msra.mxu0 0.0
      %4367 = vmatprep.subr.mxu0 0.0
      %4368 = vmatpush2.msra.mxu0 0.0
      %4369 = vmatprep.subr.mxu0 0.0
      %4370 = vmatpush2.msra.mxu0 0.0
      %4371 = vmatprep.subr.mxu0 0.0
      %4372 = vmatpush2.msra.mxu0 0.0
      %4373 = vmatprep.subr.mxu0 0.0
      %4374 = vmatpush2.msra.mxu0 0.0
      %4375 = vmatprep.subr.mxu0 0.0
      %4376 = vmatpush2.msra.mxu0 0.0
      %4377 = vmatprep.subr.mxu0 0.0
      %4378 = vmatpush2.msra.mxu0 0.0
      %4379 = vmatprep.subr.mxu0 0.0
      %4380 = vmatpush2.msra.mxu0 0.0
      %4381 = vmatprep.subr.mxu0 0.0
      %4382 = vmatpush2.msra.mxu0 0.0
      %4383 = vmatprep.subr.mxu0 0.0
      %4384 = vmatpush2.msra.mxu0 0.0
      %4385 = vmatprep.subr.mxu0 0.0
      %4386 = vmatpush2.msra.mxu0 0.0
      %4387 = vmatprep.subr.mxu0 0.0
      %4388 = vmatpush2.msra.mxu0 0.0
      %4389 = vmatprep.subr.mxu0 0.0
      %4390 = vmatpush2.msra.mxu0 0.0
      %4391 = vmatprep.subr.mxu0 0.0
      %4392 = vmatpush2.msra.mxu0 0.0
      %4393 = vmatprep.subr.mxu0 0.0
      %4394 = vmatpush2.msra.mxu0 0.0
      %4395 = vmatprep.mubr.f32.mxu0 0.0
      %v4396 = vand.u32 %v4002, 4294901760
      %4397 = vmatmul.mubr.f32.gmra.mxu0 %v4396
      %v4398 = vpop.f32.mrf.mxu0
      %v4399 = vadd.f32 %v4319, %v4398
      %v4400 = vpop.f32.mrf.mxu0
      %4401 = vdwg.mxu0
      %4402 = vmatprep.subr.mxu0 0.0
      %4403 = vmatpush1.msra.mxu0 0.0
      %4404 = vmatprep.subr.mxu0 0.0
      %4405 = vmatpush1.msra.mxu0 0.0
      %4406 = vmatprep.subr.mxu0 0.0
      %4407 = vmatpush1.msra.mxu0 0.0
      %4408 = vmatprep.subr.mxu0 0.0
      %4409 = vmatpush1.msra.mxu0 0.0
      %4410 = vmatprep.subr.mxu0 0.0
      %4411 = vmatpush1.msra.mxu0 0.0
      %4412 = vmatprep.subr.mxu0 0.0
      %4413 = vmatpush1.msra.mxu0 0.0
      %4414 = vmatprep.subr.mxu0 0.0
      %4415 = vmatpush1.msra.mxu0 0.0
      %4416 = vmatprep.subr.mxu0 0.0
      %4417 = vmatpush1.msra.mxu0 0.0
      %4418 = vmatprep.subr.mxu0 0.0
      %4419 = vmatpush1.msra.mxu0 0.0
      %4420 = vmatprep.subr.mxu0 0.0
      %4421 = vmatpush1.msra.mxu0 0.0
      %4422 = vmatprep.subr.mxu0 0.0
      %4423 = vmatpush1.msra.mxu0 0.0
      %4424 = vmatprep.subr.mxu0 0.0
      %4425 = vmatpush1.msra.mxu0 0.0
      %4426 = vmatprep.subr.mxu0 0.0
      %4427 = vmatpush1.msra.mxu0 0.0
      %4428 = vmatprep.subr.mxu0 0.0
      %v4429 = vand.u32 %v49, 4294901760
      %4430 = vmatpush1.msra.mxu0 %v4429
      %4431 = vmatprep.subr.mxu0 0.0
      %v4432 = vand.u32 %v48, 4294901760
      %4433 = vmatpush1.msra.mxu0 %v4432
      %4434 = vmatprep.subr.mxu0 0.0
      %v4435 = vand.u32 %v47, 4294901760
      %4436 = vmatpush1.msra.mxu0 %v4435
      %4437 = vmatprep.subr.mxu0 0.0
      %4438 = vmatpush2.msra.mxu0 0.0
      %4439 = vmatprep.subr.mxu0 0.0
      %4440 = vmatpush2.msra.mxu0 0.0
      %4441 = vmatprep.subr.mxu0 0.0
      %4442 = vmatpush2.msra.mxu0 0.0
      %4443 = vmatprep.subr.mxu0 0.0
      %4444 = vmatpush2.msra.mxu0 0.0
      %4445 = vmatprep.subr.mxu0 0.0
      %4446 = vmatpush2.msra.mxu0 0.0
      %4447 = vmatprep.subr.mxu0 0.0
      %4448 = vmatpush2.msra.mxu0 0.0
      %4449 = vmatprep.subr.mxu0 0.0
      %4450 = vmatpush2.msra.mxu0 0.0
      %4451 = vmatprep.subr.mxu0 0.0
      %4452 = vmatpush2.msra.mxu0 0.0
      %4453 = vmatprep.subr.mxu0 0.0
      %4454 = vmatpush2.msra.mxu0 0.0
      %4455 = vmatprep.subr.mxu0 0.0
      %4456 = vmatpush2.msra.mxu0 0.0
      %4457 = vmatprep.subr.mxu0 0.0
      %4458 = vmatpush2.msra.mxu0 0.0
      %4459 = vmatprep.subr.mxu0 0.0
      %4460 = vmatpush2.msra.mxu0 0.0
      %4461 = vmatprep.subr.mxu0 0.0
      %4462 = vmatpush2.msra.mxu0 0.0
      %4463 = vmatprep.subr.mxu0 0.0
      %4464 = vmatpush2.msra.mxu0 0.0
      %4465 = vmatprep.subr.mxu0 0.0
      %4466 = vmatpush2.msra.mxu0 0.0
      %4467 = vmatprep.subr.mxu0 0.0
      %4468 = vmatpush2.msra.mxu0 0.0
      %4469 = vmatprep.mubr.f32.mxu0 0.0
      %v4470 = vand.u32 %v4002, 4294901760
      %4471 = vmatmul.mubr.f32.gmra.mxu0 %v4470
      %v4472 = vpop.f32.mrf.mxu0
      %v4473 = vadd.f32 %v4399, %v4472
      %v4474 = vpop.f32.mrf.mxu0
      %4475 = vdwg.mxu0
      %v4476 = vrcp.pop %v3986
      %v4477 = vmul.f32 1.0, %v4476
      %4479 = vrot.lane.b32.xlu0 %v3985, 16
      %v4480 = vpop.permute.xlu0 %4479
      %v4482 = vsub.f32 %v3983, %v4480
      %v4483 = vadd.f32 %v4477, 1.0
      %v4484 = vmul.f32 %v4473, 0.5
      %4486 = vrot.lane.b32.xlu0 %v4483, 16
      %v4487 = vpop.permute.xlu0 %4486
      %v4489 = vmul.f32 %v4484, %v4487
      %v4490 = vadd.f32 %v4482, %v4489
      %v4491 = vmul.f32 %v4473, %v4490
      %v4492 = vsub.f32 1.0, %v4477
      %4494 = vrot.lane.b32.xlu0 %v4492, 16
      %v4495 = vpop.permute.xlu0 %4494
      %v4497 = vmul.f32 %v4491, %v4495
      %v4498 = vmul.f32 %v3986, %v3986
      %v4499 = vstv %s3997
      %v4500 = vrcp.pop %v4499
      %s4501 = vtos %v4500
      %s4502 = smul.f32 %s3998, %s4501
      %v4503 = vstv %s4502
      %v4504 = vsub.f32 %v4498, %v4503
      %v4505 = vstv %s3998
      %v4506 = vmul.f32 %v4505, %v4504
      %v4507 = vmul.f32 %v4473, %v4487
      %v4508 = vadd.f32 %v4482, %v4507
      %v4509 = vmul.f32 %v4484, %v4473
      %v4510 = vmul.f32 %v4477, %v4477
      %v4511 = vadd.f32 %v4510, 1.0
      %4513 = vrot.lane.b32.xlu0 %v4511, 16
      %v4514 = vpop.permute.xlu0 %4513
      %v4516 = vmul.f32 %v4509, %v4514
      %v4517 = vadd.f32 %v4508, %v4516
      %v4518 = vmul.f32 %v4482, %v4517
      %4520 = vrot.lane.b32.xlu0 %v4518, 112
      %v4521 = vpop.permute.xlu0 %4520
      %v4523 = vadd.f32 %v4506, %v4521
      %4525 = vrot.lane.b32.xlu0 %v4497, 112
      %v4526 = vpop.permute.xlu0 %4525
      %vm4528 = vcmp.ge.f32.partialorder %v4523, %v4526
      %vm4529 = vcmp.ge.f32.partialorder %v4497, 0.0
      %v4530 = vsel %vm4529, 1, 0
      %4531 = vrot.lane.b32.xlu0 %v4530, 112
      %v4532 = vpop.permute.xlu0 %4531
      %vm4533 = vcmp.ne.s32.totalorder %v4532, 0
      %vm4534 = vmand %vm4528, %vm4533
      %vm4535 = vcmp.lt.f32.partialorder %v4523, %v4526
      %vm4536 = vcmp.lt.f32.partialorder %v4497, 0.0
      %v4537 = vsel %vm4536, 1, 0
      %4538 = vrot.lane.b32.xlu0 %v4537, 112
      %v4539 = vpop.permute.xlu0 %4538
      %vm4540 = vcmp.ne.s32.totalorder %v4539, 0
      %vm4541 = vmand %vm4535, %vm4540
      %4543 = vrot.lane.b32.xlu0 %v4523, 16
      %v4544 = vpop.permute.xlu0 %4543
      %vm4546 = vcmp.lt.f32.partialorder %v4497, %v4544
      %vm4547 = vcmp.lt.f32.partialorder %v4523, 0.0
      %v4548 = vsel %vm4547, 1, 0
      %4549 = vrot.lane.b32.xlu0 %v4548, 16
      %v4550 = vpop.permute.xlu0 %4549
      %vm4551 = vcmp.ne.s32.totalorder %v4550, 0
      %vm4552 = vmand %vm4546, %vm4551
      %v4553 = vmul.f32 %v4497, %v4497
      %v4554 = vmul.f32 %v4523, %v4523
      %4556 = vrot.lane.b32.xlu0 %v4554, 16
      %v4557 = vpop.permute.xlu0 %4556
      %v4559 = vsub.f32 %v4553, %v4557
      %s4560 = smul.f32 %s3998, 2.0
      %s4561 = smul.f32 %s4560, %s3998
      %v4562 = vstv %s3997
      %v4563 = vrcp.pop %v4562
      %s4564 = vtos %v4563
      %s4565 = smul.f32 %s4561, %s4564
      %v4566 = vstv %s4565
      %v4567 = vmul.f32 %v4566, %v4523
      %4569 = vrot.lane.b32.xlu0 %v4559, 112
      %v4570 = vpop.permute.xlu0 %4569
      %vm4572 = vcmp.ge.f32.partialorder %v4567, %v4570
      %vm4573 = vcmp.gt.f32.partialorder %v4559, 0.0
      %v4574 = vsel %vm4573, 1, 0
      %4575 = vrot.lane.b32.xlu0 %v4574, 112
      %v4576 = vpop.permute.xlu0 %4575
      %vm4577 = vcmp.ne.s32.totalorder %v4576, 0
      %vm4578 = vmand %vm4572, %vm4577
      %vm4579 = vmor %vm4534, %vm4541
      %v4580 = vsel %vm4552, 1, 0
      %4581 = vrot.lane.b32.xlu0 %v4580, 112
      %v4582 = vpop.permute.xlu0 %4581
      %vm4583 = vcmp.ne.s32.totalorder %v4582, 0
      %vm4584 = vmor %vm4579, %vm4583
      %vm4585 = vmor %vm4584, %vm4578
      %v4586 = vsel %vm4585, %v4477, 1.0
      %4588 = vrot.lane.b32.xlu0 %v4586, 16
      %v4589 = vpop.permute.xlu0 %4588
      %v4591 = vmul.f32 %v4473, %v4589
      %v4592 = vadd.f32 %v3983, %v4591
      %v4593 = vadd.f32 %v3983, %v4473
      %v4594 = vsel %vm1171, %v4593, %v4592
      %v4596 = vsel %vm566, %v4594, 0
      %4598 = vmatprep.subr.mxu0 0.0
      %4599 = vmatpush1.msra.mxu0 0.0
      %4600 = vmatprep.subr.mxu0 0.0
      %4601 = vmatpush1.msra.mxu0 0.0
      %4602 = vmatprep.subr.mxu0 0.0
      %4603 = vmatpush1.msra.mxu0 0.0
      %4604 = vmatprep.subr.mxu0 0.0
      %4605 = vmatpush1.msra.mxu0 0.0
      %4606 = vmatprep.subr.mxu0 0.0
      %4607 = vmatpush1.msra.mxu0 0.0
      %4608 = vmatprep.subr.mxu0 0.0
      %4609 = vmatpush1.msra.mxu0 0.0
      %4610 = vmatprep.subr.mxu0 0.0
      %4611 = vmatpush1.msra.mxu0 0.0
      %4612 = vmatprep.subr.mxu0 0.0
      %4613 = vmatpush1.msra.mxu0 0.0
      %4614 = vmatprep.subr.mxu0 0.0
      %4615 = vmatpush1.msra.mxu0 0.0
      %4616 = vmatprep.subr.mxu0 0.0
      %4617 = vmatpush1.msra.mxu0 0.0
      %4618 = vmatprep.subr.mxu0 0.0
      %4619 = vmatpush1.msra.mxu0 0.0
      %4620 = vmatprep.subr.mxu0 0.0
      %4621 = vmatpush1.msra.mxu0 0.0
      %4622 = vmatprep.subr.mxu0 0.0
      %4623 = vmatpush1.msra.mxu0 0.0
      %4624 = vmatprep.subr.mxu0 0.0
      %v4625 = vand.u32 %v52, 4294901760
      %4626 = vmatpush1.msra.mxu0 %v4625
      %4627 = vmatprep.subr.mxu0 0.0
      %v4628 = vand.u32 %v51, 4294901760
      %4629 = vmatpush1.msra.mxu0 %v4628
      %4630 = vmatprep.subr.mxu0 0.0
      %v4631 = vand.u32 %v50, 4294901760
      %4632 = vmatpush1.msra.mxu0 %v4631
      %4633 = vmatprep.subr.mxu0 0.0
      %4634 = vmatpush2.msra.mxu0 0.0
      %4635 = vmatprep.subr.mxu0 0.0
      %4636 = vmatpush2.msra.mxu0 0.0
      %4637 = vmatprep.subr.mxu0 0.0
      %4638 = vmatpush2.msra.mxu0 0.0
      %4639 = vmatprep.subr.mxu0 0.0
      %4640 = vmatpush2.msra.mxu0 0.0
      %4641 = vmatprep.subr.mxu0 0.0
      %4642 = vmatpush2.msra.mxu0 0.0
      %4643 = vmatprep.subr.mxu0 0.0
      %4644 = vmatpush2.msra.mxu0 0.0
      %4645 = vmatprep.subr.mxu0 0.0
      %4646 = vmatpush2.msra.mxu0 0.0
      %4647 = vmatprep.subr.mxu0 0.0
      %4648 = vmatpush2.msra.mxu0 0.0
      %4649 = vmatprep.subr.mxu0 0.0
      %4650 = vmatpush2.msra.mxu0 0.0
      %4651 = vmatprep.subr.mxu0 0.0
      %4652 = vmatpush2.msra.mxu0 0.0
      %4653 = vmatprep.subr.mxu0 0.0
      %4654 = vmatpush2.msra.mxu0 0.0
      %4655 = vmatprep.subr.mxu0 0.0
      %4656 = vmatpush2.msra.mxu0 0.0
      %4657 = vmatprep.subr.mxu0 0.0
      %4658 = vmatpush2.msra.mxu0 0.0
      %4659 = vmatprep.subr.mxu0 0.0
      %4660 = vmatpush2.msra.mxu0 0.0
      %4661 = vmatprep.subr.mxu0 0.0
      %4662 = vmatpush2.msra.mxu0 0.0
      %4663 = vmatprep.subr.mxu0 0.0
      %4664 = vmatpush2.msra.mxu0 0.0
      %4665 = vmatprep.mubr.f32.mxu0 0.0
      %v4666 = vand.u32 %v4596, 4294901760
      %v4667 = vsub.f32 %v4596, %v4666
      %v4668 = vand.u32 %v4667, 4294901760
      %v4669 = vsub.f32 %v4667, %v4668
      %v4670 = vand.u32 %v4669, 4294901760
      %4671 = vmatmul.mubr.f32.gmra.mxu0 %v4670
      %v4672 = vpop.f32.mrf.mxu0
      %v4673 = vadd.f32 %v1177, %v4672
      %v4674 = vpop.f32.mrf.mxu0
      %4675 = vdwg.mxu0
      %4676 = vmatprep.subr.mxu0 0.0
      %4677 = vmatpush1.msra.mxu0 0.0
      %4678 = vmatprep.subr.mxu0 0.0
      %4679 = vmatpush1.msra.mxu0 0.0
      %4680 = vmatprep.subr.mxu0 0.0
      %4681 = vmatpush1.msra.mxu0 0.0
      %4682 = vmatprep.subr.mxu0 0.0
      %4683 = vmatpush1.msra.mxu0 0.0
      %4684 = vmatprep.subr.mxu0 0.0
      %4685 = vmatpush1.msra.mxu0 0.0
      %4686 = vmatprep.subr.mxu0 0.0
      %4687 = vmatpush1.msra.mxu0 0.0
      %4688 = vmatprep.subr.mxu0 0.0
      %4689 = vmatpush1.msra.mxu0 0.0
      %4690 = vmatprep.subr.mxu0 0.0
      %4691 = vmatpush1.msra.mxu0 0.0
      %4692 = vmatprep.subr.mxu0 0.0
      %4693 = vmatpush1.msra.mxu0 0.0
      %4694 = vmatprep.subr.mxu0 0.0
      %4695 = vmatpush1.msra.mxu0 0.0
      %4696 = vmatprep.subr.mxu0 0.0
      %4697 = vmatpush1.msra.mxu0 0.0
      %4698 = vmatprep.subr.mxu0 0.0
      %4699 = vmatpush1.msra.mxu0 0.0
      %4700 = vmatprep.subr.mxu0 0.0
      %4701 = vmatpush1.msra.mxu0 0.0
      %4702 = vmatprep.subr.mxu0 0.0
      %v4703 = vand.u32 %v52, 4294901760
      %v4704 = vsub.f32 %v52, %v4703
      %v4705 = vand.u32 %v4704, 4294901760
      %v4706 = vsub.f32 %v4704, %v4705
      %v4707 = vand.u32 %v4706, 4294901760
      %4708 = vmatpush1.msra.mxu0 %v4707
      %4709 = vmatprep.subr.mxu0 0.0
      %v4710 = vand.u32 %v51, 4294901760
      %v4711 = vsub.f32 %v51, %v4710
      %v4712 = vand.u32 %v4711, 4294901760
      %v4713 = vsub.f32 %v4711, %v4712
      %v4714 = vand.u32 %v4713, 4294901760
      %4715 = vmatpush1.msra.mxu0 %v4714
      %4716 = vmatprep.subr.mxu0 0.0
      %v4717 = vand.u32 %v50, 4294901760
      %v4718 = vsub.f32 %v50, %v4717
      %v4719 = vand.u32 %v4718, 4294901760
      %v4720 = vsub.f32 %v4718, %v4719
      %v4721 = vand.u32 %v4720, 4294901760
      %4722 = vmatpush1.msra.mxu0 %v4721
      %4723 = vmatprep.subr.mxu0 0.0
      %4724 = vmatpush2.msra.mxu0 0.0
      %4725 = vmatprep.subr.mxu0 0.0
      %4726 = vmatpush2.msra.mxu0 0.0
      %4727 = vmatprep.subr.mxu0 0.0
      %4728 = vmatpush2.msra.mxu0 0.0
      %4729 = vmatprep.subr.mxu0 0.0
      %4730 = vmatpush2.msra.mxu0 0.0
      %4731 = vmatprep.subr.mxu0 0.0
      %4732 = vmatpush2.msra.mxu0 0.0
      %4733 = vmatprep.subr.mxu0 0.0
      %4734 = vmatpush2.msra.mxu0 0.0
      %4735 = vmatprep.subr.mxu0 0.0
      %4736 = vmatpush2.msra.mxu0 0.0
      %4737 = vmatprep.subr.mxu0 0.0
      %4738 = vmatpush2.msra.mxu0 0.0
      %4739 = vmatprep.subr.mxu0 0.0
      %4740 = vmatpush2.msra.mxu0 0.0
      %4741 = vmatprep.subr.mxu0 0.0
      %4742 = vmatpush2.msra.mxu0 0.0
      %4743 = vmatprep.subr.mxu0 0.0
      %4744 = vmatpush2.msra.mxu0 0.0
      %4745 = vmatprep.subr.mxu0 0.0
      %4746 = vmatpush2.msra.mxu0 0.0
      %4747 = vmatprep.subr.mxu0 0.0
      %4748 = vmatpush2.msra.mxu0 0.0
      %4749 = vmatprep.subr.mxu0 0.0
      %4750 = vmatpush2.msra.mxu0 0.0
      %4751 = vmatprep.subr.mxu0 0.0
      %4752 = vmatpush2.msra.mxu0 0.0
      %4753 = vmatprep.subr.mxu0 0.0
      %4754 = vmatpush2.msra.mxu0 0.0
      %4755 = vmatprep.mubr.f32.mxu0 0.0
      %v4756 = vand.u32 %v4596, 4294901760
      %4757 = vmatmul.mubr.f32.gmra.mxu0 %v4756
      %v4758 = vpop.f32.mrf.mxu0
      %v4759 = vadd.f32 %v4673, %v4758
      %v4760 = vpop.f32.mrf.mxu0
      %4761 = vdwg.mxu0
      %4762 = vmatprep.subr.mxu0 0.0
      %4763 = vmatpush1.msra.mxu0 0.0
      %4764 = vmatprep.subr.mxu0 0.0
      %4765 = vmatpush1.msra.mxu0 0.0
      %4766 = vmatprep.subr.mxu0 0.0
      %4767 = vmatpush1.msra.mxu0 0.0
      %4768 = vmatprep.subr.mxu0 0.0
      %4769 = vmatpush1.msra.mxu0 0.0
      %4770 = vmatprep.subr.mxu0 0.0
      %4771 = vmatpush1.msra.mxu0 0.0
      %4772 = vmatprep.subr.mxu0 0.0
      %4773 = vmatpush1.msra.mxu0 0.0
      %4774 = vmatprep.subr.mxu0 0.0
      %4775 = vmatpush1.msra.mxu0 0.0
      %4776 = vmatprep.subr.mxu0 0.0
      %4777 = vmatpush1.msra.mxu0 0.0
      %4778 = vmatprep.subr.mxu0 0.0
      %4779 = vmatpush1.msra.mxu0 0.0
      %4780 = vmatprep.subr.mxu0 0.0
      %4781 = vmatpush1.msra.mxu0 0.0
      %4782 = vmatprep.subr.mxu0 0.0
      %4783 = vmatpush1.msra.mxu0 0.0
      %4784 = vmatprep.subr.mxu0 0.0
      %4785 = vmatpush1.msra.mxu0 0.0
      %4786 = vmatprep.subr.mxu0 0.0
      %4787 = vmatpush1.msra.mxu0 0.0
      %4788 = vmatprep.subr.mxu0 0.0
      %v4789 = vand.u32 %v52, 4294901760
      %v4790 = vsub.f32 %v52, %v4789
      %4791 = vmatpush1.msra.mxu0 %v4790
      %4792 = vmatprep.subr.mxu0 0.0
      %v4793 = vand.u32 %v51, 4294901760
      %v4794 = vsub.f32 %v51, %v4793
      %4795 = vmatpush1.msra.mxu0 %v4794
      %4796 = vmatprep.subr.mxu0 0.0
      %v4797 = vand.u32 %v50, 4294901760
      %v4798 = vsub.f32 %v50, %v4797
      %4799 = vmatpush1.msra.mxu0 %v4798
      %4800 = vmatprep.subr.mxu0 0.0
      %4801 = vmatpush2.msra.mxu0 0.0
      %4802 = vmatprep.subr.mxu0 0.0
      %4803 = vmatpush2.msra.mxu0 0.0
      %4804 = vmatprep.subr.mxu0 0.0
      %4805 = vmatpush2.msra.mxu0 0.0
      %4806 = vmatprep.subr.mxu0 0.0
      %4807 = vmatpush2.msra.mxu0 0.0
      %4808 = vmatprep.subr.mxu0 0.0
      %4809 = vmatpush2.msra.mxu0 0.0
      %4810 = vmatprep.subr.mxu0 0.0
      %4811 = vmatpush2.msra.mxu0 0.0
      %4812 = vmatprep.subr.mxu0 0.0
      %4813 = vmatpush2.msra.mxu0 0.0
      %4814 = vmatprep.subr.mxu0 0.0
      %4815 = vmatpush2.msra.mxu0 0.0
      %4816 = vmatprep.subr.mxu0 0.0
      %4817 = vmatpush2.msra.mxu0 0.0
      %4818 = vmatprep.subr.mxu0 0.0
      %4819 = vmatpush2.msra.mxu0 0.0
      %4820 = vmatprep.subr.mxu0 0.0
      %4821 = vmatpush2.msra.mxu0 0.0
      %4822 = vmatprep.subr.mxu0 0.0
      %4823 = vmatpush2.msra.mxu0 0.0
      %4824 = vmatprep.subr.mxu0 0.0
      %4825 = vmatpush2.msra.mxu0 0.0
      %4826 = vmatprep.subr.mxu0 0.0
      %4827 = vmatpush2.msra.mxu0 0.0
      %4828 = vmatprep.subr.mxu0 0.0
      %4829 = vmatpush2.msra.mxu0 0.0
      %4830 = vmatprep.subr.mxu0 0.0
      %4831 = vmatpush2.msra.mxu0 0.0
      %4832 = vmatprep.mubr.f32.mxu0 0.0
      %v4833 = vand.u32 %v4596, 4294901760
      %v4834 = vsub.f32 %v4596, %v4833
      %4835 = vmatmul.mubr.f32.gmra.mxu0 %v4834
      %v4836 = vpop.f32.mrf.mxu0
      %v4837 = vadd.f32 %v4759, %v4836
      %v4838 = vpop.f32.mrf.mxu0
      %4839 = vdwg.mxu0
      %4840 = vmatprep.subr.mxu0 0.0
      %4841 = vmatpush1.msra.mxu0 0.0
      %4842 = vmatprep.subr.mxu0 0.0
      %4843 = vmatpush1.msra.mxu0 0.0
      %4844 = vmatprep.subr.mxu0 0.0
      %4845 = vmatpush1.msra.mxu0 0.0
      %4846 = vmatprep.subr.mxu0 0.0
      %4847 = vmatpush1.msra.mxu0 0.0
      %4848 = vmatprep.subr.mxu0 0.0
      %4849 = vmatpush1.msra.mxu0 0.0
      %4850 = vmatprep.subr.mxu0 0.0
      %4851 = vmatpush1.msra.mxu0 0.0
      %4852 = vmatprep.subr.mxu0 0.0
      %4853 = vmatpush1.msra.mxu0 0.0
      %4854 = vmatprep.subr.mxu0 0.0
      %4855 = vmatpush1.msra.mxu0 0.0
      %4856 = vmatprep.subr.mxu0 0.0
      %4857 = vmatpush1.msra.mxu0 0.0
      %4858 = vmatprep.subr.mxu0 0.0
      %4859 = vmatpush1.msra.mxu0 0.0
      %4860 = vmatprep.subr.mxu0 0.0
      %4861 = vmatpush1.msra.mxu0 0.0
      %4862 = vmatprep.subr.mxu0 0.0
      %4863 = vmatpush1.msra.mxu0 0.0
      %4864 = vmatprep.subr.mxu0 0.0
      %4865 = vmatpush1.msra.mxu0 0.0
      %4866 = vmatprep.subr.mxu0 0.0
      %v4867 = vand.u32 %v52, 4294901760
      %4868 = vmatpush1.msra.mxu0 %v4867
      %4869 = vmatprep.subr.mxu0 0.0
      %v4870 = vand.u32 %v51, 4294901760
      %4871 = vmatpush1.msra.mxu0 %v4870
      %4872 = vmatprep.subr.mxu0 0.0
      %v4873 = vand.u32 %v50, 4294901760
      %4874 = vmatpush1.msra.mxu0 %v4873
      %4875 = vmatprep.subr.mxu0 0.0
      %4876 = vmatpush2.msra.mxu0 0.0
      %4877 = vmatprep.subr.mxu0 0.0
      %4878 = vmatpush2.msra.mxu0 0.0
      %4879 = vmatprep.subr.mxu0 0.0
      %4880 = vmatpush2.msra.mxu0 0.0
      %4881 = vmatprep.subr.mxu0 0.0
      %4882 = vmatpush2.msra.mxu0 0.0
      %4883 = vmatprep.subr.mxu0 0.0
      %4884 = vmatpush2.msra.mxu0 0.0
      %4885 = vmatprep.subr.mxu0 0.0
      %4886 = vmatpush2.msra.mxu0 0.0
      %4887 = vmatprep.subr.mxu0 0.0
      %4888 = vmatpush2.msra.mxu0 0.0
      %4889 = vmatprep.subr.mxu0 0.0
      %4890 = vmatpush2.msra.mxu0 0.0
      %4891 = vmatprep.subr.mxu0 0.0
      %4892 = vmatpush2.msra.mxu0 0.0
      %4893 = vmatprep.subr.mxu0 0.0
      %4894 = vmatpush2.msra.mxu0 0.0
      %4895 = vmatprep.subr.mxu0 0.0
      %4896 = vmatpush2.msra.mxu0 0.0
      %4897 = vmatprep.subr.mxu0 0.0
      %4898 = vmatpush2.msra.mxu0 0.0
      %4899 = vmatprep.subr.mxu0 0.0
      %4900 = vmatpush2.msra.mxu0 0.0
      %4901 = vmatprep.subr.mxu0 0.0
      %4902 = vmatpush2.msra.mxu0 0.0
      %4903 = vmatprep.subr.mxu0 0.0
      %4904 = vmatpush2.msra.mxu0 0.0
      %4905 = vmatprep.subr.mxu0 0.0
      %4906 = vmatpush2.msra.mxu0 0.0
      %4907 = vmatprep.mubr.f32.mxu0 0.0
      %v4908 = vand.u32 %v4596, 4294901760
      %v4909 = vsub.f32 %v4596, %v4908
      %v4910 = vand.u32 %v4909, 4294901760
      %4911 = vmatmul.mubr.f32.gmra.mxu0 %v4910
      %v4912 = vpop.f32.mrf.mxu0
      %v4913 = vadd.f32 %v4837, %v4912
      %v4914 = vpop.f32.mrf.mxu0
      %4915 = vdwg.mxu0
      %4916 = vmatprep.subr.mxu0 0.0
      %4917 = vmatpush1.msra.mxu0 0.0
      %4918 = vmatprep.subr.mxu0 0.0
      %4919 = vmatpush1.msra.mxu0 0.0
      %4920 = vmatprep.subr.mxu0 0.0
      %4921 = vmatpush1.msra.mxu0 0.0
      %4922 = vmatprep.subr.mxu0 0.0
      %4923 = vmatpush1.msra.mxu0 0.0
      %4924 = vmatprep.subr.mxu0 0.0
      %4925 = vmatpush1.msra.mxu0 0.0
      %4926 = vmatprep.subr.mxu0 0.0
      %4927 = vmatpush1.msra.mxu0 0.0
      %4928 = vmatprep.subr.mxu0 0.0
      %4929 = vmatpush1.msra.mxu0 0.0
      %4930 = vmatprep.subr.mxu0 0.0
      %4931 = vmatpush1.msra.mxu0 0.0
      %4932 = vmatprep.subr.mxu0 0.0
      %4933 = vmatpush1.msra.mxu0 0.0
      %4934 = vmatprep.subr.mxu0 0.0
      %4935 = vmatpush1.msra.mxu0 0.0
      %4936 = vmatprep.subr.mxu0 0.0
      %4937 = vmatpush1.msra.mxu0 0.0
      %4938 = vmatprep.subr.mxu0 0.0
      %4939 = vmatpush1.msra.mxu0 0.0
      %4940 = vmatprep.subr.mxu0 0.0
      %4941 = vmatpush1.msra.mxu0 0.0
      %4942 = vmatprep.subr.mxu0 0.0
      %v4943 = vand.u32 %v52, 4294901760
      %v4944 = vsub.f32 %v52, %v4943
      %v4945 = vand.u32 %v4944, 4294901760
      %4946 = vmatpush1.msra.mxu0 %v4945
      %4947 = vmatprep.subr.mxu0 0.0
      %v4948 = vand.u32 %v51, 4294901760
      %v4949 = vsub.f32 %v51, %v4948
      %v4950 = vand.u32 %v4949, 4294901760
      %4951 = vmatpush1.msra.mxu0 %v4950
      %4952 = vmatprep.subr.mxu0 0.0
      %v4953 = vand.u32 %v50, 4294901760
      %v4954 = vsub.f32 %v50, %v4953
      %v4955 = vand.u32 %v4954, 4294901760
      %4956 = vmatpush1.msra.mxu0 %v4955
      %4957 = vmatprep.subr.mxu0 0.0
      %4958 = vmatpush2.msra.mxu0 0.0
      %4959 = vmatprep.subr.mxu0 0.0
      %4960 = vmatpush2.msra.mxu0 0.0
      %4961 = vmatprep.subr.mxu0 0.0
      %4962 = vmatpush2.msra.mxu0 0.0
      %4963 = vmatprep.subr.mxu0 0.0
      %4964 = vmatpush2.msra.mxu0 0.0
      %4965 = vmatprep.subr.mxu0 0.0
      %4966 = vmatpush2.msra.mxu0 0.0
      %4967 = vmatprep.subr.mxu0 0.0
      %4968 = vmatpush2.msra.mxu0 0.0
      %4969 = vmatprep.subr.mxu0 0.0
      %4970 = vmatpush2.msra.mxu0 0.0
      %4971 = vmatprep.subr.mxu0 0.0
      %4972 = vmatpush2.msra.mxu0 0.0
      %4973 = vmatprep.subr.mxu0 0.0
      %4974 = vmatpush2.msra.mxu0 0.0
      %4975 = vmatprep.subr.mxu0 0.0
      %4976 = vmatpush2.msra.mxu0 0.0
      %4977 = vmatprep.subr.mxu0 0.0
      %4978 = vmatpush2.msra.mxu0 0.0
      %4979 = vmatprep.subr.mxu0 0.0
      %4980 = vmatpush2.msra.mxu0 0.0
      %4981 = vmatprep.subr.mxu0 0.0
      %4982 = vmatpush2.msra.mxu0 0.0
      %4983 = vmatprep.subr.mxu0 0.0
      %4984 = vmatpush2.msra.mxu0 0.0
      %4985 = vmatprep.subr.mxu0 0.0
      %4986 = vmatpush2.msra.mxu0 0.0
      %4987 = vmatprep.subr.mxu0 0.0
      %4988 = vmatpush2.msra.mxu0 0.0
      %4989 = vmatprep.mubr.f32.mxu0 0.0
      %v4990 = vand.u32 %v4596, 4294901760
      %4991 = vmatmul.mubr.f32.gmra.mxu0 %v4990
      %v4992 = vpop.f32.mrf.mxu0
      %v4993 = vadd.f32 %v4913, %v4992
      %v4994 = vpop.f32.mrf.mxu0
      %4995 = vdwg.mxu0
      %4996 = vmatprep.subr.mxu0 0.0
      %4997 = vmatpush1.msra.mxu0 0.0
      %4998 = vmatprep.subr.mxu0 0.0
      %4999 = vmatpush1.msra.mxu0 0.0
      %5000 = vmatprep.subr.mxu0 0.0
      %5001 = vmatpush1.msra.mxu0 0.0
      %5002 = vmatprep.subr.mxu0 0.0
      %5003 = vmatpush1.msra.mxu0 0.0
      %5004 = vmatprep.subr.mxu0 0.0
      %5005 = vmatpush1.msra.mxu0 0.0
      %5006 = vmatprep.subr.mxu0 0.0
      %5007 = vmatpush1.msra.mxu0 0.0
      %5008 = vmatprep.subr.mxu0 0.0
      %5009 = vmatpush1.msra.mxu0 0.0
      %5010 = vmatprep.subr.mxu0 0.0
      %5011 = vmatpush1.msra.mxu0 0.0
      %5012 = vmatprep.subr.mxu0 0.0
      %5013 = vmatpush1.msra.mxu0 0.0
      %5014 = vmatprep.subr.mxu0 0.0
      %5015 = vmatpush1.msra.mxu0 0.0
      %5016 = vmatprep.subr.mxu0 0.0
      %5017 = vmatpush1.msra.mxu0 0.0
      %5018 = vmatprep.subr.mxu0 0.0
      %5019 = vmatpush1.msra.mxu0 0.0
      %5020 = vmatprep.subr.mxu0 0.0
      %5021 = vmatpush1.msra.mxu0 0.0
      %5022 = vmatprep.subr.mxu0 0.0
      %v5023 = vand.u32 %v52, 4294901760
      %5024 = vmatpush1.msra.mxu0 %v5023
      %5025 = vmatprep.subr.mxu0 0.0
      %v5026 = vand.u32 %v51, 4294901760
      %5027 = vmatpush1.msra.mxu0 %v5026
      %5028 = vmatprep.subr.mxu0 0.0
      %v5029 = vand.u32 %v50, 4294901760
      %5030 = vmatpush1.msra.mxu0 %v5029
      %5031 = vmatprep.subr.mxu0 0.0
      %5032 = vmatpush2.msra.mxu0 0.0
      %5033 = vmatprep.subr.mxu0 0.0
      %5034 = vmatpush2.msra.mxu0 0.0
      %5035 = vmatprep.subr.mxu0 0.0
      %5036 = vmatpush2.msra.mxu0 0.0
      %5037 = vmatprep.subr.mxu0 0.0
      %5038 = vmatpush2.msra.mxu0 0.0
      %5039 = vmatprep.subr.mxu0 0.0
      %5040 = vmatpush2.msra.mxu0 0.0
      %5041 = vmatprep.subr.mxu0 0.0
      %5042 = vmatpush2.msra.mxu0 0.0
      %5043 = vmatprep.subr.mxu0 0.0
      %5044 = vmatpush2.msra.mxu0 0.0
      %5045 = vmatprep.subr.mxu0 0.0
      %5046 = vmatpush2.msra.mxu0 0.0
      %5047 = vmatprep.subr.mxu0 0.0
      %5048 = vmatpush2.msra.mxu0 0.0
      %5049 = vmatprep.subr.mxu0 0.0
      %5050 = vmatpush2.msra.mxu0 0.0
      %5051 = vmatprep.subr.mxu0 0.0
      %5052 = vmatpush2.msra.mxu0 0.0
      %5053 = vmatprep.subr.mxu0 0.0
      %5054 = vmatpush2.msra.mxu0 0.0
      %5055 = vmatprep.subr.mxu0 0.0
      %5056 = vmatpush2.msra.mxu0 0.0
      %5057 = vmatprep.subr.mxu0 0.0
      %5058 = vmatpush2.msra.mxu0 0.0
      %5059 = vmatprep.subr.mxu0 0.0
      %5060 = vmatpush2.msra.mxu0 0.0
      %5061 = vmatprep.subr.mxu0 0.0
      %5062 = vmatpush2.msra.mxu0 0.0
      %5063 = vmatprep.mubr.f32.mxu0 0.0
      %v5064 = vand.u32 %v4596, 4294901760
      %5065 = vmatmul.mubr.f32.gmra.mxu0 %v5064
      %v5066 = vpop.f32.mrf.mxu0
      %v5067 = vadd.f32 %v4993, %v5066
      %v5068 = vpop.f32.mrf.mxu0
      %5069 = vdwg.mxu0
      %v5070 = vmax.f32 %v4593, -5.0
      %v5071 = vmin.f32 %v5070, 5.0
      %v5072 = vmax.f32 %v5067, -5.0
      %v5073 = vmin.f32 %v5072, 5.0
      %v5074 = vmax.f32 %v4592, -3.0
      %v5075 = vmin.f32 %v5074, 3.0
      %v5076 = vsub.f32 %v5075, %v4480
      %v5077 = vstv %s3998
      %v5078 = vrcp.pop %v5077
      %s5079 = vtos %v5078
      %s5080 = smul.f32 %s3997, %s5079
      %v5081 = vstv %s5080
      %v5082 = vmul.f32 %v5081, %v3986
      %v5083 = vmul.f32 %v5082, %v3986
      %s5084 = smul.f32 %s3998, %s3998
      %v5085 = vstv %s5084
      %v5086 = vrcp.pop %v5085
      %s5087 = vtos %v5086
      %s5088 = smul.f32 %s3997, %s5087
      %v5089 = vstv %s5088
      %v5090 = vmul.f32 %v5089, %v5076
      %v5091 = vmul.f32 %v5090, %v5076
      %5093 = vrot.lane.b32.xlu0 %v5091, 112
      %v5094 = vpop.permute.xlu0 %5093
      %v5096 = vadd.f32 %v5083, %v5094
      %v5097 = vrsqrt.pop %v5096
      %v5098 = vmul.f32 %v5096, %v5097
      %vm5099 = vcmp.eq.f32.partialorder %v5096, inf
      %v5100 = vsel %vm5099, %v5096, %v5098
      %vm5101 = vcmp.eq.f32.partialorder %v5096, 0.0
      %v5102 = vand.u32 %v5096, 2147483648
      %v5103 = vsel %vm5101, %v5102, %v5100
      %v5104 = vmul.f32 %v5081, %v3985
      %v5105 = vstv %s3998
      %v5106 = vrcp.pop %v5105
      %s5107 = vtos %v5106
      %v5108 = vstv %s5107
      %v5109 = vmul.f32 %v5108, %v5075
      %5111 = vrot.lane.b32.xlu0 %v5109, 112
      %v5112 = vpop.permute.xlu0 %5111
      %v5114 = vadd.f32 %v5104, %v5112
      %v5115 = vsel %vm1171, %v5071, %v5075
      %5116 = vst.msk [vmem:[#allocation2] sm:$0xff] %vm566, %v5115
      %5117 = vst.msk [vmem:[#allocation3] sm:$0xff] %vm1701, %v5073
      %5118 = vst.msk [vmem:[#allocation4] sm:$0xff] %vm1703, %v5114
      %5119 = vst.msk [vmem:[#allocation5] sm:$0xff] %vm1703, %v5103
      %s5120 = sadd.s32 %s557, 4
      %v5121 = vld [vmem:[#allocation2] sm:$0xff]
      %v5122 = vld [vmem:[#allocation3] sm:$0xff]
      %v5123 = vld [vmem:[#allocation4] sm:$0xff]
      %v5124 = vld [vmem:[#allocation5] sm:$0xff]
      %5126 = vrot.lane.b32.xlu0 %v5122, 24
      %v5127 = vpop.permute.xlu0 %5126
      %v5129 = vsel %vm566, %v5121, %v5127
      %s5130 = smul.u32 %s5120, 8
      %s5131 = scalar_lea.vmem [#allocation11], %s5130
      %5132 = vst.msk [vmem:[%s5131] sm:$0xff] %vm570, %v5129
      %s5133 = sadd.s32 %s550, %s5120
      %s5134 = scvt.s32.f32 %s5133
      %s5135 = sadd.f32 %s5134, 1.0
      %s5136 = sadd.f32 %s5134, 2.0
      %s5137 = scalar_lea.vmem [#allocation9], %s5130
      %v5138 = vld [vmem:[%s5137] sm:$0xff]
      %v5140 = vsel %vm566, %v5121, 0
      %5142 = vmatprep.subr.mxu0 0.0
      %5143 = vmatpush1.msra.mxu0 0.0
      %5144 = vmatprep.subr.mxu0 0.0
      %5145 = vmatpush1.msra.mxu0 0.0
      %5146 = vmatprep.subr.mxu0 0.0
      %5147 = vmatpush1.msra.mxu0 0.0
      %5148 = vmatprep.subr.mxu0 0.0
      %5149 = vmatpush1.msra.mxu0 0.0
      %5150 = vmatprep.subr.mxu0 0.0
      %5151 = vmatpush1.msra.mxu0 0.0
      %5152 = vmatprep.subr.mxu0 0.0
      %5153 = vmatpush1.msra.mxu0 0.0
      %5154 = vmatprep.subr.mxu0 0.0
      %5155 = vmatpush1.msra.mxu0 0.0
      %5156 = vmatprep.subr.mxu0 0.0
      %5157 = vmatpush1.msra.mxu0 0.0
      %5158 = vmatprep.subr.mxu0 0.0
      %5159 = vmatpush1.msra.mxu0 0.0
      %5160 = vmatprep.subr.mxu0 0.0
      %5161 = vmatpush1.msra.mxu0 0.0
      %5162 = vmatprep.subr.mxu0 0.0
      %5163 = vmatpush1.msra.mxu0 0.0
      %5164 = vmatprep.subr.mxu0 0.0
      %5165 = vmatpush1.msra.mxu0 0.0
      %5166 = vmatprep.subr.mxu0 0.0
      %5167 = vmatpush1.msra.mxu0 0.0
      %5168 = vmatprep.subr.mxu0 0.0
      %v5169 = vand.u32 %v49, 4294901760
      %5170 = vmatpush1.msra.mxu0 %v5169
      %5171 = vmatprep.subr.mxu0 0.0
      %v5172 = vand.u32 %v48, 4294901760
      %5173 = vmatpush1.msra.mxu0 %v5172
      %5174 = vmatprep.subr.mxu0 0.0
      %v5175 = vand.u32 %v47, 4294901760
      %5176 = vmatpush1.msra.mxu0 %v5175
      %5177 = vmatprep.subr.mxu0 0.0
      %5178 = vmatpush2.msra.mxu0 0.0
      %5179 = vmatprep.subr.mxu0 0.0
      %5180 = vmatpush2.msra.mxu0 0.0
      %5181 = vmatprep.subr.mxu0 0.0
      %5182 = vmatpush2.msra.mxu0 0.0
      %5183 = vmatprep.subr.mxu0 0.0
      %5184 = vmatpush2.msra.mxu0 0.0
      %5185 = vmatprep.subr.mxu0 0.0
      %5186 = vmatpush2.msra.mxu0 0.0
      %5187 = vmatprep.subr.mxu0 0.0
      %5188 = vmatpush2.msra.mxu0 0.0
      %5189 = vmatprep.subr.mxu0 0.0
      %5190 = vmatpush2.msra.mxu0 0.0
      %5191 = vmatprep.subr.mxu0 0.0
      %5192 = vmatpush2.msra.mxu0 0.0
      %5193 = vmatprep.subr.mxu0 0.0
      %5194 = vmatpush2.msra.mxu0 0.0
      %5195 = vmatprep.subr.mxu0 0.0
      %5196 = vmatpush2.msra.mxu0 0.0
      %5197 = vmatprep.subr.mxu0 0.0
      %5198 = vmatpush2.msra.mxu0 0.0
      %5199 = vmatprep.subr.mxu0 0.0
      %5200 = vmatpush2.msra.mxu0 0.0
      %5201 = vmatprep.subr.mxu0 0.0
      %5202 = vmatpush2.msra.mxu0 0.0
      %5203 = vmatprep.subr.mxu0 0.0
      %5204 = vmatpush2.msra.mxu0 0.0
      %5205 = vmatprep.subr.mxu0 0.0
      %5206 = vmatpush2.msra.mxu0 0.0
      %5207 = vmatprep.subr.mxu0 0.0
      %5208 = vmatpush2.msra.mxu0 0.0
      %5209 = vmatprep.mubr.f32.mxu0 0.0
      %v5210 = vand.u32 %v5140, 4294901760
      %v5211 = vsub.f32 %v5140, %v5210
      %v5212 = vand.u32 %v5211, 4294901760
      %v5213 = vsub.f32 %v5211, %v5212
      %v5214 = vand.u32 %v5213, 4294901760
      %5215 = vmatmul.mubr.f32.gmra.mxu0 %v5214
      %v5216 = vpop.f32.mrf.mxu0
      %v5217 = vadd.f32 %v5138, %v5216
      %v5218 = vpop.f32.mrf.mxu0
      %5219 = vdwg.mxu0
      %5220 = vmatprep.subr.mxu0 0.0
      %5221 = vmatpush1.msra.mxu0 0.0
      %5222 = vmatprep.subr.mxu0 0.0
      %5223 = vmatpush1.msra.mxu0 0.0
      %5224 = vmatprep.subr.mxu0 0.0
      %5225 = vmatpush1.msra.mxu0 0.0
      %5226 = vmatprep.subr.mxu0 0.0
      %5227 = vmatpush1.msra.mxu0 0.0
      %5228 = vmatprep.subr.mxu0 0.0
      %5229 = vmatpush1.msra.mxu0 0.0
      %5230 = vmatprep.subr.mxu0 0.0
      %5231 = vmatpush1.msra.mxu0 0.0
      %5232 = vmatprep.subr.mxu0 0.0
      %5233 = vmatpush1.msra.mxu0 0.0
      %5234 = vmatprep.subr.mxu0 0.0
      %5235 = vmatpush1.msra.mxu0 0.0
      %5236 = vmatprep.subr.mxu0 0.0
      %5237 = vmatpush1.msra.mxu0 0.0
      %5238 = vmatprep.subr.mxu0 0.0
      %5239 = vmatpush1.msra.mxu0 0.0
      %5240 = vmatprep.subr.mxu0 0.0
      %5241 = vmatpush1.msra.mxu0 0.0
      %5242 = vmatprep.subr.mxu0 0.0
      %5243 = vmatpush1.msra.mxu0 0.0
      %5244 = vmatprep.subr.mxu0 0.0
      %5245 = vmatpush1.msra.mxu0 0.0
      %5246 = vmatprep.subr.mxu0 0.0
      %v5247 = vand.u32 %v49, 4294901760
      %v5248 = vsub.f32 %v49, %v5247
      %v5249 = vand.u32 %v5248, 4294901760
      %v5250 = vsub.f32 %v5248, %v5249
      %v5251 = vand.u32 %v5250, 4294901760
      %5252 = vmatpush1.msra.mxu0 %v5251
      %5253 = vmatprep.subr.mxu0 0.0
      %v5254 = vand.u32 %v48, 4294901760
      %v5255 = vsub.f32 %v48, %v5254
      %v5256 = vand.u32 %v5255, 4294901760
      %v5257 = vsub.f32 %v5255, %v5256
      %v5258 = vand.u32 %v5257, 4294901760
      %5259 = vmatpush1.msra.mxu0 %v5258
      %5260 = vmatprep.subr.mxu0 0.0
      %v5261 = vand.u32 %v47, 4294901760
      %v5262 = vsub.f32 %v47, %v5261
      %v5263 = vand.u32 %v5262, 4294901760
      %v5264 = vsub.f32 %v5262, %v5263
      %v5265 = vand.u32 %v5264, 4294901760
      %5266 = vmatpush1.msra.mxu0 %v5265
      %5267 = vmatprep.subr.mxu0 0.0
      %5268 = vmatpush2.msra.mxu0 0.0
      %5269 = vmatprep.subr.mxu0 0.0
      %5270 = vmatpush2.msra.mxu0 0.0
      %5271 = vmatprep.subr.mxu0 0.0
      %5272 = vmatpush2.msra.mxu0 0.0
      %5273 = vmatprep.subr.mxu0 0.0
      %5274 = vmatpush2.msra.mxu0 0.0
      %5275 = vmatprep.subr.mxu0 0.0
      %5276 = vmatpush2.msra.mxu0 0.0
      %5277 = vmatprep.subr.mxu0 0.0
      %5278 = vmatpush2.msra.mxu0 0.0
      %5279 = vmatprep.subr.mxu0 0.0
      %5280 = vmatpush2.msra.mxu0 0.0
      %5281 = vmatprep.subr.mxu0 0.0
      %5282 = vmatpush2.msra.mxu0 0.0
      %5283 = vmatprep.subr.mxu0 0.0
      %5284 = vmatpush2.msra.mxu0 0.0
      %5285 = vmatprep.subr.mxu0 0.0
      %5286 = vmatpush2.msra.mxu0 0.0
      %5287 = vmatprep.subr.mxu0 0.0
      %5288 = vmatpush2.msra.mxu0 0.0
      %5289 = vmatprep.subr.mxu0 0.0
      %5290 = vmatpush2.msra.mxu0 0.0
      %5291 = vmatprep.subr.mxu0 0.0
      %5292 = vmatpush2.msra.mxu0 0.0
      %5293 = vmatprep.subr.mxu0 0.0
      %5294 = vmatpush2.msra.mxu0 0.0
      %5295 = vmatprep.subr.mxu0 0.0
      %5296 = vmatpush2.msra.mxu0 0.0
      %5297 = vmatprep.subr.mxu0 0.0
      %5298 = vmatpush2.msra.mxu0 0.0
      %5299 = vmatprep.mubr.f32.mxu0 0.0
      %v5300 = vand.u32 %v5140, 4294901760
      %5301 = vmatmul.mubr.f32.gmra.mxu0 %v5300
      %v5302 = vpop.f32.mrf.mxu0
      %v5303 = vadd.f32 %v5217, %v5302
      %v5304 = vpop.f32.mrf.mxu0
      %5305 = vdwg.mxu0
      %5306 = vmatprep.subr.mxu0 0.0
      %5307 = vmatpush1.msra.mxu0 0.0
      %5308 = vmatprep.subr.mxu0 0.0
      %5309 = vmatpush1.msra.mxu0 0.0
      %5310 = vmatprep.subr.mxu0 0.0
      %5311 = vmatpush1.msra.mxu0 0.0
      %5312 = vmatprep.subr.mxu0 0.0
      %5313 = vmatpush1.msra.mxu0 0.0
      %5314 = vmatprep.subr.mxu0 0.0
      %5315 = vmatpush1.msra.mxu0 0.0
      %5316 = vmatprep.subr.mxu0 0.0
      %5317 = vmatpush1.msra.mxu0 0.0
      %5318 = vmatprep.subr.mxu0 0.0
      %5319 = vmatpush1.msra.mxu0 0.0
      %5320 = vmatprep.subr.mxu0 0.0
      %5321 = vmatpush1.msra.mxu0 0.0
      %5322 = vmatprep.subr.mxu0 0.0
      %5323 = vmatpush1.msra.mxu0 0.0
      %5324 = vmatprep.subr.mxu0 0.0
      %5325 = vmatpush1.msra.mxu0 0.0
      %5326 = vmatprep.subr.mxu0 0.0
      %5327 = vmatpush1.msra.mxu0 0.0
      %5328 = vmatprep.subr.mxu0 0.0
      %5329 = vmatpush1.msra.mxu0 0.0
      %5330 = vmatprep.subr.mxu0 0.0
      %5331 = vmatpush1.msra.mxu0 0.0
      %5332 = vmatprep.subr.mxu0 0.0
      %v5333 = vand.u32 %v49, 4294901760
      %v5334 = vsub.f32 %v49, %v5333
      %5335 = vmatpush1.msra.mxu0 %v5334
      %5336 = vmatprep.subr.mxu0 0.0
      %v5337 = vand.u32 %v48, 4294901760
      %v5338 = vsub.f32 %v48, %v5337
      %5339 = vmatpush1.msra.mxu0 %v5338
      %5340 = vmatprep.subr.mxu0 0.0
      %v5341 = vand.u32 %v47, 4294901760
      %v5342 = vsub.f32 %v47, %v5341
      %5343 = vmatpush1.msra.mxu0 %v5342
      %5344 = vmatprep.subr.mxu0 0.0
      %5345 = vmatpush2.msra.mxu0 0.0
      %5346 = vmatprep.subr.mxu0 0.0
      %5347 = vmatpush2.msra.mxu0 0.0
      %5348 = vmatprep.subr.mxu0 0.0
      %5349 = vmatpush2.msra.mxu0 0.0
      %5350 = vmatprep.subr.mxu0 0.0
      %5351 = vmatpush2.msra.mxu0 0.0
      %5352 = vmatprep.subr.mxu0 0.0
      %5353 = vmatpush2.msra.mxu0 0.0
      %5354 = vmatprep.subr.mxu0 0.0
      %5355 = vmatpush2.msra.mxu0 0.0
      %5356 = vmatprep.subr.mxu0 0.0
      %5357 = vmatpush2.msra.mxu0 0.0
      %5358 = vmatprep.subr.mxu0 0.0
      %5359 = vmatpush2.msra.mxu0 0.0
      %5360 = vmatprep.subr.mxu0 0.0
      %5361 = vmatpush2.msra.mxu0 0.0
      %5362 = vmatprep.subr.mxu0 0.0
      %5363 = vmatpush2.msra.mxu0 0.0
      %5364 = vmatprep.subr.mxu0 0.0
      %5365 = vmatpush2.msra.mxu0 0.0
      %5366 = vmatprep.subr.mxu0 0.0
      %5367 = vmatpush2.msra.mxu0 0.0
      %5368 = vmatprep.subr.mxu0 0.0
      %5369 = vmatpush2.msra.mxu0 0.0
      %5370 = vmatprep.subr.mxu0 0.0
      %5371 = vmatpush2.msra.mxu0 0.0
      %5372 = vmatprep.subr.mxu0 0.0
      %5373 = vmatpush2.msra.mxu0 0.0
      %5374 = vmatprep.subr.mxu0 0.0
      %5375 = vmatpush2.msra.mxu0 0.0
      %5376 = vmatprep.mubr.f32.mxu0 0.0
      %v5377 = vand.u32 %v5140, 4294901760
      %v5378 = vsub.f32 %v5140, %v5377
      %5379 = vmatmul.mubr.f32.gmra.mxu0 %v5378
      %v5380 = vpop.f32.mrf.mxu0
      %v5381 = vadd.f32 %v5303, %v5380
      %v5382 = vpop.f32.mrf.mxu0
      %5383 = vdwg.mxu0
      %5384 = vmatprep.subr.mxu0 0.0
      %5385 = vmatpush1.msra.mxu0 0.0
      %5386 = vmatprep.subr.mxu0 0.0
      %5387 = vmatpush1.msra.mxu0 0.0
      %5388 = vmatprep.subr.mxu0 0.0
      %5389 = vmatpush1.msra.mxu0 0.0
      %5390 = vmatprep.subr.mxu0 0.0
      %5391 = vmatpush1.msra.mxu0 0.0
      %5392 = vmatprep.subr.mxu0 0.0
      %5393 = vmatpush1.msra.mxu0 0.0
      %5394 = vmatprep.subr.mxu0 0.0
      %5395 = vmatpush1.msra.mxu0 0.0
      %5396 = vmatprep.subr.mxu0 0.0
      %5397 = vmatpush1.msra.mxu0 0.0
      %5398 = vmatprep.subr.mxu0 0.0
      %5399 = vmatpush1.msra.mxu0 0.0
      %5400 = vmatprep.subr.mxu0 0.0
      %5401 = vmatpush1.msra.mxu0 0.0
      %5402 = vmatprep.subr.mxu0 0.0
      %5403 = vmatpush1.msra.mxu0 0.0
      %5404 = vmatprep.subr.mxu0 0.0
      %5405 = vmatpush1.msra.mxu0 0.0
      %5406 = vmatprep.subr.mxu0 0.0
      %5407 = vmatpush1.msra.mxu0 0.0
      %5408 = vmatprep.subr.mxu0 0.0
      %5409 = vmatpush1.msra.mxu0 0.0
      %5410 = vmatprep.subr.mxu0 0.0
      %v5411 = vand.u32 %v49, 4294901760
      %5412 = vmatpush1.msra.mxu0 %v5411
      %5413 = vmatprep.subr.mxu0 0.0
      %v5414 = vand.u32 %v48, 4294901760
      %5415 = vmatpush1.msra.mxu0 %v5414
      %5416 = vmatprep.subr.mxu0 0.0
      %v5417 = vand.u32 %v47, 4294901760
      %5418 = vmatpush1.msra.mxu0 %v5417
      %5419 = vmatprep.subr.mxu0 0.0
      %5420 = vmatpush2.msra.mxu0 0.0
      %5421 = vmatprep.subr.mxu0 0.0
      %5422 = vmatpush2.msra.mxu0 0.0
      %5423 = vmatprep.subr.mxu0 0.0
      %5424 = vmatpush2.msra.mxu0 0.0
      %5425 = vmatprep.subr.mxu0 0.0
      %5426 = vmatpush2.msra.mxu0 0.0
      %5427 = vmatprep.subr.mxu0 0.0
      %5428 = vmatpush2.msra.mxu0 0.0
      %5429 = vmatprep.subr.mxu0 0.0
      %5430 = vmatpush2.msra.mxu0 0.0
      %5431 = vmatprep.subr.mxu0 0.0
      %5432 = vmatpush2.msra.mxu0 0.0
      %5433 = vmatprep.subr.mxu0 0.0
      %5434 = vmatpush2.msra.mxu0 0.0
      %5435 = vmatprep.subr.mxu0 0.0
      %5436 = vmatpush2.msra.mxu0 0.0
      %5437 = vmatprep.subr.mxu0 0.0
      %5438 = vmatpush2.msra.mxu0 0.0
      %5439 = vmatprep.subr.mxu0 0.0
      %5440 = vmatpush2.msra.mxu0 0.0
      %5441 = vmatprep.subr.mxu0 0.0
      %5442 = vmatpush2.msra.mxu0 0.0
      %5443 = vmatprep.subr.mxu0 0.0
      %5444 = vmatpush2.msra.mxu0 0.0
      %5445 = vmatprep.subr.mxu0 0.0
      %5446 = vmatpush2.msra.mxu0 0.0
      %5447 = vmatprep.subr.mxu0 0.0
      %5448 = vmatpush2.msra.mxu0 0.0
      %5449 = vmatprep.subr.mxu0 0.0
      %5450 = vmatpush2.msra.mxu0 0.0
      %5451 = vmatprep.mubr.f32.mxu0 0.0
      %v5452 = vand.u32 %v5140, 4294901760
      %v5453 = vsub.f32 %v5140, %v5452
      %v5454 = vand.u32 %v5453, 4294901760
      %5455 = vmatmul.mubr.f32.gmra.mxu0 %v5454
      %v5456 = vpop.f32.mrf.mxu0
      %v5457 = vadd.f32 %v5381, %v5456
      %v5458 = vpop.f32.mrf.mxu0
      %5459 = vdwg.mxu0
      %5460 = vmatprep.subr.mxu0 0.0
      %5461 = vmatpush1.msra.mxu0 0.0
      %5462 = vmatprep.subr.mxu0 0.0
      %5463 = vmatpush1.msra.mxu0 0.0
      %5464 = vmatprep.subr.mxu0 0.0
      %5465 = vmatpush1.msra.mxu0 0.0
      %5466 = vmatprep.subr.mxu0 0.0
      %5467 = vmatpush1.msra.mxu0 0.0
      %5468 = vmatprep.subr.mxu0 0.0
      %5469 = vmatpush1.msra.mxu0 0.0
      %5470 = vmatprep.subr.mxu0 0.0
      %5471 = vmatpush1.msra.mxu0 0.0
      %5472 = vmatprep.subr.mxu0 0.0
      %5473 = vmatpush1.msra.mxu0 0.0
      %5474 = vmatprep.subr.mxu0 0.0
      %5475 = vmatpush1.msra.mxu0 0.0
      %5476 = vmatprep.subr.mxu0 0.0
      %5477 = vmatpush1.msra.mxu0 0.0
      %5478 = vmatprep.subr.mxu0 0.0
      %5479 = vmatpush1.msra.mxu0 0.0
      %5480 = vmatprep.subr.mxu0 0.0
      %5481 = vmatpush1.msra.mxu0 0.0
      %5482 = vmatprep.subr.mxu0 0.0
      %5483 = vmatpush1.msra.mxu0 0.0
      %5484 = vmatprep.subr.mxu0 0.0
      %5485 = vmatpush1.msra.mxu0 0.0
      %5486 = vmatprep.subr.mxu0 0.0
      %v5487 = vand.u32 %v49, 4294901760
      %v5488 = vsub.f32 %v49, %v5487
      %v5489 = vand.u32 %v5488, 4294901760
      %5490 = vmatpush1.msra.mxu0 %v5489
      %5491 = vmatprep.subr.mxu0 0.0
      %v5492 = vand.u32 %v48, 4294901760
      %v5493 = vsub.f32 %v48, %v5492
      %v5494 = vand.u32 %v5493, 4294901760
      %5495 = vmatpush1.msra.mxu0 %v5494
      %5496 = vmatprep.subr.mxu0 0.0
      %v5497 = vand.u32 %v47, 4294901760
      %v5498 = vsub.f32 %v47, %v5497
      %v5499 = vand.u32 %v5498, 4294901760
      %5500 = vmatpush1.msra.mxu0 %v5499
      %5501 = vmatprep.subr.mxu0 0.0
      %5502 = vmatpush2.msra.mxu0 0.0
      %5503 = vmatprep.subr.mxu0 0.0
      %5504 = vmatpush2.msra.mxu0 0.0
      %5505 = vmatprep.subr.mxu0 0.0
      %5506 = vmatpush2.msra.mxu0 0.0
      %5507 = vmatprep.subr.mxu0 0.0
      %5508 = vmatpush2.msra.mxu0 0.0
      %5509 = vmatprep.subr.mxu0 0.0
      %5510 = vmatpush2.msra.mxu0 0.0
      %5511 = vmatprep.subr.mxu0 0.0
      %5512 = vmatpush2.msra.mxu0 0.0
      %5513 = vmatprep.subr.mxu0 0.0
      %5514 = vmatpush2.msra.mxu0 0.0
      %5515 = vmatprep.subr.mxu0 0.0
      %5516 = vmatpush2.msra.mxu0 0.0
      %5517 = vmatprep.subr.mxu0 0.0
      %5518 = vmatpush2.msra.mxu0 0.0
      %5519 = vmatprep.subr.mxu0 0.0
      %5520 = vmatpush2.msra.mxu0 0.0
      %5521 = vmatprep.subr.mxu0 0.0
      %5522 = vmatpush2.msra.mxu0 0.0
      %5523 = vmatprep.subr.mxu0 0.0
      %5524 = vmatpush2.msra.mxu0 0.0
      %5525 = vmatprep.subr.mxu0 0.0
      %5526 = vmatpush2.msra.mxu0 0.0
      %5527 = vmatprep.subr.mxu0 0.0
      %5528 = vmatpush2.msra.mxu0 0.0
      %5529 = vmatprep.subr.mxu0 0.0
      %5530 = vmatpush2.msra.mxu0 0.0
      %5531 = vmatprep.subr.mxu0 0.0
      %5532 = vmatpush2.msra.mxu0 0.0
      %5533 = vmatprep.mubr.f32.mxu0 0.0
      %v5534 = vand.u32 %v5140, 4294901760
      %5535 = vmatmul.mubr.f32.gmra.mxu0 %v5534
      %v5536 = vpop.f32.mrf.mxu0
      %v5537 = vadd.f32 %v5457, %v5536
      %v5538 = vpop.f32.mrf.mxu0
      %5539 = vdwg.mxu0
      %5540 = vmatprep.subr.mxu0 0.0
      %5541 = vmatpush1.msra.mxu0 0.0
      %5542 = vmatprep.subr.mxu0 0.0
      %5543 = vmatpush1.msra.mxu0 0.0
      %5544 = vmatprep.subr.mxu0 0.0
      %5545 = vmatpush1.msra.mxu0 0.0
      %5546 = vmatprep.subr.mxu0 0.0
      %5547 = vmatpush1.msra.mxu0 0.0
      %5548 = vmatprep.subr.mxu0 0.0
      %5549 = vmatpush1.msra.mxu0 0.0
      %5550 = vmatprep.subr.mxu0 0.0
      %5551 = vmatpush1.msra.mxu0 0.0
      %5552 = vmatprep.subr.mxu0 0.0
      %5553 = vmatpush1.msra.mxu0 0.0
      %5554 = vmatprep.subr.mxu0 0.0
      %5555 = vmatpush1.msra.mxu0 0.0
      %5556 = vmatprep.subr.mxu0 0.0
      %5557 = vmatpush1.msra.mxu0 0.0
      %5558 = vmatprep.subr.mxu0 0.0
      %5559 = vmatpush1.msra.mxu0 0.0
      %5560 = vmatprep.subr.mxu0 0.0
      %5561 = vmatpush1.msra.mxu0 0.0
      %5562 = vmatprep.subr.mxu0 0.0
      %5563 = vmatpush1.msra.mxu0 0.0
      %5564 = vmatprep.subr.mxu0 0.0
      %5565 = vmatpush1.msra.mxu0 0.0
      %5566 = vmatprep.subr.mxu0 0.0
      %v5567 = vand.u32 %v49, 4294901760
      %5568 = vmatpush1.msra.mxu0 %v5567
      %5569 = vmatprep.subr.mxu0 0.0
      %v5570 = vand.u32 %v48, 4294901760
      %5571 = vmatpush1.msra.mxu0 %v5570
      %5572 = vmatprep.subr.mxu0 0.0
      %v5573 = vand.u32 %v47, 4294901760
      %5574 = vmatpush1.msra.mxu0 %v5573
      %5575 = vmatprep.subr.mxu0 0.0
      %5576 = vmatpush2.msra.mxu0 0.0
      %5577 = vmatprep.subr.mxu0 0.0
      %5578 = vmatpush2.msra.mxu0 0.0
      %5579 = vmatprep.subr.mxu0 0.0
      %5580 = vmatpush2.msra.mxu0 0.0
      %5581 = vmatprep.subr.mxu0 0.0
      %5582 = vmatpush2.msra.mxu0 0.0
      %5583 = vmatprep.subr.mxu0 0.0
      %5584 = vmatpush2.msra.mxu0 0.0
      %5585 = vmatprep.subr.mxu0 0.0
      %5586 = vmatpush2.msra.mxu0 0.0
      %5587 = vmatprep.subr.mxu0 0.0
      %5588 = vmatpush2.msra.mxu0 0.0
      %5589 = vmatprep.subr.mxu0 0.0
      %5590 = vmatpush2.msra.mxu0 0.0
      %5591 = vmatprep.subr.mxu0 0.0
      %5592 = vmatpush2.msra.mxu0 0.0
      %5593 = vmatprep.subr.mxu0 0.0
      %5594 = vmatpush2.msra.mxu0 0.0
      %5595 = vmatprep.subr.mxu0 0.0
      %5596 = vmatpush2.msra.mxu0 0.0
      %5597 = vmatprep.subr.mxu0 0.0
      %5598 = vmatpush2.msra.mxu0 0.0
      %5599 = vmatprep.subr.mxu0 0.0
      %5600 = vmatpush2.msra.mxu0 0.0
      %5601 = vmatprep.subr.mxu0 0.0
      %5602 = vmatpush2.msra.mxu0 0.0
      %5603 = vmatprep.subr.mxu0 0.0
      %5604 = vmatpush2.msra.mxu0 0.0
      %5605 = vmatprep.subr.mxu0 0.0
      %5606 = vmatpush2.msra.mxu0 0.0
      %5607 = vmatprep.mubr.f32.mxu0 0.0
      %v5608 = vand.u32 %v5140, 4294901760
      %5609 = vmatmul.mubr.f32.gmra.mxu0 %v5608
      %v5610 = vpop.f32.mrf.mxu0
      %v5611 = vadd.f32 %v5537, %v5610
      %v5612 = vpop.f32.mrf.mxu0
      %5613 = vdwg.mxu0
      %v5614 = vrcp.pop %v5124
      %v5615 = vmul.f32 1.0, %v5614
      %5617 = vrot.lane.b32.xlu0 %v5123, 16
      %v5618 = vpop.permute.xlu0 %5617
      %v5620 = vsub.f32 %v5121, %v5618
      %v5621 = vadd.f32 %v5615, 1.0
      %v5622 = vmul.f32 %v5611, 0.5
      %5624 = vrot.lane.b32.xlu0 %v5621, 16
      %v5625 = vpop.permute.xlu0 %5624
      %v5627 = vmul.f32 %v5622, %v5625
      %v5628 = vadd.f32 %v5620, %v5627
      %v5629 = vmul.f32 %v5611, %v5628
      %v5630 = vsub.f32 1.0, %v5615
      %5632 = vrot.lane.b32.xlu0 %v5630, 16
      %v5633 = vpop.permute.xlu0 %5632
      %v5635 = vmul.f32 %v5629, %v5633
      %v5636 = vmul.f32 %v5124, %v5124
      %v5637 = vstv %s5135
      %v5638 = vrcp.pop %v5637
      %s5639 = vtos %v5638
      %s5640 = smul.f32 %s5136, %s5639
      %v5641 = vstv %s5640
      %v5642 = vsub.f32 %v5636, %v5641
      %v5643 = vstv %s5136
      %v5644 = vmul.f32 %v5643, %v5642
      %v5645 = vmul.f32 %v5611, %v5625
      %v5646 = vadd.f32 %v5620, %v5645
      %v5647 = vmul.f32 %v5622, %v5611
      %v5648 = vmul.f32 %v5615, %v5615
      %v5649 = vadd.f32 %v5648, 1.0
      %5651 = vrot.lane.b32.xlu0 %v5649, 16
      %v5652 = vpop.permute.xlu0 %5651
      %v5654 = vmul.f32 %v5647, %v5652
      %v5655 = vadd.f32 %v5646, %v5654
      %v5656 = vmul.f32 %v5620, %v5655
      %5658 = vrot.lane.b32.xlu0 %v5656, 112
      %v5659 = vpop.permute.xlu0 %5658
      %v5661 = vadd.f32 %v5644, %v5659
      %5663 = vrot.lane.b32.xlu0 %v5635, 112
      %v5664 = vpop.permute.xlu0 %5663
      %vm5666 = vcmp.ge.f32.partialorder %v5661, %v5664
      %vm5667 = vcmp.ge.f32.partialorder %v5635, 0.0
      %v5668 = vsel %vm5667, 1, 0
      %5669 = vrot.lane.b32.xlu0 %v5668, 112
      %v5670 = vpop.permute.xlu0 %5669
      %vm5671 = vcmp.ne.s32.totalorder %v5670, 0
      %vm5672 = vmand %vm5666, %vm5671
      %vm5673 = vcmp.lt.f32.partialorder %v5661, %v5664
      %vm5674 = vcmp.lt.f32.partialorder %v5635, 0.0
      %v5675 = vsel %vm5674, 1, 0
      %5676 = vrot.lane.b32.xlu0 %v5675, 112
      %v5677 = vpop.permute.xlu0 %5676
      %vm5678 = vcmp.ne.s32.totalorder %v5677, 0
      %vm5679 = vmand %vm5673, %vm5678
      %5681 = vrot.lane.b32.xlu0 %v5661, 16
      %v5682 = vpop.permute.xlu0 %5681
      %vm5684 = vcmp.lt.f32.partialorder %v5635, %v5682
      %vm5685 = vcmp.lt.f32.partialorder %v5661, 0.0
      %v5686 = vsel %vm5685, 1, 0
      %5687 = vrot.lane.b32.xlu0 %v5686, 16
      %v5688 = vpop.permute.xlu0 %5687
      %vm5689 = vcmp.ne.s32.totalorder %v5688, 0
      %vm5690 = vmand %vm5684, %vm5689
      %v5691 = vmul.f32 %v5635, %v5635
      %v5692 = vmul.f32 %v5661, %v5661
      %5694 = vrot.lane.b32.xlu0 %v5692, 16
      %v5695 = vpop.permute.xlu0 %5694
      %v5697 = vsub.f32 %v5691, %v5695
      %s5698 = smul.f32 %s5136, 2.0
      %s5699 = smul.f32 %s5698, %s5136
      %v5700 = vstv %s5135
      %v5701 = vrcp.pop %v5700
      %s5702 = vtos %v5701
      %s5703 = smul.f32 %s5699, %s5702
      %v5704 = vstv %s5703
      %v5705 = vmul.f32 %v5704, %v5661
      %5707 = vrot.lane.b32.xlu0 %v5697, 112
      %v5708 = vpop.permute.xlu0 %5707
      %vm5710 = vcmp.ge.f32.partialorder %v5705, %v5708
      %vm5711 = vcmp.gt.f32.partialorder %v5697, 0.0
      %v5712 = vsel %vm5711, 1, 0
      %5713 = vrot.lane.b32.xlu0 %v5712, 112
      %v5714 = vpop.permute.xlu0 %5713
      %vm5715 = vcmp.ne.s32.totalorder %v5714, 0
      %vm5716 = vmand %vm5710, %vm5715
      %vm5717 = vmor %vm5672, %vm5679
      %v5718 = vsel %vm5690, 1, 0
      %5719 = vrot.lane.b32.xlu0 %v5718, 112
      %v5720 = vpop.permute.xlu0 %5719
      %vm5721 = vcmp.ne.s32.totalorder %v5720, 0
      %vm5722 = vmor %vm5717, %vm5721
      %vm5723 = vmor %vm5722, %vm5716
      %v5724 = vsel %vm5723, %v5615, 1.0
      %5726 = vrot.lane.b32.xlu0 %v5724, 16
      %v5727 = vpop.permute.xlu0 %5726
      %v5729 = vmul.f32 %v5611, %v5727
      %v5730 = vadd.f32 %v5121, %v5729
      %v5731 = vadd.f32 %v5121, %v5611
      %v5732 = vsel %vm1171, %v5731, %v5730
      %v5734 = vsel %vm566, %v5732, 0
      %5736 = vmatprep.subr.mxu0 0.0
      %5737 = vmatpush1.msra.mxu0 0.0
      %5738 = vmatprep.subr.mxu0 0.0
      %5739 = vmatpush1.msra.mxu0 0.0
      %5740 = vmatprep.subr.mxu0 0.0
      %5741 = vmatpush1.msra.mxu0 0.0
      %5742 = vmatprep.subr.mxu0 0.0
      %5743 = vmatpush1.msra.mxu0 0.0
      %5744 = vmatprep.subr.mxu0 0.0
      %5745 = vmatpush1.msra.mxu0 0.0
      %5746 = vmatprep.subr.mxu0 0.0
      %5747 = vmatpush1.msra.mxu0 0.0
      %5748 = vmatprep.subr.mxu0 0.0
      %5749 = vmatpush1.msra.mxu0 0.0
      %5750 = vmatprep.subr.mxu0 0.0
      %5751 = vmatpush1.msra.mxu0 0.0
      %5752 = vmatprep.subr.mxu0 0.0
      %5753 = vmatpush1.msra.mxu0 0.0
      %5754 = vmatprep.subr.mxu0 0.0
      %5755 = vmatpush1.msra.mxu0 0.0
      %5756 = vmatprep.subr.mxu0 0.0
      %5757 = vmatpush1.msra.mxu0 0.0
      %5758 = vmatprep.subr.mxu0 0.0
      %5759 = vmatpush1.msra.mxu0 0.0
      %5760 = vmatprep.subr.mxu0 0.0
      %5761 = vmatpush1.msra.mxu0 0.0
      %5762 = vmatprep.subr.mxu0 0.0
      %v5763 = vand.u32 %v52, 4294901760
      %5764 = vmatpush1.msra.mxu0 %v5763
      %5765 = vmatprep.subr.mxu0 0.0
      %v5766 = vand.u32 %v51, 4294901760
      %5767 = vmatpush1.msra.mxu0 %v5766
      %5768 = vmatprep.subr.mxu0 0.0
      %v5769 = vand.u32 %v50, 4294901760
      %5770 = vmatpush1.msra.mxu0 %v5769
      %5771 = vmatprep.subr.mxu0 0.0
      %5772 = vmatpush2.msra.mxu0 0.0
      %5773 = vmatprep.subr.mxu0 0.0
      %5774 = vmatpush2.msra.mxu0 0.0
      %5775 = vmatprep.subr.mxu0 0.0
      %5776 = vmatpush2.msra.mxu0 0.0
      %5777 = vmatprep.subr.mxu0 0.0
      %5778 = vmatpush2.msra.mxu0 0.0
      %5779 = vmatprep.subr.mxu0 0.0
      %5780 = vmatpush2.msra.mxu0 0.0
      %5781 = vmatprep.subr.mxu0 0.0
      %5782 = vmatpush2.msra.mxu0 0.0
      %5783 = vmatprep.subr.mxu0 0.0
      %5784 = vmatpush2.msra.mxu0 0.0
      %5785 = vmatprep.subr.mxu0 0.0
      %5786 = vmatpush2.msra.mxu0 0.0
      %5787 = vmatprep.subr.mxu0 0.0
      %5788 = vmatpush2.msra.mxu0 0.0
      %5789 = vmatprep.subr.mxu0 0.0
      %5790 = vmatpush2.msra.mxu0 0.0
      %5791 = vmatprep.subr.mxu0 0.0
      %5792 = vmatpush2.msra.mxu0 0.0
      %5793 = vmatprep.subr.mxu0 0.0
      %5794 = vmatpush2.msra.mxu0 0.0
      %5795 = vmatprep.subr.mxu0 0.0
      %5796 = vmatpush2.msra.mxu0 0.0
      %5797 = vmatprep.subr.mxu0 0.0
      %5798 = vmatpush2.msra.mxu0 0.0
      %5799 = vmatprep.subr.mxu0 0.0
      %5800 = vmatpush2.msra.mxu0 0.0
      %5801 = vmatprep.subr.mxu0 0.0
      %5802 = vmatpush2.msra.mxu0 0.0
      %5803 = vmatprep.mubr.f32.mxu0 0.0
      %v5804 = vand.u32 %v5734, 4294901760
      %v5805 = vsub.f32 %v5734, %v5804
      %v5806 = vand.u32 %v5805, 4294901760
      %v5807 = vsub.f32 %v5805, %v5806
      %v5808 = vand.u32 %v5807, 4294901760
      %5809 = vmatmul.mubr.f32.gmra.mxu0 %v5808
      %v5810 = vpop.f32.mrf.mxu0
      %v5811 = vadd.f32 %v1177, %v5810
      %v5812 = vpop.f32.mrf.mxu0
      %5813 = vdwg.mxu0
      %5814 = vmatprep.subr.mxu0 0.0
      %5815 = vmatpush1.msra.mxu0 0.0
      %5816 = vmatprep.subr.mxu0 0.0
      %5817 = vmatpush1.msra.mxu0 0.0
      %5818 = vmatprep.subr.mxu0 0.0
      %5819 = vmatpush1.msra.mxu0 0.0
      %5820 = vmatprep.subr.mxu0 0.0
      %5821 = vmatpush1.msra.mxu0 0.0
      %5822 = vmatprep.subr.mxu0 0.0
      %5823 = vmatpush1.msra.mxu0 0.0
      %5824 = vmatprep.subr.mxu0 0.0
      %5825 = vmatpush1.msra.mxu0 0.0
      %5826 = vmatprep.subr.mxu0 0.0
      %5827 = vmatpush1.msra.mxu0 0.0
      %5828 = vmatprep.subr.mxu0 0.0
      %5829 = vmatpush1.msra.mxu0 0.0
      %5830 = vmatprep.subr.mxu0 0.0
      %5831 = vmatpush1.msra.mxu0 0.0
      %5832 = vmatprep.subr.mxu0 0.0
      %5833 = vmatpush1.msra.mxu0 0.0
      %5834 = vmatprep.subr.mxu0 0.0
      %5835 = vmatpush1.msra.mxu0 0.0
      %5836 = vmatprep.subr.mxu0 0.0
      %5837 = vmatpush1.msra.mxu0 0.0
      %5838 = vmatprep.subr.mxu0 0.0
      %5839 = vmatpush1.msra.mxu0 0.0
      %5840 = vmatprep.subr.mxu0 0.0
      %v5841 = vand.u32 %v52, 4294901760
      %v5842 = vsub.f32 %v52, %v5841
      %v5843 = vand.u32 %v5842, 4294901760
      %v5844 = vsub.f32 %v5842, %v5843
      %v5845 = vand.u32 %v5844, 4294901760
      %5846 = vmatpush1.msra.mxu0 %v5845
      %5847 = vmatprep.subr.mxu0 0.0
      %v5848 = vand.u32 %v51, 4294901760
      %v5849 = vsub.f32 %v51, %v5848
      %v5850 = vand.u32 %v5849, 4294901760
      %v5851 = vsub.f32 %v5849, %v5850
      %v5852 = vand.u32 %v5851, 4294901760
      %5853 = vmatpush1.msra.mxu0 %v5852
      %5854 = vmatprep.subr.mxu0 0.0
      %v5855 = vand.u32 %v50, 4294901760
      %v5856 = vsub.f32 %v50, %v5855
      %v5857 = vand.u32 %v5856, 4294901760
      %v5858 = vsub.f32 %v5856, %v5857
      %v5859 = vand.u32 %v5858, 4294901760
      %5860 = vmatpush1.msra.mxu0 %v5859
      %5861 = vmatprep.subr.mxu0 0.0
      %5862 = vmatpush2.msra.mxu0 0.0
      %5863 = vmatprep.subr.mxu0 0.0
      %5864 = vmatpush2.msra.mxu0 0.0
      %5865 = vmatprep.subr.mxu0 0.0
      %5866 = vmatpush2.msra.mxu0 0.0
      %5867 = vmatprep.subr.mxu0 0.0
      %5868 = vmatpush2.msra.mxu0 0.0
      %5869 = vmatprep.subr.mxu0 0.0
      %5870 = vmatpush2.msra.mxu0 0.0
      %5871 = vmatprep.subr.mxu0 0.0
      %5872 = vmatpush2.msra.mxu0 0.0
      %5873 = vmatprep.subr.mxu0 0.0
      %5874 = vmatpush2.msra.mxu0 0.0
      %5875 = vmatprep.subr.mxu0 0.0
      %5876 = vmatpush2.msra.mxu0 0.0
      %5877 = vmatprep.subr.mxu0 0.0
      %5878 = vmatpush2.msra.mxu0 0.0
      %5879 = vmatprep.subr.mxu0 0.0
      %5880 = vmatpush2.msra.mxu0 0.0
      %5881 = vmatprep.subr.mxu0 0.0
      %5882 = vmatpush2.msra.mxu0 0.0
      %5883 = vmatprep.subr.mxu0 0.0
      %5884 = vmatpush2.msra.mxu0 0.0
      %5885 = vmatprep.subr.mxu0 0.0
      %5886 = vmatpush2.msra.mxu0 0.0
      %5887 = vmatprep.subr.mxu0 0.0
      %5888 = vmatpush2.msra.mxu0 0.0
      %5889 = vmatprep.subr.mxu0 0.0
      %5890 = vmatpush2.msra.mxu0 0.0
      %5891 = vmatprep.subr.mxu0 0.0
      %5892 = vmatpush2.msra.mxu0 0.0
      %5893 = vmatprep.mubr.f32.mxu0 0.0
      %v5894 = vand.u32 %v5734, 4294901760
      %5895 = vmatmul.mubr.f32.gmra.mxu0 %v5894
      %v5896 = vpop.f32.mrf.mxu0
      %v5897 = vadd.f32 %v5811, %v5896
      %v5898 = vpop.f32.mrf.mxu0
      %5899 = vdwg.mxu0
      %5900 = vmatprep.subr.mxu0 0.0
      %5901 = vmatpush1.msra.mxu0 0.0
      %5902 = vmatprep.subr.mxu0 0.0
      %5903 = vmatpush1.msra.mxu0 0.0
      %5904 = vmatprep.subr.mxu0 0.0
      %5905 = vmatpush1.msra.mxu0 0.0
      %5906 = vmatprep.subr.mxu0 0.0
      %5907 = vmatpush1.msra.mxu0 0.0
      %5908 = vmatprep.subr.mxu0 0.0
      %5909 = vmatpush1.msra.mxu0 0.0
      %5910 = vmatprep.subr.mxu0 0.0
      %5911 = vmatpush1.msra.mxu0 0.0
      %5912 = vmatprep.subr.mxu0 0.0
      %5913 = vmatpush1.msra.mxu0 0.0
      %5914 = vmatprep.subr.mxu0 0.0
      %5915 = vmatpush1.msra.mxu0 0.0
      %5916 = vmatprep.subr.mxu0 0.0
      %5917 = vmatpush1.msra.mxu0 0.0
      %5918 = vmatprep.subr.mxu0 0.0
      %5919 = vmatpush1.msra.mxu0 0.0
      %5920 = vmatprep.subr.mxu0 0.0
      %5921 = vmatpush1.msra.mxu0 0.0
      %5922 = vmatprep.subr.mxu0 0.0
      %5923 = vmatpush1.msra.mxu0 0.0
      %5924 = vmatprep.subr.mxu0 0.0
      %5925 = vmatpush1.msra.mxu0 0.0
      %5926 = vmatprep.subr.mxu0 0.0
      %v5927 = vand.u32 %v52, 4294901760
      %v5928 = vsub.f32 %v52, %v5927
      %5929 = vmatpush1.msra.mxu0 %v5928
      %5930 = vmatprep.subr.mxu0 0.0
      %v5931 = vand.u32 %v51, 4294901760
      %v5932 = vsub.f32 %v51, %v5931
      %5933 = vmatpush1.msra.mxu0 %v5932
      %5934 = vmatprep.subr.mxu0 0.0
      %v5935 = vand.u32 %v50, 4294901760
      %v5936 = vsub.f32 %v50, %v5935
      %5937 = vmatpush1.msra.mxu0 %v5936
      %5938 = vmatprep.subr.mxu0 0.0
      %5939 = vmatpush2.msra.mxu0 0.0
      %5940 = vmatprep.subr.mxu0 0.0
      %5941 = vmatpush2.msra.mxu0 0.0
      %5942 = vmatprep.subr.mxu0 0.0
      %5943 = vmatpush2.msra.mxu0 0.0
      %5944 = vmatprep.subr.mxu0 0.0
      %5945 = vmatpush2.msra.mxu0 0.0
      %5946 = vmatprep.subr.mxu0 0.0
      %5947 = vmatpush2.msra.mxu0 0.0
      %5948 = vmatprep.subr.mxu0 0.0
      %5949 = vmatpush2.msra.mxu0 0.0
      %5950 = vmatprep.subr.mxu0 0.0
      %5951 = vmatpush2.msra.mxu0 0.0
      %5952 = vmatprep.subr.mxu0 0.0
      %5953 = vmatpush2.msra.mxu0 0.0
      %5954 = vmatprep.subr.mxu0 0.0
      %5955 = vmatpush2.msra.mxu0 0.0
      %5956 = vmatprep.subr.mxu0 0.0
      %5957 = vmatpush2.msra.mxu0 0.0
      %5958 = vmatprep.subr.mxu0 0.0
      %5959 = vmatpush2.msra.mxu0 0.0
      %5960 = vmatprep.subr.mxu0 0.0
      %5961 = vmatpush2.msra.mxu0 0.0
      %5962 = vmatprep.subr.mxu0 0.0
      %5963 = vmatpush2.msra.mxu0 0.0
      %5964 = vmatprep.subr.mxu0 0.0
      %5965 = vmatpush2.msra.mxu0 0.0
      %5966 = vmatprep.subr.mxu0 0.0
      %5967 = vmatpush2.msra.mxu0 0.0
      %5968 = vmatprep.subr.mxu0 0.0
      %5969 = vmatpush2.msra.mxu0 0.0
      %5970 = vmatprep.mubr.f32.mxu0 0.0
      %v5971 = vand.u32 %v5734, 4294901760
      %v5972 = vsub.f32 %v5734, %v5971
      %5973 = vmatmul.mubr.f32.gmra.mxu0 %v5972
      %v5974 = vpop.f32.mrf.mxu0
      %v5975 = vadd.f32 %v5897, %v5974
      %v5976 = vpop.f32.mrf.mxu0
      %5977 = vdwg.mxu0
      %5978 = vmatprep.subr.mxu0 0.0
      %5979 = vmatpush1.msra.mxu0 0.0
      %5980 = vmatprep.subr.mxu0 0.0
      %5981 = vmatpush1.msra.mxu0 0.0
      %5982 = vmatprep.subr.mxu0 0.0
      %5983 = vmatpush1.msra.mxu0 0.0
      %5984 = vmatprep.subr.mxu0 0.0
      %5985 = vmatpush1.msra.mxu0 0.0
      %5986 = vmatprep.subr.mxu0 0.0
      %5987 = vmatpush1.msra.mxu0 0.0
      %5988 = vmatprep.subr.mxu0 0.0
      %5989 = vmatpush1.msra.mxu0 0.0
      %5990 = vmatprep.subr.mxu0 0.0
      %5991 = vmatpush1.msra.mxu0 0.0
      %5992 = vmatprep.subr.mxu0 0.0
      %5993 = vmatpush1.msra.mxu0 0.0
      %5994 = vmatprep.subr.mxu0 0.0
      %5995 = vmatpush1.msra.mxu0 0.0
      %5996 = vmatprep.subr.mxu0 0.0
      %5997 = vmatpush1.msra.mxu0 0.0
      %5998 = vmatprep.subr.mxu0 0.0
      %5999 = vmatpush1.msra.mxu0 0.0
      %6000 = vmatprep.subr.mxu0 0.0
      %6001 = vmatpush1.msra.mxu0 0.0
      %6002 = vmatprep.subr.mxu0 0.0
      %6003 = vmatpush1.msra.mxu0 0.0
      %6004 = vmatprep.subr.mxu0 0.0
      %v6005 = vand.u32 %v52, 4294901760
      %6006 = vmatpush1.msra.mxu0 %v6005
      %6007 = vmatprep.subr.mxu0 0.0
      %v6008 = vand.u32 %v51, 4294901760
      %6009 = vmatpush1.msra.mxu0 %v6008
      %6010 = vmatprep.subr.mxu0 0.0
      %v6011 = vand.u32 %v50, 4294901760
      %6012 = vmatpush1.msra.mxu0 %v6011
      %6013 = vmatprep.subr.mxu0 0.0
      %6014 = vmatpush2.msra.mxu0 0.0
      %6015 = vmatprep.subr.mxu0 0.0
      %6016 = vmatpush2.msra.mxu0 0.0
      %6017 = vmatprep.subr.mxu0 0.0
      %6018 = vmatpush2.msra.mxu0 0.0
      %6019 = vmatprep.subr.mxu0 0.0
      %6020 = vmatpush2.msra.mxu0 0.0
      %6021 = vmatprep.subr.mxu0 0.0
      %6022 = vmatpush2.msra.mxu0 0.0
      %6023 = vmatprep.subr.mxu0 0.0
      %6024 = vmatpush2.msra.mxu0 0.0
      %6025 = vmatprep.subr.mxu0 0.0
      %6026 = vmatpush2.msra.mxu0 0.0
      %6027 = vmatprep.subr.mxu0 0.0
      %6028 = vmatpush2.msra.mxu0 0.0
      %6029 = vmatprep.subr.mxu0 0.0
      %6030 = vmatpush2.msra.mxu0 0.0
      %6031 = vmatprep.subr.mxu0 0.0
      %6032 = vmatpush2.msra.mxu0 0.0
      %6033 = vmatprep.subr.mxu0 0.0
      %6034 = vmatpush2.msra.mxu0 0.0
      %6035 = vmatprep.subr.mxu0 0.0
      %6036 = vmatpush2.msra.mxu0 0.0
      %6037 = vmatprep.subr.mxu0 0.0
      %6038 = vmatpush2.msra.mxu0 0.0
      %6039 = vmatprep.subr.mxu0 0.0
      %6040 = vmatpush2.msra.mxu0 0.0
      %6041 = vmatprep.subr.mxu0 0.0
      %6042 = vmatpush2.msra.mxu0 0.0
      %6043 = vmatprep.subr.mxu0 0.0
      %6044 = vmatpush2.msra.mxu0 0.0
      %6045 = vmatprep.mubr.f32.mxu0 0.0
      %v6046 = vand.u32 %v5734, 4294901760
      %v6047 = vsub.f32 %v5734, %v6046
      %v6048 = vand.u32 %v6047, 4294901760
      %6049 = vmatmul.mubr.f32.gmra.mxu0 %v6048
      %v6050 = vpop.f32.mrf.mxu0
      %v6051 = vadd.f32 %v5975, %v6050
      %v6052 = vpop.f32.mrf.mxu0
      %6053 = vdwg.mxu0
      %6054 = vmatprep.subr.mxu0 0.0
      %6055 = vmatpush1.msra.mxu0 0.0
      %6056 = vmatprep.subr.mxu0 0.0
      %6057 = vmatpush1.msra.mxu0 0.0
      %6058 = vmatprep.subr.mxu0 0.0
      %6059 = vmatpush1.msra.mxu0 0.0
      %6060 = vmatprep.subr.mxu0 0.0
      %6061 = vmatpush1.msra.mxu0 0.0
      %6062 = vmatprep.subr.mxu0 0.0
      %6063 = vmatpush1.msra.mxu0 0.0
      %6064 = vmatprep.subr.mxu0 0.0
      %6065 = vmatpush1.msra.mxu0 0.0
      %6066 = vmatprep.subr.mxu0 0.0
      %6067 = vmatpush1.msra.mxu0 0.0
      %6068 = vmatprep.subr.mxu0 0.0
      %6069 = vmatpush1.msra.mxu0 0.0
      %6070 = vmatprep.subr.mxu0 0.0
      %6071 = vmatpush1.msra.mxu0 0.0
      %6072 = vmatprep.subr.mxu0 0.0
      %6073 = vmatpush1.msra.mxu0 0.0
      %6074 = vmatprep.subr.mxu0 0.0
      %6075 = vmatpush1.msra.mxu0 0.0
      %6076 = vmatprep.subr.mxu0 0.0
      %6077 = vmatpush1.msra.mxu0 0.0
      %6078 = vmatprep.subr.mxu0 0.0
      %6079 = vmatpush1.msra.mxu0 0.0
      %6080 = vmatprep.subr.mxu0 0.0
      %v6081 = vand.u32 %v52, 4294901760
      %v6082 = vsub.f32 %v52, %v6081
      %v6083 = vand.u32 %v6082, 4294901760
      %6084 = vmatpush1.msra.mxu0 %v6083
      %6085 = vmatprep.subr.mxu0 0.0
      %v6086 = vand.u32 %v51, 4294901760
      %v6087 = vsub.f32 %v51, %v6086
      %v6088 = vand.u32 %v6087, 4294901760
      %6089 = vmatpush1.msra.mxu0 %v6088
      %6090 = vmatprep.subr.mxu0 0.0
      %v6091 = vand.u32 %v50, 4294901760
      %v6092 = vsub.f32 %v50, %v6091
      %v6093 = vand.u32 %v6092, 4294901760
      %6094 = vmatpush1.msra.mxu0 %v6093
      %6095 = vmatprep.subr.mxu0 0.0
      %6096 = vmatpush2.msra.mxu0 0.0
      %6097 = vmatprep.subr.mxu0 0.0
      %6098 = vmatpush2.msra.mxu0 0.0
      %6099 = vmatprep.subr.mxu0 0.0
      %6100 = vmatpush2.msra.mxu0 0.0
      %6101 = vmatprep.subr.mxu0 0.0
      %6102 = vmatpush2.msra.mxu0 0.0
      %6103 = vmatprep.subr.mxu0 0.0
      %6104 = vmatpush2.msra.mxu0 0.0
      %6105 = vmatprep.subr.mxu0 0.0
      %6106 = vmatpush2.msra.mxu0 0.0
      %6107 = vmatprep.subr.mxu0 0.0
      %6108 = vmatpush2.msra.mxu0 0.0
      %6109 = vmatprep.subr.mxu0 0.0
      %6110 = vmatpush2.msra.mxu0 0.0
      %6111 = vmatprep.subr.mxu0 0.0
      %6112 = vmatpush2.msra.mxu0 0.0
      %6113 = vmatprep.subr.mxu0 0.0
      %6114 = vmatpush2.msra.mxu0 0.0
      %6115 = vmatprep.subr.mxu0 0.0
      %6116 = vmatpush2.msra.mxu0 0.0
      %6117 = vmatprep.subr.mxu0 0.0
      %6118 = vmatpush2.msra.mxu0 0.0
      %6119 = vmatprep.subr.mxu0 0.0
      %6120 = vmatpush2.msra.mxu0 0.0
      %6121 = vmatprep.subr.mxu0 0.0
      %6122 = vmatpush2.msra.mxu0 0.0
      %6123 = vmatprep.subr.mxu0 0.0
      %6124 = vmatpush2.msra.mxu0 0.0
      %6125 = vmatprep.subr.mxu0 0.0
      %6126 = vmatpush2.msra.mxu0 0.0
      %6127 = vmatprep.mubr.f32.mxu0 0.0
      %v6128 = vand.u32 %v5734, 4294901760
      %6129 = vmatmul.mubr.f32.gmra.mxu0 %v6128
      %v6130 = vpop.f32.mrf.mxu0
      %v6131 = vadd.f32 %v6051, %v6130
      %v6132 = vpop.f32.mrf.mxu0
      %6133 = vdwg.mxu0
      %6134 = vmatprep.subr.mxu0 0.0
      %6135 = vmatpush1.msra.mxu0 0.0
      %6136 = vmatprep.subr.mxu0 0.0
      %6137 = vmatpush1.msra.mxu0 0.0
      %6138 = vmatprep.subr.mxu0 0.0
      %6139 = vmatpush1.msra.mxu0 0.0
      %6140 = vmatprep.subr.mxu0 0.0
      %6141 = vmatpush1.msra.mxu0 0.0
      %6142 = vmatprep.subr.mxu0 0.0
      %6143 = vmatpush1.msra.mxu0 0.0
      %6144 = vmatprep.subr.mxu0 0.0
      %6145 = vmatpush1.msra.mxu0 0.0
      %6146 = vmatprep.subr.mxu0 0.0
      %6147 = vmatpush1.msra.mxu0 0.0
      %6148 = vmatprep.subr.mxu0 0.0
      %6149 = vmatpush1.msra.mxu0 0.0
      %6150 = vmatprep.subr.mxu0 0.0
      %6151 = vmatpush1.msra.mxu0 0.0
      %6152 = vmatprep.subr.mxu0 0.0
      %6153 = vmatpush1.msra.mxu0 0.0
      %6154 = vmatprep.subr.mxu0 0.0
      %6155 = vmatpush1.msra.mxu0 0.0
      %6156 = vmatprep.subr.mxu0 0.0
      %6157 = vmatpush1.msra.mxu0 0.0
      %6158 = vmatprep.subr.mxu0 0.0
      %6159 = vmatpush1.msra.mxu0 0.0
      %6160 = vmatprep.subr.mxu0 0.0
      %v6161 = vand.u32 %v52, 4294901760
      %6162 = vmatpush1.msra.mxu0 %v6161
      %6163 = vmatprep.subr.mxu0 0.0
      %v6164 = vand.u32 %v51, 4294901760
      %6165 = vmatpush1.msra.mxu0 %v6164
      %6166 = vmatprep.subr.mxu0 0.0
      %v6167 = vand.u32 %v50, 4294901760
      %6168 = vmatpush1.msra.mxu0 %v6167
      %6169 = vmatprep.subr.mxu0 0.0
      %6170 = vmatpush2.msra.mxu0 0.0
      %6171 = vmatprep.subr.mxu0 0.0
      %6172 = vmatpush2.msra.mxu0 0.0
      %6173 = vmatprep.subr.mxu0 0.0
      %6174 = vmatpush2.msra.mxu0 0.0
      %6175 = vmatprep.subr.mxu0 0.0
      %6176 = vmatpush2.msra.mxu0 0.0
      %6177 = vmatprep.subr.mxu0 0.0
      %6178 = vmatpush2.msra.mxu0 0.0
      %6179 = vmatprep.subr.mxu0 0.0
      %6180 = vmatpush2.msra.mxu0 0.0
      %6181 = vmatprep.subr.mxu0 0.0
      %6182 = vmatpush2.msra.mxu0 0.0
      %6183 = vmatprep.subr.mxu0 0.0
      %6184 = vmatpush2.msra.mxu0 0.0
      %6185 = vmatprep.subr.mxu0 0.0
      %6186 = vmatpush2.msra.mxu0 0.0
      %6187 = vmatprep.subr.mxu0 0.0
      %6188 = vmatpush2.msra.mxu0 0.0
      %6189 = vmatprep.subr.mxu0 0.0
      %6190 = vmatpush2.msra.mxu0 0.0
      %6191 = vmatprep.subr.mxu0 0.0
      %6192 = vmatpush2.msra.mxu0 0.0
      %6193 = vmatprep.subr.mxu0 0.0
      %6194 = vmatpush2.msra.mxu0 0.0
      %6195 = vmatprep.subr.mxu0 0.0
      %6196 = vmatpush2.msra.mxu0 0.0
      %6197 = vmatprep.subr.mxu0 0.0
      %6198 = vmatpush2.msra.mxu0 0.0
      %6199 = vmatprep.subr.mxu0 0.0
      %6200 = vmatpush2.msra.mxu0 0.0
      %6201 = vmatprep.mubr.f32.mxu0 0.0
      %v6202 = vand.u32 %v5734, 4294901760
      %6203 = vmatmul.mubr.f32.gmra.mxu0 %v6202
      %v6204 = vpop.f32.mrf.mxu0
      %v6205 = vadd.f32 %v6131, %v6204
      %v6206 = vpop.f32.mrf.mxu0
      %6207 = vdwg.mxu0
      %v6208 = vmax.f32 %v5731, -5.0
      %v6209 = vmin.f32 %v6208, 5.0
      %v6210 = vmax.f32 %v6205, -5.0
      %v6211 = vmin.f32 %v6210, 5.0
      %v6212 = vmax.f32 %v5730, -3.0
      %v6213 = vmin.f32 %v6212, 3.0
      %v6214 = vsub.f32 %v6213, %v5618
      %v6215 = vstv %s5136
      %v6216 = vrcp.pop %v6215
      %s6217 = vtos %v6216
      %s6218 = smul.f32 %s5135, %s6217
      %v6219 = vstv %s6218
      %v6220 = vmul.f32 %v6219, %v5124
      %v6221 = vmul.f32 %v6220, %v5124
      %s6222 = smul.f32 %s5136, %s5136
      %v6223 = vstv %s6222
      %v6224 = vrcp.pop %v6223
      %s6225 = vtos %v6224
      %s6226 = smul.f32 %s5135, %s6225
      %v6227 = vstv %s6226
      %v6228 = vmul.f32 %v6227, %v6214
      %v6229 = vmul.f32 %v6228, %v6214
      %6231 = vrot.lane.b32.xlu0 %v6229, 112
      %v6232 = vpop.permute.xlu0 %6231
      %v6234 = vadd.f32 %v6221, %v6232
      %v6235 = vrsqrt.pop %v6234
      %v6236 = vmul.f32 %v6234, %v6235
      %vm6237 = vcmp.eq.f32.partialorder %v6234, inf
      %v6238 = vsel %vm6237, %v6234, %v6236
      %vm6239 = vcmp.eq.f32.partialorder %v6234, 0.0
      %v6240 = vand.u32 %v6234, 2147483648
      %v6241 = vsel %vm6239, %v6240, %v6238
      %v6242 = vmul.f32 %v6219, %v5123
      %v6243 = vstv %s5136
      %v6244 = vrcp.pop %v6243
      %s6245 = vtos %v6244
      %v6246 = vstv %s6245
      %v6247 = vmul.f32 %v6246, %v6213
      %6249 = vrot.lane.b32.xlu0 %v6247, 112
      %v6250 = vpop.permute.xlu0 %6249
      %v6252 = vadd.f32 %v6242, %v6250
      %v6253 = vsel %vm1171, %v6209, %v6213
      %6254 = vst.msk [vmem:[#allocation2] sm:$0xff] %vm566, %v6253
      %6255 = vst.msk [vmem:[#allocation3] sm:$0xff] %vm1701, %v6211
      %6256 = vst.msk [vmem:[#allocation4] sm:$0xff] %vm1703, %v6252
      %6257 = vst.msk [vmem:[#allocation5] sm:$0xff] %vm1703, %v6241
      %s6258 = sadd.s32 %s557, 5
      %v6259 = vld [vmem:[#allocation2] sm:$0xff]
      %v6260 = vld [vmem:[#allocation3] sm:$0xff]
      %v6261 = vld [vmem:[#allocation4] sm:$0xff]
      %v6262 = vld [vmem:[#allocation5] sm:$0xff]
      %6264 = vrot.lane.b32.xlu0 %v6260, 24
      %v6265 = vpop.permute.xlu0 %6264
      %v6267 = vsel %vm566, %v6259, %v6265
      %s6268 = smul.u32 %s6258, 8
      %s6269 = scalar_lea.vmem [#allocation11], %s6268
      %6270 = vst.msk [vmem:[%s6269] sm:$0xff] %vm570, %v6267
      %s6271 = sadd.s32 %s550, %s6258
      %s6272 = scvt.s32.f32 %s6271
      %s6273 = sadd.f32 %s6272, 1.0
      %s6274 = sadd.f32 %s6272, 2.0
      %s6275 = scalar_lea.vmem [#allocation9], %s6268
      %v6276 = vld [vmem:[%s6275] sm:$0xff]
      %v6278 = vsel %vm566, %v6259, 0
      %6280 = vmatprep.subr.mxu0 0.0
      %6281 = vmatpush1.msra.mxu0 0.0
      %6282 = vmatprep.subr.mxu0 0.0
      %6283 = vmatpush1.msra.mxu0 0.0
      %6284 = vmatprep.subr.mxu0 0.0
      %6285 = vmatpush1.msra.mxu0 0.0
      %6286 = vmatprep.subr.mxu0 0.0
      %6287 = vmatpush1.msra.mxu0 0.0
      %6288 = vmatprep.subr.mxu0 0.0
      %6289 = vmatpush1.msra.mxu0 0.0
      %6290 = vmatprep.subr.mxu0 0.0
      %6291 = vmatpush1.msra.mxu0 0.0
      %6292 = vmatprep.subr.mxu0 0.0
      %6293 = vmatpush1.msra.mxu0 0.0
      %6294 = vmatprep.subr.mxu0 0.0
      %6295 = vmatpush1.msra.mxu0 0.0
      %6296 = vmatprep.subr.mxu0 0.0
      %6297 = vmatpush1.msra.mxu0 0.0
      %6298 = vmatprep.subr.mxu0 0.0
      %6299 = vmatpush1.msra.mxu0 0.0
      %6300 = vmatprep.subr.mxu0 0.0
      %6301 = vmatpush1.msra.mxu0 0.0
      %6302 = vmatprep.subr.mxu0 0.0
      %6303 = vmatpush1.msra.mxu0 0.0
      %6304 = vmatprep.subr.mxu0 0.0
      %6305 = vmatpush1.msra.mxu0 0.0
      %6306 = vmatprep.subr.mxu0 0.0
      %v6307 = vand.u32 %v49, 4294901760
      %6308 = vmatpush1.msra.mxu0 %v6307
      %6309 = vmatprep.subr.mxu0 0.0
      %v6310 = vand.u32 %v48, 4294901760
      %6311 = vmatpush1.msra.mxu0 %v6310
      %6312 = vmatprep.subr.mxu0 0.0
      %v6313 = vand.u32 %v47, 4294901760
      %6314 = vmatpush1.msra.mxu0 %v6313
      %6315 = vmatprep.subr.mxu0 0.0
      %6316 = vmatpush2.msra.mxu0 0.0
      %6317 = vmatprep.subr.mxu0 0.0
      %6318 = vmatpush2.msra.mxu0 0.0
      %6319 = vmatprep.subr.mxu0 0.0
      %6320 = vmatpush2.msra.mxu0 0.0
      %6321 = vmatprep.subr.mxu0 0.0
      %6322 = vmatpush2.msra.mxu0 0.0
      %6323 = vmatprep.subr.mxu0 0.0
      %6324 = vmatpush2.msra.mxu0 0.0
      %6325 = vmatprep.subr.mxu0 0.0
      %6326 = vmatpush2.msra.mxu0 0.0
      %6327 = vmatprep.subr.mxu0 0.0
      %6328 = vmatpush2.msra.mxu0 0.0
      %6329 = vmatprep.subr.mxu0 0.0
      %6330 = vmatpush2.msra.mxu0 0.0
      %6331 = vmatprep.subr.mxu0 0.0
      %6332 = vmatpush2.msra.mxu0 0.0
      %6333 = vmatprep.subr.mxu0 0.0
      %6334 = vmatpush2.msra.mxu0 0.0
      %6335 = vmatprep.subr.mxu0 0.0
      %6336 = vmatpush2.msra.mxu0 0.0
      %6337 = vmatprep.subr.mxu0 0.0
      %6338 = vmatpush2.msra.mxu0 0.0
      %6339 = vmatprep.subr.mxu0 0.0
      %6340 = vmatpush2.msra.mxu0 0.0
      %6341 = vmatprep.subr.mxu0 0.0
      %6342 = vmatpush2.msra.mxu0 0.0
      %6343 = vmatprep.subr.mxu0 0.0
      %6344 = vmatpush2.msra.mxu0 0.0
      %6345 = vmatprep.subr.mxu0 0.0
      %6346 = vmatpush2.msra.mxu0 0.0
      %6347 = vmatprep.mubr.f32.mxu0 0.0
      %v6348 = vand.u32 %v6278, 4294901760
      %v6349 = vsub.f32 %v6278, %v6348
      %v6350 = vand.u32 %v6349, 4294901760
      %v6351 = vsub.f32 %v6349, %v6350
      %v6352 = vand.u32 %v6351, 4294901760
      %6353 = vmatmul.mubr.f32.gmra.mxu0 %v6352
      %v6354 = vpop.f32.mrf.mxu0
      %v6355 = vadd.f32 %v6276, %v6354
      %v6356 = vpop.f32.mrf.mxu0
      %6357 = vdwg.mxu0
      %6358 = vmatprep.subr.mxu0 0.0
      %6359 = vmatpush1.msra.mxu0 0.0
      %6360 = vmatprep.subr.mxu0 0.0
      %6361 = vmatpush1.msra.mxu0 0.0
      %6362 = vmatprep.subr.mxu0 0.0
      %6363 = vmatpush1.msra.mxu0 0.0
      %6364 = vmatprep.subr.mxu0 0.0
      %6365 = vmatpush1.msra.mxu0 0.0
      %6366 = vmatprep.subr.mxu0 0.0
      %6367 = vmatpush1.msra.mxu0 0.0
      %6368 = vmatprep.subr.mxu0 0.0
      %6369 = vmatpush1.msra.mxu0 0.0
      %6370 = vmatprep.subr.mxu0 0.0
      %6371 = vmatpush1.msra.mxu0 0.0
      %6372 = vmatprep.subr.mxu0 0.0
      %6373 = vmatpush1.msra.mxu0 0.0
      %6374 = vmatprep.subr.mxu0 0.0
      %6375 = vmatpush1.msra.mxu0 0.0
      %6376 = vmatprep.subr.mxu0 0.0
      %6377 = vmatpush1.msra.mxu0 0.0
      %6378 = vmatprep.subr.mxu0 0.0
      %6379 = vmatpush1.msra.mxu0 0.0
      %6380 = vmatprep.subr.mxu0 0.0
      %6381 = vmatpush1.msra.mxu0 0.0
      %6382 = vmatprep.subr.mxu0 0.0
      %6383 = vmatpush1.msra.mxu0 0.0
      %6384 = vmatprep.subr.mxu0 0.0
      %v6385 = vand.u32 %v49, 4294901760
      %v6386 = vsub.f32 %v49, %v6385
      %v6387 = vand.u32 %v6386, 4294901760
      %v6388 = vsub.f32 %v6386, %v6387
      %v6389 = vand.u32 %v6388, 4294901760
      %6390 = vmatpush1.msra.mxu0 %v6389
      %6391 = vmatprep.subr.mxu0 0.0
      %v6392 = vand.u32 %v48, 4294901760
      %v6393 = vsub.f32 %v48, %v6392
      %v6394 = vand.u32 %v6393, 4294901760
      %v6395 = vsub.f32 %v6393, %v6394
      %v6396 = vand.u32 %v6395, 4294901760
      %6397 = vmatpush1.msra.mxu0 %v6396
      %6398 = vmatprep.subr.mxu0 0.0
      %v6399 = vand.u32 %v47, 4294901760
      %v6400 = vsub.f32 %v47, %v6399
      %v6401 = vand.u32 %v6400, 4294901760
      %v6402 = vsub.f32 %v6400, %v6401
      %v6403 = vand.u32 %v6402, 4294901760
      %6404 = vmatpush1.msra.mxu0 %v6403
      %6405 = vmatprep.subr.mxu0 0.0
      %6406 = vmatpush2.msra.mxu0 0.0
      %6407 = vmatprep.subr.mxu0 0.0
      %6408 = vmatpush2.msra.mxu0 0.0
      %6409 = vmatprep.subr.mxu0 0.0
      %6410 = vmatpush2.msra.mxu0 0.0
      %6411 = vmatprep.subr.mxu0 0.0
      %6412 = vmatpush2.msra.mxu0 0.0
      %6413 = vmatprep.subr.mxu0 0.0
      %6414 = vmatpush2.msra.mxu0 0.0
      %6415 = vmatprep.subr.mxu0 0.0
      %6416 = vmatpush2.msra.mxu0 0.0
      %6417 = vmatprep.subr.mxu0 0.0
      %6418 = vmatpush2.msra.mxu0 0.0
      %6419 = vmatprep.subr.mxu0 0.0
      %6420 = vmatpush2.msra.mxu0 0.0
      %6421 = vmatprep.subr.mxu0 0.0
      %6422 = vmatpush2.msra.mxu0 0.0
      %6423 = vmatprep.subr.mxu0 0.0
      %6424 = vmatpush2.msra.mxu0 0.0
      %6425 = vmatprep.subr.mxu0 0.0
      %6426 = vmatpush2.msra.mxu0 0.0
      %6427 = vmatprep.subr.mxu0 0.0
      %6428 = vmatpush2.msra.mxu0 0.0
      %6429 = vmatprep.subr.mxu0 0.0
      %6430 = vmatpush2.msra.mxu0 0.0
      %6431 = vmatprep.subr.mxu0 0.0
      %6432 = vmatpush2.msra.mxu0 0.0
      %6433 = vmatprep.subr.mxu0 0.0
      %6434 = vmatpush2.msra.mxu0 0.0
      %6435 = vmatprep.subr.mxu0 0.0
      %6436 = vmatpush2.msra.mxu0 0.0
      %6437 = vmatprep.mubr.f32.mxu0 0.0
      %v6438 = vand.u32 %v6278, 4294901760
      %6439 = vmatmul.mubr.f32.gmra.mxu0 %v6438
      %v6440 = vpop.f32.mrf.mxu0
      %v6441 = vadd.f32 %v6355, %v6440
      %v6442 = vpop.f32.mrf.mxu0
      %6443 = vdwg.mxu0
      %6444 = vmatprep.subr.mxu0 0.0
      %6445 = vmatpush1.msra.mxu0 0.0
      %6446 = vmatprep.subr.mxu0 0.0
      %6447 = vmatpush1.msra.mxu0 0.0
      %6448 = vmatprep.subr.mxu0 0.0
      %6449 = vmatpush1.msra.mxu0 0.0
      %6450 = vmatprep.subr.mxu0 0.0
      %6451 = vmatpush1.msra.mxu0 0.0
      %6452 = vmatprep.subr.mxu0 0.0
      %6453 = vmatpush1.msra.mxu0 0.0
      %6454 = vmatprep.subr.mxu0 0.0
      %6455 = vmatpush1.msra.mxu0 0.0
      %6456 = vmatprep.subr.mxu0 0.0
      %6457 = vmatpush1.msra.mxu0 0.0
      %6458 = vmatprep.subr.mxu0 0.0
      %6459 = vmatpush1.msra.mxu0 0.0
      %6460 = vmatprep.subr.mxu0 0.0
      %6461 = vmatpush1.msra.mxu0 0.0
      %6462 = vmatprep.subr.mxu0 0.0
      %6463 = vmatpush1.msra.mxu0 0.0
      %6464 = vmatprep.subr.mxu0 0.0
      %6465 = vmatpush1.msra.mxu0 0.0
      %6466 = vmatprep.subr.mxu0 0.0
      %6467 = vmatpush1.msra.mxu0 0.0
      %6468 = vmatprep.subr.mxu0 0.0
      %6469 = vmatpush1.msra.mxu0 0.0
      %6470 = vmatprep.subr.mxu0 0.0
      %v6471 = vand.u32 %v49, 4294901760
      %v6472 = vsub.f32 %v49, %v6471
      %6473 = vmatpush1.msra.mxu0 %v6472
      %6474 = vmatprep.subr.mxu0 0.0
      %v6475 = vand.u32 %v48, 4294901760
      %v6476 = vsub.f32 %v48, %v6475
      %6477 = vmatpush1.msra.mxu0 %v6476
      %6478 = vmatprep.subr.mxu0 0.0
      %v6479 = vand.u32 %v47, 4294901760
      %v6480 = vsub.f32 %v47, %v6479
      %6481 = vmatpush1.msra.mxu0 %v6480
      %6482 = vmatprep.subr.mxu0 0.0
      %6483 = vmatpush2.msra.mxu0 0.0
      %6484 = vmatprep.subr.mxu0 0.0
      %6485 = vmatpush2.msra.mxu0 0.0
      %6486 = vmatprep.subr.mxu0 0.0
      %6487 = vmatpush2.msra.mxu0 0.0
      %6488 = vmatprep.subr.mxu0 0.0
      %6489 = vmatpush2.msra.mxu0 0.0
      %6490 = vmatprep.subr.mxu0 0.0
      %6491 = vmatpush2.msra.mxu0 0.0
      %6492 = vmatprep.subr.mxu0 0.0
      %6493 = vmatpush2.msra.mxu0 0.0
      %6494 = vmatprep.subr.mxu0 0.0
      %6495 = vmatpush2.msra.mxu0 0.0
      %6496 = vmatprep.subr.mxu0 0.0
      %6497 = vmatpush2.msra.mxu0 0.0
      %6498 = vmatprep.subr.mxu0 0.0
      %6499 = vmatpush2.msra.mxu0 0.0
      %6500 = vmatprep.subr.mxu0 0.0
      %6501 = vmatpush2.msra.mxu0 0.0
      %6502 = vmatprep.subr.mxu0 0.0
      %6503 = vmatpush2.msra.mxu0 0.0
      %6504 = vmatprep.subr.mxu0 0.0
      %6505 = vmatpush2.msra.mxu0 0.0
      %6506 = vmatprep.subr.mxu0 0.0
      %6507 = vmatpush2.msra.mxu0 0.0
      %6508 = vmatprep.subr.mxu0 0.0
      %6509 = vmatpush2.msra.mxu0 0.0
      %6510 = vmatprep.subr.mxu0 0.0
      %6511 = vmatpush2.msra.mxu0 0.0
      %6512 = vmatprep.subr.mxu0 0.0
      %6513 = vmatpush2.msra.mxu0 0.0
      %6514 = vmatprep.mubr.f32.mxu0 0.0
      %v6515 = vand.u32 %v6278, 4294901760
      %v6516 = vsub.f32 %v6278, %v6515
      %6517 = vmatmul.mubr.f32.gmra.mxu0 %v6516
      %v6518 = vpop.f32.mrf.mxu0
      %v6519 = vadd.f32 %v6441, %v6518
      %v6520 = vpop.f32.mrf.mxu0
      %6521 = vdwg.mxu0
      %6522 = vmatprep.subr.mxu0 0.0
      %6523 = vmatpush1.msra.mxu0 0.0
      %6524 = vmatprep.subr.mxu0 0.0
      %6525 = vmatpush1.msra.mxu0 0.0
      %6526 = vmatprep.subr.mxu0 0.0
      %6527 = vmatpush1.msra.mxu0 0.0
      %6528 = vmatprep.subr.mxu0 0.0
      %6529 = vmatpush1.msra.mxu0 0.0
      %6530 = vmatprep.subr.mxu0 0.0
      %6531 = vmatpush1.msra.mxu0 0.0
      %6532 = vmatprep.subr.mxu0 0.0
      %6533 = vmatpush1.msra.mxu0 0.0
      %6534 = vmatprep.subr.mxu0 0.0
      %6535 = vmatpush1.msra.mxu0 0.0
      %6536 = vmatprep.subr.mxu0 0.0
      %6537 = vmatpush1.msra.mxu0 0.0
      %6538 = vmatprep.subr.mxu0 0.0
      %6539 = vmatpush1.msra.mxu0 0.0
      %6540 = vmatprep.subr.mxu0 0.0
      %6541 = vmatpush1.msra.mxu0 0.0
      %6542 = vmatprep.subr.mxu0 0.0
      %6543 = vmatpush1.msra.mxu0 0.0
      %6544 = vmatprep.subr.mxu0 0.0
      %6545 = vmatpush1.msra.mxu0 0.0
      %6546 = vmatprep.subr.mxu0 0.0
      %6547 = vmatpush1.msra.mxu0 0.0
      %6548 = vmatprep.subr.mxu0 0.0
      %v6549 = vand.u32 %v49, 4294901760
      %6550 = vmatpush1.msra.mxu0 %v6549
      %6551 = vmatprep.subr.mxu0 0.0
      %v6552 = vand.u32 %v48, 4294901760
      %6553 = vmatpush1.msra.mxu0 %v6552
      %6554 = vmatprep.subr.mxu0 0.0
      %v6555 = vand.u32 %v47, 4294901760
      %6556 = vmatpush1.msra.mxu0 %v6555
      %6557 = vmatprep.subr.mxu0 0.0
      %6558 = vmatpush2.msra.mxu0 0.0
      %6559 = vmatprep.subr.mxu0 0.0
      %6560 = vmatpush2.msra.mxu0 0.0
      %6561 = vmatprep.subr.mxu0 0.0
      %6562 = vmatpush2.msra.mxu0 0.0
      %6563 = vmatprep.subr.mxu0 0.0
      %6564 = vmatpush2.msra.mxu0 0.0
      %6565 = vmatprep.subr.mxu0 0.0
      %6566 = vmatpush2.msra.mxu0 0.0
      %6567 = vmatprep.subr.mxu0 0.0
      %6568 = vmatpush2.msra.mxu0 0.0
      %6569 = vmatprep.subr.mxu0 0.0
      %6570 = vmatpush2.msra.mxu0 0.0
      %6571 = vmatprep.subr.mxu0 0.0
      %6572 = vmatpush2.msra.mxu0 0.0
      %6573 = vmatprep.subr.mxu0 0.0
      %6574 = vmatpush2.msra.mxu0 0.0
      %6575 = vmatprep.subr.mxu0 0.0
      %6576 = vmatpush2.msra.mxu0 0.0
      %6577 = vmatprep.subr.mxu0 0.0
      %6578 = vmatpush2.msra.mxu0 0.0
      %6579 = vmatprep.subr.mxu0 0.0
      %6580 = vmatpush2.msra.mxu0 0.0
      %6581 = vmatprep.subr.mxu0 0.0
      %6582 = vmatpush2.msra.mxu0 0.0
      %6583 = vmatprep.subr.mxu0 0.0
      %6584 = vmatpush2.msra.mxu0 0.0
      %6585 = vmatprep.subr.mxu0 0.0
      %6586 = vmatpush2.msra.mxu0 0.0
      %6587 = vmatprep.subr.mxu0 0.0
      %6588 = vmatpush2.msra.mxu0 0.0
      %6589 = vmatprep.mubr.f32.mxu0 0.0
      %v6590 = vand.u32 %v6278, 4294901760
      %v6591 = vsub.f32 %v6278, %v6590
      %v6592 = vand.u32 %v6591, 4294901760
      %6593 = vmatmul.mubr.f32.gmra.mxu0 %v6592
      %v6594 = vpop.f32.mrf.mxu0
      %v6595 = vadd.f32 %v6519, %v6594
      %v6596 = vpop.f32.mrf.mxu0
      %6597 = vdwg.mxu0
      %6598 = vmatprep.subr.mxu0 0.0
      %6599 = vmatpush1.msra.mxu0 0.0
      %6600 = vmatprep.subr.mxu0 0.0
      %6601 = vmatpush1.msra.mxu0 0.0
      %6602 = vmatprep.subr.mxu0 0.0
      %6603 = vmatpush1.msra.mxu0 0.0
      %6604 = vmatprep.subr.mxu0 0.0
      %6605 = vmatpush1.msra.mxu0 0.0
      %6606 = vmatprep.subr.mxu0 0.0
      %6607 = vmatpush1.msra.mxu0 0.0
      %6608 = vmatprep.subr.mxu0 0.0
      %6609 = vmatpush1.msra.mxu0 0.0
      %6610 = vmatprep.subr.mxu0 0.0
      %6611 = vmatpush1.msra.mxu0 0.0
      %6612 = vmatprep.subr.mxu0 0.0
      %6613 = vmatpush1.msra.mxu0 0.0
      %6614 = vmatprep.subr.mxu0 0.0
      %6615 = vmatpush1.msra.mxu0 0.0
      %6616 = vmatprep.subr.mxu0 0.0
      %6617 = vmatpush1.msra.mxu0 0.0
      %6618 = vmatprep.subr.mxu0 0.0
      %6619 = vmatpush1.msra.mxu0 0.0
      %6620 = vmatprep.subr.mxu0 0.0
      %6621 = vmatpush1.msra.mxu0 0.0
      %6622 = vmatprep.subr.mxu0 0.0
      %6623 = vmatpush1.msra.mxu0 0.0
      %6624 = vmatprep.subr.mxu0 0.0
      %v6625 = vand.u32 %v49, 4294901760
      %v6626 = vsub.f32 %v49, %v6625
      %v6627 = vand.u32 %v6626, 4294901760
      %6628 = vmatpush1.msra.mxu0 %v6627
      %6629 = vmatprep.subr.mxu0 0.0
      %v6630 = vand.u32 %v48, 4294901760
      %v6631 = vsub.f32 %v48, %v6630
      %v6632 = vand.u32 %v6631, 4294901760
      %6633 = vmatpush1.msra.mxu0 %v6632
      %6634 = vmatprep.subr.mxu0 0.0
      %v6635 = vand.u32 %v47, 4294901760
      %v6636 = vsub.f32 %v47, %v6635
      %v6637 = vand.u32 %v6636, 4294901760
      %6638 = vmatpush1.msra.mxu0 %v6637
      %6639 = vmatprep.subr.mxu0 0.0
      %6640 = vmatpush2.msra.mxu0 0.0
      %6641 = vmatprep.subr.mxu0 0.0
      %6642 = vmatpush2.msra.mxu0 0.0
      %6643 = vmatprep.subr.mxu0 0.0
      %6644 = vmatpush2.msra.mxu0 0.0
      %6645 = vmatprep.subr.mxu0 0.0
      %6646 = vmatpush2.msra.mxu0 0.0
      %6647 = vmatprep.subr.mxu0 0.0
      %6648 = vmatpush2.msra.mxu0 0.0
      %6649 = vmatprep.subr.mxu0 0.0
      %6650 = vmatpush2.msra.mxu0 0.0
      %6651 = vmatprep.subr.mxu0 0.0
      %6652 = vmatpush2.msra.mxu0 0.0
      %6653 = vmatprep.subr.mxu0 0.0
      %6654 = vmatpush2.msra.mxu0 0.0
      %6655 = vmatprep.subr.mxu0 0.0
      %6656 = vmatpush2.msra.mxu0 0.0
      %6657 = vmatprep.subr.mxu0 0.0
      %6658 = vmatpush2.msra.mxu0 0.0
      %6659 = vmatprep.subr.mxu0 0.0
      %6660 = vmatpush2.msra.mxu0 0.0
      %6661 = vmatprep.subr.mxu0 0.0
      %6662 = vmatpush2.msra.mxu0 0.0
      %6663 = vmatprep.subr.mxu0 0.0
      %6664 = vmatpush2.msra.mxu0 0.0
      %6665 = vmatprep.subr.mxu0 0.0
      %6666 = vmatpush2.msra.mxu0 0.0
      %6667 = vmatprep.subr.mxu0 0.0
      %6668 = vmatpush2.msra.mxu0 0.0
      %6669 = vmatprep.subr.mxu0 0.0
      %6670 = vmatpush2.msra.mxu0 0.0
      %6671 = vmatprep.mubr.f32.mxu0 0.0
      %v6672 = vand.u32 %v6278, 4294901760
      %6673 = vmatmul.mubr.f32.gmra.mxu0 %v6672
      %v6674 = vpop.f32.mrf.mxu0
      %v6675 = vadd.f32 %v6595, %v6674
      %v6676 = vpop.f32.mrf.mxu0
      %6677 = vdwg.mxu0
      %6678 = vmatprep.subr.mxu0 0.0
      %6679 = vmatpush1.msra.mxu0 0.0
      %6680 = vmatprep.subr.mxu0 0.0
      %6681 = vmatpush1.msra.mxu0 0.0
      %6682 = vmatprep.subr.mxu0 0.0
      %6683 = vmatpush1.msra.mxu0 0.0
      %6684 = vmatprep.subr.mxu0 0.0
      %6685 = vmatpush1.msra.mxu0 0.0
      %6686 = vmatprep.subr.mxu0 0.0
      %6687 = vmatpush1.msra.mxu0 0.0
      %6688 = vmatprep.subr.mxu0 0.0
      %6689 = vmatpush1.msra.mxu0 0.0
      %6690 = vmatprep.subr.mxu0 0.0
      %6691 = vmatpush1.msra.mxu0 0.0
      %6692 = vmatprep.subr.mxu0 0.0
      %6693 = vmatpush1.msra.mxu0 0.0
      %6694 = vmatprep.subr.mxu0 0.0
      %6695 = vmatpush1.msra.mxu0 0.0
      %6696 = vmatprep.subr.mxu0 0.0
      %6697 = vmatpush1.msra.mxu0 0.0
      %6698 = vmatprep.subr.mxu0 0.0
      %6699 = vmatpush1.msra.mxu0 0.0
      %6700 = vmatprep.subr.mxu0 0.0
      %6701 = vmatpush1.msra.mxu0 0.0
      %6702 = vmatprep.subr.mxu0 0.0
      %6703 = vmatpush1.msra.mxu0 0.0
      %6704 = vmatprep.subr.mxu0 0.0
      %v6705 = vand.u32 %v49, 4294901760
      %6706 = vmatpush1.msra.mxu0 %v6705
      %6707 = vmatprep.subr.mxu0 0.0
      %v6708 = vand.u32 %v48, 4294901760
      %6709 = vmatpush1.msra.mxu0 %v6708
      %6710 = vmatprep.subr.mxu0 0.0
      %v6711 = vand.u32 %v47, 4294901760
      %6712 = vmatpush1.msra.mxu0 %v6711
      %6713 = vmatprep.subr.mxu0 0.0
      %6714 = vmatpush2.msra.mxu0 0.0
      %6715 = vmatprep.subr.mxu0 0.0
      %6716 = vmatpush2.msra.mxu0 0.0
      %6717 = vmatprep.subr.mxu0 0.0
      %6718 = vmatpush2.msra.mxu0 0.0
      %6719 = vmatprep.subr.mxu0 0.0
      %6720 = vmatpush2.msra.mxu0 0.0
      %6721 = vmatprep.subr.mxu0 0.0
      %6722 = vmatpush2.msra.mxu0 0.0
      %6723 = vmatprep.subr.mxu0 0.0
      %6724 = vmatpush2.msra.mxu0 0.0
      %6725 = vmatprep.subr.mxu0 0.0
      %6726 = vmatpush2.msra.mxu0 0.0
      %6727 = vmatprep.subr.mxu0 0.0
      %6728 = vmatpush2.msra.mxu0 0.0
      %6729 = vmatprep.subr.mxu0 0.0
      %6730 = vmatpush2.msra.mxu0 0.0
      %6731 = vmatprep.subr.mxu0 0.0
      %6732 = vmatpush2.msra.mxu0 0.0
      %6733 = vmatprep.subr.mxu0 0.0
      %6734 = vmatpush2.msra.mxu0 0.0
      %6735 = vmatprep.subr.mxu0 0.0
      %6736 = vmatpush2.msra.mxu0 0.0
      %6737 = vmatprep.subr.mxu0 0.0
      %6738 = vmatpush2.msra.mxu0 0.0
      %6739 = vmatprep.subr.mxu0 0.0
      %6740 = vmatpush2.msra.mxu0 0.0
      %6741 = vmatprep.subr.mxu0 0.0
      %6742 = vmatpush2.msra.mxu0 0.0
      %6743 = vmatprep.subr.mxu0 0.0
      %6744 = vmatpush2.msra.mxu0 0.0
      %6745 = vmatprep.mubr.f32.mxu0 0.0
      %v6746 = vand.u32 %v6278, 4294901760
      %6747 = vmatmul.mubr.f32.gmra.mxu0 %v6746
      %v6748 = vpop.f32.mrf.mxu0
      %v6749 = vadd.f32 %v6675, %v6748
      %v6750 = vpop.f32.mrf.mxu0
      %6751 = vdwg.mxu0
      %v6752 = vrcp.pop %v6262
      %v6753 = vmul.f32 1.0, %v6752
      %6755 = vrot.lane.b32.xlu0 %v6261, 16
      %v6756 = vpop.permute.xlu0 %6755
      %v6758 = vsub.f32 %v6259, %v6756
      %v6759 = vadd.f32 %v6753, 1.0
      %v6760 = vmul.f32 %v6749, 0.5
      %6762 = vrot.lane.b32.xlu0 %v6759, 16
      %v6763 = vpop.permute.xlu0 %6762
      %v6765 = vmul.f32 %v6760, %v6763
      %v6766 = vadd.f32 %v6758, %v6765
      %v6767 = vmul.f32 %v6749, %v6766
      %v6768 = vsub.f32 1.0, %v6753
      %6770 = vrot.lane.b32.xlu0 %v6768, 16
      %v6771 = vpop.permute.xlu0 %6770
      %v6773 = vmul.f32 %v6767, %v6771
      %v6774 = vmul.f32 %v6262, %v6262
      %v6775 = vstv %s6273
      %v6776 = vrcp.pop %v6775
      %s6777 = vtos %v6776
      %s6778 = smul.f32 %s6274, %s6777
      %v6779 = vstv %s6778
      %v6780 = vsub.f32 %v6774, %v6779
      %v6781 = vstv %s6274
      %v6782 = vmul.f32 %v6781, %v6780
      %v6783 = vmul.f32 %v6749, %v6763
      %v6784 = vadd.f32 %v6758, %v6783
      %v6785 = vmul.f32 %v6760, %v6749
      %v6786 = vmul.f32 %v6753, %v6753
      %v6787 = vadd.f32 %v6786, 1.0
      %6789 = vrot.lane.b32.xlu0 %v6787, 16
      %v6790 = vpop.permute.xlu0 %6789
      %v6792 = vmul.f32 %v6785, %v6790
      %v6793 = vadd.f32 %v6784, %v6792
      %v6794 = vmul.f32 %v6758, %v6793
      %6796 = vrot.lane.b32.xlu0 %v6794, 112
      %v6797 = vpop.permute.xlu0 %6796
      %v6799 = vadd.f32 %v6782, %v6797
      %6801 = vrot.lane.b32.xlu0 %v6773, 112
      %v6802 = vpop.permute.xlu0 %6801
      %vm6804 = vcmp.ge.f32.partialorder %v6799, %v6802
      %vm6805 = vcmp.ge.f32.partialorder %v6773, 0.0
      %v6806 = vsel %vm6805, 1, 0
      %6807 = vrot.lane.b32.xlu0 %v6806, 112
      %v6808 = vpop.permute.xlu0 %6807
      %vm6809 = vcmp.ne.s32.totalorder %v6808, 0
      %vm6810 = vmand %vm6804, %vm6809
      %vm6811 = vcmp.lt.f32.partialorder %v6799, %v6802
      %vm6812 = vcmp.lt.f32.partialorder %v6773, 0.0
      %v6813 = vsel %vm6812, 1, 0
      %6814 = vrot.lane.b32.xlu0 %v6813, 112
      %v6815 = vpop.permute.xlu0 %6814
      %vm6816 = vcmp.ne.s32.totalorder %v6815, 0
      %vm6817 = vmand %vm6811, %vm6816
      %6819 = vrot.lane.b32.xlu0 %v6799, 16
      %v6820 = vpop.permute.xlu0 %6819
      %vm6822 = vcmp.lt.f32.partialorder %v6773, %v6820
      %vm6823 = vcmp.lt.f32.partialorder %v6799, 0.0
      %v6824 = vsel %vm6823, 1, 0
      %6825 = vrot.lane.b32.xlu0 %v6824, 16
      %v6826 = vpop.permute.xlu0 %6825
      %vm6827 = vcmp.ne.s32.totalorder %v6826, 0
      %vm6828 = vmand %vm6822, %vm6827
      %v6829 = vmul.f32 %v6773, %v6773
      %v6830 = vmul.f32 %v6799, %v6799
      %6832 = vrot.lane.b32.xlu0 %v6830, 16
      %v6833 = vpop.permute.xlu0 %6832
      %v6835 = vsub.f32 %v6829, %v6833
      %s6836 = smul.f32 %s6274, 2.0
      %s6837 = smul.f32 %s6836, %s6274
      %v6838 = vstv %s6273
      %v6839 = vrcp.pop %v6838
      %s6840 = vtos %v6839
      %s6841 = smul.f32 %s6837, %s6840
      %v6842 = vstv %s6841
      %v6843 = vmul.f32 %v6842, %v6799
      %6845 = vrot.lane.b32.xlu0 %v6835, 112
      %v6846 = vpop.permute.xlu0 %6845
      %vm6848 = vcmp.ge.f32.partialorder %v6843, %v6846
      %vm6849 = vcmp.gt.f32.partialorder %v6835, 0.0
      %v6850 = vsel %vm6849, 1, 0
      %6851 = vrot.lane.b32.xlu0 %v6850, 112
      %v6852 = vpop.permute.xlu0 %6851
      %vm6853 = vcmp.ne.s32.totalorder %v6852, 0
      %vm6854 = vmand %vm6848, %vm6853
      %vm6855 = vmor %vm6810, %vm6817
      %v6856 = vsel %vm6828, 1, 0
      %6857 = vrot.lane.b32.xlu0 %v6856, 112
      %v6858 = vpop.permute.xlu0 %6857
      %vm6859 = vcmp.ne.s32.totalorder %v6858, 0
      %vm6860 = vmor %vm6855, %vm6859
      %vm6861 = vmor %vm6860, %vm6854
      %v6862 = vsel %vm6861, %v6753, 1.0
      %6864 = vrot.lane.b32.xlu0 %v6862, 16
      %v6865 = vpop.permute.xlu0 %6864
      %v6867 = vmul.f32 %v6749, %v6865
      %v6868 = vadd.f32 %v6259, %v6867
      %v6869 = vadd.f32 %v6259, %v6749
      %v6870 = vsel %vm1171, %v6869, %v6868
      %v6872 = vsel %vm566, %v6870, 0
      %6874 = vmatprep.subr.mxu0 0.0
      %6875 = vmatpush1.msra.mxu0 0.0
      %6876 = vmatprep.subr.mxu0 0.0
      %6877 = vmatpush1.msra.mxu0 0.0
      %6878 = vmatprep.subr.mxu0 0.0
      %6879 = vmatpush1.msra.mxu0 0.0
      %6880 = vmatprep.subr.mxu0 0.0
      %6881 = vmatpush1.msra.mxu0 0.0
      %6882 = vmatprep.subr.mxu0 0.0
      %6883 = vmatpush1.msra.mxu0 0.0
      %6884 = vmatprep.subr.mxu0 0.0
      %6885 = vmatpush1.msra.mxu0 0.0
      %6886 = vmatprep.subr.mxu0 0.0
      %6887 = vmatpush1.msra.mxu0 0.0
      %6888 = vmatprep.subr.mxu0 0.0
      %6889 = vmatpush1.msra.mxu0 0.0
      %6890 = vmatprep.subr.mxu0 0.0
      %6891 = vmatpush1.msra.mxu0 0.0
      %6892 = vmatprep.subr.mxu0 0.0
      %6893 = vmatpush1.msra.mxu0 0.0
      %6894 = vmatprep.subr.mxu0 0.0
      %6895 = vmatpush1.msra.mxu0 0.0
      %6896 = vmatprep.subr.mxu0 0.0
      %6897 = vmatpush1.msra.mxu0 0.0
      %6898 = vmatprep.subr.mxu0 0.0
      %6899 = vmatpush1.msra.mxu0 0.0
      %6900 = vmatprep.subr.mxu0 0.0
      %v6901 = vand.u32 %v52, 4294901760
      %6902 = vmatpush1.msra.mxu0 %v6901
      %6903 = vmatprep.subr.mxu0 0.0
      %v6904 = vand.u32 %v51, 4294901760
      %6905 = vmatpush1.msra.mxu0 %v6904
      %6906 = vmatprep.subr.mxu0 0.0
      %v6907 = vand.u32 %v50, 4294901760
      %6908 = vmatpush1.msra.mxu0 %v6907
      %6909 = vmatprep.subr.mxu0 0.0
      %6910 = vmatpush2.msra.mxu0 0.0
      %6911 = vmatprep.subr.mxu0 0.0
      %6912 = vmatpush2.msra.mxu0 0.0
      %6913 = vmatprep.subr.mxu0 0.0
      %6914 = vmatpush2.msra.mxu0 0.0
      %6915 = vmatprep.subr.mxu0 0.0
      %6916 = vmatpush2.msra.mxu0 0.0
      %6917 = vmatprep.subr.mxu0 0.0
      %6918 = vmatpush2.msra.mxu0 0.0
      %6919 = vmatprep.subr.mxu0 0.0
      %6920 = vmatpush2.msra.mxu0 0.0
      %6921 = vmatprep.subr.mxu0 0.0
      %6922 = vmatpush2.msra.mxu0 0.0
      %6923 = vmatprep.subr.mxu0 0.0
      %6924 = vmatpush2.msra.mxu0 0.0
      %6925 = vmatprep.subr.mxu0 0.0
      %6926 = vmatpush2.msra.mxu0 0.0
      %6927 = vmatprep.subr.mxu0 0.0
      %6928 = vmatpush2.msra.mxu0 0.0
      %6929 = vmatprep.subr.mxu0 0.0
      %6930 = vmatpush2.msra.mxu0 0.0
      %6931 = vmatprep.subr.mxu0 0.0
      %6932 = vmatpush2.msra.mxu0 0.0
      %6933 = vmatprep.subr.mxu0 0.0
      %6934 = vmatpush2.msra.mxu0 0.0
      %6935 = vmatprep.subr.mxu0 0.0
      %6936 = vmatpush2.msra.mxu0 0.0
      %6937 = vmatprep.subr.mxu0 0.0
      %6938 = vmatpush2.msra.mxu0 0.0
      %6939 = vmatprep.subr.mxu0 0.0
      %6940 = vmatpush2.msra.mxu0 0.0
      %6941 = vmatprep.mubr.f32.mxu0 0.0
      %v6942 = vand.u32 %v6872, 4294901760
      %v6943 = vsub.f32 %v6872, %v6942
      %v6944 = vand.u32 %v6943, 4294901760
      %v6945 = vsub.f32 %v6943, %v6944
      %v6946 = vand.u32 %v6945, 4294901760
      %6947 = vmatmul.mubr.f32.gmra.mxu0 %v6946
      %v6948 = vpop.f32.mrf.mxu0
      %v6949 = vadd.f32 %v1177, %v6948
      %v6950 = vpop.f32.mrf.mxu0
      %6951 = vdwg.mxu0
      %6952 = vmatprep.subr.mxu0 0.0
      %6953 = vmatpush1.msra.mxu0 0.0
      %6954 = vmatprep.subr.mxu0 0.0
      %6955 = vmatpush1.msra.mxu0 0.0
      %6956 = vmatprep.subr.mxu0 0.0
      %6957 = vmatpush1.msra.mxu0 0.0
      %6958 = vmatprep.subr.mxu0 0.0
      %6959 = vmatpush1.msra.mxu0 0.0
      %6960 = vmatprep.subr.mxu0 0.0
      %6961 = vmatpush1.msra.mxu0 0.0
      %6962 = vmatprep.subr.mxu0 0.0
      %6963 = vmatpush1.msra.mxu0 0.0
      %6964 = vmatprep.subr.mxu0 0.0
      %6965 = vmatpush1.msra.mxu0 0.0
      %6966 = vmatprep.subr.mxu0 0.0
      %6967 = vmatpush1.msra.mxu0 0.0
      %6968 = vmatprep.subr.mxu0 0.0
      %6969 = vmatpush1.msra.mxu0 0.0
      %6970 = vmatprep.subr.mxu0 0.0
      %6971 = vmatpush1.msra.mxu0 0.0
      %6972 = vmatprep.subr.mxu0 0.0
      %6973 = vmatpush1.msra.mxu0 0.0
      %6974 = vmatprep.subr.mxu0 0.0
      %6975 = vmatpush1.msra.mxu0 0.0
      %6976 = vmatprep.subr.mxu0 0.0
      %6977 = vmatpush1.msra.mxu0 0.0
      %6978 = vmatprep.subr.mxu0 0.0
      %v6979 = vand.u32 %v52, 4294901760
      %v6980 = vsub.f32 %v52, %v6979
      %v6981 = vand.u32 %v6980, 4294901760
      %v6982 = vsub.f32 %v6980, %v6981
      %v6983 = vand.u32 %v6982, 4294901760
      %6984 = vmatpush1.msra.mxu0 %v6983
      %6985 = vmatprep.subr.mxu0 0.0
      %v6986 = vand.u32 %v51, 4294901760
      %v6987 = vsub.f32 %v51, %v6986
      %v6988 = vand.u32 %v6987, 4294901760
      %v6989 = vsub.f32 %v6987, %v6988
      %v6990 = vand.u32 %v6989, 4294901760
      %6991 = vmatpush1.msra.mxu0 %v6990
      %6992 = vmatprep.subr.mxu0 0.0
      %v6993 = vand.u32 %v50, 4294901760
      %v6994 = vsub.f32 %v50, %v6993
      %v6995 = vand.u32 %v6994, 4294901760
      %v6996 = vsub.f32 %v6994, %v6995
      %v6997 = vand.u32 %v6996, 4294901760
      %6998 = vmatpush1.msra.mxu0 %v6997
      %6999 = vmatprep.subr.mxu0 0.0
      %7000 = vmatpush2.msra.mxu0 0.0
      %7001 = vmatprep.subr.mxu0 0.0
      %7002 = vmatpush2.msra.mxu0 0.0
      %7003 = vmatprep.subr.mxu0 0.0
      %7004 = vmatpush2.msra.mxu0 0.0
      %7005 = vmatprep.subr.mxu0 0.0
      %7006 = vmatpush2.msra.mxu0 0.0
      %7007 = vmatprep.subr.mxu0 0.0
      %7008 = vmatpush2.msra.mxu0 0.0
      %7009 = vmatprep.subr.mxu0 0.0
      %7010 = vmatpush2.msra.mxu0 0.0
      %7011 = vmatprep.subr.mxu0 0.0
      %7012 = vmatpush2.msra.mxu0 0.0
      %7013 = vmatprep.subr.mxu0 0.0
      %7014 = vmatpush2.msra.mxu0 0.0
      %7015 = vmatprep.subr.mxu0 0.0
      %7016 = vmatpush2.msra.mxu0 0.0
      %7017 = vmatprep.subr.mxu0 0.0
      %7018 = vmatpush2.msra.mxu0 0.0
      %7019 = vmatprep.subr.mxu0 0.0
      %7020 = vmatpush2.msra.mxu0 0.0
      %7021 = vmatprep.subr.mxu0 0.0
      %7022 = vmatpush2.msra.mxu0 0.0
      %7023 = vmatprep.subr.mxu0 0.0
      %7024 = vmatpush2.msra.mxu0 0.0
      %7025 = vmatprep.subr.mxu0 0.0
      %7026 = vmatpush2.msra.mxu0 0.0
      %7027 = vmatprep.subr.mxu0 0.0
      %7028 = vmatpush2.msra.mxu0 0.0
      %7029 = vmatprep.subr.mxu0 0.0
      %7030 = vmatpush2.msra.mxu0 0.0
      %7031 = vmatprep.mubr.f32.mxu0 0.0
      %v7032 = vand.u32 %v6872, 4294901760
      %7033 = vmatmul.mubr.f32.gmra.mxu0 %v7032
      %v7034 = vpop.f32.mrf.mxu0
      %v7035 = vadd.f32 %v6949, %v7034
      %v7036 = vpop.f32.mrf.mxu0
      %7037 = vdwg.mxu0
      %7038 = vmatprep.subr.mxu0 0.0
      %7039 = vmatpush1.msra.mxu0 0.0
      %7040 = vmatprep.subr.mxu0 0.0
      %7041 = vmatpush1.msra.mxu0 0.0
      %7042 = vmatprep.subr.mxu0 0.0
      %7043 = vmatpush1.msra.mxu0 0.0
      %7044 = vmatprep.subr.mxu0 0.0
      %7045 = vmatpush1.msra.mxu0 0.0
      %7046 = vmatprep.subr.mxu0 0.0
      %7047 = vmatpush1.msra.mxu0 0.0
      %7048 = vmatprep.subr.mxu0 0.0
      %7049 = vmatpush1.msra.mxu0 0.0
      %7050 = vmatprep.subr.mxu0 0.0
      %7051 = vmatpush1.msra.mxu0 0.0
      %7052 = vmatprep.subr.mxu0 0.0
      %7053 = vmatpush1.msra.mxu0 0.0
      %7054 = vmatprep.subr.mxu0 0.0
      %7055 = vmatpush1.msra.mxu0 0.0
      %7056 = vmatprep.subr.mxu0 0.0
      %7057 = vmatpush1.msra.mxu0 0.0
      %7058 = vmatprep.subr.mxu0 0.0
      %7059 = vmatpush1.msra.mxu0 0.0
      %7060 = vmatprep.subr.mxu0 0.0
      %7061 = vmatpush1.msra.mxu0 0.0
      %7062 = vmatprep.subr.mxu0 0.0
      %7063 = vmatpush1.msra.mxu0 0.0
      %7064 = vmatprep.subr.mxu0 0.0
      %v7065 = vand.u32 %v52, 4294901760
      %v7066 = vsub.f32 %v52, %v7065
      %7067 = vmatpush1.msra.mxu0 %v7066
      %7068 = vmatprep.subr.mxu0 0.0
      %v7069 = vand.u32 %v51, 4294901760
      %v7070 = vsub.f32 %v51, %v7069
      %7071 = vmatpush1.msra.mxu0 %v7070
      %7072 = vmatprep.subr.mxu0 0.0
      %v7073 = vand.u32 %v50, 4294901760
      %v7074 = vsub.f32 %v50, %v7073
      %7075 = vmatpush1.msra.mxu0 %v7074
      %7076 = vmatprep.subr.mxu0 0.0
      %7077 = vmatpush2.msra.mxu0 0.0
      %7078 = vmatprep.subr.mxu0 0.0
      %7079 = vmatpush2.msra.mxu0 0.0
      %7080 = vmatprep.subr.mxu0 0.0
      %7081 = vmatpush2.msra.mxu0 0.0
      %7082 = vmatprep.subr.mxu0 0.0
      %7083 = vmatpush2.msra.mxu0 0.0
      %7084 = vmatprep.subr.mxu0 0.0
      %7085 = vmatpush2.msra.mxu0 0.0
      %7086 = vmatprep.subr.mxu0 0.0
      %7087 = vmatpush2.msra.mxu0 0.0
      %7088 = vmatprep.subr.mxu0 0.0
      %7089 = vmatpush2.msra.mxu0 0.0
      %7090 = vmatprep.subr.mxu0 0.0
      %7091 = vmatpush2.msra.mxu0 0.0
      %7092 = vmatprep.subr.mxu0 0.0
      %7093 = vmatpush2.msra.mxu0 0.0
      %7094 = vmatprep.subr.mxu0 0.0
      %7095 = vmatpush2.msra.mxu0 0.0
      %7096 = vmatprep.subr.mxu0 0.0
      %7097 = vmatpush2.msra.mxu0 0.0
      %7098 = vmatprep.subr.mxu0 0.0
      %7099 = vmatpush2.msra.mxu0 0.0
      %7100 = vmatprep.subr.mxu0 0.0
      %7101 = vmatpush2.msra.mxu0 0.0
      %7102 = vmatprep.subr.mxu0 0.0
      %7103 = vmatpush2.msra.mxu0 0.0
      %7104 = vmatprep.subr.mxu0 0.0
      %7105 = vmatpush2.msra.mxu0 0.0
      %7106 = vmatprep.subr.mxu0 0.0
      %7107 = vmatpush2.msra.mxu0 0.0
      %7108 = vmatprep.mubr.f32.mxu0 0.0
      %v7109 = vand.u32 %v6872, 4294901760
      %v7110 = vsub.f32 %v6872, %v7109
      %7111 = vmatmul.mubr.f32.gmra.mxu0 %v7110
      %v7112 = vpop.f32.mrf.mxu0
      %v7113 = vadd.f32 %v7035, %v7112
      %v7114 = vpop.f32.mrf.mxu0
      %7115 = vdwg.mxu0
      %7116 = vmatprep.subr.mxu0 0.0
      %7117 = vmatpush1.msra.mxu0 0.0
      %7118 = vmatprep.subr.mxu0 0.0
      %7119 = vmatpush1.msra.mxu0 0.0
      %7120 = vmatprep.subr.mxu0 0.0
      %7121 = vmatpush1.msra.mxu0 0.0
      %7122 = vmatprep.subr.mxu0 0.0
      %7123 = vmatpush1.msra.mxu0 0.0
      %7124 = vmatprep.subr.mxu0 0.0
      %7125 = vmatpush1.msra.mxu0 0.0
      %7126 = vmatprep.subr.mxu0 0.0
      %7127 = vmatpush1.msra.mxu0 0.0
      %7128 = vmatprep.subr.mxu0 0.0
      %7129 = vmatpush1.msra.mxu0 0.0
      %7130 = vmatprep.subr.mxu0 0.0
      %7131 = vmatpush1.msra.mxu0 0.0
      %7132 = vmatprep.subr.mxu0 0.0
      %7133 = vmatpush1.msra.mxu0 0.0
      %7134 = vmatprep.subr.mxu0 0.0
      %7135 = vmatpush1.msra.mxu0 0.0
      %7136 = vmatprep.subr.mxu0 0.0
      %7137 = vmatpush1.msra.mxu0 0.0
      %7138 = vmatprep.subr.mxu0 0.0
      %7139 = vmatpush1.msra.mxu0 0.0
      %7140 = vmatprep.subr.mxu0 0.0
      %7141 = vmatpush1.msra.mxu0 0.0
      %7142 = vmatprep.subr.mxu0 0.0
      %v7143 = vand.u32 %v52, 4294901760
      %7144 = vmatpush1.msra.mxu0 %v7143
      %7145 = vmatprep.subr.mxu0 0.0
      %v7146 = vand.u32 %v51, 4294901760
      %7147 = vmatpush1.msra.mxu0 %v7146
      %7148 = vmatprep.subr.mxu0 0.0
      %v7149 = vand.u32 %v50, 4294901760
      %7150 = vmatpush1.msra.mxu0 %v7149
      %7151 = vmatprep.subr.mxu0 0.0
      %7152 = vmatpush2.msra.mxu0 0.0
      %7153 = vmatprep.subr.mxu0 0.0
      %7154 = vmatpush2.msra.mxu0 0.0
      %7155 = vmatprep.subr.mxu0 0.0
      %7156 = vmatpush2.msra.mxu0 0.0
      %7157 = vmatprep.subr.mxu0 0.0
      %7158 = vmatpush2.msra.mxu0 0.0
      %7159 = vmatprep.subr.mxu0 0.0
      %7160 = vmatpush2.msra.mxu0 0.0
      %7161 = vmatprep.subr.mxu0 0.0
      %7162 = vmatpush2.msra.mxu0 0.0
      %7163 = vmatprep.subr.mxu0 0.0
      %7164 = vmatpush2.msra.mxu0 0.0
      %7165 = vmatprep.subr.mxu0 0.0
      %7166 = vmatpush2.msra.mxu0 0.0
      %7167 = vmatprep.subr.mxu0 0.0
      %7168 = vmatpush2.msra.mxu0 0.0
      %7169 = vmatprep.subr.mxu0 0.0
      %7170 = vmatpush2.msra.mxu0 0.0
      %7171 = vmatprep.subr.mxu0 0.0
      %7172 = vmatpush2.msra.mxu0 0.0
      %7173 = vmatprep.subr.mxu0 0.0
      %7174 = vmatpush2.msra.mxu0 0.0
      %7175 = vmatprep.subr.mxu0 0.0
      %7176 = vmatpush2.msra.mxu0 0.0
      %7177 = vmatprep.subr.mxu0 0.0
      %7178 = vmatpush2.msra.mxu0 0.0
      %7179 = vmatprep.subr.mxu0 0.0
      %7180 = vmatpush2.msra.mxu0 0.0
      %7181 = vmatprep.subr.mxu0 0.0
      %7182 = vmatpush2.msra.mxu0 0.0
      %7183 = vmatprep.mubr.f32.mxu0 0.0
      %v7184 = vand.u32 %v6872, 4294901760
      %v7185 = vsub.f32 %v6872, %v7184
      %v7186 = vand.u32 %v7185, 4294901760
      %7187 = vmatmul.mubr.f32.gmra.mxu0 %v7186
      %v7188 = vpop.f32.mrf.mxu0
      %v7189 = vadd.f32 %v7113, %v7188
      %v7190 = vpop.f32.mrf.mxu0
      %7191 = vdwg.mxu0
      %7192 = vmatprep.subr.mxu0 0.0
      %7193 = vmatpush1.msra.mxu0 0.0
      %7194 = vmatprep.subr.mxu0 0.0
      %7195 = vmatpush1.msra.mxu0 0.0
      %7196 = vmatprep.subr.mxu0 0.0
      %7197 = vmatpush1.msra.mxu0 0.0
      %7198 = vmatprep.subr.mxu0 0.0
      %7199 = vmatpush1.msra.mxu0 0.0
      %7200 = vmatprep.subr.mxu0 0.0
      %7201 = vmatpush1.msra.mxu0 0.0
      %7202 = vmatprep.subr.mxu0 0.0
      %7203 = vmatpush1.msra.mxu0 0.0
      %7204 = vmatprep.subr.mxu0 0.0
      %7205 = vmatpush1.msra.mxu0 0.0
      %7206 = vmatprep.subr.mxu0 0.0
      %7207 = vmatpush1.msra.mxu0 0.0
      %7208 = vmatprep.subr.mxu0 0.0
      %7209 = vmatpush1.msra.mxu0 0.0
      %7210 = vmatprep.subr.mxu0 0.0
      %7211 = vmatpush1.msra.mxu0 0.0
      %7212 = vmatprep.subr.mxu0 0.0
      %7213 = vmatpush1.msra.mxu0 0.0
      %7214 = vmatprep.subr.mxu0 0.0
      %7215 = vmatpush1.msra.mxu0 0.0
      %7216 = vmatprep.subr.mxu0 0.0
      %7217 = vmatpush1.msra.mxu0 0.0
      %7218 = vmatprep.subr.mxu0 0.0
      %v7219 = vand.u32 %v52, 4294901760
      %v7220 = vsub.f32 %v52, %v7219
      %v7221 = vand.u32 %v7220, 4294901760
      %7222 = vmatpush1.msra.mxu0 %v7221
      %7223 = vmatprep.subr.mxu0 0.0
      %v7224 = vand.u32 %v51, 4294901760
      %v7225 = vsub.f32 %v51, %v7224
      %v7226 = vand.u32 %v7225, 4294901760
      %7227 = vmatpush1.msra.mxu0 %v7226
      %7228 = vmatprep.subr.mxu0 0.0
      %v7229 = vand.u32 %v50, 4294901760
      %v7230 = vsub.f32 %v50, %v7229
      %v7231 = vand.u32 %v7230, 4294901760
      %7232 = vmatpush1.msra.mxu0 %v7231
      %7233 = vmatprep.subr.mxu0 0.0
      %7234 = vmatpush2.msra.mxu0 0.0
      %7235 = vmatprep.subr.mxu0 0.0
      %7236 = vmatpush2.msra.mxu0 0.0
      %7237 = vmatprep.subr.mxu0 0.0
      %7238 = vmatpush2.msra.mxu0 0.0
      %7239 = vmatprep.subr.mxu0 0.0
      %7240 = vmatpush2.msra.mxu0 0.0
      %7241 = vmatprep.subr.mxu0 0.0
      %7242 = vmatpush2.msra.mxu0 0.0
      %7243 = vmatprep.subr.mxu0 0.0
      %7244 = vmatpush2.msra.mxu0 0.0
      %7245 = vmatprep.subr.mxu0 0.0
      %7246 = vmatpush2.msra.mxu0 0.0
      %7247 = vmatprep.subr.mxu0 0.0
      %7248 = vmatpush2.msra.mxu0 0.0
      %7249 = vmatprep.subr.mxu0 0.0
      %7250 = vmatpush2.msra.mxu0 0.0
      %7251 = vmatprep.subr.mxu0 0.0
      %7252 = vmatpush2.msra.mxu0 0.0
      %7253 = vmatprep.subr.mxu0 0.0
      %7254 = vmatpush2.msra.mxu0 0.0
      %7255 = vmatprep.subr.mxu0 0.0
      %7256 = vmatpush2.msra.mxu0 0.0
      %7257 = vmatprep.subr.mxu0 0.0
      %7258 = vmatpush2.msra.mxu0 0.0
      %7259 = vmatprep.subr.mxu0 0.0
      %7260 = vmatpush2.msra.mxu0 0.0
      %7261 = vmatprep.subr.mxu0 0.0
      %7262 = vmatpush2.msra.mxu0 0.0
      %7263 = vmatprep.subr.mxu0 0.0
      %7264 = vmatpush2.msra.mxu0 0.0
      %7265 = vmatprep.mubr.f32.mxu0 0.0
      %v7266 = vand.u32 %v6872, 4294901760
      %7267 = vmatmul.mubr.f32.gmra.mxu0 %v7266
      %v7268 = vpop.f32.mrf.mxu0
      %v7269 = vadd.f32 %v7189, %v7268
      %v7270 = vpop.f32.mrf.mxu0
      %7271 = vdwg.mxu0
      %7272 = vmatprep.subr.mxu0 0.0
      %7273 = vmatpush1.msra.mxu0 0.0
      %7274 = vmatprep.subr.mxu0 0.0
      %7275 = vmatpush1.msra.mxu0 0.0
      %7276 = vmatprep.subr.mxu0 0.0
      %7277 = vmatpush1.msra.mxu0 0.0
      %7278 = vmatprep.subr.mxu0 0.0
      %7279 = vmatpush1.msra.mxu0 0.0
      %7280 = vmatprep.subr.mxu0 0.0
      %7281 = vmatpush1.msra.mxu0 0.0
      %7282 = vmatprep.subr.mxu0 0.0
      %7283 = vmatpush1.msra.mxu0 0.0
      %7284 = vmatprep.subr.mxu0 0.0
      %7285 = vmatpush1.msra.mxu0 0.0
      %7286 = vmatprep.subr.mxu0 0.0
      %7287 = vmatpush1.msra.mxu0 0.0
      %7288 = vmatprep.subr.mxu0 0.0
      %7289 = vmatpush1.msra.mxu0 0.0
      %7290 = vmatprep.subr.mxu0 0.0
      %7291 = vmatpush1.msra.mxu0 0.0
      %7292 = vmatprep.subr.mxu0 0.0
      %7293 = vmatpush1.msra.mxu0 0.0
      %7294 = vmatprep.subr.mxu0 0.0
      %7295 = vmatpush1.msra.mxu0 0.0
      %7296 = vmatprep.subr.mxu0 0.0
      %7297 = vmatpush1.msra.mxu0 0.0
      %7298 = vmatprep.subr.mxu0 0.0
      %v7299 = vand.u32 %v52, 4294901760
      %7300 = vmatpush1.msra.mxu0 %v7299
      %7301 = vmatprep.subr.mxu0 0.0
      %v7302 = vand.u32 %v51, 4294901760
      %7303 = vmatpush1.msra.mxu0 %v7302
      %7304 = vmatprep.subr.mxu0 0.0
      %v7305 = vand.u32 %v50, 4294901760
      %7306 = vmatpush1.msra.mxu0 %v7305
      %7307 = vmatprep.subr.mxu0 0.0
      %7308 = vmatpush2.msra.mxu0 0.0
      %7309 = vmatprep.subr.mxu0 0.0
      %7310 = vmatpush2.msra.mxu0 0.0
      %7311 = vmatprep.subr.mxu0 0.0
      %7312 = vmatpush2.msra.mxu0 0.0
      %7313 = vmatprep.subr.mxu0 0.0
      %7314 = vmatpush2.msra.mxu0 0.0
      %7315 = vmatprep.subr.mxu0 0.0
      %7316 = vmatpush2.msra.mxu0 0.0
      %7317 = vmatprep.subr.mxu0 0.0
      %7318 = vmatpush2.msra.mxu0 0.0
      %7319 = vmatprep.subr.mxu0 0.0
      %7320 = vmatpush2.msra.mxu0 0.0
      %7321 = vmatprep.subr.mxu0 0.0
      %7322 = vmatpush2.msra.mxu0 0.0
      %7323 = vmatprep.subr.mxu0 0.0
      %7324 = vmatpush2.msra.mxu0 0.0
      %7325 = vmatprep.subr.mxu0 0.0
      %7326 = vmatpush2.msra.mxu0 0.0
      %7327 = vmatprep.subr.mxu0 0.0
      %7328 = vmatpush2.msra.mxu0 0.0
      %7329 = vmatprep.subr.mxu0 0.0
      %7330 = vmatpush2.msra.mxu0 0.0
      %7331 = vmatprep.subr.mxu0 0.0
      %7332 = vmatpush2.msra.mxu0 0.0
      %7333 = vmatprep.subr.mxu0 0.0
      %7334 = vmatpush2.msra.mxu0 0.0
      %7335 = vmatprep.subr.mxu0 0.0
      %7336 = vmatpush2.msra.mxu0 0.0
      %7337 = vmatprep.subr.mxu0 0.0
      %7338 = vmatpush2.msra.mxu0 0.0
      %7339 = vmatprep.mubr.f32.mxu0 0.0
      %v7340 = vand.u32 %v6872, 4294901760
      %7341 = vmatmul.mubr.f32.gmra.mxu0 %v7340
      %v7342 = vpop.f32.mrf.mxu0
      %v7343 = vadd.f32 %v7269, %v7342
      %v7344 = vpop.f32.mrf.mxu0
      %7345 = vdwg.mxu0
      %v7346 = vmax.f32 %v6869, -5.0
      %v7347 = vmin.f32 %v7346, 5.0
      %v7348 = vmax.f32 %v7343, -5.0
      %v7349 = vmin.f32 %v7348, 5.0
      %v7350 = vmax.f32 %v6868, -3.0
      %v7351 = vmin.f32 %v7350, 3.0
      %v7352 = vsub.f32 %v7351, %v6756
      %v7353 = vstv %s6274
      %v7354 = vrcp.pop %v7353
      %s7355 = vtos %v7354
      %s7356 = smul.f32 %s6273, %s7355
      %v7357 = vstv %s7356
      %v7358 = vmul.f32 %v7357, %v6262
      %v7359 = vmul.f32 %v7358, %v6262
      %s7360 = smul.f32 %s6274, %s6274
      %v7361 = vstv %s7360
      %v7362 = vrcp.pop %v7361
      %s7363 = vtos %v7362
      %s7364 = smul.f32 %s6273, %s7363
      %v7365 = vstv %s7364
      %v7366 = vmul.f32 %v7365, %v7352
      %v7367 = vmul.f32 %v7366, %v7352
      %7369 = vrot.lane.b32.xlu0 %v7367, 112
      %v7370 = vpop.permute.xlu0 %7369
      %v7372 = vadd.f32 %v7359, %v7370
      %v7373 = vrsqrt.pop %v7372
      %v7374 = vmul.f32 %v7372, %v7373
      %vm7375 = vcmp.eq.f32.partialorder %v7372, inf
      %v7376 = vsel %vm7375, %v7372, %v7374
      %vm7377 = vcmp.eq.f32.partialorder %v7372, 0.0
      %v7378 = vand.u32 %v7372, 2147483648
      %v7379 = vsel %vm7377, %v7378, %v7376
      %v7380 = vmul.f32 %v7357, %v6261
      %v7381 = vstv %s6274
      %v7382 = vrcp.pop %v7381
      %s7383 = vtos %v7382
      %v7384 = vstv %s7383
      %v7385 = vmul.f32 %v7384, %v7351
      %7387 = vrot.lane.b32.xlu0 %v7385, 112
      %v7388 = vpop.permute.xlu0 %7387
      %v7390 = vadd.f32 %v7380, %v7388
      %v7391 = vsel %vm1171, %v7347, %v7351
      %7392 = vst.msk [vmem:[#allocation2] sm:$0xff] %vm566, %v7391
      %7393 = vst.msk [vmem:[#allocation3] sm:$0xff] %vm1701, %v7349
      %7394 = vst.msk [vmem:[#allocation4] sm:$0xff] %vm1703, %v7390
      %7395 = vst.msk [vmem:[#allocation5] sm:$0xff] %vm1703, %v7379
      %s7396 = sadd.s32 %s557, 6
      %v7397 = vld [vmem:[#allocation2] sm:$0xff]
      %v7398 = vld [vmem:[#allocation3] sm:$0xff]
      %v7399 = vld [vmem:[#allocation4] sm:$0xff]
      %v7400 = vld [vmem:[#allocation5] sm:$0xff]
      %7402 = vrot.lane.b32.xlu0 %v7398, 24
      %v7403 = vpop.permute.xlu0 %7402
      %v7405 = vsel %vm566, %v7397, %v7403
      %s7406 = smul.u32 %s7396, 8
      %s7407 = scalar_lea.vmem [#allocation11], %s7406
      %7408 = vst.msk [vmem:[%s7407] sm:$0xff] %vm570, %v7405
      %s7409 = sadd.s32 %s550, %s7396
      %s7410 = scvt.s32.f32 %s7409
      %s7411 = sadd.f32 %s7410, 1.0
      %s7412 = sadd.f32 %s7410, 2.0
      %s7413 = scalar_lea.vmem [#allocation9], %s7406
      %v7414 = vld [vmem:[%s7413] sm:$0xff]
      %v7416 = vsel %vm566, %v7397, 0
      %7418 = vmatprep.subr.mxu0 0.0
      %7419 = vmatpush1.msra.mxu0 0.0
      %7420 = vmatprep.subr.mxu0 0.0
      %7421 = vmatpush1.msra.mxu0 0.0
      %7422 = vmatprep.subr.mxu0 0.0
      %7423 = vmatpush1.msra.mxu0 0.0
      %7424 = vmatprep.subr.mxu0 0.0
      %7425 = vmatpush1.msra.mxu0 0.0
      %7426 = vmatprep.subr.mxu0 0.0
      %7427 = vmatpush1.msra.mxu0 0.0
      %7428 = vmatprep.subr.mxu0 0.0
      %7429 = vmatpush1.msra.mxu0 0.0
      %7430 = vmatprep.subr.mxu0 0.0
      %7431 = vmatpush1.msra.mxu0 0.0
      %7432 = vmatprep.subr.mxu0 0.0
      %7433 = vmatpush1.msra.mxu0 0.0
      %7434 = vmatprep.subr.mxu0 0.0
      %7435 = vmatpush1.msra.mxu0 0.0
      %7436 = vmatprep.subr.mxu0 0.0
      %7437 = vmatpush1.msra.mxu0 0.0
      %7438 = vmatprep.subr.mxu0 0.0
      %7439 = vmatpush1.msra.mxu0 0.0
      %7440 = vmatprep.subr.mxu0 0.0
      %7441 = vmatpush1.msra.mxu0 0.0
      %7442 = vmatprep.subr.mxu0 0.0
      %7443 = vmatpush1.msra.mxu0 0.0
      %7444 = vmatprep.subr.mxu0 0.0
      %v7445 = vand.u32 %v49, 4294901760
      %7446 = vmatpush1.msra.mxu0 %v7445
      %7447 = vmatprep.subr.mxu0 0.0
      %v7448 = vand.u32 %v48, 4294901760
      %7449 = vmatpush1.msra.mxu0 %v7448
      %7450 = vmatprep.subr.mxu0 0.0
      %v7451 = vand.u32 %v47, 4294901760
      %7452 = vmatpush1.msra.mxu0 %v7451
      %7453 = vmatprep.subr.mxu0 0.0
      %7454 = vmatpush2.msra.mxu0 0.0
      %7455 = vmatprep.subr.mxu0 0.0
      %7456 = vmatpush2.msra.mxu0 0.0
      %7457 = vmatprep.subr.mxu0 0.0
      %7458 = vmatpush2.msra.mxu0 0.0
      %7459 = vmatprep.subr.mxu0 0.0
      %7460 = vmatpush2.msra.mxu0 0.0
      %7461 = vmatprep.subr.mxu0 0.0
      %7462 = vmatpush2.msra.mxu0 0.0
      %7463 = vmatprep.subr.mxu0 0.0
      %7464 = vmatpush2.msra.mxu0 0.0
      %7465 = vmatprep.subr.mxu0 0.0
      %7466 = vmatpush2.msra.mxu0 0.0
      %7467 = vmatprep.subr.mxu0 0.0
      %7468 = vmatpush2.msra.mxu0 0.0
      %7469 = vmatprep.subr.mxu0 0.0
      %7470 = vmatpush2.msra.mxu0 0.0
      %7471 = vmatprep.subr.mxu0 0.0
      %7472 = vmatpush2.msra.mxu0 0.0
      %7473 = vmatprep.subr.mxu0 0.0
      %7474 = vmatpush2.msra.mxu0 0.0
      %7475 = vmatprep.subr.mxu0 0.0
      %7476 = vmatpush2.msra.mxu0 0.0
      %7477 = vmatprep.subr.mxu0 0.0
      %7478 = vmatpush2.msra.mxu0 0.0
      %7479 = vmatprep.subr.mxu0 0.0
      %7480 = vmatpush2.msra.mxu0 0.0
      %7481 = vmatprep.subr.mxu0 0.0
      %7482 = vmatpush2.msra.mxu0 0.0
      %7483 = vmatprep.subr.mxu0 0.0
      %7484 = vmatpush2.msra.mxu0 0.0
      %7485 = vmatprep.mubr.f32.mxu0 0.0
      %v7486 = vand.u32 %v7416, 4294901760
      %v7487 = vsub.f32 %v7416, %v7486
      %v7488 = vand.u32 %v7487, 4294901760
      %v7489 = vsub.f32 %v7487, %v7488
      %v7490 = vand.u32 %v7489, 4294901760
      %7491 = vmatmul.mubr.f32.gmra.mxu0 %v7490
      %v7492 = vpop.f32.mrf.mxu0
      %v7493 = vadd.f32 %v7414, %v7492
      %v7494 = vpop.f32.mrf.mxu0
      %7495 = vdwg.mxu0
      %7496 = vmatprep.subr.mxu0 0.0
      %7497 = vmatpush1.msra.mxu0 0.0
      %7498 = vmatprep.subr.mxu0 0.0
      %7499 = vmatpush1.msra.mxu0 0.0
      %7500 = vmatprep.subr.mxu0 0.0
      %7501 = vmatpush1.msra.mxu0 0.0
      %7502 = vmatprep.subr.mxu0 0.0
      %7503 = vmatpush1.msra.mxu0 0.0
      %7504 = vmatprep.subr.mxu0 0.0
      %7505 = vmatpush1.msra.mxu0 0.0
      %7506 = vmatprep.subr.mxu0 0.0
      %7507 = vmatpush1.msra.mxu0 0.0
      %7508 = vmatprep.subr.mxu0 0.0
      %7509 = vmatpush1.msra.mxu0 0.0
      %7510 = vmatprep.subr.mxu0 0.0
      %7511 = vmatpush1.msra.mxu0 0.0
      %7512 = vmatprep.subr.mxu0 0.0
      %7513 = vmatpush1.msra.mxu0 0.0
      %7514 = vmatprep.subr.mxu0 0.0
      %7515 = vmatpush1.msra.mxu0 0.0
      %7516 = vmatprep.subr.mxu0 0.0
      %7517 = vmatpush1.msra.mxu0 0.0
      %7518 = vmatprep.subr.mxu0 0.0
      %7519 = vmatpush1.msra.mxu0 0.0
      %7520 = vmatprep.subr.mxu0 0.0
      %7521 = vmatpush1.msra.mxu0 0.0
      %7522 = vmatprep.subr.mxu0 0.0
      %v7523 = vand.u32 %v49, 4294901760
      %v7524 = vsub.f32 %v49, %v7523
      %v7525 = vand.u32 %v7524, 4294901760
      %v7526 = vsub.f32 %v7524, %v7525
      %v7527 = vand.u32 %v7526, 4294901760
      %7528 = vmatpush1.msra.mxu0 %v7527
      %7529 = vmatprep.subr.mxu0 0.0
      %v7530 = vand.u32 %v48, 4294901760
      %v7531 = vsub.f32 %v48, %v7530
      %v7532 = vand.u32 %v7531, 4294901760
      %v7533 = vsub.f32 %v7531, %v7532
      %v7534 = vand.u32 %v7533, 4294901760
      %7535 = vmatpush1.msra.mxu0 %v7534
      %7536 = vmatprep.subr.mxu0 0.0
      %v7537 = vand.u32 %v47, 4294901760
      %v7538 = vsub.f32 %v47, %v7537
      %v7539 = vand.u32 %v7538, 4294901760
      %v7540 = vsub.f32 %v7538, %v7539
      %v7541 = vand.u32 %v7540, 4294901760
      %7542 = vmatpush1.msra.mxu0 %v7541
      %7543 = vmatprep.subr.mxu0 0.0
      %7544 = vmatpush2.msra.mxu0 0.0
      %7545 = vmatprep.subr.mxu0 0.0
      %7546 = vmatpush2.msra.mxu0 0.0
      %7547 = vmatprep.subr.mxu0 0.0
      %7548 = vmatpush2.msra.mxu0 0.0
      %7549 = vmatprep.subr.mxu0 0.0
      %7550 = vmatpush2.msra.mxu0 0.0
      %7551 = vmatprep.subr.mxu0 0.0
      %7552 = vmatpush2.msra.mxu0 0.0
      %7553 = vmatprep.subr.mxu0 0.0
      %7554 = vmatpush2.msra.mxu0 0.0
      %7555 = vmatprep.subr.mxu0 0.0
      %7556 = vmatpush2.msra.mxu0 0.0
      %7557 = vmatprep.subr.mxu0 0.0
      %7558 = vmatpush2.msra.mxu0 0.0
      %7559 = vmatprep.subr.mxu0 0.0
      %7560 = vmatpush2.msra.mxu0 0.0
      %7561 = vmatprep.subr.mxu0 0.0
      %7562 = vmatpush2.msra.mxu0 0.0
      %7563 = vmatprep.subr.mxu0 0.0
      %7564 = vmatpush2.msra.mxu0 0.0
      %7565 = vmatprep.subr.mxu0 0.0
      %7566 = vmatpush2.msra.mxu0 0.0
      %7567 = vmatprep.subr.mxu0 0.0
      %7568 = vmatpush2.msra.mxu0 0.0
      %7569 = vmatprep.subr.mxu0 0.0
      %7570 = vmatpush2.msra.mxu0 0.0
      %7571 = vmatprep.subr.mxu0 0.0
      %7572 = vmatpush2.msra.mxu0 0.0
      %7573 = vmatprep.subr.mxu0 0.0
      %7574 = vmatpush2.msra.mxu0 0.0
      %7575 = vmatprep.mubr.f32.mxu0 0.0
      %v7576 = vand.u32 %v7416, 4294901760
      %7577 = vmatmul.mubr.f32.gmra.mxu0 %v7576
      %v7578 = vpop.f32.mrf.mxu0
      %v7579 = vadd.f32 %v7493, %v7578
      %v7580 = vpop.f32.mrf.mxu0
      %7581 = vdwg.mxu0
      %7582 = vmatprep.subr.mxu0 0.0
      %7583 = vmatpush1.msra.mxu0 0.0
      %7584 = vmatprep.subr.mxu0 0.0
      %7585 = vmatpush1.msra.mxu0 0.0
      %7586 = vmatprep.subr.mxu0 0.0
      %7587 = vmatpush1.msra.mxu0 0.0
      %7588 = vmatprep.subr.mxu0 0.0
      %7589 = vmatpush1.msra.mxu0 0.0
      %7590 = vmatprep.subr.mxu0 0.0
      %7591 = vmatpush1.msra.mxu0 0.0
      %7592 = vmatprep.subr.mxu0 0.0
      %7593 = vmatpush1.msra.mxu0 0.0
      %7594 = vmatprep.subr.mxu0 0.0
      %7595 = vmatpush1.msra.mxu0 0.0
      %7596 = vmatprep.subr.mxu0 0.0
      %7597 = vmatpush1.msra.mxu0 0.0
      %7598 = vmatprep.subr.mxu0 0.0
      %7599 = vmatpush1.msra.mxu0 0.0
      %7600 = vmatprep.subr.mxu0 0.0
      %7601 = vmatpush1.msra.mxu0 0.0
      %7602 = vmatprep.subr.mxu0 0.0
      %7603 = vmatpush1.msra.mxu0 0.0
      %7604 = vmatprep.subr.mxu0 0.0
      %7605 = vmatpush1.msra.mxu0 0.0
      %7606 = vmatprep.subr.mxu0 0.0
      %7607 = vmatpush1.msra.mxu0 0.0
      %7608 = vmatprep.subr.mxu0 0.0
      %v7609 = vand.u32 %v49, 4294901760
      %v7610 = vsub.f32 %v49, %v7609
      %7611 = vmatpush1.msra.mxu0 %v7610
      %7612 = vmatprep.subr.mxu0 0.0
      %v7613 = vand.u32 %v48, 4294901760
      %v7614 = vsub.f32 %v48, %v7613
      %7615 = vmatpush1.msra.mxu0 %v7614
      %7616 = vmatprep.subr.mxu0 0.0
      %v7617 = vand.u32 %v47, 4294901760
      %v7618 = vsub.f32 %v47, %v7617
      %7619 = vmatpush1.msra.mxu0 %v7618
      %7620 = vmatprep.subr.mxu0 0.0
      %7621 = vmatpush2.msra.mxu0 0.0
      %7622 = vmatprep.subr.mxu0 0.0
      %7623 = vmatpush2.msra.mxu0 0.0
      %7624 = vmatprep.subr.mxu0 0.0
      %7625 = vmatpush2.msra.mxu0 0.0
      %7626 = vmatprep.subr.mxu0 0.0
      %7627 = vmatpush2.msra.mxu0 0.0
      %7628 = vmatprep.subr.mxu0 0.0
      %7629 = vmatpush2.msra.mxu0 0.0
      %7630 = vmatprep.subr.mxu0 0.0
      %7631 = vmatpush2.msra.mxu0 0.0
      %7632 = vmatprep.subr.mxu0 0.0
      %7633 = vmatpush2.msra.mxu0 0.0
      %7634 = vmatprep.subr.mxu0 0.0
      %7635 = vmatpush2.msra.mxu0 0.0
      %7636 = vmatprep.subr.mxu0 0.0
      %7637 = vmatpush2.msra.mxu0 0.0
      %7638 = vmatprep.subr.mxu0 0.0
      %7639 = vmatpush2.msra.mxu0 0.0
      %7640 = vmatprep.subr.mxu0 0.0
      %7641 = vmatpush2.msra.mxu0 0.0
      %7642 = vmatprep.subr.mxu0 0.0
      %7643 = vmatpush2.msra.mxu0 0.0
      %7644 = vmatprep.subr.mxu0 0.0
      %7645 = vmatpush2.msra.mxu0 0.0
      %7646 = vmatprep.subr.mxu0 0.0
      %7647 = vmatpush2.msra.mxu0 0.0
      %7648 = vmatprep.subr.mxu0 0.0
      %7649 = vmatpush2.msra.mxu0 0.0
      %7650 = vmatprep.subr.mxu0 0.0
      %7651 = vmatpush2.msra.mxu0 0.0
      %7652 = vmatprep.mubr.f32.mxu0 0.0
      %v7653 = vand.u32 %v7416, 4294901760
      %v7654 = vsub.f32 %v7416, %v7653
      %7655 = vmatmul.mubr.f32.gmra.mxu0 %v7654
      %v7656 = vpop.f32.mrf.mxu0
      %v7657 = vadd.f32 %v7579, %v7656
      %v7658 = vpop.f32.mrf.mxu0
      %7659 = vdwg.mxu0
      %7660 = vmatprep.subr.mxu0 0.0
      %7661 = vmatpush1.msra.mxu0 0.0
      %7662 = vmatprep.subr.mxu0 0.0
      %7663 = vmatpush1.msra.mxu0 0.0
      %7664 = vmatprep.subr.mxu0 0.0
      %7665 = vmatpush1.msra.mxu0 0.0
      %7666 = vmatprep.subr.mxu0 0.0
      %7667 = vmatpush1.msra.mxu0 0.0
      %7668 = vmatprep.subr.mxu0 0.0
      %7669 = vmatpush1.msra.mxu0 0.0
      %7670 = vmatprep.subr.mxu0 0.0
      %7671 = vmatpush1.msra.mxu0 0.0
      %7672 = vmatprep.subr.mxu0 0.0
      %7673 = vmatpush1.msra.mxu0 0.0
      %7674 = vmatprep.subr.mxu0 0.0
      %7675 = vmatpush1.msra.mxu0 0.0
      %7676 = vmatprep.subr.mxu0 0.0
      %7677 = vmatpush1.msra.mxu0 0.0
      %7678 = vmatprep.subr.mxu0 0.0
      %7679 = vmatpush1.msra.mxu0 0.0
      %7680 = vmatprep.subr.mxu0 0.0
      %7681 = vmatpush1.msra.mxu0 0.0
      %7682 = vmatprep.subr.mxu0 0.0
      %7683 = vmatpush1.msra.mxu0 0.0
      %7684 = vmatprep.subr.mxu0 0.0
      %7685 = vmatpush1.msra.mxu0 0.0
      %7686 = vmatprep.subr.mxu0 0.0
      %v7687 = vand.u32 %v49, 4294901760
      %7688 = vmatpush1.msra.mxu0 %v7687
      %7689 = vmatprep.subr.mxu0 0.0
      %v7690 = vand.u32 %v48, 4294901760
      %7691 = vmatpush1.msra.mxu0 %v7690
      %7692 = vmatprep.subr.mxu0 0.0
      %v7693 = vand.u32 %v47, 4294901760
      %7694 = vmatpush1.msra.mxu0 %v7693
      %7695 = vmatprep.subr.mxu0 0.0
      %7696 = vmatpush2.msra.mxu0 0.0
      %7697 = vmatprep.subr.mxu0 0.0
      %7698 = vmatpush2.msra.mxu0 0.0
      %7699 = vmatprep.subr.mxu0 0.0
      %7700 = vmatpush2.msra.mxu0 0.0
      %7701 = vmatprep.subr.mxu0 0.0
      %7702 = vmatpush2.msra.mxu0 0.0
      %7703 = vmatprep.subr.mxu0 0.0
      %7704 = vmatpush2.msra.mxu0 0.0
      %7705 = vmatprep.subr.mxu0 0.0
      %7706 = vmatpush2.msra.mxu0 0.0
      %7707 = vmatprep.subr.mxu0 0.0
      %7708 = vmatpush2.msra.mxu0 0.0
      %7709 = vmatprep.subr.mxu0 0.0
      %7710 = vmatpush2.msra.mxu0 0.0
      %7711 = vmatprep.subr.mxu0 0.0
      %7712 = vmatpush2.msra.mxu0 0.0
      %7713 = vmatprep.subr.mxu0 0.0
      %7714 = vmatpush2.msra.mxu0 0.0
      %7715 = vmatprep.subr.mxu0 0.0
      %7716 = vmatpush2.msra.mxu0 0.0
      %7717 = vmatprep.subr.mxu0 0.0
      %7718 = vmatpush2.msra.mxu0 0.0
      %7719 = vmatprep.subr.mxu0 0.0
      %7720 = vmatpush2.msra.mxu0 0.0
      %7721 = vmatprep.subr.mxu0 0.0
      %7722 = vmatpush2.msra.mxu0 0.0
      %7723 = vmatprep.subr.mxu0 0.0
      %7724 = vmatpush2.msra.mxu0 0.0
      %7725 = vmatprep.subr.mxu0 0.0
      %7726 = vmatpush2.msra.mxu0 0.0
      %7727 = vmatprep.mubr.f32.mxu0 0.0
      %v7728 = vand.u32 %v7416, 4294901760
      %v7729 = vsub.f32 %v7416, %v7728
      %v7730 = vand.u32 %v7729, 4294901760
      %7731 = vmatmul.mubr.f32.gmra.mxu0 %v7730
      %v7732 = vpop.f32.mrf.mxu0
      %v7733 = vadd.f32 %v7657, %v7732
      %v7734 = vpop.f32.mrf.mxu0
      %7735 = vdwg.mxu0
      %7736 = vmatprep.subr.mxu0 0.0
      %7737 = vmatpush1.msra.mxu0 0.0
      %7738 = vmatprep.subr.mxu0 0.0
      %7739 = vmatpush1.msra.mxu0 0.0
      %7740 = vmatprep.subr.mxu0 0.0
      %7741 = vmatpush1.msra.mxu0 0.0
      %7742 = vmatprep.subr.mxu0 0.0
      %7743 = vmatpush1.msra.mxu0 0.0
      %7744 = vmatprep.subr.mxu0 0.0
      %7745 = vmatpush1.msra.mxu0 0.0
      %7746 = vmatprep.subr.mxu0 0.0
      %7747 = vmatpush1.msra.mxu0 0.0
      %7748 = vmatprep.subr.mxu0 0.0
      %7749 = vmatpush1.msra.mxu0 0.0
      %7750 = vmatprep.subr.mxu0 0.0
      %7751 = vmatpush1.msra.mxu0 0.0
      %7752 = vmatprep.subr.mxu0 0.0
      %7753 = vmatpush1.msra.mxu0 0.0
      %7754 = vmatprep.subr.mxu0 0.0
      %7755 = vmatpush1.msra.mxu0 0.0
      %7756 = vmatprep.subr.mxu0 0.0
      %7757 = vmatpush1.msra.mxu0 0.0
      %7758 = vmatprep.subr.mxu0 0.0
      %7759 = vmatpush1.msra.mxu0 0.0
      %7760 = vmatprep.subr.mxu0 0.0
      %7761 = vmatpush1.msra.mxu0 0.0
      %7762 = vmatprep.subr.mxu0 0.0
      %v7763 = vand.u32 %v49, 4294901760
      %v7764 = vsub.f32 %v49, %v7763
      %v7765 = vand.u32 %v7764, 4294901760
      %7766 = vmatpush1.msra.mxu0 %v7765
      %7767 = vmatprep.subr.mxu0 0.0
      %v7768 = vand.u32 %v48, 4294901760
      %v7769 = vsub.f32 %v48, %v7768
      %v7770 = vand.u32 %v7769, 4294901760
      %7771 = vmatpush1.msra.mxu0 %v7770
      %7772 = vmatprep.subr.mxu0 0.0
      %v7773 = vand.u32 %v47, 4294901760
      %v7774 = vsub.f32 %v47, %v7773
      %v7775 = vand.u32 %v7774, 4294901760
      %7776 = vmatpush1.msra.mxu0 %v7775
      %7777 = vmatprep.subr.mxu0 0.0
      %7778 = vmatpush2.msra.mxu0 0.0
      %7779 = vmatprep.subr.mxu0 0.0
      %7780 = vmatpush2.msra.mxu0 0.0
      %7781 = vmatprep.subr.mxu0 0.0
      %7782 = vmatpush2.msra.mxu0 0.0
      %7783 = vmatprep.subr.mxu0 0.0
      %7784 = vmatpush2.msra.mxu0 0.0
      %7785 = vmatprep.subr.mxu0 0.0
      %7786 = vmatpush2.msra.mxu0 0.0
      %7787 = vmatprep.subr.mxu0 0.0
      %7788 = vmatpush2.msra.mxu0 0.0
      %7789 = vmatprep.subr.mxu0 0.0
      %7790 = vmatpush2.msra.mxu0 0.0
      %7791 = vmatprep.subr.mxu0 0.0
      %7792 = vmatpush2.msra.mxu0 0.0
      %7793 = vmatprep.subr.mxu0 0.0
      %7794 = vmatpush2.msra.mxu0 0.0
      %7795 = vmatprep.subr.mxu0 0.0
      %7796 = vmatpush2.msra.mxu0 0.0
      %7797 = vmatprep.subr.mxu0 0.0
      %7798 = vmatpush2.msra.mxu0 0.0
      %7799 = vmatprep.subr.mxu0 0.0
      %7800 = vmatpush2.msra.mxu0 0.0
      %7801 = vmatprep.subr.mxu0 0.0
      %7802 = vmatpush2.msra.mxu0 0.0
      %7803 = vmatprep.subr.mxu0 0.0
      %7804 = vmatpush2.msra.mxu0 0.0
      %7805 = vmatprep.subr.mxu0 0.0
      %7806 = vmatpush2.msra.mxu0 0.0
      %7807 = vmatprep.subr.mxu0 0.0
      %7808 = vmatpush2.msra.mxu0 0.0
      %7809 = vmatprep.mubr.f32.mxu0 0.0
      %v7810 = vand.u32 %v7416, 4294901760
      %7811 = vmatmul.mubr.f32.gmra.mxu0 %v7810
      %v7812 = vpop.f32.mrf.mxu0
      %v7813 = vadd.f32 %v7733, %v7812
      %v7814 = vpop.f32.mrf.mxu0
      %7815 = vdwg.mxu0
      %7816 = vmatprep.subr.mxu0 0.0
      %7817 = vmatpush1.msra.mxu0 0.0
      %7818 = vmatprep.subr.mxu0 0.0
      %7819 = vmatpush1.msra.mxu0 0.0
      %7820 = vmatprep.subr.mxu0 0.0
      %7821 = vmatpush1.msra.mxu0 0.0
      %7822 = vmatprep.subr.mxu0 0.0
      %7823 = vmatpush1.msra.mxu0 0.0
      %7824 = vmatprep.subr.mxu0 0.0
      %7825 = vmatpush1.msra.mxu0 0.0
      %7826 = vmatprep.subr.mxu0 0.0
      %7827 = vmatpush1.msra.mxu0 0.0
      %7828 = vmatprep.subr.mxu0 0.0
      %7829 = vmatpush1.msra.mxu0 0.0
      %7830 = vmatprep.subr.mxu0 0.0
      %7831 = vmatpush1.msra.mxu0 0.0
      %7832 = vmatprep.subr.mxu0 0.0
      %7833 = vmatpush1.msra.mxu0 0.0
      %7834 = vmatprep.subr.mxu0 0.0
      %7835 = vmatpush1.msra.mxu0 0.0
      %7836 = vmatprep.subr.mxu0 0.0
      %7837 = vmatpush1.msra.mxu0 0.0
      %7838 = vmatprep.subr.mxu0 0.0
      %7839 = vmatpush1.msra.mxu0 0.0
      %7840 = vmatprep.subr.mxu0 0.0
      %7841 = vmatpush1.msra.mxu0 0.0
      %7842 = vmatprep.subr.mxu0 0.0
      %v7843 = vand.u32 %v49, 4294901760
      %7844 = vmatpush1.msra.mxu0 %v7843
      %7845 = vmatprep.subr.mxu0 0.0
      %v7846 = vand.u32 %v48, 4294901760
      %7847 = vmatpush1.msra.mxu0 %v7846
      %7848 = vmatprep.subr.mxu0 0.0
      %v7849 = vand.u32 %v47, 4294901760
      %7850 = vmatpush1.msra.mxu0 %v7849
      %7851 = vmatprep.subr.mxu0 0.0
      %7852 = vmatpush2.msra.mxu0 0.0
      %7853 = vmatprep.subr.mxu0 0.0
      %7854 = vmatpush2.msra.mxu0 0.0
      %7855 = vmatprep.subr.mxu0 0.0
      %7856 = vmatpush2.msra.mxu0 0.0
      %7857 = vmatprep.subr.mxu0 0.0
      %7858 = vmatpush2.msra.mxu0 0.0
      %7859 = vmatprep.subr.mxu0 0.0
      %7860 = vmatpush2.msra.mxu0 0.0
      %7861 = vmatprep.subr.mxu0 0.0
      %7862 = vmatpush2.msra.mxu0 0.0
      %7863 = vmatprep.subr.mxu0 0.0
      %7864 = vmatpush2.msra.mxu0 0.0
      %7865 = vmatprep.subr.mxu0 0.0
      %7866 = vmatpush2.msra.mxu0 0.0
      %7867 = vmatprep.subr.mxu0 0.0
      %7868 = vmatpush2.msra.mxu0 0.0
      %7869 = vmatprep.subr.mxu0 0.0
      %7870 = vmatpush2.msra.mxu0 0.0
      %7871 = vmatprep.subr.mxu0 0.0
      %7872 = vmatpush2.msra.mxu0 0.0
      %7873 = vmatprep.subr.mxu0 0.0
      %7874 = vmatpush2.msra.mxu0 0.0
      %7875 = vmatprep.subr.mxu0 0.0
      %7876 = vmatpush2.msra.mxu0 0.0
      %7877 = vmatprep.subr.mxu0 0.0
      %7878 = vmatpush2.msra.mxu0 0.0
      %7879 = vmatprep.subr.mxu0 0.0
      %7880 = vmatpush2.msra.mxu0 0.0
      %7881 = vmatprep.subr.mxu0 0.0
      %7882 = vmatpush2.msra.mxu0 0.0
      %7883 = vmatprep.mubr.f32.mxu0 0.0
      %v7884 = vand.u32 %v7416, 4294901760
      %7885 = vmatmul.mubr.f32.gmra.mxu0 %v7884
      %v7886 = vpop.f32.mrf.mxu0
      %v7887 = vadd.f32 %v7813, %v7886
      %v7888 = vpop.f32.mrf.mxu0
      %7889 = vdwg.mxu0
      %v7890 = vrcp.pop %v7400
      %v7891 = vmul.f32 1.0, %v7890
      %7893 = vrot.lane.b32.xlu0 %v7399, 16
      %v7894 = vpop.permute.xlu0 %7893
      %v7896 = vsub.f32 %v7397, %v7894
      %v7897 = vadd.f32 %v7891, 1.0
      %v7898 = vmul.f32 %v7887, 0.5
      %7900 = vrot.lane.b32.xlu0 %v7897, 16
      %v7901 = vpop.permute.xlu0 %7900
      %v7903 = vmul.f32 %v7898, %v7901
      %v7904 = vadd.f32 %v7896, %v7903
      %v7905 = vmul.f32 %v7887, %v7904
      %v7906 = vsub.f32 1.0, %v7891
      %7908 = vrot.lane.b32.xlu0 %v7906, 16
      %v7909 = vpop.permute.xlu0 %7908
      %v7911 = vmul.f32 %v7905, %v7909
      %v7912 = vmul.f32 %v7400, %v7400
      %v7913 = vstv %s7411
      %v7914 = vrcp.pop %v7913
      %s7915 = vtos %v7914
      %s7916 = smul.f32 %s7412, %s7915
      %v7917 = vstv %s7916
      %v7918 = vsub.f32 %v7912, %v7917
      %v7919 = vstv %s7412
      %v7920 = vmul.f32 %v7919, %v7918
      %v7921 = vmul.f32 %v7887, %v7901
      %v7922 = vadd.f32 %v7896, %v7921
      %v7923 = vmul.f32 %v7898, %v7887
      %v7924 = vmul.f32 %v7891, %v7891
      %v7925 = vadd.f32 %v7924, 1.0
      %7927 = vrot.lane.b32.xlu0 %v7925, 16
      %v7928 = vpop.permute.xlu0 %7927
      %v7930 = vmul.f32 %v7923, %v7928
      %v7931 = vadd.f32 %v7922, %v7930
      %v7932 = vmul.f32 %v7896, %v7931
      %7934 = vrot.lane.b32.xlu0 %v7932, 112
      %v7935 = vpop.permute.xlu0 %7934
      %v7937 = vadd.f32 %v7920, %v7935
      %7939 = vrot.lane.b32.xlu0 %v7911, 112
      %v7940 = vpop.permute.xlu0 %7939
      %vm7942 = vcmp.ge.f32.partialorder %v7937, %v7940
      %vm7943 = vcmp.ge.f32.partialorder %v7911, 0.0
      %v7944 = vsel %vm7943, 1, 0
      %7945 = vrot.lane.b32.xlu0 %v7944, 112
      %v7946 = vpop.permute.xlu0 %7945
      %vm7947 = vcmp.ne.s32.totalorder %v7946, 0
      %vm7948 = vmand %vm7942, %vm7947
      %vm7949 = vcmp.lt.f32.partialorder %v7937, %v7940
      %vm7950 = vcmp.lt.f32.partialorder %v7911, 0.0
      %v7951 = vsel %vm7950, 1, 0
      %7952 = vrot.lane.b32.xlu0 %v7951, 112
      %v7953 = vpop.permute.xlu0 %7952
      %vm7954 = vcmp.ne.s32.totalorder %v7953, 0
      %vm7955 = vmand %vm7949, %vm7954
      %7957 = vrot.lane.b32.xlu0 %v7937, 16
      %v7958 = vpop.permute.xlu0 %7957
      %vm7960 = vcmp.lt.f32.partialorder %v7911, %v7958
      %vm7961 = vcmp.lt.f32.partialorder %v7937, 0.0
      %v7962 = vsel %vm7961, 1, 0
      %7963 = vrot.lane.b32.xlu0 %v7962, 16
      %v7964 = vpop.permute.xlu0 %7963
      %vm7965 = vcmp.ne.s32.totalorder %v7964, 0
      %vm7966 = vmand %vm7960, %vm7965
      %v7967 = vmul.f32 %v7911, %v7911
      %v7968 = vmul.f32 %v7937, %v7937
      %7970 = vrot.lane.b32.xlu0 %v7968, 16
      %v7971 = vpop.permute.xlu0 %7970
      %v7973 = vsub.f32 %v7967, %v7971
      %s7974 = smul.f32 %s7412, 2.0
      %s7975 = smul.f32 %s7974, %s7412
      %v7976 = vstv %s7411
      %v7977 = vrcp.pop %v7976
      %s7978 = vtos %v7977
      %s7979 = smul.f32 %s7975, %s7978
      %v7980 = vstv %s7979
      %v7981 = vmul.f32 %v7980, %v7937
      %7983 = vrot.lane.b32.xlu0 %v7973, 112
      %v7984 = vpop.permute.xlu0 %7983
      %vm7986 = vcmp.ge.f32.partialorder %v7981, %v7984
      %vm7987 = vcmp.gt.f32.partialorder %v7973, 0.0
      %v7988 = vsel %vm7987, 1, 0
      %7989 = vrot.lane.b32.xlu0 %v7988, 112
      %v7990 = vpop.permute.xlu0 %7989
      %vm7991 = vcmp.ne.s32.totalorder %v7990, 0
      %vm7992 = vmand %vm7986, %vm7991
      %vm7993 = vmor %vm7948, %vm7955
      %v7994 = vsel %vm7966, 1, 0
      %7995 = vrot.lane.b32.xlu0 %v7994, 112
      %v7996 = vpop.permute.xlu0 %7995
      %vm7997 = vcmp.ne.s32.totalorder %v7996, 0
      %vm7998 = vmor %vm7993, %vm7997
      %vm7999 = vmor %vm7998, %vm7992
      %v8000 = vsel %vm7999, %v7891, 1.0
      %8002 = vrot.lane.b32.xlu0 %v8000, 16
      %v8003 = vpop.permute.xlu0 %8002
      %v8005 = vmul.f32 %v7887, %v8003
      %v8006 = vadd.f32 %v7397, %v8005
      %v8007 = vadd.f32 %v7397, %v7887
      %v8008 = vsel %vm1171, %v8007, %v8006
      %v8010 = vsel %vm566, %v8008, 0
      %8012 = vmatprep.subr.mxu0 0.0
      %8013 = vmatpush1.msra.mxu0 0.0
      %8014 = vmatprep.subr.mxu0 0.0
      %8015 = vmatpush1.msra.mxu0 0.0
      %8016 = vmatprep.subr.mxu0 0.0
      %8017 = vmatpush1.msra.mxu0 0.0
      %8018 = vmatprep.subr.mxu0 0.0
      %8019 = vmatpush1.msra.mxu0 0.0
      %8020 = vmatprep.subr.mxu0 0.0
      %8021 = vmatpush1.msra.mxu0 0.0
      %8022 = vmatprep.subr.mxu0 0.0
      %8023 = vmatpush1.msra.mxu0 0.0
      %8024 = vmatprep.subr.mxu0 0.0
      %8025 = vmatpush1.msra.mxu0 0.0
      %8026 = vmatprep.subr.mxu0 0.0
      %8027 = vmatpush1.msra.mxu0 0.0
      %8028 = vmatprep.subr.mxu0 0.0
      %8029 = vmatpush1.msra.mxu0 0.0
      %8030 = vmatprep.subr.mxu0 0.0
      %8031 = vmatpush1.msra.mxu0 0.0
      %8032 = vmatprep.subr.mxu0 0.0
      %8033 = vmatpush1.msra.mxu0 0.0
      %8034 = vmatprep.subr.mxu0 0.0
      %8035 = vmatpush1.msra.mxu0 0.0
      %8036 = vmatprep.subr.mxu0 0.0
      %8037 = vmatpush1.msra.mxu0 0.0
      %8038 = vmatprep.subr.mxu0 0.0
      %v8039 = vand.u32 %v52, 4294901760
      %8040 = vmatpush1.msra.mxu0 %v8039
      %8041 = vmatprep.subr.mxu0 0.0
      %v8042 = vand.u32 %v51, 4294901760
      %8043 = vmatpush1.msra.mxu0 %v8042
      %8044 = vmatprep.subr.mxu0 0.0
      %v8045 = vand.u32 %v50, 4294901760
      %8046 = vmatpush1.msra.mxu0 %v8045
      %8047 = vmatprep.subr.mxu0 0.0
      %8048 = vmatpush2.msra.mxu0 0.0
      %8049 = vmatprep.subr.mxu0 0.0
      %8050 = vmatpush2.msra.mxu0 0.0
      %8051 = vmatprep.subr.mxu0 0.0
      %8052 = vmatpush2.msra.mxu0 0.0
      %8053 = vmatprep.subr.mxu0 0.0
      %8054 = vmatpush2.msra.mxu0 0.0
      %8055 = vmatprep.subr.mxu0 0.0
      %8056 = vmatpush2.msra.mxu0 0.0
      %8057 = vmatprep.subr.mxu0 0.0
      %8058 = vmatpush2.msra.mxu0 0.0
      %8059 = vmatprep.subr.mxu0 0.0
      %8060 = vmatpush2.msra.mxu0 0.0
      %8061 = vmatprep.subr.mxu0 0.0
      %8062 = vmatpush2.msra.mxu0 0.0
      %8063 = vmatprep.subr.mxu0 0.0
      %8064 = vmatpush2.msra.mxu0 0.0
      %8065 = vmatprep.subr.mxu0 0.0
      %8066 = vmatpush2.msra.mxu0 0.0
      %8067 = vmatprep.subr.mxu0 0.0
      %8068 = vmatpush2.msra.mxu0 0.0
      %8069 = vmatprep.subr.mxu0 0.0
      %8070 = vmatpush2.msra.mxu0 0.0
      %8071 = vmatprep.subr.mxu0 0.0
      %8072 = vmatpush2.msra.mxu0 0.0
      %8073 = vmatprep.subr.mxu0 0.0
      %8074 = vmatpush2.msra.mxu0 0.0
      %8075 = vmatprep.subr.mxu0 0.0
      %8076 = vmatpush2.msra.mxu0 0.0
      %8077 = vmatprep.subr.mxu0 0.0
      %8078 = vmatpush2.msra.mxu0 0.0
      %8079 = vmatprep.mubr.f32.mxu0 0.0
      %v8080 = vand.u32 %v8010, 4294901760
      %v8081 = vsub.f32 %v8010, %v8080
      %v8082 = vand.u32 %v8081, 4294901760
      %v8083 = vsub.f32 %v8081, %v8082
      %v8084 = vand.u32 %v8083, 4294901760
      %8085 = vmatmul.mubr.f32.gmra.mxu0 %v8084
      %v8086 = vpop.f32.mrf.mxu0
      %v8087 = vadd.f32 %v1177, %v8086
      %v8088 = vpop.f32.mrf.mxu0
      %8089 = vdwg.mxu0
      %8090 = vmatprep.subr.mxu0 0.0
      %8091 = vmatpush1.msra.mxu0 0.0
      %8092 = vmatprep.subr.mxu0 0.0
      %8093 = vmatpush1.msra.mxu0 0.0
      %8094 = vmatprep.subr.mxu0 0.0
      %8095 = vmatpush1.msra.mxu0 0.0
      %8096 = vmatprep.subr.mxu0 0.0
      %8097 = vmatpush1.msra.mxu0 0.0
      %8098 = vmatprep.subr.mxu0 0.0
      %8099 = vmatpush1.msra.mxu0 0.0
      %8100 = vmatprep.subr.mxu0 0.0
      %8101 = vmatpush1.msra.mxu0 0.0
      %8102 = vmatprep.subr.mxu0 0.0
      %8103 = vmatpush1.msra.mxu0 0.0
      %8104 = vmatprep.subr.mxu0 0.0
      %8105 = vmatpush1.msra.mxu0 0.0
      %8106 = vmatprep.subr.mxu0 0.0
      %8107 = vmatpush1.msra.mxu0 0.0
      %8108 = vmatprep.subr.mxu0 0.0
      %8109 = vmatpush1.msra.mxu0 0.0
      %8110 = vmatprep.subr.mxu0 0.0
      %8111 = vmatpush1.msra.mxu0 0.0
      %8112 = vmatprep.subr.mxu0 0.0
      %8113 = vmatpush1.msra.mxu0 0.0
      %8114 = vmatprep.subr.mxu0 0.0
      %8115 = vmatpush1.msra.mxu0 0.0
      %8116 = vmatprep.subr.mxu0 0.0
      %v8117 = vand.u32 %v52, 4294901760
      %v8118 = vsub.f32 %v52, %v8117
      %v8119 = vand.u32 %v8118, 4294901760
      %v8120 = vsub.f32 %v8118, %v8119
      %v8121 = vand.u32 %v8120, 4294901760
      %8122 = vmatpush1.msra.mxu0 %v8121
      %8123 = vmatprep.subr.mxu0 0.0
      %v8124 = vand.u32 %v51, 4294901760
      %v8125 = vsub.f32 %v51, %v8124
      %v8126 = vand.u32 %v8125, 4294901760
      %v8127 = vsub.f32 %v8125, %v8126
      %v8128 = vand.u32 %v8127, 4294901760
      %8129 = vmatpush1.msra.mxu0 %v8128
      %8130 = vmatprep.subr.mxu0 0.0
      %v8131 = vand.u32 %v50, 4294901760
      %v8132 = vsub.f32 %v50, %v8131
      %v8133 = vand.u32 %v8132, 4294901760
      %v8134 = vsub.f32 %v8132, %v8133
      %v8135 = vand.u32 %v8134, 4294901760
      %8136 = vmatpush1.msra.mxu0 %v8135
      %8137 = vmatprep.subr.mxu0 0.0
      %8138 = vmatpush2.msra.mxu0 0.0
      %8139 = vmatprep.subr.mxu0 0.0
      %8140 = vmatpush2.msra.mxu0 0.0
      %8141 = vmatprep.subr.mxu0 0.0
      %8142 = vmatpush2.msra.mxu0 0.0
      %8143 = vmatprep.subr.mxu0 0.0
      %8144 = vmatpush2.msra.mxu0 0.0
      %8145 = vmatprep.subr.mxu0 0.0
      %8146 = vmatpush2.msra.mxu0 0.0
      %8147 = vmatprep.subr.mxu0 0.0
      %8148 = vmatpush2.msra.mxu0 0.0
      %8149 = vmatprep.subr.mxu0 0.0
      %8150 = vmatpush2.msra.mxu0 0.0
      %8151 = vmatprep.subr.mxu0 0.0
      %8152 = vmatpush2.msra.mxu0 0.0
      %8153 = vmatprep.subr.mxu0 0.0
      %8154 = vmatpush2.msra.mxu0 0.0
      %8155 = vmatprep.subr.mxu0 0.0
      %8156 = vmatpush2.msra.mxu0 0.0
      %8157 = vmatprep.subr.mxu0 0.0
      %8158 = vmatpush2.msra.mxu0 0.0
      %8159 = vmatprep.subr.mxu0 0.0
      %8160 = vmatpush2.msra.mxu0 0.0
      %8161 = vmatprep.subr.mxu0 0.0
      %8162 = vmatpush2.msra.mxu0 0.0
      %8163 = vmatprep.subr.mxu0 0.0
      %8164 = vmatpush2.msra.mxu0 0.0
      %8165 = vmatprep.subr.mxu0 0.0
      %8166 = vmatpush2.msra.mxu0 0.0
      %8167 = vmatprep.subr.mxu0 0.0
      %8168 = vmatpush2.msra.mxu0 0.0
      %8169 = vmatprep.mubr.f32.mxu0 0.0
      %v8170 = vand.u32 %v8010, 4294901760
      %8171 = vmatmul.mubr.f32.gmra.mxu0 %v8170
      %v8172 = vpop.f32.mrf.mxu0
      %v8173 = vadd.f32 %v8087, %v8172
      %v8174 = vpop.f32.mrf.mxu0
      %8175 = vdwg.mxu0
      %8176 = vmatprep.subr.mxu0 0.0
      %8177 = vmatpush1.msra.mxu0 0.0
      %8178 = vmatprep.subr.mxu0 0.0
      %8179 = vmatpush1.msra.mxu0 0.0
      %8180 = vmatprep.subr.mxu0 0.0
      %8181 = vmatpush1.msra.mxu0 0.0
      %8182 = vmatprep.subr.mxu0 0.0
      %8183 = vmatpush1.msra.mxu0 0.0
      %8184 = vmatprep.subr.mxu0 0.0
      %8185 = vmatpush1.msra.mxu0 0.0
      %8186 = vmatprep.subr.mxu0 0.0
      %8187 = vmatpush1.msra.mxu0 0.0
      %8188 = vmatprep.subr.mxu0 0.0
      %8189 = vmatpush1.msra.mxu0 0.0
      %8190 = vmatprep.subr.mxu0 0.0
      %8191 = vmatpush1.msra.mxu0 0.0
      %8192 = vmatprep.subr.mxu0 0.0
      %8193 = vmatpush1.msra.mxu0 0.0
      %8194 = vmatprep.subr.mxu0 0.0
      %8195 = vmatpush1.msra.mxu0 0.0
      %8196 = vmatprep.subr.mxu0 0.0
      %8197 = vmatpush1.msra.mxu0 0.0
      %8198 = vmatprep.subr.mxu0 0.0
      %8199 = vmatpush1.msra.mxu0 0.0
      %8200 = vmatprep.subr.mxu0 0.0
      %8201 = vmatpush1.msra.mxu0 0.0
      %8202 = vmatprep.subr.mxu0 0.0
      %v8203 = vand.u32 %v52, 4294901760
      %v8204 = vsub.f32 %v52, %v8203
      %8205 = vmatpush1.msra.mxu0 %v8204
      %8206 = vmatprep.subr.mxu0 0.0
      %v8207 = vand.u32 %v51, 4294901760
      %v8208 = vsub.f32 %v51, %v8207
      %8209 = vmatpush1.msra.mxu0 %v8208
      %8210 = vmatprep.subr.mxu0 0.0
      %v8211 = vand.u32 %v50, 4294901760
      %v8212 = vsub.f32 %v50, %v8211
      %8213 = vmatpush1.msra.mxu0 %v8212
      %8214 = vmatprep.subr.mxu0 0.0
      %8215 = vmatpush2.msra.mxu0 0.0
      %8216 = vmatprep.subr.mxu0 0.0
      %8217 = vmatpush2.msra.mxu0 0.0
      %8218 = vmatprep.subr.mxu0 0.0
      %8219 = vmatpush2.msra.mxu0 0.0
      %8220 = vmatprep.subr.mxu0 0.0
      %8221 = vmatpush2.msra.mxu0 0.0
      %8222 = vmatprep.subr.mxu0 0.0
      %8223 = vmatpush2.msra.mxu0 0.0
      %8224 = vmatprep.subr.mxu0 0.0
      %8225 = vmatpush2.msra.mxu0 0.0
      %8226 = vmatprep.subr.mxu0 0.0
      %8227 = vmatpush2.msra.mxu0 0.0
      %8228 = vmatprep.subr.mxu0 0.0
      %8229 = vmatpush2.msra.mxu0 0.0
      %8230 = vmatprep.subr.mxu0 0.0
      %8231 = vmatpush2.msra.mxu0 0.0
      %8232 = vmatprep.subr.mxu0 0.0
      %8233 = vmatpush2.msra.mxu0 0.0
      %8234 = vmatprep.subr.mxu0 0.0
      %8235 = vmatpush2.msra.mxu0 0.0
      %8236 = vmatprep.subr.mxu0 0.0
      %8237 = vmatpush2.msra.mxu0 0.0
      %8238 = vmatprep.subr.mxu0 0.0
      %8239 = vmatpush2.msra.mxu0 0.0
      %8240 = vmatprep.subr.mxu0 0.0
      %8241 = vmatpush2.msra.mxu0 0.0
      %8242 = vmatprep.subr.mxu0 0.0
      %8243 = vmatpush2.msra.mxu0 0.0
      %8244 = vmatprep.subr.mxu0 0.0
      %8245 = vmatpush2.msra.mxu0 0.0
      %8246 = vmatprep.mubr.f32.mxu0 0.0
      %v8247 = vand.u32 %v8010, 4294901760
      %v8248 = vsub.f32 %v8010, %v8247
      %8249 = vmatmul.mubr.f32.gmra.mxu0 %v8248
      %v8250 = vpop.f32.mrf.mxu0
      %v8251 = vadd.f32 %v8173, %v8250
      %v8252 = vpop.f32.mrf.mxu0
      %8253 = vdwg.mxu0
      %8254 = vmatprep.subr.mxu0 0.0
      %8255 = vmatpush1.msra.mxu0 0.0
      %8256 = vmatprep.subr.mxu0 0.0
      %8257 = vmatpush1.msra.mxu0 0.0
      %8258 = vmatprep.subr.mxu0 0.0
      %8259 = vmatpush1.msra.mxu0 0.0
      %8260 = vmatprep.subr.mxu0 0.0
      %8261 = vmatpush1.msra.mxu0 0.0
      %8262 = vmatprep.subr.mxu0 0.0
      %8263 = vmatpush1.msra.mxu0 0.0
      %8264 = vmatprep.subr.mxu0 0.0
      %8265 = vmatpush1.msra.mxu0 0.0
      %8266 = vmatprep.subr.mxu0 0.0
      %8267 = vmatpush1.msra.mxu0 0.0
      %8268 = vmatprep.subr.mxu0 0.0
      %8269 = vmatpush1.msra.mxu0 0.0
      %8270 = vmatprep.subr.mxu0 0.0
      %8271 = vmatpush1.msra.mxu0 0.0
      %8272 = vmatprep.subr.mxu0 0.0
      %8273 = vmatpush1.msra.mxu0 0.0
      %8274 = vmatprep.subr.mxu0 0.0
      %8275 = vmatpush1.msra.mxu0 0.0
      %8276 = vmatprep.subr.mxu0 0.0
      %8277 = vmatpush1.msra.mxu0 0.0
      %8278 = vmatprep.subr.mxu0 0.0
      %8279 = vmatpush1.msra.mxu0 0.0
      %8280 = vmatprep.subr.mxu0 0.0
      %v8281 = vand.u32 %v52, 4294901760
      %8282 = vmatpush1.msra.mxu0 %v8281
      %8283 = vmatprep.subr.mxu0 0.0
      %v8284 = vand.u32 %v51, 4294901760
      %8285 = vmatpush1.msra.mxu0 %v8284
      %8286 = vmatprep.subr.mxu0 0.0
      %v8287 = vand.u32 %v50, 4294901760
      %8288 = vmatpush1.msra.mxu0 %v8287
      %8289 = vmatprep.subr.mxu0 0.0
      %8290 = vmatpush2.msra.mxu0 0.0
      %8291 = vmatprep.subr.mxu0 0.0
      %8292 = vmatpush2.msra.mxu0 0.0
      %8293 = vmatprep.subr.mxu0 0.0
      %8294 = vmatpush2.msra.mxu0 0.0
      %8295 = vmatprep.subr.mxu0 0.0
      %8296 = vmatpush2.msra.mxu0 0.0
      %8297 = vmatprep.subr.mxu0 0.0
      %8298 = vmatpush2.msra.mxu0 0.0
      %8299 = vmatprep.subr.mxu0 0.0
      %8300 = vmatpush2.msra.mxu0 0.0
      %8301 = vmatprep.subr.mxu0 0.0
      %8302 = vmatpush2.msra.mxu0 0.0
      %8303 = vmatprep.subr.mxu0 0.0
      %8304 = vmatpush2.msra.mxu0 0.0
      %8305 = vmatprep.subr.mxu0 0.0
      %8306 = vmatpush2.msra.mxu0 0.0
      %8307 = vmatprep.subr.mxu0 0.0
      %8308 = vmatpush2.msra.mxu0 0.0
      %8309 = vmatprep.subr.mxu0 0.0
      %8310 = vmatpush2.msra.mxu0 0.0
      %8311 = vmatprep.subr.mxu0 0.0
      %8312 = vmatpush2.msra.mxu0 0.0
      %8313 = vmatprep.subr.mxu0 0.0
      %8314 = vmatpush2.msra.mxu0 0.0
      %8315 = vmatprep.subr.mxu0 0.0
      %8316 = vmatpush2.msra.mxu0 0.0
      %8317 = vmatprep.subr.mxu0 0.0
      %8318 = vmatpush2.msra.mxu0 0.0
      %8319 = vmatprep.subr.mxu0 0.0
      %8320 = vmatpush2.msra.mxu0 0.0
      %8321 = vmatprep.mubr.f32.mxu0 0.0
      %v8322 = vand.u32 %v8010, 4294901760
      %v8323 = vsub.f32 %v8010, %v8322
      %v8324 = vand.u32 %v8323, 4294901760
      %8325 = vmatmul.mubr.f32.gmra.mxu0 %v8324
      %v8326 = vpop.f32.mrf.mxu0
      %v8327 = vadd.f32 %v8251, %v8326
      %v8328 = vpop.f32.mrf.mxu0
      %8329 = vdwg.mxu0
      %8330 = vmatprep.subr.mxu0 0.0
      %8331 = vmatpush1.msra.mxu0 0.0
      %8332 = vmatprep.subr.mxu0 0.0
      %8333 = vmatpush1.msra.mxu0 0.0
      %8334 = vmatprep.subr.mxu0 0.0
      %8335 = vmatpush1.msra.mxu0 0.0
      %8336 = vmatprep.subr.mxu0 0.0
      %8337 = vmatpush1.msra.mxu0 0.0
      %8338 = vmatprep.subr.mxu0 0.0
      %8339 = vmatpush1.msra.mxu0 0.0
      %8340 = vmatprep.subr.mxu0 0.0
      %8341 = vmatpush1.msra.mxu0 0.0
      %8342 = vmatprep.subr.mxu0 0.0
      %8343 = vmatpush1.msra.mxu0 0.0
      %8344 = vmatprep.subr.mxu0 0.0
      %8345 = vmatpush1.msra.mxu0 0.0
      %8346 = vmatprep.subr.mxu0 0.0
      %8347 = vmatpush1.msra.mxu0 0.0
      %8348 = vmatprep.subr.mxu0 0.0
      %8349 = vmatpush1.msra.mxu0 0.0
      %8350 = vmatprep.subr.mxu0 0.0
      %8351 = vmatpush1.msra.mxu0 0.0
      %8352 = vmatprep.subr.mxu0 0.0
      %8353 = vmatpush1.msra.mxu0 0.0
      %8354 = vmatprep.subr.mxu0 0.0
      %8355 = vmatpush1.msra.mxu0 0.0
      %8356 = vmatprep.subr.mxu0 0.0
      %v8357 = vand.u32 %v52, 4294901760
      %v8358 = vsub.f32 %v52, %v8357
      %v8359 = vand.u32 %v8358, 4294901760
      %8360 = vmatpush1.msra.mxu0 %v8359
      %8361 = vmatprep.subr.mxu0 0.0
      %v8362 = vand.u32 %v51, 4294901760
      %v8363 = vsub.f32 %v51, %v8362
      %v8364 = vand.u32 %v8363, 4294901760
      %8365 = vmatpush1.msra.mxu0 %v8364
      %8366 = vmatprep.subr.mxu0 0.0
      %v8367 = vand.u32 %v50, 4294901760
      %v8368 = vsub.f32 %v50, %v8367
      %v8369 = vand.u32 %v8368, 4294901760
      %8370 = vmatpush1.msra.mxu0 %v8369
      %8371 = vmatprep.subr.mxu0 0.0
      %8372 = vmatpush2.msra.mxu0 0.0
      %8373 = vmatprep.subr.mxu0 0.0
      %8374 = vmatpush2.msra.mxu0 0.0
      %8375 = vmatprep.subr.mxu0 0.0
      %8376 = vmatpush2.msra.mxu0 0.0
      %8377 = vmatprep.subr.mxu0 0.0
      %8378 = vmatpush2.msra.mxu0 0.0
      %8379 = vmatprep.subr.mxu0 0.0
      %8380 = vmatpush2.msra.mxu0 0.0
      %8381 = vmatprep.subr.mxu0 0.0
      %8382 = vmatpush2.msra.mxu0 0.0
      %8383 = vmatprep.subr.mxu0 0.0
      %8384 = vmatpush2.msra.mxu0 0.0
      %8385 = vmatprep.subr.mxu0 0.0
      %8386 = vmatpush2.msra.mxu0 0.0
      %8387 = vmatprep.subr.mxu0 0.0
      %8388 = vmatpush2.msra.mxu0 0.0
      %8389 = vmatprep.subr.mxu0 0.0
      %8390 = vmatpush2.msra.mxu0 0.0
      %8391 = vmatprep.subr.mxu0 0.0
      %8392 = vmatpush2.msra.mxu0 0.0
      %8393 = vmatprep.subr.mxu0 0.0
      %8394 = vmatpush2.msra.mxu0 0.0
      %8395 = vmatprep.subr.mxu0 0.0
      %8396 = vmatpush2.msra.mxu0 0.0
      %8397 = vmatprep.subr.mxu0 0.0
      %8398 = vmatpush2.msra.mxu0 0.0
      %8399 = vmatprep.subr.mxu0 0.0
      %8400 = vmatpush2.msra.mxu0 0.0
      %8401 = vmatprep.subr.mxu0 0.0
      %8402 = vmatpush2.msra.mxu0 0.0
      %8403 = vmatprep.mubr.f32.mxu0 0.0
      %v8404 = vand.u32 %v8010, 4294901760
      %8405 = vmatmul.mubr.f32.gmra.mxu0 %v8404
      %v8406 = vpop.f32.mrf.mxu0
      %v8407 = vadd.f32 %v8327, %v8406
      %v8408 = vpop.f32.mrf.mxu0
      %8409 = vdwg.mxu0
      %8410 = vmatprep.subr.mxu0 0.0
      %8411 = vmatpush1.msra.mxu0 0.0
      %8412 = vmatprep.subr.mxu0 0.0
      %8413 = vmatpush1.msra.mxu0 0.0
      %8414 = vmatprep.subr.mxu0 0.0
      %8415 = vmatpush1.msra.mxu0 0.0
      %8416 = vmatprep.subr.mxu0 0.0
      %8417 = vmatpush1.msra.mxu0 0.0
      %8418 = vmatprep.subr.mxu0 0.0
      %8419 = vmatpush1.msra.mxu0 0.0
      %8420 = vmatprep.subr.mxu0 0.0
      %8421 = vmatpush1.msra.mxu0 0.0
      %8422 = vmatprep.subr.mxu0 0.0
      %8423 = vmatpush1.msra.mxu0 0.0
      %8424 = vmatprep.subr.mxu0 0.0
      %8425 = vmatpush1.msra.mxu0 0.0
      %8426 = vmatprep.subr.mxu0 0.0
      %8427 = vmatpush1.msra.mxu0 0.0
      %8428 = vmatprep.subr.mxu0 0.0
      %8429 = vmatpush1.msra.mxu0 0.0
      %8430 = vmatprep.subr.mxu0 0.0
      %8431 = vmatpush1.msra.mxu0 0.0
      %8432 = vmatprep.subr.mxu0 0.0
      %8433 = vmatpush1.msra.mxu0 0.0
      %8434 = vmatprep.subr.mxu0 0.0
      %8435 = vmatpush1.msra.mxu0 0.0
      %8436 = vmatprep.subr.mxu0 0.0
      %v8437 = vand.u32 %v52, 4294901760
      %8438 = vmatpush1.msra.mxu0 %v8437
      %8439 = vmatprep.subr.mxu0 0.0
      %v8440 = vand.u32 %v51, 4294901760
      %8441 = vmatpush1.msra.mxu0 %v8440
      %8442 = vmatprep.subr.mxu0 0.0
      %v8443 = vand.u32 %v50, 4294901760
      %8444 = vmatpush1.msra.mxu0 %v8443
      %8445 = vmatprep.subr.mxu0 0.0
      %8446 = vmatpush2.msra.mxu0 0.0
      %8447 = vmatprep.subr.mxu0 0.0
      %8448 = vmatpush2.msra.mxu0 0.0
      %8449 = vmatprep.subr.mxu0 0.0
      %8450 = vmatpush2.msra.mxu0 0.0
      %8451 = vmatprep.subr.mxu0 0.0
      %8452 = vmatpush2.msra.mxu0 0.0
      %8453 = vmatprep.subr.mxu0 0.0
      %8454 = vmatpush2.msra.mxu0 0.0
      %8455 = vmatprep.subr.mxu0 0.0
      %8456 = vmatpush2.msra.mxu0 0.0
      %8457 = vmatprep.subr.mxu0 0.0
      %8458 = vmatpush2.msra.mxu0 0.0
      %8459 = vmatprep.subr.mxu0 0.0
      %8460 = vmatpush2.msra.mxu0 0.0
      %8461 = vmatprep.subr.mxu0 0.0
      %8462 = vmatpush2.msra.mxu0 0.0
      %8463 = vmatprep.subr.mxu0 0.0
      %8464 = vmatpush2.msra.mxu0 0.0
      %8465 = vmatprep.subr.mxu0 0.0
      %8466 = vmatpush2.msra.mxu0 0.0
      %8467 = vmatprep.subr.mxu0 0.0
      %8468 = vmatpush2.msra.mxu0 0.0
      %8469 = vmatprep.subr.mxu0 0.0
      %8470 = vmatpush2.msra.mxu0 0.0
      %8471 = vmatprep.subr.mxu0 0.0
      %8472 = vmatpush2.msra.mxu0 0.0
      %8473 = vmatprep.subr.mxu0 0.0
      %8474 = vmatpush2.msra.mxu0 0.0
      %8475 = vmatprep.subr.mxu0 0.0
      %8476 = vmatpush2.msra.mxu0 0.0
      %8477 = vmatprep.mubr.f32.mxu0 0.0
      %v8478 = vand.u32 %v8010, 4294901760
      %8479 = vmatmul.mubr.f32.gmra.mxu0 %v8478
      %v8480 = vpop.f32.mrf.mxu0
      %v8481 = vadd.f32 %v8407, %v8480
      %v8482 = vpop.f32.mrf.mxu0
      %8483 = vdwg.mxu0
      %v8484 = vmax.f32 %v8007, -5.0
      %v8485 = vmin.f32 %v8484, 5.0
      %v8486 = vmax.f32 %v8481, -5.0
      %v8487 = vmin.f32 %v8486, 5.0
      %v8488 = vmax.f32 %v8006, -3.0
      %v8489 = vmin.f32 %v8488, 3.0
      %v8490 = vsub.f32 %v8489, %v7894
      %v8491 = vstv %s7412
      %v8492 = vrcp.pop %v8491
      %s8493 = vtos %v8492
      %s8494 = smul.f32 %s7411, %s8493
      %v8495 = vstv %s8494
      %v8496 = vmul.f32 %v8495, %v7400
      %v8497 = vmul.f32 %v8496, %v7400
      %s8498 = smul.f32 %s7412, %s7412
      %v8499 = vstv %s8498
      %v8500 = vrcp.pop %v8499
      %s8501 = vtos %v8500
      %s8502 = smul.f32 %s7411, %s8501
      %v8503 = vstv %s8502
      %v8504 = vmul.f32 %v8503, %v8490
      %v8505 = vmul.f32 %v8504, %v8490
      %8507 = vrot.lane.b32.xlu0 %v8505, 112
      %v8508 = vpop.permute.xlu0 %8507
      %v8510 = vadd.f32 %v8497, %v8508
      %v8511 = vrsqrt.pop %v8510
      %v8512 = vmul.f32 %v8510, %v8511
      %vm8513 = vcmp.eq.f32.partialorder %v8510, inf
      %v8514 = vsel %vm8513, %v8510, %v8512
      %vm8515 = vcmp.eq.f32.partialorder %v8510, 0.0
      %v8516 = vand.u32 %v8510, 2147483648
      %v8517 = vsel %vm8515, %v8516, %v8514
      %v8518 = vmul.f32 %v8495, %v7399
      %v8519 = vstv %s7412
      %v8520 = vrcp.pop %v8519
      %s8521 = vtos %v8520
      %v8522 = vstv %s8521
      %v8523 = vmul.f32 %v8522, %v8489
      %8525 = vrot.lane.b32.xlu0 %v8523, 112
      %v8526 = vpop.permute.xlu0 %8525
      %v8528 = vadd.f32 %v8518, %v8526
      %v8529 = vsel %vm1171, %v8485, %v8489
      %8530 = vst.msk [vmem:[#allocation2] sm:$0xff] %vm566, %v8529
      %8531 = vst.msk [vmem:[#allocation3] sm:$0xff] %vm1701, %v8487
      %8532 = vst.msk [vmem:[#allocation4] sm:$0xff] %vm1703, %v8528
      %8533 = vst.msk [vmem:[#allocation5] sm:$0xff] %vm1703, %v8517
      %s8534 = sadd.s32 %s557, 7
      %v8535 = vld [vmem:[#allocation2] sm:$0xff]
      %v8536 = vld [vmem:[#allocation3] sm:$0xff]
      %v8537 = vld [vmem:[#allocation4] sm:$0xff]
      %v8538 = vld [vmem:[#allocation5] sm:$0xff]
      %8540 = vrot.lane.b32.xlu0 %v8536, 24
      %v8541 = vpop.permute.xlu0 %8540
      %v8543 = vsel %vm566, %v8535, %v8541
      %s8544 = smul.u32 %s8534, 8
      %s8545 = scalar_lea.vmem [#allocation11], %s8544
      %8546 = vst.msk [vmem:[%s8545] sm:$0xff] %vm570, %v8543
      %s8547 = sadd.s32 %s550, %s8534
      %s8548 = scvt.s32.f32 %s8547
      %s8549 = sadd.f32 %s8548, 1.0
      %s8550 = sadd.f32 %s8548, 2.0
      %s8551 = scalar_lea.vmem [#allocation9], %s8544
      %v8552 = vld [vmem:[%s8551] sm:$0xff]
      %v8554 = vsel %vm566, %v8535, 0
      %8556 = vmatprep.subr.mxu0 0.0
      %8557 = vmatpush1.msra.mxu0 0.0
      %8558 = vmatprep.subr.mxu0 0.0
      %8559 = vmatpush1.msra.mxu0 0.0
      %8560 = vmatprep.subr.mxu0 0.0
      %8561 = vmatpush1.msra.mxu0 0.0
      %8562 = vmatprep.subr.mxu0 0.0
      %8563 = vmatpush1.msra.mxu0 0.0
      %8564 = vmatprep.subr.mxu0 0.0
      %8565 = vmatpush1.msra.mxu0 0.0
      %8566 = vmatprep.subr.mxu0 0.0
      %8567 = vmatpush1.msra.mxu0 0.0
      %8568 = vmatprep.subr.mxu0 0.0
      %8569 = vmatpush1.msra.mxu0 0.0
      %8570 = vmatprep.subr.mxu0 0.0
      %8571 = vmatpush1.msra.mxu0 0.0
      %8572 = vmatprep.subr.mxu0 0.0
      %8573 = vmatpush1.msra.mxu0 0.0
      %8574 = vmatprep.subr.mxu0 0.0
      %8575 = vmatpush1.msra.mxu0 0.0
      %8576 = vmatprep.subr.mxu0 0.0
      %8577 = vmatpush1.msra.mxu0 0.0
      %8578 = vmatprep.subr.mxu0 0.0
      %8579 = vmatpush1.msra.mxu0 0.0
      %8580 = vmatprep.subr.mxu0 0.0
      %8581 = vmatpush1.msra.mxu0 0.0
      %8582 = vmatprep.subr.mxu0 0.0
      %v8583 = vand.u32 %v49, 4294901760
      %8584 = vmatpush1.msra.mxu0 %v8583
      %8585 = vmatprep.subr.mxu0 0.0
      %v8586 = vand.u32 %v48, 4294901760
      %8587 = vmatpush1.msra.mxu0 %v8586
      %8588 = vmatprep.subr.mxu0 0.0
      %v8589 = vand.u32 %v47, 4294901760
      %8590 = vmatpush1.msra.mxu0 %v8589
      %8591 = vmatprep.subr.mxu0 0.0
      %8592 = vmatpush2.msra.mxu0 0.0
      %8593 = vmatprep.subr.mxu0 0.0
      %8594 = vmatpush2.msra.mxu0 0.0
      %8595 = vmatprep.subr.mxu0 0.0
      %8596 = vmatpush2.msra.mxu0 0.0
      %8597 = vmatprep.subr.mxu0 0.0
      %8598 = vmatpush2.msra.mxu0 0.0
      %8599 = vmatprep.subr.mxu0 0.0
      %8600 = vmatpush2.msra.mxu0 0.0
      %8601 = vmatprep.subr.mxu0 0.0
      %8602 = vmatpush2.msra.mxu0 0.0
      %8603 = vmatprep.subr.mxu0 0.0
      %8604 = vmatpush2.msra.mxu0 0.0
      %8605 = vmatprep.subr.mxu0 0.0
      %8606 = vmatpush2.msra.mxu0 0.0
      %8607 = vmatprep.subr.mxu0 0.0
      %8608 = vmatpush2.msra.mxu0 0.0
      %8609 = vmatprep.subr.mxu0 0.0
      %8610 = vmatpush2.msra.mxu0 0.0
      %8611 = vmatprep.subr.mxu0 0.0
      %8612 = vmatpush2.msra.mxu0 0.0
      %8613 = vmatprep.subr.mxu0 0.0
      %8614 = vmatpush2.msra.mxu0 0.0
      %8615 = vmatprep.subr.mxu0 0.0
      %8616 = vmatpush2.msra.mxu0 0.0
      %8617 = vmatprep.subr.mxu0 0.0
      %8618 = vmatpush2.msra.mxu0 0.0
      %8619 = vmatprep.subr.mxu0 0.0
      %8620 = vmatpush2.msra.mxu0 0.0
      %8621 = vmatprep.subr.mxu0 0.0
      %8622 = vmatpush2.msra.mxu0 0.0
      %8623 = vmatprep.mubr.f32.mxu0 0.0
      %v8624 = vand.u32 %v8554, 4294901760
      %v8625 = vsub.f32 %v8554, %v8624
      %v8626 = vand.u32 %v8625, 4294901760
      %v8627 = vsub.f32 %v8625, %v8626
      %v8628 = vand.u32 %v8627, 4294901760
      %8629 = vmatmul.mubr.f32.gmra.mxu0 %v8628
      %v8630 = vpop.f32.mrf.mxu0
      %v8631 = vadd.f32 %v8552, %v8630
      %v8632 = vpop.f32.mrf.mxu0
      %8633 = vdwg.mxu0
      %8634 = vmatprep.subr.mxu0 0.0
      %8635 = vmatpush1.msra.mxu0 0.0
      %8636 = vmatprep.subr.mxu0 0.0
      %8637 = vmatpush1.msra.mxu0 0.0
      %8638 = vmatprep.subr.mxu0 0.0
      %8639 = vmatpush1.msra.mxu0 0.0
      %8640 = vmatprep.subr.mxu0 0.0
      %8641 = vmatpush1.msra.mxu0 0.0
      %8642 = vmatprep.subr.mxu0 0.0
      %8643 = vmatpush1.msra.mxu0 0.0
      %8644 = vmatprep.subr.mxu0 0.0
      %8645 = vmatpush1.msra.mxu0 0.0
      %8646 = vmatprep.subr.mxu0 0.0
      %8647 = vmatpush1.msra.mxu0 0.0
      %8648 = vmatprep.subr.mxu0 0.0
      %8649 = vmatpush1.msra.mxu0 0.0
      %8650 = vmatprep.subr.mxu0 0.0
      %8651 = vmatpush1.msra.mxu0 0.0
      %8652 = vmatprep.subr.mxu0 0.0
      %8653 = vmatpush1.msra.mxu0 0.0
      %8654 = vmatprep.subr.mxu0 0.0
      %8655 = vmatpush1.msra.mxu0 0.0
      %8656 = vmatprep.subr.mxu0 0.0
      %8657 = vmatpush1.msra.mxu0 0.0
      %8658 = vmatprep.subr.mxu0 0.0
      %8659 = vmatpush1.msra.mxu0 0.0
      %8660 = vmatprep.subr.mxu0 0.0
      %v8661 = vand.u32 %v49, 4294901760
      %v8662 = vsub.f32 %v49, %v8661
      %v8663 = vand.u32 %v8662, 4294901760
      %v8664 = vsub.f32 %v8662, %v8663
      %v8665 = vand.u32 %v8664, 4294901760
      %8666 = vmatpush1.msra.mxu0 %v8665
      %8667 = vmatprep.subr.mxu0 0.0
      %v8668 = vand.u32 %v48, 4294901760
      %v8669 = vsub.f32 %v48, %v8668
      %v8670 = vand.u32 %v8669, 4294901760
      %v8671 = vsub.f32 %v8669, %v8670
      %v8672 = vand.u32 %v8671, 4294901760
      %8673 = vmatpush1.msra.mxu0 %v8672
      %8674 = vmatprep.subr.mxu0 0.0
      %v8675 = vand.u32 %v47, 4294901760
      %v8676 = vsub.f32 %v47, %v8675
      %v8677 = vand.u32 %v8676, 4294901760
      %v8678 = vsub.f32 %v8676, %v8677
      %v8679 = vand.u32 %v8678, 4294901760
      %8680 = vmatpush1.msra.mxu0 %v8679
      %8681 = vmatprep.subr.mxu0 0.0
      %8682 = vmatpush2.msra.mxu0 0.0
      %8683 = vmatprep.subr.mxu0 0.0
      %8684 = vmatpush2.msra.mxu0 0.0
      %8685 = vmatprep.subr.mxu0 0.0
      %8686 = vmatpush2.msra.mxu0 0.0
      %8687 = vmatprep.subr.mxu0 0.0
      %8688 = vmatpush2.msra.mxu0 0.0
      %8689 = vmatprep.subr.mxu0 0.0
      %8690 = vmatpush2.msra.mxu0 0.0
      %8691 = vmatprep.subr.mxu0 0.0
      %8692 = vmatpush2.msra.mxu0 0.0
      %8693 = vmatprep.subr.mxu0 0.0
      %8694 = vmatpush2.msra.mxu0 0.0
      %8695 = vmatprep.subr.mxu0 0.0
      %8696 = vmatpush2.msra.mxu0 0.0
      %8697 = vmatprep.subr.mxu0 0.0
      %8698 = vmatpush2.msra.mxu0 0.0
      %8699 = vmatprep.subr.mxu0 0.0
      %8700 = vmatpush2.msra.mxu0 0.0
      %8701 = vmatprep.subr.mxu0 0.0
      %8702 = vmatpush2.msra.mxu0 0.0
      %8703 = vmatprep.subr.mxu0 0.0
      %8704 = vmatpush2.msra.mxu0 0.0
      %8705 = vmatprep.subr.mxu0 0.0
      %8706 = vmatpush2.msra.mxu0 0.0
      %8707 = vmatprep.subr.mxu0 0.0
      %8708 = vmatpush2.msra.mxu0 0.0
      %8709 = vmatprep.subr.mxu0 0.0
      %8710 = vmatpush2.msra.mxu0 0.0
      %8711 = vmatprep.subr.mxu0 0.0
      %8712 = vmatpush2.msra.mxu0 0.0
      %8713 = vmatprep.mubr.f32.mxu0 0.0
      %v8714 = vand.u32 %v8554, 4294901760
      %8715 = vmatmul.mubr.f32.gmra.mxu0 %v8714
      %v8716 = vpop.f32.mrf.mxu0
      %v8717 = vadd.f32 %v8631, %v8716
      %v8718 = vpop.f32.mrf.mxu0
      %8719 = vdwg.mxu0
      %8720 = vmatprep.subr.mxu0 0.0
      %8721 = vmatpush1.msra.mxu0 0.0
      %8722 = vmatprep.subr.mxu0 0.0
      %8723 = vmatpush1.msra.mxu0 0.0
      %8724 = vmatprep.subr.mxu0 0.0
      %8725 = vmatpush1.msra.mxu0 0.0
      %8726 = vmatprep.subr.mxu0 0.0
      %8727 = vmatpush1.msra.mxu0 0.0
      %8728 = vmatprep.subr.mxu0 0.0
      %8729 = vmatpush1.msra.mxu0 0.0
      %8730 = vmatprep.subr.mxu0 0.0
      %8731 = vmatpush1.msra.mxu0 0.0
      %8732 = vmatprep.subr.mxu0 0.0
      %8733 = vmatpush1.msra.mxu0 0.0
      %8734 = vmatprep.subr.mxu0 0.0
      %8735 = vmatpush1.msra.mxu0 0.0
      %8736 = vmatprep.subr.mxu0 0.0
      %8737 = vmatpush1.msra.mxu0 0.0
      %8738 = vmatprep.subr.mxu0 0.0
      %8739 = vmatpush1.msra.mxu0 0.0
      %8740 = vmatprep.subr.mxu0 0.0
      %8741 = vmatpush1.msra.mxu0 0.0
      %8742 = vmatprep.subr.mxu0 0.0
      %8743 = vmatpush1.msra.mxu0 0.0
      %8744 = vmatprep.subr.mxu0 0.0
      %8745 = vmatpush1.msra.mxu0 0.0
      %8746 = vmatprep.subr.mxu0 0.0
      %v8747 = vand.u32 %v49, 4294901760
      %v8748 = vsub.f32 %v49, %v8747
      %8749 = vmatpush1.msra.mxu0 %v8748
      %8750 = vmatprep.subr.mxu0 0.0
      %v8751 = vand.u32 %v48, 4294901760
      %v8752 = vsub.f32 %v48, %v8751
      %8753 = vmatpush1.msra.mxu0 %v8752
      %8754 = vmatprep.subr.mxu0 0.0
      %v8755 = vand.u32 %v47, 4294901760
      %v8756 = vsub.f32 %v47, %v8755
      %8757 = vmatpush1.msra.mxu0 %v8756
      %8758 = vmatprep.subr.mxu0 0.0
      %8759 = vmatpush2.msra.mxu0 0.0
      %8760 = vmatprep.subr.mxu0 0.0
      %8761 = vmatpush2.msra.mxu0 0.0
      %8762 = vmatprep.subr.mxu0 0.0
      %8763 = vmatpush2.msra.mxu0 0.0
      %8764 = vmatprep.subr.mxu0 0.0
      %8765 = vmatpush2.msra.mxu0 0.0
      %8766 = vmatprep.subr.mxu0 0.0
      %8767 = vmatpush2.msra.mxu0 0.0
      %8768 = vmatprep.subr.mxu0 0.0
      %8769 = vmatpush2.msra.mxu0 0.0
      %8770 = vmatprep.subr.mxu0 0.0
      %8771 = vmatpush2.msra.mxu0 0.0
      %8772 = vmatprep.subr.mxu0 0.0
      %8773 = vmatpush2.msra.mxu0 0.0
      %8774 = vmatprep.subr.mxu0 0.0
      %8775 = vmatpush2.msra.mxu0 0.0
      %8776 = vmatprep.subr.mxu0 0.0
      %8777 = vmatpush2.msra.mxu0 0.0
      %8778 = vmatprep.subr.mxu0 0.0
      %8779 = vmatpush2.msra.mxu0 0.0
      %8780 = vmatprep.subr.mxu0 0.0
      %8781 = vmatpush2.msra.mxu0 0.0
      %8782 = vmatprep.subr.mxu0 0.0
      %8783 = vmatpush2.msra.mxu0 0.0
      %8784 = vmatprep.subr.mxu0 0.0
      %8785 = vmatpush2.msra.mxu0 0.0
      %8786 = vmatprep.subr.mxu0 0.0
      %8787 = vmatpush2.msra.mxu0 0.0
      %8788 = vmatprep.subr.mxu0 0.0
      %8789 = vmatpush2.msra.mxu0 0.0
      %8790 = vmatprep.mubr.f32.mxu0 0.0
      %v8791 = vand.u32 %v8554, 4294901760
      %v8792 = vsub.f32 %v8554, %v8791
      %8793 = vmatmul.mubr.f32.gmra.mxu0 %v8792
      %v8794 = vpop.f32.mrf.mxu0
      %v8795 = vadd.f32 %v8717, %v8794
      %v8796 = vpop.f32.mrf.mxu0
      %8797 = vdwg.mxu0
      %8798 = vmatprep.subr.mxu0 0.0
      %8799 = vmatpush1.msra.mxu0 0.0
      %8800 = vmatprep.subr.mxu0 0.0
      %8801 = vmatpush1.msra.mxu0 0.0
      %8802 = vmatprep.subr.mxu0 0.0
      %8803 = vmatpush1.msra.mxu0 0.0
      %8804 = vmatprep.subr.mxu0 0.0
      %8805 = vmatpush1.msra.mxu0 0.0
      %8806 = vmatprep.subr.mxu0 0.0
      %8807 = vmatpush1.msra.mxu0 0.0
      %8808 = vmatprep.subr.mxu0 0.0
      %8809 = vmatpush1.msra.mxu0 0.0
      %8810 = vmatprep.subr.mxu0 0.0
      %8811 = vmatpush1.msra.mxu0 0.0
      %8812 = vmatprep.subr.mxu0 0.0
      %8813 = vmatpush1.msra.mxu0 0.0
      %8814 = vmatprep.subr.mxu0 0.0
      %8815 = vmatpush1.msra.mxu0 0.0
      %8816 = vmatprep.subr.mxu0 0.0
      %8817 = vmatpush1.msra.mxu0 0.0
      %8818 = vmatprep.subr.mxu0 0.0
      %8819 = vmatpush1.msra.mxu0 0.0
      %8820 = vmatprep.subr.mxu0 0.0
      %8821 = vmatpush1.msra.mxu0 0.0
      %8822 = vmatprep.subr.mxu0 0.0
      %8823 = vmatpush1.msra.mxu0 0.0
      %8824 = vmatprep.subr.mxu0 0.0
      %v8825 = vand.u32 %v49, 4294901760
      %8826 = vmatpush1.msra.mxu0 %v8825
      %8827 = vmatprep.subr.mxu0 0.0
      %v8828 = vand.u32 %v48, 4294901760
      %8829 = vmatpush1.msra.mxu0 %v8828
      %8830 = vmatprep.subr.mxu0 0.0
      %v8831 = vand.u32 %v47, 4294901760
      %8832 = vmatpush1.msra.mxu0 %v8831
      %8833 = vmatprep.subr.mxu0 0.0
      %8834 = vmatpush2.msra.mxu0 0.0
      %8835 = vmatprep.subr.mxu0 0.0
      %8836 = vmatpush2.msra.mxu0 0.0
      %8837 = vmatprep.subr.mxu0 0.0
      %8838 = vmatpush2.msra.mxu0 0.0
      %8839 = vmatprep.subr.mxu0 0.0
      %8840 = vmatpush2.msra.mxu0 0.0
      %8841 = vmatprep.subr.mxu0 0.0
      %8842 = vmatpush2.msra.mxu0 0.0
      %8843 = vmatprep.subr.mxu0 0.0
      %8844 = vmatpush2.msra.mxu0 0.0
      %8845 = vmatprep.subr.mxu0 0.0
      %8846 = vmatpush2.msra.mxu0 0.0
      %8847 = vmatprep.subr.mxu0 0.0
      %8848 = vmatpush2.msra.mxu0 0.0
      %8849 = vmatprep.subr.mxu0 0.0
      %8850 = vmatpush2.msra.mxu0 0.0
      %8851 = vmatprep.subr.mxu0 0.0
      %8852 = vmatpush2.msra.mxu0 0.0
      %8853 = vmatprep.subr.mxu0 0.0
      %8854 = vmatpush2.msra.mxu0 0.0
      %8855 = vmatprep.subr.mxu0 0.0
      %8856 = vmatpush2.msra.mxu0 0.0
      %8857 = vmatprep.subr.mxu0 0.0
      %8858 = vmatpush2.msra.mxu0 0.0
      %8859 = vmatprep.subr.mxu0 0.0
      %8860 = vmatpush2.msra.mxu0 0.0
      %8861 = vmatprep.subr.mxu0 0.0
      %8862 = vmatpush2.msra.mxu0 0.0
      %8863 = vmatprep.subr.mxu0 0.0
      %8864 = vmatpush2.msra.mxu0 0.0
      %8865 = vmatprep.mubr.f32.mxu0 0.0
      %v8866 = vand.u32 %v8554, 4294901760
      %v8867 = vsub.f32 %v8554, %v8866
      %v8868 = vand.u32 %v8867, 4294901760
      %8869 = vmatmul.mubr.f32.gmra.mxu0 %v8868
      %v8870 = vpop.f32.mrf.mxu0
      %v8871 = vadd.f32 %v8795, %v8870
      %v8872 = vpop.f32.mrf.mxu0
      %8873 = vdwg.mxu0
      %8874 = vmatprep.subr.mxu0 0.0
      %8875 = vmatpush1.msra.mxu0 0.0
      %8876 = vmatprep.subr.mxu0 0.0
      %8877 = vmatpush1.msra.mxu0 0.0
      %8878 = vmatprep.subr.mxu0 0.0
      %8879 = vmatpush1.msra.mxu0 0.0
      %8880 = vmatprep.subr.mxu0 0.0
      %8881 = vmatpush1.msra.mxu0 0.0
      %8882 = vmatprep.subr.mxu0 0.0
      %8883 = vmatpush1.msra.mxu0 0.0
      %8884 = vmatprep.subr.mxu0 0.0
      %8885 = vmatpush1.msra.mxu0 0.0
      %8886 = vmatprep.subr.mxu0 0.0
      %8887 = vmatpush1.msra.mxu0 0.0
      %8888 = vmatprep.subr.mxu0 0.0
      %8889 = vmatpush1.msra.mxu0 0.0
      %8890 = vmatprep.subr.mxu0 0.0
      %8891 = vmatpush1.msra.mxu0 0.0
      %8892 = vmatprep.subr.mxu0 0.0
      %8893 = vmatpush1.msra.mxu0 0.0
      %8894 = vmatprep.subr.mxu0 0.0
      %8895 = vmatpush1.msra.mxu0 0.0
      %8896 = vmatprep.subr.mxu0 0.0
      %8897 = vmatpush1.msra.mxu0 0.0
      %8898 = vmatprep.subr.mxu0 0.0
      %8899 = vmatpush1.msra.mxu0 0.0
      %8900 = vmatprep.subr.mxu0 0.0
      %v8901 = vand.u32 %v49, 4294901760
      %v8902 = vsub.f32 %v49, %v8901
      %v8903 = vand.u32 %v8902, 4294901760
      %8904 = vmatpush1.msra.mxu0 %v8903
      %8905 = vmatprep.subr.mxu0 0.0
      %v8906 = vand.u32 %v48, 4294901760
      %v8907 = vsub.f32 %v48, %v8906
      %v8908 = vand.u32 %v8907, 4294901760
      %8909 = vmatpush1.msra.mxu0 %v8908
      %8910 = vmatprep.subr.mxu0 0.0
      %v8911 = vand.u32 %v47, 4294901760
      %v8912 = vsub.f32 %v47, %v8911
      %v8913 = vand.u32 %v8912, 4294901760
      %8914 = vmatpush1.msra.mxu0 %v8913
      %8915 = vmatprep.subr.mxu0 0.0
      %8916 = vmatpush2.msra.mxu0 0.0
      %8917 = vmatprep.subr.mxu0 0.0
      %8918 = vmatpush2.msra.mxu0 0.0
      %8919 = vmatprep.subr.mxu0 0.0
      %8920 = vmatpush2.msra.mxu0 0.0
      %8921 = vmatprep.subr.mxu0 0.0
      %8922 = vmatpush2.msra.mxu0 0.0
      %8923 = vmatprep.subr.mxu0 0.0
      %8924 = vmatpush2.msra.mxu0 0.0
      %8925 = vmatprep.subr.mxu0 0.0
      %8926 = vmatpush2.msra.mxu0 0.0
      %8927 = vmatprep.subr.mxu0 0.0
      %8928 = vmatpush2.msra.mxu0 0.0
      %8929 = vmatprep.subr.mxu0 0.0
      %8930 = vmatpush2.msra.mxu0 0.0
      %8931 = vmatprep.subr.mxu0 0.0
      %8932 = vmatpush2.msra.mxu0 0.0
      %8933 = vmatprep.subr.mxu0 0.0
      %8934 = vmatpush2.msra.mxu0 0.0
      %8935 = vmatprep.subr.mxu0 0.0
      %8936 = vmatpush2.msra.mxu0 0.0
      %8937 = vmatprep.subr.mxu0 0.0
      %8938 = vmatpush2.msra.mxu0 0.0
      %8939 = vmatprep.subr.mxu0 0.0
      %8940 = vmatpush2.msra.mxu0 0.0
      %8941 = vmatprep.subr.mxu0 0.0
      %8942 = vmatpush2.msra.mxu0 0.0
      %8943 = vmatprep.subr.mxu0 0.0
      %8944 = vmatpush2.msra.mxu0 0.0
      %8945 = vmatprep.subr.mxu0 0.0
      %8946 = vmatpush2.msra.mxu0 0.0
      %8947 = vmatprep.mubr.f32.mxu0 0.0
      %v8948 = vand.u32 %v8554, 4294901760
      %8949 = vmatmul.mubr.f32.gmra.mxu0 %v8948
      %v8950 = vpop.f32.mrf.mxu0
      %v8951 = vadd.f32 %v8871, %v8950
      %v8952 = vpop.f32.mrf.mxu0
      %8953 = vdwg.mxu0
      %8954 = vmatprep.subr.mxu0 0.0
      %8955 = vmatpush1.msra.mxu0 0.0
      %8956 = vmatprep.subr.mxu0 0.0
      %8957 = vmatpush1.msra.mxu0 0.0
      %8958 = vmatprep.subr.mxu0 0.0
      %8959 = vmatpush1.msra.mxu0 0.0
      %8960 = vmatprep.subr.mxu0 0.0
      %8961 = vmatpush1.msra.mxu0 0.0
      %8962 = vmatprep.subr.mxu0 0.0
      %8963 = vmatpush1.msra.mxu0 0.0
      %8964 = vmatprep.subr.mxu0 0.0
      %8965 = vmatpush1.msra.mxu0 0.0
      %8966 = vmatprep.subr.mxu0 0.0
      %8967 = vmatpush1.msra.mxu0 0.0
      %8968 = vmatprep.subr.mxu0 0.0
      %8969 = vmatpush1.msra.mxu0 0.0
      %8970 = vmatprep.subr.mxu0 0.0
      %8971 = vmatpush1.msra.mxu0 0.0
      %8972 = vmatprep.subr.mxu0 0.0
      %8973 = vmatpush1.msra.mxu0 0.0
      %8974 = vmatprep.subr.mxu0 0.0
      %8975 = vmatpush1.msra.mxu0 0.0
      %8976 = vmatprep.subr.mxu0 0.0
      %8977 = vmatpush1.msra.mxu0 0.0
      %8978 = vmatprep.subr.mxu0 0.0
      %8979 = vmatpush1.msra.mxu0 0.0
      %8980 = vmatprep.subr.mxu0 0.0
      %v8981 = vand.u32 %v49, 4294901760
      %8982 = vmatpush1.msra.mxu0 %v8981
      %8983 = vmatprep.subr.mxu0 0.0
      %v8984 = vand.u32 %v48, 4294901760
      %8985 = vmatpush1.msra.mxu0 %v8984
      %8986 = vmatprep.subr.mxu0 0.0
      %v8987 = vand.u32 %v47, 4294901760
      %8988 = vmatpush1.msra.mxu0 %v8987
      %8989 = vmatprep.subr.mxu0 0.0
      %8990 = vmatpush2.msra.mxu0 0.0
      %8991 = vmatprep.subr.mxu0 0.0
      %8992 = vmatpush2.msra.mxu0 0.0
      %8993 = vmatprep.subr.mxu0 0.0
      %8994 = vmatpush2.msra.mxu0 0.0
      %8995 = vmatprep.subr.mxu0 0.0
      %8996 = vmatpush2.msra.mxu0 0.0
      %8997 = vmatprep.subr.mxu0 0.0
      %8998 = vmatpush2.msra.mxu0 0.0
      %8999 = vmatprep.subr.mxu0 0.0
      %9000 = vmatpush2.msra.mxu0 0.0
      %9001 = vmatprep.subr.mxu0 0.0
      %9002 = vmatpush2.msra.mxu0 0.0
      %9003 = vmatprep.subr.mxu0 0.0
      %9004 = vmatpush2.msra.mxu0 0.0
      %9005 = vmatprep.subr.mxu0 0.0
      %9006 = vmatpush2.msra.mxu0 0.0
      %9007 = vmatprep.subr.mxu0 0.0
      %9008 = vmatpush2.msra.mxu0 0.0
      %9009 = vmatprep.subr.mxu0 0.0
      %9010 = vmatpush2.msra.mxu0 0.0
      %9011 = vmatprep.subr.mxu0 0.0
      %9012 = vmatpush2.msra.mxu0 0.0
      %9013 = vmatprep.subr.mxu0 0.0
      %9014 = vmatpush2.msra.mxu0 0.0
      %9015 = vmatprep.subr.mxu0 0.0
      %9016 = vmatpush2.msra.mxu0 0.0
      %9017 = vmatprep.subr.mxu0 0.0
      %9018 = vmatpush2.msra.mxu0 0.0
      %9019 = vmatprep.subr.mxu0 0.0
      %9020 = vmatpush2.msra.mxu0 0.0
      %9021 = vmatprep.mubr.f32.mxu0 0.0
      %v9022 = vand.u32 %v8554, 4294901760
      %9023 = vmatmul.mubr.f32.gmra.mxu0 %v9022
      %v9024 = vpop.f32.mrf.mxu0
      %v9025 = vadd.f32 %v8951, %v9024
      %v9026 = vpop.f32.mrf.mxu0
      %9027 = vdwg.mxu0
      %v9028 = vrcp.pop %v8538
      %v9029 = vmul.f32 1.0, %v9028
      %9031 = vrot.lane.b32.xlu0 %v8537, 16
      %v9032 = vpop.permute.xlu0 %9031
      %v9034 = vsub.f32 %v8535, %v9032
      %v9035 = vadd.f32 %v9029, 1.0
      %v9036 = vmul.f32 %v9025, 0.5
      %9038 = vrot.lane.b32.xlu0 %v9035, 16
      %v9039 = vpop.permute.xlu0 %9038
      %v9041 = vmul.f32 %v9036, %v9039
      %v9042 = vadd.f32 %v9034, %v9041
      %v9043 = vmul.f32 %v9025, %v9042
      %v9044 = vsub.f32 1.0, %v9029
      %9046 = vrot.lane.b32.xlu0 %v9044, 16
      %v9047 = vpop.permute.xlu0 %9046
      %v9049 = vmul.f32 %v9043, %v9047
      %v9050 = vmul.f32 %v8538, %v8538
      %v9051 = vstv %s8549
      %v9052 = vrcp.pop %v9051
      %s9053 = vtos %v9052
      %s9054 = smul.f32 %s8550, %s9053
      %v9055 = vstv %s9054
      %v9056 = vsub.f32 %v9050, %v9055
      %v9057 = vstv %s8550
      %v9058 = vmul.f32 %v9057, %v9056
      %v9059 = vmul.f32 %v9025, %v9039
      %v9060 = vadd.f32 %v9034, %v9059
      %v9061 = vmul.f32 %v9036, %v9025
      %v9062 = vmul.f32 %v9029, %v9029
      %v9063 = vadd.f32 %v9062, 1.0
      %9065 = vrot.lane.b32.xlu0 %v9063, 16
      %v9066 = vpop.permute.xlu0 %9065
      %v9068 = vmul.f32 %v9061, %v9066
      %v9069 = vadd.f32 %v9060, %v9068
      %v9070 = vmul.f32 %v9034, %v9069
      %9072 = vrot.lane.b32.xlu0 %v9070, 112
      %v9073 = vpop.permute.xlu0 %9072
      %v9075 = vadd.f32 %v9058, %v9073
      %9077 = vrot.lane.b32.xlu0 %v9049, 112
      %v9078 = vpop.permute.xlu0 %9077
      %vm9080 = vcmp.ge.f32.partialorder %v9075, %v9078
      %vm9081 = vcmp.ge.f32.partialorder %v9049, 0.0
      %v9082 = vsel %vm9081, 1, 0
      %9083 = vrot.lane.b32.xlu0 %v9082, 112
      %v9084 = vpop.permute.xlu0 %9083
      %vm9085 = vcmp.ne.s32.totalorder %v9084, 0
      %vm9086 = vmand %vm9080, %vm9085
      %vm9087 = vcmp.lt.f32.partialorder %v9075, %v9078
      %vm9088 = vcmp.lt.f32.partialorder %v9049, 0.0
      %v9089 = vsel %vm9088, 1, 0
      %9090 = vrot.lane.b32.xlu0 %v9089, 112
      %v9091 = vpop.permute.xlu0 %9090
      %vm9092 = vcmp.ne.s32.totalorder %v9091, 0
      %vm9093 = vmand %vm9087, %vm9092
      %9095 = vrot.lane.b32.xlu0 %v9075, 16
      %v9096 = vpop.permute.xlu0 %9095
      %vm9098 = vcmp.lt.f32.partialorder %v9049, %v9096
      %vm9099 = vcmp.lt.f32.partialorder %v9075, 0.0
      %v9100 = vsel %vm9099, 1, 0
      %9101 = vrot.lane.b32.xlu0 %v9100, 16
      %v9102 = vpop.permute.xlu0 %9101
      %vm9103 = vcmp.ne.s32.totalorder %v9102, 0
      %vm9104 = vmand %vm9098, %vm9103
      %v9105 = vmul.f32 %v9049, %v9049
      %v9106 = vmul.f32 %v9075, %v9075
      %9108 = vrot.lane.b32.xlu0 %v9106, 16
      %v9109 = vpop.permute.xlu0 %9108
      %v9111 = vsub.f32 %v9105, %v9109
      %s9112 = smul.f32 %s8550, 2.0
      %s9113 = smul.f32 %s9112, %s8550
      %v9114 = vstv %s8549
      %v9115 = vrcp.pop %v9114
      %s9116 = vtos %v9115
      %s9117 = smul.f32 %s9113, %s9116
      %v9118 = vstv %s9117
      %v9119 = vmul.f32 %v9118, %v9075
      %9121 = vrot.lane.b32.xlu0 %v9111, 112
      %v9122 = vpop.permute.xlu0 %9121
      %vm9124 = vcmp.ge.f32.partialorder %v9119, %v9122
      %vm9125 = vcmp.gt.f32.partialorder %v9111, 0.0
      %v9126 = vsel %vm9125, 1, 0
      %9127 = vrot.lane.b32.xlu0 %v9126, 112
      %v9128 = vpop.permute.xlu0 %9127
      %vm9129 = vcmp.ne.s32.totalorder %v9128, 0
      %vm9130 = vmand %vm9124, %vm9129
      %vm9131 = vmor %vm9086, %vm9093
      %v9132 = vsel %vm9104, 1, 0
      %9133 = vrot.lane.b32.xlu0 %v9132, 112
      %v9134 = vpop.permute.xlu0 %9133
      %vm9135 = vcmp.ne.s32.totalorder %v9134, 0
      %vm9136 = vmor %vm9131, %vm9135
      %vm9137 = vmor %vm9136, %vm9130
      %v9138 = vsel %vm9137, %v9029, 1.0
      %9140 = vrot.lane.b32.xlu0 %v9138, 16
      %v9141 = vpop.permute.xlu0 %9140
      %v9143 = vmul.f32 %v9025, %v9141
      %v9144 = vadd.f32 %v8535, %v9143
      %v9145 = vadd.f32 %v8535, %v9025
      %v9146 = vsel %vm1171, %v9145, %v9144
      %v9148 = vsel %vm566, %v9146, 0
      %9150 = vmatprep.subr.mxu0 0.0
      %9151 = vmatpush1.msra.mxu0 0.0
      %9152 = vmatprep.subr.mxu0 0.0
      %9153 = vmatpush1.msra.mxu0 0.0
      %9154 = vmatprep.subr.mxu0 0.0
      %9155 = vmatpush1.msra.mxu0 0.0
      %9156 = vmatprep.subr.mxu0 0.0
      %9157 = vmatpush1.msra.mxu0 0.0
      %9158 = vmatprep.subr.mxu0 0.0
      %9159 = vmatpush1.msra.mxu0 0.0
      %9160 = vmatprep.subr.mxu0 0.0
      %9161 = vmatpush1.msra.mxu0 0.0
      %9162 = vmatprep.subr.mxu0 0.0
      %9163 = vmatpush1.msra.mxu0 0.0
      %9164 = vmatprep.subr.mxu0 0.0
      %9165 = vmatpush1.msra.mxu0 0.0
      %9166 = vmatprep.subr.mxu0 0.0
      %9167 = vmatpush1.msra.mxu0 0.0
      %9168 = vmatprep.subr.mxu0 0.0
      %9169 = vmatpush1.msra.mxu0 0.0
      %9170 = vmatprep.subr.mxu0 0.0
      %9171 = vmatpush1.msra.mxu0 0.0
      %9172 = vmatprep.subr.mxu0 0.0
      %9173 = vmatpush1.msra.mxu0 0.0
      %9174 = vmatprep.subr.mxu0 0.0
      %9175 = vmatpush1.msra.mxu0 0.0
      %9176 = vmatprep.subr.mxu0 0.0
      %v9177 = vand.u32 %v52, 4294901760
      %9178 = vmatpush1.msra.mxu0 %v9177
      %9179 = vmatprep.subr.mxu0 0.0
      %v9180 = vand.u32 %v51, 4294901760
      %9181 = vmatpush1.msra.mxu0 %v9180
      %9182 = vmatprep.subr.mxu0 0.0
      %v9183 = vand.u32 %v50, 4294901760
      %9184 = vmatpush1.msra.mxu0 %v9183
      %9185 = vmatprep.subr.mxu0 0.0
      %9186 = vmatpush2.msra.mxu0 0.0
      %9187 = vmatprep.subr.mxu0 0.0
      %9188 = vmatpush2.msra.mxu0 0.0
      %9189 = vmatprep.subr.mxu0 0.0
      %9190 = vmatpush2.msra.mxu0 0.0
      %9191 = vmatprep.subr.mxu0 0.0
      %9192 = vmatpush2.msra.mxu0 0.0
      %9193 = vmatprep.subr.mxu0 0.0
      %9194 = vmatpush2.msra.mxu0 0.0
      %9195 = vmatprep.subr.mxu0 0.0
      %9196 = vmatpush2.msra.mxu0 0.0
      %9197 = vmatprep.subr.mxu0 0.0
      %9198 = vmatpush2.msra.mxu0 0.0
      %9199 = vmatprep.subr.mxu0 0.0
      %9200 = vmatpush2.msra.mxu0 0.0
      %9201 = vmatprep.subr.mxu0 0.0
      %9202 = vmatpush2.msra.mxu0 0.0
      %9203 = vmatprep.subr.mxu0 0.0
      %9204 = vmatpush2.msra.mxu0 0.0
      %9205 = vmatprep.subr.mxu0 0.0
      %9206 = vmatpush2.msra.mxu0 0.0
      %9207 = vmatprep.subr.mxu0 0.0
      %9208 = vmatpush2.msra.mxu0 0.0
      %9209 = vmatprep.subr.mxu0 0.0
      %9210 = vmatpush2.msra.mxu0 0.0
      %9211 = vmatprep.subr.mxu0 0.0
      %9212 = vmatpush2.msra.mxu0 0.0
      %9213 = vmatprep.subr.mxu0 0.0
      %9214 = vmatpush2.msra.mxu0 0.0
      %9215 = vmatprep.subr.mxu0 0.0
      %9216 = vmatpush2.msra.mxu0 0.0
      %9217 = vmatprep.mubr.f32.mxu0 0.0
      %v9218 = vand.u32 %v9148, 4294901760
      %v9219 = vsub.f32 %v9148, %v9218
      %v9220 = vand.u32 %v9219, 4294901760
      %v9221 = vsub.f32 %v9219, %v9220
      %v9222 = vand.u32 %v9221, 4294901760
      %9223 = vmatmul.mubr.f32.gmra.mxu0 %v9222
      %v9224 = vpop.f32.mrf.mxu0
      %v9225 = vadd.f32 %v1177, %v9224
      %v9226 = vpop.f32.mrf.mxu0
      %9227 = vdwg.mxu0
      %9228 = vmatprep.subr.mxu0 0.0
      %9229 = vmatpush1.msra.mxu0 0.0
      %9230 = vmatprep.subr.mxu0 0.0
      %9231 = vmatpush1.msra.mxu0 0.0
      %9232 = vmatprep.subr.mxu0 0.0
      %9233 = vmatpush1.msra.mxu0 0.0
      %9234 = vmatprep.subr.mxu0 0.0
      %9235 = vmatpush1.msra.mxu0 0.0
      %9236 = vmatprep.subr.mxu0 0.0
      %9237 = vmatpush1.msra.mxu0 0.0
      %9238 = vmatprep.subr.mxu0 0.0
      %9239 = vmatpush1.msra.mxu0 0.0
      %9240 = vmatprep.subr.mxu0 0.0
      %9241 = vmatpush1.msra.mxu0 0.0
      %9242 = vmatprep.subr.mxu0 0.0
      %9243 = vmatpush1.msra.mxu0 0.0
      %9244 = vmatprep.subr.mxu0 0.0
      %9245 = vmatpush1.msra.mxu0 0.0
      %9246 = vmatprep.subr.mxu0 0.0
      %9247 = vmatpush1.msra.mxu0 0.0
      %9248 = vmatprep.subr.mxu0 0.0
      %9249 = vmatpush1.msra.mxu0 0.0
      %9250 = vmatprep.subr.mxu0 0.0
      %9251 = vmatpush1.msra.mxu0 0.0
      %9252 = vmatprep.subr.mxu0 0.0
      %9253 = vmatpush1.msra.mxu0 0.0
      %9254 = vmatprep.subr.mxu0 0.0
      %v9255 = vand.u32 %v52, 4294901760
      %v9256 = vsub.f32 %v52, %v9255
      %v9257 = vand.u32 %v9256, 4294901760
      %v9258 = vsub.f32 %v9256, %v9257
      %v9259 = vand.u32 %v9258, 4294901760
      %9260 = vmatpush1.msra.mxu0 %v9259
      %9261 = vmatprep.subr.mxu0 0.0
      %v9262 = vand.u32 %v51, 4294901760
      %v9263 = vsub.f32 %v51, %v9262
      %v9264 = vand.u32 %v9263, 4294901760
      %v9265 = vsub.f32 %v9263, %v9264
      %v9266 = vand.u32 %v9265, 4294901760
      %9267 = vmatpush1.msra.mxu0 %v9266
      %9268 = vmatprep.subr.mxu0 0.0
      %v9269 = vand.u32 %v50, 4294901760
      %v9270 = vsub.f32 %v50, %v9269
      %v9271 = vand.u32 %v9270, 4294901760
      %v9272 = vsub.f32 %v9270, %v9271
      %v9273 = vand.u32 %v9272, 4294901760
      %9274 = vmatpush1.msra.mxu0 %v9273
      %9275 = vmatprep.subr.mxu0 0.0
      %9276 = vmatpush2.msra.mxu0 0.0
      %9277 = vmatprep.subr.mxu0 0.0
      %9278 = vmatpush2.msra.mxu0 0.0
      %9279 = vmatprep.subr.mxu0 0.0
      %9280 = vmatpush2.msra.mxu0 0.0
      %9281 = vmatprep.subr.mxu0 0.0
      %9282 = vmatpush2.msra.mxu0 0.0
      %9283 = vmatprep.subr.mxu0 0.0
      %9284 = vmatpush2.msra.mxu0 0.0
      %9285 = vmatprep.subr.mxu0 0.0
      %9286 = vmatpush2.msra.mxu0 0.0
      %9287 = vmatprep.subr.mxu0 0.0
      %9288 = vmatpush2.msra.mxu0 0.0
      %9289 = vmatprep.subr.mxu0 0.0
      %9290 = vmatpush2.msra.mxu0 0.0
      %9291 = vmatprep.subr.mxu0 0.0
      %9292 = vmatpush2.msra.mxu0 0.0
      %9293 = vmatprep.subr.mxu0 0.0
      %9294 = vmatpush2.msra.mxu0 0.0
      %9295 = vmatprep.subr.mxu0 0.0
      %9296 = vmatpush2.msra.mxu0 0.0
      %9297 = vmatprep.subr.mxu0 0.0
      %9298 = vmatpush2.msra.mxu0 0.0
      %9299 = vmatprep.subr.mxu0 0.0
      %9300 = vmatpush2.msra.mxu0 0.0
      %9301 = vmatprep.subr.mxu0 0.0
      %9302 = vmatpush2.msra.mxu0 0.0
      %9303 = vmatprep.subr.mxu0 0.0
      %9304 = vmatpush2.msra.mxu0 0.0
      %9305 = vmatprep.subr.mxu0 0.0
      %9306 = vmatpush2.msra.mxu0 0.0
      %9307 = vmatprep.mubr.f32.mxu0 0.0
      %v9308 = vand.u32 %v9148, 4294901760
      %9309 = vmatmul.mubr.f32.gmra.mxu0 %v9308
      %v9310 = vpop.f32.mrf.mxu0
      %v9311 = vadd.f32 %v9225, %v9310
      %v9312 = vpop.f32.mrf.mxu0
      %9313 = vdwg.mxu0
      %9314 = vmatprep.subr.mxu0 0.0
      %9315 = vmatpush1.msra.mxu0 0.0
      %9316 = vmatprep.subr.mxu0 0.0
      %9317 = vmatpush1.msra.mxu0 0.0
      %9318 = vmatprep.subr.mxu0 0.0
      %9319 = vmatpush1.msra.mxu0 0.0
      %9320 = vmatprep.subr.mxu0 0.0
      %9321 = vmatpush1.msra.mxu0 0.0
      %9322 = vmatprep.subr.mxu0 0.0
      %9323 = vmatpush1.msra.mxu0 0.0
      %9324 = vmatprep.subr.mxu0 0.0
      %9325 = vmatpush1.msra.mxu0 0.0
      %9326 = vmatprep.subr.mxu0 0.0
      %9327 = vmatpush1.msra.mxu0 0.0
      %9328 = vmatprep.subr.mxu0 0.0
      %9329 = vmatpush1.msra.mxu0 0.0
      %9330 = vmatprep.subr.mxu0 0.0
      %9331 = vmatpush1.msra.mxu0 0.0
      %9332 = vmatprep.subr.mxu0 0.0
      %9333 = vmatpush1.msra.mxu0 0.0
      %9334 = vmatprep.subr.mxu0 0.0
      %9335 = vmatpush1.msra.mxu0 0.0
      %9336 = vmatprep.subr.mxu0 0.0
      %9337 = vmatpush1.msra.mxu0 0.0
      %9338 = vmatprep.subr.mxu0 0.0
      %9339 = vmatpush1.msra.mxu0 0.0
      %9340 = vmatprep.subr.mxu0 0.0
      %v9341 = vand.u32 %v52, 4294901760
      %v9342 = vsub.f32 %v52, %v9341
      %9343 = vmatpush1.msra.mxu0 %v9342
      %9344 = vmatprep.subr.mxu0 0.0
      %v9345 = vand.u32 %v51, 4294901760
      %v9346 = vsub.f32 %v51, %v9345
      %9347 = vmatpush1.msra.mxu0 %v9346
      %9348 = vmatprep.subr.mxu0 0.0
      %v9349 = vand.u32 %v50, 4294901760
      %v9350 = vsub.f32 %v50, %v9349
      %9351 = vmatpush1.msra.mxu0 %v9350
      %9352 = vmatprep.subr.mxu0 0.0
      %9353 = vmatpush2.msra.mxu0 0.0
      %9354 = vmatprep.subr.mxu0 0.0
      %9355 = vmatpush2.msra.mxu0 0.0
      %9356 = vmatprep.subr.mxu0 0.0
      %9357 = vmatpush2.msra.mxu0 0.0
      %9358 = vmatprep.subr.mxu0 0.0
      %9359 = vmatpush2.msra.mxu0 0.0
      %9360 = vmatprep.subr.mxu0 0.0
      %9361 = vmatpush2.msra.mxu0 0.0
      %9362 = vmatprep.subr.mxu0 0.0
      %9363 = vmatpush2.msra.mxu0 0.0
      %9364 = vmatprep.subr.mxu0 0.0
      %9365 = vmatpush2.msra.mxu0 0.0
      %9366 = vmatprep.subr.mxu0 0.0
      %9367 = vmatpush2.msra.mxu0 0.0
      %9368 = vmatprep.subr.mxu0 0.0
      %9369 = vmatpush2.msra.mxu0 0.0
      %9370 = vmatprep.subr.mxu0 0.0
      %9371 = vmatpush2.msra.mxu0 0.0
      %9372 = vmatprep.subr.mxu0 0.0
      %9373 = vmatpush2.msra.mxu0 0.0
      %9374 = vmatprep.subr.mxu0 0.0
      %9375 = vmatpush2.msra.mxu0 0.0
      %9376 = vmatprep.subr.mxu0 0.0
      %9377 = vmatpush2.msra.mxu0 0.0
      %9378 = vmatprep.subr.mxu0 0.0
      %9379 = vmatpush2.msra.mxu0 0.0
      %9380 = vmatprep.subr.mxu0 0.0
      %9381 = vmatpush2.msra.mxu0 0.0
      %9382 = vmatprep.subr.mxu0 0.0
      %9383 = vmatpush2.msra.mxu0 0.0
      %9384 = vmatprep.mubr.f32.mxu0 0.0
      %v9385 = vand.u32 %v9148, 4294901760
      %v9386 = vsub.f32 %v9148, %v9385
      %9387 = vmatmul.mubr.f32.gmra.mxu0 %v9386
      %v9388 = vpop.f32.mrf.mxu0
      %v9389 = vadd.f32 %v9311, %v9388
      %v9390 = vpop.f32.mrf.mxu0
      %9391 = vdwg.mxu0
      %9392 = vmatprep.subr.mxu0 0.0
      %9393 = vmatpush1.msra.mxu0 0.0
      %9394 = vmatprep.subr.mxu0 0.0
      %9395 = vmatpush1.msra.mxu0 0.0
      %9396 = vmatprep.subr.mxu0 0.0
      %9397 = vmatpush1.msra.mxu0 0.0
      %9398 = vmatprep.subr.mxu0 0.0
      %9399 = vmatpush1.msra.mxu0 0.0
      %9400 = vmatprep.subr.mxu0 0.0
      %9401 = vmatpush1.msra.mxu0 0.0
      %9402 = vmatprep.subr.mxu0 0.0
      %9403 = vmatpush1.msra.mxu0 0.0
      %9404 = vmatprep.subr.mxu0 0.0
      %9405 = vmatpush1.msra.mxu0 0.0
      %9406 = vmatprep.subr.mxu0 0.0
      %9407 = vmatpush1.msra.mxu0 0.0
      %9408 = vmatprep.subr.mxu0 0.0
      %9409 = vmatpush1.msra.mxu0 0.0
      %9410 = vmatprep.subr.mxu0 0.0
      %9411 = vmatpush1.msra.mxu0 0.0
      %9412 = vmatprep.subr.mxu0 0.0
      %9413 = vmatpush1.msra.mxu0 0.0
      %9414 = vmatprep.subr.mxu0 0.0
      %9415 = vmatpush1.msra.mxu0 0.0
      %9416 = vmatprep.subr.mxu0 0.0
      %9417 = vmatpush1.msra.mxu0 0.0
      %9418 = vmatprep.subr.mxu0 0.0
      %v9419 = vand.u32 %v52, 4294901760
      %9420 = vmatpush1.msra.mxu0 %v9419
      %9421 = vmatprep.subr.mxu0 0.0
      %v9422 = vand.u32 %v51, 4294901760
      %9423 = vmatpush1.msra.mxu0 %v9422
      %9424 = vmatprep.subr.mxu0 0.0
      %v9425 = vand.u32 %v50, 4294901760
      %9426 = vmatpush1.msra.mxu0 %v9425
      %9427 = vmatprep.subr.mxu0 0.0
      %9428 = vmatpush2.msra.mxu0 0.0
      %9429 = vmatprep.subr.mxu0 0.0
      %9430 = vmatpush2.msra.mxu0 0.0
      %9431 = vmatprep.subr.mxu0 0.0
      %9432 = vmatpush2.msra.mxu0 0.0
      %9433 = vmatprep.subr.mxu0 0.0
      %9434 = vmatpush2.msra.mxu0 0.0
      %9435 = vmatprep.subr.mxu0 0.0
      %9436 = vmatpush2.msra.mxu0 0.0
      %9437 = vmatprep.subr.mxu0 0.0
      %9438 = vmatpush2.msra.mxu0 0.0
      %9439 = vmatprep.subr.mxu0 0.0
      %9440 = vmatpush2.msra.mxu0 0.0
      %9441 = vmatprep.subr.mxu0 0.0
      %9442 = vmatpush2.msra.mxu0 0.0
      %9443 = vmatprep.subr.mxu0 0.0
      %9444 = vmatpush2.msra.mxu0 0.0
      %9445 = vmatprep.subr.mxu0 0.0
      %9446 = vmatpush2.msra.mxu0 0.0
      %9447 = vmatprep.subr.mxu0 0.0
      %9448 = vmatpush2.msra.mxu0 0.0
      %9449 = vmatprep.subr.mxu0 0.0
      %9450 = vmatpush2.msra.mxu0 0.0
      %9451 = vmatprep.subr.mxu0 0.0
      %9452 = vmatpush2.msra.mxu0 0.0
      %9453 = vmatprep.subr.mxu0 0.0
      %9454 = vmatpush2.msra.mxu0 0.0
      %9455 = vmatprep.subr.mxu0 0.0
      %9456 = vmatpush2.msra.mxu0 0.0
      %9457 = vmatprep.subr.mxu0 0.0
      %9458 = vmatpush2.msra.mxu0 0.0
      %9459 = vmatprep.mubr.f32.mxu0 0.0
      %v9460 = vand.u32 %v9148, 4294901760
      %v9461 = vsub.f32 %v9148, %v9460
      %v9462 = vand.u32 %v9461, 4294901760
      %9463 = vmatmul.mubr.f32.gmra.mxu0 %v9462
      %v9464 = vpop.f32.mrf.mxu0
      %v9465 = vadd.f32 %v9389, %v9464
      %v9466 = vpop.f32.mrf.mxu0
      %9467 = vdwg.mxu0
      %9468 = vmatprep.subr.mxu0 0.0
      %9469 = vmatpush1.msra.mxu0 0.0
      %9470 = vmatprep.subr.mxu0 0.0
      %9471 = vmatpush1.msra.mxu0 0.0
      %9472 = vmatprep.subr.mxu0 0.0
      %9473 = vmatpush1.msra.mxu0 0.0
      %9474 = vmatprep.subr.mxu0 0.0
      %9475 = vmatpush1.msra.mxu0 0.0
      %9476 = vmatprep.subr.mxu0 0.0
      %9477 = vmatpush1.msra.mxu0 0.0
      %9478 = vmatprep.subr.mxu0 0.0
      %9479 = vmatpush1.msra.mxu0 0.0
      %9480 = vmatprep.subr.mxu0 0.0
      %9481 = vmatpush1.msra.mxu0 0.0
      %9482 = vmatprep.subr.mxu0 0.0
      %9483 = vmatpush1.msra.mxu0 0.0
      %9484 = vmatprep.subr.mxu0 0.0
      %9485 = vmatpush1.msra.mxu0 0.0
      %9486 = vmatprep.subr.mxu0 0.0
      %9487 = vmatpush1.msra.mxu0 0.0
      %9488 = vmatprep.subr.mxu0 0.0
      %9489 = vmatpush1.msra.mxu0 0.0
      %9490 = vmatprep.subr.mxu0 0.0
      %9491 = vmatpush1.msra.mxu0 0.0
      %9492 = vmatprep.subr.mxu0 0.0
      %9493 = vmatpush1.msra.mxu0 0.0
      %9494 = vmatprep.subr.mxu0 0.0
      %v9495 = vand.u32 %v52, 4294901760
      %v9496 = vsub.f32 %v52, %v9495
      %v9497 = vand.u32 %v9496, 4294901760
      %9498 = vmatpush1.msra.mxu0 %v9497
      %9499 = vmatprep.subr.mxu0 0.0
      %v9500 = vand.u32 %v51, 4294901760
      %v9501 = vsub.f32 %v51, %v9500
      %v9502 = vand.u32 %v9501, 4294901760
      %9503 = vmatpush1.msra.mxu0 %v9502
      %9504 = vmatprep.subr.mxu0 0.0
      %v9505 = vand.u32 %v50, 4294901760
      %v9506 = vsub.f32 %v50, %v9505
      %v9507 = vand.u32 %v9506, 4294901760
      %9508 = vmatpush1.msra.mxu0 %v9507
      %9509 = vmatprep.subr.mxu0 0.0
      %9510 = vmatpush2.msra.mxu0 0.0
      %9511 = vmatprep.subr.mxu0 0.0
      %9512 = vmatpush2.msra.mxu0 0.0
      %9513 = vmatprep.subr.mxu0 0.0
      %9514 = vmatpush2.msra.mxu0 0.0
      %9515 = vmatprep.subr.mxu0 0.0
      %9516 = vmatpush2.msra.mxu0 0.0
      %9517 = vmatprep.subr.mxu0 0.0
      %9518 = vmatpush2.msra.mxu0 0.0
      %9519 = vmatprep.subr.mxu0 0.0
      %9520 = vmatpush2.msra.mxu0 0.0
      %9521 = vmatprep.subr.mxu0 0.0
      %9522 = vmatpush2.msra.mxu0 0.0
      %9523 = vmatprep.subr.mxu0 0.0
      %9524 = vmatpush2.msra.mxu0 0.0
      %9525 = vmatprep.subr.mxu0 0.0
      %9526 = vmatpush2.msra.mxu0 0.0
      %9527 = vmatprep.subr.mxu0 0.0
      %9528 = vmatpush2.msra.mxu0 0.0
      %9529 = vmatprep.subr.mxu0 0.0
      %9530 = vmatpush2.msra.mxu0 0.0
      %9531 = vmatprep.subr.mxu0 0.0
      %9532 = vmatpush2.msra.mxu0 0.0
      %9533 = vmatprep.subr.mxu0 0.0
      %9534 = vmatpush2.msra.mxu0 0.0
      %9535 = vmatprep.subr.mxu0 0.0
      %9536 = vmatpush2.msra.mxu0 0.0
      %9537 = vmatprep.subr.mxu0 0.0
      %9538 = vmatpush2.msra.mxu0 0.0
      %9539 = vmatprep.subr.mxu0 0.0
      %9540 = vmatpush2.msra.mxu0 0.0
      %9541 = vmatprep.mubr.f32.mxu0 0.0
      %v9542 = vand.u32 %v9148, 4294901760
      %9543 = vmatmul.mubr.f32.gmra.mxu0 %v9542
      %v9544 = vpop.f32.mrf.mxu0
      %v9545 = vadd.f32 %v9465, %v9544
      %v9546 = vpop.f32.mrf.mxu0
      %9547 = vdwg.mxu0
      %9548 = vmatprep.subr.mxu0 0.0
      %9549 = vmatpush1.msra.mxu0 0.0
      %9550 = vmatprep.subr.mxu0 0.0
      %9551 = vmatpush1.msra.mxu0 0.0
      %9552 = vmatprep.subr.mxu0 0.0
      %9553 = vmatpush1.msra.mxu0 0.0
      %9554 = vmatprep.subr.mxu0 0.0
      %9555 = vmatpush1.msra.mxu0 0.0
      %9556 = vmatprep.subr.mxu0 0.0
      %9557 = vmatpush1.msra.mxu0 0.0
      %9558 = vmatprep.subr.mxu0 0.0
      %9559 = vmatpush1.msra.mxu0 0.0
      %9560 = vmatprep.subr.mxu0 0.0
      %9561 = vmatpush1.msra.mxu0 0.0
      %9562 = vmatprep.subr.mxu0 0.0
      %9563 = vmatpush1.msra.mxu0 0.0
      %9564 = vmatprep.subr.mxu0 0.0
      %9565 = vmatpush1.msra.mxu0 0.0
      %9566 = vmatprep.subr.mxu0 0.0
      %9567 = vmatpush1.msra.mxu0 0.0
      %9568 = vmatprep.subr.mxu0 0.0
      %9569 = vmatpush1.msra.mxu0 0.0
      %9570 = vmatprep.subr.mxu0 0.0
      %9571 = vmatpush1.msra.mxu0 0.0
      %9572 = vmatprep.subr.mxu0 0.0
      %9573 = vmatpush1.msra.mxu0 0.0
      %9574 = vmatprep.subr.mxu0 0.0
      %v9575 = vand.u32 %v52, 4294901760
      %9576 = vmatpush1.msra.mxu0 %v9575
      %9577 = vmatprep.subr.mxu0 0.0
      %v9578 = vand.u32 %v51, 4294901760
      %9579 = vmatpush1.msra.mxu0 %v9578
      %9580 = vmatprep.subr.mxu0 0.0
      %v9581 = vand.u32 %v50, 4294901760
      %9582 = vmatpush1.msra.mxu0 %v9581
      %9583 = vmatprep.subr.mxu0 0.0
      %9584 = vmatpush2.msra.mxu0 0.0
      %9585 = vmatprep.subr.mxu0 0.0
      %9586 = vmatpush2.msra.mxu0 0.0
      %9587 = vmatprep.subr.mxu0 0.0
      %9588 = vmatpush2.msra.mxu0 0.0
      %9589 = vmatprep.subr.mxu0 0.0
      %9590 = vmatpush2.msra.mxu0 0.0
      %9591 = vmatprep.subr.mxu0 0.0
      %9592 = vmatpush2.msra.mxu0 0.0
      %9593 = vmatprep.subr.mxu0 0.0
      %9594 = vmatpush2.msra.mxu0 0.0
      %9595 = vmatprep.subr.mxu0 0.0
      %9596 = vmatpush2.msra.mxu0 0.0
      %9597 = vmatprep.subr.mxu0 0.0
      %9598 = vmatpush2.msra.mxu0 0.0
      %9599 = vmatprep.subr.mxu0 0.0
      %9600 = vmatpush2.msra.mxu0 0.0
      %9601 = vmatprep.subr.mxu0 0.0
      %9602 = vmatpush2.msra.mxu0 0.0
      %9603 = vmatprep.subr.mxu0 0.0
      %9604 = vmatpush2.msra.mxu0 0.0
      %9605 = vmatprep.subr.mxu0 0.0
      %9606 = vmatpush2.msra.mxu0 0.0
      %9607 = vmatprep.subr.mxu0 0.0
      %9608 = vmatpush2.msra.mxu0 0.0
      %9609 = vmatprep.subr.mxu0 0.0
      %9610 = vmatpush2.msra.mxu0 0.0
      %9611 = vmatprep.subr.mxu0 0.0
      %9612 = vmatpush2.msra.mxu0 0.0
      %9613 = vmatprep.subr.mxu0 0.0
      %9614 = vmatpush2.msra.mxu0 0.0
      %9615 = vmatprep.mubr.f32.mxu0 0.0
      %v9616 = vand.u32 %v9148, 4294901760
      %9617 = vmatmul.mubr.f32.gmra.mxu0 %v9616
      %v9618 = vpop.f32.mrf.mxu0
      %v9619 = vadd.f32 %v9545, %v9618
      %v9620 = vpop.f32.mrf.mxu0
      %9621 = vdwg.mxu0
      %v9622 = vmax.f32 %v9145, -5.0
      %v9623 = vmin.f32 %v9622, 5.0
      %v9624 = vmax.f32 %v9619, -5.0
      %v9625 = vmin.f32 %v9624, 5.0
      %v9626 = vmax.f32 %v9144, -3.0
      %v9627 = vmin.f32 %v9626, 3.0
      %v9628 = vsub.f32 %v9627, %v9032
      %v9629 = vstv %s8550
      %v9630 = vrcp.pop %v9629
      %s9631 = vtos %v9630
      %s9632 = smul.f32 %s8549, %s9631
      %v9633 = vstv %s9632
      %v9634 = vmul.f32 %v9633, %v8538
      %v9635 = vmul.f32 %v9634, %v8538
      %s9636 = smul.f32 %s8550, %s8550
      %v9637 = vstv %s9636
      %v9638 = vrcp.pop %v9637
      %s9639 = vtos %v9638
      %s9640 = smul.f32 %s8549, %s9639
      %v9641 = vstv %s9640
      %v9642 = vmul.f32 %v9641, %v9628
      %v9643 = vmul.f32 %v9642, %v9628
      %9645 = vrot.lane.b32.xlu0 %v9643, 112
      %v9646 = vpop.permute.xlu0 %9645
      %v9648 = vadd.f32 %v9635, %v9646
      %v9649 = vrsqrt.pop %v9648
      %v9650 = vmul.f32 %v9648, %v9649
      %vm9651 = vcmp.eq.f32.partialorder %v9648, inf
      %v9652 = vsel %vm9651, %v9648, %v9650
      %vm9653 = vcmp.eq.f32.partialorder %v9648, 0.0
      %v9654 = vand.u32 %v9648, 2147483648
      %v9655 = vsel %vm9653, %v9654, %v9652
      %v9656 = vmul.f32 %v9633, %v8537
      %v9657 = vstv %s8550
      %v9658 = vrcp.pop %v9657
      %s9659 = vtos %v9658
      %v9660 = vstv %s9659
      %v9661 = vmul.f32 %v9660, %v9627
      %9663 = vrot.lane.b32.xlu0 %v9661, 112
      %v9664 = vpop.permute.xlu0 %9663
      %v9666 = vadd.f32 %v9656, %v9664
      %v9667 = vsel %vm1171, %v9623, %v9627
      %9668 = vst.msk [vmem:[#allocation2] sm:$0xff] %vm566, %v9667
      %9669 = vst.msk [vmem:[#allocation3] sm:$0xff] %vm1701, %v9625
      %9670 = vst.msk [vmem:[#allocation4] sm:$0xff] %vm1703, %v9666
      %9671 = vst.msk [vmem:[#allocation5] sm:$0xff] %vm1703, %v9655
    $region38: #{tpu_custom_call.1} parent=1 // loop_footer
      %s556 = sadd.s32 1, %s552
    $region39: #{tpu_custom_call.1} parent=1 // loop_footer_branch
      %551 = sbr.rel target = $region35
    $region40: #{tpu_custom_call.1} parent=1 // loop_exit
      _
    // Predicated region
    $region41: #{tpu_custom_call.1} parent=1 // pred_check
      _
    $region42: #{tpu_custom_call.1} parent=1 // pred_check_branch
      %9673 = sbr.rel (0) target = $region44
    $region43: #{tpu_custom_call.1} parent=1 // pred_region
      %s9675 = ssub.s32 2048, 2048
      %9676 = vsyncadd [#allocation8], %s9675
      %s9677 = sshll.u32 [#allocation11], 4
      %s9678 = int_to_ptr.vmem [resolvable:$true] %s9677
      %9683 = dma.vmem_to_hbm [thread:$0]  %s9678, 2048, %s5, [#allocation8], 128, 128, 8
    $region44: #{tpu_custom_call.1} parent=1 // pred_fallthru
      _
    // Predicated region
    $region45: #{tpu_custom_call.1} parent=1 // pred_check
      _
    $region46: #{tpu_custom_call.1} parent=1 // pred_check_branch
      %9685 = sbr.rel (0) target = $region48
    $region47: #{tpu_custom_call.1} parent=1 // pred_region
      %9686 = dma.done [#allocation8], 2048
    $region48: #{tpu_custom_call.1} parent=1 // pred_fallthru
      _
    %9687 = vsyncpa [#allocation7], 1
    %9688 = vsyncpa [#allocation10], 1
    %9689 = vsyncpa [#allocation8], 1

</llo_original>
